<compile_context>
chip_gen: v7x
topology: tpu7x:2x2x1
jax: 0.10.0
libtpu: 0.0.40
codegen_flags: <defaults>
</compile_context>

<pallas_src>
import functools

import numpy as np
import jax
import jax.numpy as jnp
from jax.experimental import pallas as pl
from jax.experimental.pallas import tpu as pltpu

H_FEAT = 128
IN_FEATS = 16
E_FEATS = 20
NUM_CLASSES = 4
NUM_LAYERS = 20
NEG_SLOPE = 0.01        # nn.LeakyReLU default
NEG_BIG = -1e38         # finite "minus infinity" for invalid edge slots


# -----------------------------------------------------------------------------
# Fused Pallas kernel: single invocation, all layers looped in-kernel.
# -----------------------------------------------------------------------------
def _fused_gin_kernel(h0_ref, a_ref, bias_ref, init_ref, w_ref, b_ref,
                      wfc_ref, bfc_ref, out_ref, *, num_layers, d_max):
    init = init_ref[...]                                   # (N, F): 0 if in-deg==0 else -1e38

    def layer(l, h):
        # MXU aggregation over in-edge slots: acc[dst] = max_k (w_k(dst) * h[src_k(dst)])
        acc = init
        for k in range(d_max):                             # d_max is small & static (3 here)
            m = jnp.dot(a_ref[k], h, preferred_element_type=jnp.float32) + bias_ref[k]
            acc = jnp.maximum(acc, m)
        rst = h + acc                                      # (1 + eps) * h + neigh, eps = 0
        hn = jnp.dot(rst, w_ref[l], preferred_element_type=jnp.float32) + b_ref[l]
        return jnp.where(hn >= 0.0, hn, NEG_SLOPE * hn)    # LeakyReLU

    h = jax.lax.fori_loop(0, num_layers, layer, h0_ref[...], unroll=True)

    # Final fc into a lane-dense (N, 128) zero-padded block (logits sliced outside).
    out_ref[...] = jnp.dot(h, wfc_ref[...], preferred_element_type=jnp.float32) + bfc_ref[...]


def gin_forward_fused(h0, a_slots, bias_slots, init, w_stack, b_stack, w_fc, b_fc, *, d_max):
    n, f = h0.shape
    nl = w_stack.shape[0]
    flops = nl * (2 * d_max * n * n * f + 2 * n * f * f + (3 * d_max + 4) * n * f) + 2 * n * f * f
    bytes_accessed = sum(int(a.size) * a.dtype.itemsize for a in
                         (h0, a_slots, bias_slots, init, w_stack, b_stack, w_fc, b_fc))
    bytes_accessed += n * f * 4  # output

    vmem = pl.BlockSpec(memory_space=pltpu.MemorySpace.VMEM)  # whole array, resident in VMEM
    return pl.pallas_call(
        functools.partial(_fused_gin_kernel, num_layers=nl, d_max=d_max),
        out_shape=jax.ShapeDtypeStruct((n, f), jnp.float32),
        in_specs=[vmem] * 8,
        out_specs=vmem,
        cost_estimate=pl.CostEstimate(flops=flops, transcendentals=0,
                                      bytes_accessed=bytes_accessed),
    )(h0, a_slots, bias_slots, init, w_stack, b_stack, w_fc, b_fc)


# -----------------------------------------------------------------------------
# Parameter init (deterministic, PyTorch nn.Linear-style uniform bounds)
# -----------------------------------------------------------------------------
def init_linear(key, fin, fout):
    kw, kb = jax.random.split(key)
    bound = 1.0 / (fin ** 0.5)
    w = jax.random.uniform(kw, (fin, fout), jnp.float32, -bound, bound)
    b = jax.random.uniform(kb, (1, fout), jnp.float32, -bound, bound)
    return w, b


def init_params(key):
    keys = jax.random.split(key, NUM_LAYERS + 1)
    dims = [IN_FEATS] + [H_FEAT] * NUM_LAYERS
    convs = [init_linear(keys[i], dims[i], dims[i + 1]) for i in range(NUM_LAYERS)]
    fc = init_linear(keys[NUM_LAYERS], H_FEAT, NUM_CLASSES)
    return convs, fc


def pack_params(convs, fc):
    w_list, b_list = [], []
    for w, b in convs:
        if w.shape[0] < H_FEAT:  # conv1: zero-pad K from 16 -> 128
            w = jnp.pad(w, ((0, H_FEAT - w.shape[0]), (0, 0)))
        w_list.append(w)
        b_list.append(b)
    w_stack = jnp.stack(w_list).astype(jnp.float32)          # (20, 128, 128)
    b_stack = jnp.stack(b_list).astype(jnp.float32)          # (20, 1, 128)
    w_fc, b_fc = fc
    w_fc = jnp.pad(w_fc, ((0, 0), (0, H_FEAT - NUM_CLASSES))).astype(jnp.float32)  # (128,128)
    b_fc = jnp.pad(b_fc, ((0, 0), (0, H_FEAT - NUM_CLASSES))).astype(jnp.float32)  # (1,128)
    return w_stack, b_stack, w_fc, b_fc


# -----------------------------------------------------------------------------
# Graph preprocessing: slot the in-edges of every destination node into d_max
# weighted one-hot matrices A_k plus a per-(slot, dst) validity bias.
# -----------------------------------------------------------------------------
def build_slots(edge_src, edge_dst, edge_weight, n, d_max):
    e = edge_dst.shape[0]
    order = jnp.argsort(edge_dst)                      # group edges by destination
    s_dst = edge_dst[order]
    s_src = edge_src[order]
    s_w = edge_weight[order].astype(jnp.float32)
    first = jnp.searchsorted(s_dst, s_dst, side='left')
    rank = jnp.arange(e) - first                       # rank of each edge within its dst group
    # TODO(synk): edges whose within-destination rank exceeds d_max-1 are silently dropped
    # by the scatter; d_max must be >= the true max in-degree (checked on concrete data in __main__).
    a = jnp.zeros((d_max, n, n), jnp.float32).at[rank, s_dst, s_src].set(s_w)
    valid = jnp.zeros((d_max, n), jnp.float32).at[rank, s_dst].set(1.0)
    bias = jnp.where(valid > 0.5, 0.0, NEG_BIG)
    bias = jnp.broadcast_to(bias[:, :, None], (d_max, n, H_FEAT)).astype(jnp.float32)
    has_in = jnp.zeros((n,), jnp.float32).at[edge_dst].set(1.0)
    init = jnp.where(has_in > 0.5, NEG_BIG, 0.0).astype(jnp.float32)
    init = jnp.broadcast_to(init[:, None], (n, H_FEAT))     # pre-broadcast, lane-dense
    return a, bias, init


# -----------------------------------------------------------------------------
# Forward pass (mirrors Net.forward).  Glue (plain JAX): slot-matrix build,
# padding, weight stacking — all independent of the per-layer loop.
# -----------------------------------------------------------------------------
def net_forward(node_feat, edge_src, edge_dst, edge_feat, params, *, d_max):
    n = node_feat.shape[0]
    convs, fc = params
    w_stack, b_stack, w_fc, b_fc = pack_params(convs, fc)

    edge_weight = edge_feat[:, 0]  # g.edata['feat'][:, 0]
    a_slots, bias_slots, init = build_slots(edge_src, edge_dst, edge_weight, n, d_max)

    h0 = jnp.pad(node_feat.astype(jnp.float32), ((0, 0), (0, H_FEAT - IN_FEATS)))

    out_padded = gin_forward_fused(h0, a_slots, bias_slots, init,
                                   w_stack, b_stack, w_fc, b_fc, d_max=d_max)
    return out_padded[:, :NUM_CLASSES]


# -----------------------------------------------------------------------------
# Pure-JAX reference (per-edge segment-max, same GINConv('max') semantics).
# -----------------------------------------------------------------------------
def reference_forward(node_feat, edge_src, edge_dst, edge_feat, params):
    convs, fc = params
    n = node_feat.shape[0]
    w_e = edge_feat[:, 0]
    has_in = jnp.zeros((n,), jnp.float32).at[edge_dst].set(1.0) > 0.5
    h = node_feat.astype(jnp.float32)
    for w, b in convs:
        msg = w_e[:, None] * h[edge_src]                            # (E, F)
        seg = jax.ops.segment_max(msg, edge_dst, num_segments=n)    # -inf for empty segments
        neigh = jnp.where(has_in[:, None], seg, 0.0)
        rst = h + neigh
        h = jnp.dot(rst, w, precision=jax.lax.Precision.HIGHEST) + b
        h = jnp.where(h >= 0.0, h, NEG_SLOPE * h)
    w_fc, b_fc = fc
    return jnp.dot(h, w_fc, precision=jax.lax.Precision.HIGHEST) + b_fc


# -----------------------------------------------------------------------------
if __name__ == "__main__":
    key = jax.random.PRNGKey(0)
    k_node, k_edge, k_param = jax.random.split(key, 3)

    N = 64  # number of nodes
    # Deterministic edge list: each node i sends edges to (i+1)%N, (i+2)%N, (i+5)%N.
    offsets = [1, 2, 5]
    src = jnp.concatenate([jnp.arange(N, dtype=jnp.int32) for _ in offsets])
    dst = jnp.concatenate([(jnp.arange(N, dtype=jnp.int32) + o) % N for o in offsets])
    E = src.shape[0]  # 192

    node_feat = jax.random.normal(k_node, (N, IN_FEATS), jnp.float32)
    edge_feat = jax.random.normal(k_edge, (E, E_FEATS), jnp.float32)
    params = init_params(k_param)

    # Static max in-degree (3 here) computed on concrete data outside jit.
    d_max = int(np.bincount(np.asarray(dst), minlength=N).max())

    fwd = jax.jit(functools.partial(net_forward, d_max=d_max))
    out = jax.block_until_ready(fwd(node_feat, src, dst, edge_feat, params))
    assert out.shape == (N, NUM_CLASSES)
    assert bool(jnp.all(jnp.isfinite(out)))

    # Correctness sanity check against the pure-JAX per-edge reference.
    ref = jax.block_until_ready(jax.jit(reference_forward)(node_feat, src, dst, edge_feat, params))
    max_err = float(jnp.max(jnp.abs(out - ref)))
    scale = float(jnp.max(jnp.abs(ref))) + 1.0
    assert max_err < 5e-2 * scale, f"mismatch: max_err={max_err}, scale={scale}"

    print("KERNEL_OK")
</pallas_src>

<mosaic_0001>
module attributes {stable_mosaic.version = 11 : i64} {
  func.func @_fused_gin_kernel(%arg0: memref<64x128xf32, #tpu.memory_space<vmem>>, %arg1: memref<3x64x64xf32, #tpu.memory_space<vmem>>, %arg2: memref<3x64x128xf32, #tpu.memory_space<vmem>>, %arg3: memref<64x128xf32, #tpu.memory_space<vmem>>, %arg4: memref<20x128x128xf32, #tpu.memory_space<vmem>>, %arg5: memref<20x1x128xf32, #tpu.memory_space<vmem>>, %arg6: memref<128x128xf32, #tpu.memory_space<vmem>>, %arg7: memref<1x128xf32, #tpu.memory_space<vmem>>, %arg8: memref<64x128xf32, #tpu.memory_space<vmem>>) attributes {dimension_semantics = [], scalar_prefetch = 0 : i64, scratch_operands = 0 : i64, tpu.core_type = #tpu.core_type<tc>} {
    %c0 = arith.constant 0 : index
    %c0_0 = arith.constant 0 : index
    %0 = vector.load %arg3[%c0, %c0_0] : memref<64x128xf32, #tpu.memory_space<vmem>>, vector<64x128xf32>
    %c0_1 = arith.constant 0 : index
    %c0_2 = arith.constant 0 : index
    %1 = vector.load %arg0[%c0_1, %c0_2] : memref<64x128xf32, #tpu.memory_space<vmem>>, vector<64x128xf32>
    %c0_i32 = arith.constant 0 : i32
    %c0_3 = arith.constant 0 : index
    %c0_4 = arith.constant 0 : index
    %c0_5 = arith.constant 0 : index
    %2 = vector.load %arg1[%c0_3, %c0_4, %c0_5] : memref<3x64x64xf32, #tpu.memory_space<vmem>>, vector<1x64x64xf32>
    %3 = vector.shape_cast %2 : vector<1x64x64xf32> to vector<64x64xf32>
    %cst = arith.constant dense<0.000000e+00> : vector<64x128xf32>
    %4 = tpu.matmul %3, %1, %cst {dimension_numbers = #tpu.dot_dimension_numbers<[1], [0], [0], [1], [0, 0, 1, 1], [], []>} : vector<64x64xf32>, vector<64x128xf32>, vector<64x128xf32> -> vector<64x128xf32>
    %c0_6 = arith.constant 0 : index
    %c0_7 = arith.constant 0 : index
    %c0_8 = arith.constant 0 : index
    %5 = vector.load %arg2[%c0_6, %c0_7, %c0_8] : memref<3x64x128xf32, #tpu.memory_space<vmem>>, vector<1x64x128xf32>
    %6 = vector.shape_cast %5 : vector<1x64x128xf32> to vector<64x128xf32>
    %7 = arith.addf %4, %6 : vector<64x128xf32>
    %8 = arith.maximumf %0, %7 : vector<64x128xf32>
    %c1 = arith.constant 1 : index
    %c0_9 = arith.constant 0 : index
    %c0_10 = arith.constant 0 : index
    %9 = vector.load %arg1[%c1, %c0_9, %c0_10] : memref<3x64x64xf32, #tpu.memory_space<vmem>>, vector<1x64x64xf32>
    %10 = vector.shape_cast %9 : vector<1x64x64xf32> to vector<64x64xf32>
    %cst_11 = arith.constant dense<0.000000e+00> : vector<64x128xf32>
    %11 = tpu.matmul %10, %1, %cst_11 {dimension_numbers = #tpu.dot_dimension_numbers<[1], [0], [0], [1], [0, 0, 1, 1], [], []>} : vector<64x64xf32>, vector<64x128xf32>, vector<64x128xf32> -> vector<64x128xf32>
    %c1_12 = arith.constant 1 : index
    %c0_13 = arith.constant 0 : index
    %c0_14 = arith.constant 0 : index
    %12 = vector.load %arg2[%c1_12, %c0_13, %c0_14] : memref<3x64x128xf32, #tpu.memory_space<vmem>>, vector<1x64x128xf32>
    %13 = vector.shape_cast %12 : vector<1x64x128xf32> to vector<64x128xf32>
    %14 = arith.addf %11, %13 : vector<64x128xf32>
    %15 = arith.maximumf %8, %14 : vector<64x128xf32>
    %c2 = arith.constant 2 : index
    %c0_15 = arith.constant 0 : index
    %c0_16 = arith.constant 0 : index
    %16 = vector.load %arg1[%c2, %c0_15, %c0_16] : memref<3x64x64xf32, #tpu.memory_space<vmem>>, vector<1x64x64xf32>
    %17 = vector.shape_cast %16 : vector<1x64x64xf32> to vector<64x64xf32>
    %cst_17 = arith.constant dense<0.000000e+00> : vector<64x128xf32>
    %18 = tpu.matmul %17, %1, %cst_17 {dimension_numbers = #tpu.dot_dimension_numbers<[1], [0], [0], [1], [0, 0, 1, 1], [], []>} : vector<64x64xf32>, vector<64x128xf32>, vector<64x128xf32> -> vector<64x128xf32>
    %c2_18 = arith.constant 2 : index
    %c0_19 = arith.constant 0 : index
    %c0_20 = arith.constant 0 : index
    %19 = vector.load %arg2[%c2_18, %c0_19, %c0_20] : memref<3x64x128xf32, #tpu.memory_space<vmem>>, vector<1x64x128xf32>
    %20 = vector.shape_cast %19 : vector<1x64x128xf32> to vector<64x128xf32>
    %21 = arith.addf %18, %20 : vector<64x128xf32>
    %22 = arith.maximumf %15, %21 : vector<64x128xf32>
    %23 = arith.addf %1, %22 : vector<64x128xf32>
    %24 = arith.index_cast %c0_i32 : i32 to index
    %c0_21 = arith.constant 0 : index
    %c0_22 = arith.constant 0 : index
    %25 = vector.load %arg4[%24, %c0_21, %c0_22] : memref<20x128x128xf32, #tpu.memory_space<vmem>>, vector<1x128x128xf32>
    %26 = vector.shape_cast %25 : vector<1x128x128xf32> to vector<128x128xf32>
    %cst_23 = arith.constant dense<0.000000e+00> : vector<64x128xf32>
    %27 = tpu.matmul %23, %26, %cst_23 {dimension_numbers = #tpu.dot_dimension_numbers<[1], [0], [0], [1], [0, 0, 1, 1], [], []>} : vector<64x128xf32>, vector<128x128xf32>, vector<64x128xf32> -> vector<64x128xf32>
    %28 = arith.index_cast %c0_i32 : i32 to index
    %c0_24 = arith.constant 0 : index
    %c0_25 = arith.constant 0 : index
    %29 = vector.load %arg5[%28, %c0_24, %c0_25] : memref<20x1x128xf32, #tpu.memory_space<vmem>>, vector<1x1x128xf32>
    %30 = vector.shape_cast %29 : vector<1x1x128xf32> to vector<1x128xf32>
    %31 = vector.broadcast %30 : vector<1x128xf32> to vector<64x128xf32>
    %32 = arith.addf %27, %31 : vector<64x128xf32>
    %cst_26 = arith.constant 0.000000e+00 : f32
    %33 = vector.broadcast %cst_26 : f32 to vector<64x128xf32>
    %34 = arith.cmpf oge, %32, %33 : vector<64x128xf32>
    %cst_27 = arith.constant 0.00999999977 : f32
    %35 = vector.broadcast %cst_27 : f32 to vector<64x128xf32>
    %36 = arith.mulf %35, %32 : vector<64x128xf32>
    %37 = arith.select %34, %32, %36 : vector<64x128xi1>, vector<64x128xf32>
    %c1_i32 = arith.constant 1 : i32
    %c0_28 = arith.constant 0 : index
    %c0_29 = arith.constant 0 : index
    %c0_30 = arith.constant 0 : index
    %38 = vector.load %arg1[%c0_28, %c0_29, %c0_30] : memref<3x64x64xf32, #tpu.memory_space<vmem>>, vector<1x64x64xf32>
    %39 = vector.shape_cast %38 : vector<1x64x64xf32> to vector<64x64xf32>
    %cst_31 = arith.constant dense<0.000000e+00> : vector<64x128xf32>
    %40 = tpu.matmul %39, %37, %cst_31 {dimension_numbers = #tpu.dot_dimension_numbers<[1], [0], [0], [1], [0, 0, 1, 1], [], []>} : vector<64x64xf32>, vector<64x128xf32>, vector<64x128xf32> -> vector<64x128xf32>
    %c0_32 = arith.constant 0 : index
    %c0_33 = arith.constant 0 : index
    %c0_34 = arith.constant 0 : index
    %41 = vector.load %arg2[%c0_32, %c0_33, %c0_34] : memref<3x64x128xf32, #tpu.memory_space<vmem>>, vector<1x64x128xf32>
    %42 = vector.shape_cast %41 : vector<1x64x128xf32> to vector<64x128xf32>
    %43 = arith.addf %40, %42 : vector<64x128xf32>
    %44 = arith.maximumf %0, %43 : vector<64x128xf32>
    %c1_35 = arith.constant 1 : index
    %c0_36 = arith.constant 0 : index
    %c0_37 = arith.constant 0 : index
    %45 = vector.load %arg1[%c1_35, %c0_36, %c0_37] : memref<3x64x64xf32, #tpu.memory_space<vmem>>, vector<1x64x64xf32>
    %46 = vector.shape_cast %45 : vector<1x64x64xf32> to vector<64x64xf32>
    %cst_38 = arith.constant dense<0.000000e+00> : vector<64x128xf32>
    %47 = tpu.matmul %46, %37, %cst_38 {dimension_numbers = #tpu.dot_dimension_numbers<[1], [0], [0], [1], [0, 0, 1, 1], [], []>} : vector<64x64xf32>, vector<64x128xf32>, vector<64x128xf32> -> vector<64x128xf32>
    %c1_39 = arith.constant 1 : index
    %c0_40 = arith.constant 0 : index
    %c0_41 = arith.constant 0 : index
    %48 = vector.load %arg2[%c1_39, %c0_40, %c0_41] : memref<3x64x128xf32, #tpu.memory_space<vmem>>, vector<1x64x128xf32>
    %49 = vector.shape_cast %48 : vector<1x64x128xf32> to vector<64x128xf32>
    %50 = arith.addf %47, %49 : vector<64x128xf32>
    %51 = arith.maximumf %44, %50 : vector<64x128xf32>
    %c2_42 = arith.constant 2 : index
    %c0_43 = arith.constant 0 : index
    %c0_44 = arith.constant 0 : index
    %52 = vector.load %arg1[%c2_42, %c0_43, %c0_44] : memref<3x64x64xf32, #tpu.memory_space<vmem>>, vector<1x64x64xf32>
    %53 = vector.shape_cast %52 : vector<1x64x64xf32> to vector<64x64xf32>
    %cst_45 = arith.constant dense<0.000000e+00> : vector<64x128xf32>
    %54 = tpu.matmul %53, %37, %cst_45 {dimension_numbers = #tpu.dot_dimension_numbers<[1], [0], [0], [1], [0, 0, 1, 1], [], []>} : vector<64x64xf32>, vector<64x128xf32>, vector<64x128xf32> -> vector<64x128xf32>
    %c2_46 = arith.constant 2 : index
    %c0_47 = arith.constant 0 : index
    %c0_48 = arith.constant 0 : index
    %55 = vector.load %arg2[%c2_46, %c0_47, %c0_48] : memref<3x64x128xf32, #tpu.memory_space<vmem>>, vector<1x64x128xf32>
    %56 = vector.shape_cast %55 : vector<1x64x128xf32> to vector<64x128xf32>
    %57 = arith.addf %54, %56 : vector<64x128xf32>
    %58 = arith.maximumf %51, %57 : vector<64x128xf32>
    %59 = arith.addf %37, %58 : vector<64x128xf32>
    %60 = arith.index_cast %c1_i32 : i32 to index
    %c0_49 = arith.constant 0 : index
    %c0_50 = arith.constant 0 : index
    %61 = vector.load %arg4[%60, %c0_49, %c0_50] : memref<20x128x128xf32, #tpu.memory_space<vmem>>, vector<1x128x128xf32>
    %62 = vector.shape_cast %61 : vector<1x128x128xf32> to vector<128x128xf32>
    %cst_51 = arith.constant dense<0.000000e+00> : vector<64x128xf32>
    %63 = tpu.matmul %59, %62, %cst_51 {dimension_numbers = #tpu.dot_dimension_numbers<[1], [0], [0], [1], [0, 0, 1, 1], [], []>} : vector<64x128xf32>, vector<128x128xf32>, vector<64x128xf32> -> vector<64x128xf32>
    %64 = arith.index_cast %c1_i32 : i32 to index
    %c0_52 = arith.constant 0 : index
    %c0_53 = arith.constant 0 : index
    %65 = vector.load %arg5[%64, %c0_52, %c0_53] : memref<20x1x128xf32, #tpu.memory_space<vmem>>, vector<1x1x128xf32>
    %66 = vector.shape_cast %65 : vector<1x1x128xf32> to vector<1x128xf32>
    %67 = vector.broadcast %66 : vector<1x128xf32> to vector<64x128xf32>
    %68 = arith.addf %63, %67 : vector<64x128xf32>
    %cst_54 = arith.constant 0.000000e+00 : f32
    %69 = vector.broadcast %cst_54 : f32 to vector<64x128xf32>
    %70 = arith.cmpf oge, %68, %69 : vector<64x128xf32>
    %cst_55 = arith.constant 0.00999999977 : f32
    %71 = vector.broadcast %cst_55 : f32 to vector<64x128xf32>
    %72 = arith.mulf %71, %68 : vector<64x128xf32>
    %73 = arith.select %70, %68, %72 : vector<64x128xi1>, vector<64x128xf32>
    %c2_i32 = arith.constant 2 : i32
    %c0_56 = arith.constant 0 : index
    %c0_57 = arith.constant 0 : index
    %c0_58 = arith.constant 0 : index
    %74 = vector.load %arg1[%c0_56, %c0_57, %c0_58] : memref<3x64x64xf32, #tpu.memory_space<vmem>>, vector<1x64x64xf32>
    %75 = vector.shape_cast %74 : vector<1x64x64xf32> to vector<64x64xf32>
    %cst_59 = arith.constant dense<0.000000e+00> : vector<64x128xf32>
    %76 = tpu.matmul %75, %73, %cst_59 {dimension_numbers = #tpu.dot_dimension_numbers<[1], [0], [0], [1], [0, 0, 1, 1], [], []>} : vector<64x64xf32>, vector<64x128xf32>, vector<64x128xf32> -> vector<64x128xf32>
    %c0_60 = arith.constant 0 : index
    %c0_61 = arith.constant 0 : index
    %c0_62 = arith.constant 0 : index
    %77 = vector.load %arg2[%c0_60, %c0_61, %c0_62] : memref<3x64x128xf32, #tpu.memory_space<vmem>>, vector<1x64x128xf32>
    %78 = vector.shape_cast %77 : vector<1x64x128xf32> to vector<64x128xf32>
    %79 = arith.addf %76, %78 : vector<64x128xf32>
    %80 = arith.maximumf %0, %79 : vector<64x128xf32>
    %c1_63 = arith.constant 1 : index
    %c0_64 = arith.constant 0 : index
    %c0_65 = arith.constant 0 : index
    %81 = vector.load %arg1[%c1_63, %c0_64, %c0_65] : memref<3x64x64xf32, #tpu.memory_space<vmem>>, vector<1x64x64xf32>
    %82 = vector.shape_cast %81 : vector<1x64x64xf32> to vector<64x64xf32>
    %cst_66 = arith.constant dense<0.000000e+00> : vector<64x128xf32>
    %83 = tpu.matmul %82, %73, %cst_66 {dimension_numbers = #tpu.dot_dimension_numbers<[1], [0], [0], [1], [0, 0, 1, 1], [], []>} : vector<64x64xf32>, vector<64x128xf32>, vector<64x128xf32> -> vector<64x128xf32>
    %c1_67 = arith.constant 1 : index
    %c0_68 = arith.constant 0 : index
    %c0_69 = arith.constant 0 : index
    %84 = vector.load %arg2[%c1_67, %c0_68, %c0_69] : memref<3x64x128xf32, #tpu.memory_space<vmem>>, vector<1x64x128xf32>
    %85 = vector.shape_cast %84 : vector<1x64x128xf32> to vector<64x128xf32>
    %86 = arith.addf %83, %85 : vector<64x128xf32>
    %87 = arith.maximumf %80, %86 : vector<64x128xf32>
    %c2_70 = arith.constant 2 : index
    %c0_71 = arith.constant 0 : index
    %c0_72 = arith.constant 0 : index
    %88 = vector.load %arg1[%c2_70, %c0_71, %c0_72] : memref<3x64x64xf32, #tpu.memory_space<vmem>>, vector<1x64x64xf32>
    %89 = vector.shape_cast %88 : vector<1x64x64xf32> to vector<64x64xf32>
    %cst_73 = arith.constant dense<0.000000e+00> : vector<64x128xf32>
    %90 = tpu.matmul %89, %73, %cst_73 {dimension_numbers = #tpu.dot_dimension_numbers<[1], [0], [0], [1], [0, 0, 1, 1], [], []>} : vector<64x64xf32>, vector<64x128xf32>, vector<64x128xf32> -> vector<64x128xf32>
    %c2_74 = arith.constant 2 : index
    %c0_75 = arith.constant 0 : index
    %c0_76 = arith.constant 0 : index
    %91 = vector.load %arg2[%c2_74, %c0_75, %c0_76] : memref<3x64x128xf32, #tpu.memory_space<vmem>>, vector<1x64x128xf32>
    %92 = vector.shape_cast %91 : vector<1x64x128xf32> to vector<64x128xf32>
    %93 = arith.addf %90, %92 : vector<64x128xf32>
    %94 = arith.maximumf %87, %93 : vector<64x128xf32>
    %95 = arith.addf %73, %94 : vector<64x128xf32>
    %96 = arith.index_cast %c2_i32 : i32 to index
    %c0_77 = arith.constant 0 : index
    %c0_78 = arith.constant 0 : index
    %97 = vector.load %arg4[%96, %c0_77, %c0_78] : memref<20x128x128xf32, #tpu.memory_space<vmem>>, vector<1x128x128xf32>
    %98 = vector.shape_cast %97 : vector<1x128x128xf32> to vector<128x128xf32>
    %cst_79 = arith.constant dense<0.000000e+00> : vector<64x128xf32>
    %99 = tpu.matmul %95, %98, %cst_79 {dimension_numbers = #tpu.dot_dimension_numbers<[1], [0], [0], [1], [0, 0, 1, 1], [], []>} : vector<64x128xf32>, vector<128x128xf32>, vector<64x128xf32> -> vector<64x128xf32>
    %100 = arith.index_cast %c2_i32 : i32 to index
    %c0_80 = arith.constant 0 : index
    %c0_81 = arith.constant 0 : index
    %101 = vector.load %arg5[%100, %c0_80, %c0_81] : memref<20x1x128xf32, #tpu.memory_space<vmem>>, vector<1x1x128xf32>
    %102 = vector.shape_cast %101 : vector<1x1x128xf32> to vector<1x128xf32>
    %103 = vector.broadcast %102 : vector<1x128xf32> to vector<64x128xf32>
    %104 = arith.addf %99, %103 : vector<64x128xf32>
    %cst_82 = arith.constant 0.000000e+00 : f32
    %105 = vector.broadcast %cst_82 : f32 to vector<64x128xf32>
    %106 = arith.cmpf oge, %104, %105 : vector<64x128xf32>
    %cst_83 = arith.constant 0.00999999977 : f32
    %107 = vector.broadcast %cst_83 : f32 to vector<64x128xf32>
    %108 = arith.mulf %107, %104 : vector<64x128xf32>
    %109 = arith.select %106, %104, %108 : vector<64x128xi1>, vector<64x128xf32>
    %c3_i32 = arith.constant 3 : i32
    %c0_84 = arith.constant 0 : index
    %c0_85 = arith.constant 0 : index
    %c0_86 = arith.constant 0 : index
    %110 = vector.load %arg1[%c0_84, %c0_85, %c0_86] : memref<3x64x64xf32, #tpu.memory_space<vmem>>, vector<1x64x64xf32>
    %111 = vector.shape_cast %110 : vector<1x64x64xf32> to vector<64x64xf32>
    %cst_87 = arith.constant dense<0.000000e+00> : vector<64x128xf32>
    %112 = tpu.matmul %111, %109, %cst_87 {dimension_numbers = #tpu.dot_dimension_numbers<[1], [0], [0], [1], [0, 0, 1, 1], [], []>} : vector<64x64xf32>, vector<64x128xf32>, vector<64x128xf32> -> vector<64x128xf32>
    %c0_88 = arith.constant 0 : index
    %c0_89 = arith.constant 0 : index
    %c0_90 = arith.constant 0 : index
    %113 = vector.load %arg2[%c0_88, %c0_89, %c0_90] : memref<3x64x128xf32, #tpu.memory_space<vmem>>, vector<1x64x128xf32>
    %114 = vector.shape_cast %113 : vector<1x64x128xf32> to vector<64x128xf32>
    %115 = arith.addf %112, %114 : vector<64x128xf32>
    %116 = arith.maximumf %0, %115 : vector<64x128xf32>
    %c1_91 = arith.constant 1 : index
    %c0_92 = arith.constant 0 : index
    %c0_93 = arith.constant 0 : index
    %117 = vector.load %arg1[%c1_91, %c0_92, %c0_93] : memref<3x64x64xf32, #tpu.memory_space<vmem>>, vector<1x64x64xf32>
    %118 = vector.shape_cast %117 : vector<1x64x64xf32> to vector<64x64xf32>
    %cst_94 = arith.constant dense<0.000000e+00> : vector<64x128xf32>
    %119 = tpu.matmul %118, %109, %cst_94 {dimension_numbers = #tpu.dot_dimension_numbers<[1], [0], [0], [1], [0, 0, 1, 1], [], []>} : vector<64x64xf32>, vector<64x128xf32>, vector<64x128xf32> -> vector<64x128xf32>
    %c1_95 = arith.constant 1 : index
    %c0_96 = arith.constant 0 : index
    %c0_97 = arith.constant 0 : index
    %120 = vector.load %arg2[%c1_95, %c0_96, %c0_97] : memref<3x64x128xf32, #tpu.memory_space<vmem>>, vector<1x64x128xf32>
    %121 = vector.shape_cast %120 : vector<1x64x128xf32> to vector<64x128xf32>
    %122 = arith.addf %119, %121 : vector<64x128xf32>
    %123 = arith.maximumf %116, %122 : vector<64x128xf32>
    %c2_98 = arith.constant 2 : index
    %c0_99 = arith.constant 0 : index
    %c0_100 = arith.constant 0 : index
    %124 = vector.load %arg1[%c2_98, %c0_99, %c0_100] : memref<3x64x64xf32, #tpu.memory_space<vmem>>, vector<1x64x64xf32>
    %125 = vector.shape_cast %124 : vector<1x64x64xf32> to vector<64x64xf32>
    %cst_101 = arith.constant dense<0.000000e+00> : vector<64x128xf32>
    %126 = tpu.matmul %125, %109, %cst_101 {dimension_numbers = #tpu.dot_dimension_numbers<[1], [0], [0], [1], [0, 0, 1, 1], [], []>} : vector<64x64xf32>, vector<64x128xf32>, vector<64x128xf32> -> vector<64x128xf32>
    %c2_102 = arith.constant 2 : index
    %c0_103 = arith.constant 0 : index
    %c0_104 = arith.constant 0 : index
    %127 = vector.load %arg2[%c2_102, %c0_103, %c0_104] : memref<3x64x128xf32, #tpu.memory_space<vmem>>, vector<1x64x128xf32>
    %128 = vector.shape_cast %127 : vector<1x64x128xf32> to vector<64x128xf32>
    %129 = arith.addf %126, %128 : vector<64x128xf32>
    %130 = arith.maximumf %123, %129 : vector<64x128xf32>
    %131 = arith.addf %109, %130 : vector<64x128xf32>
    %132 = arith.index_cast %c3_i32 : i32 to index
    %c0_105 = arith.constant 0 : index
    %c0_106 = arith.constant 0 : index
    %133 = vector.load %arg4[%132, %c0_105, %c0_106] : memref<20x128x128xf32, #tpu.memory_space<vmem>>, vector<1x128x128xf32>
    %134 = vector.shape_cast %133 : vector<1x128x128xf32> to vector<128x128xf32>
    %cst_107 = arith.constant dense<0.000000e+00> : vector<64x128xf32>
    %135 = tpu.matmul %131, %134, %cst_107 {dimension_numbers = #tpu.dot_dimension_numbers<[1], [0], [0], [1], [0, 0, 1, 1], [], []>} : vector<64x128xf32>, vector<128x128xf32>, vector<64x128xf32> -> vector<64x128xf32>
    %136 = arith.index_cast %c3_i32 : i32 to index
    %c0_108 = arith.constant 0 : index
    %c0_109 = arith.constant 0 : index
    %137 = vector.load %arg5[%136, %c0_108, %c0_109] : memref<20x1x128xf32, #tpu.memory_space<vmem>>, vector<1x1x128xf32>
    %138 = vector.shape_cast %137 : vector<1x1x128xf32> to vector<1x128xf32>
    %139 = vector.broadcast %138 : vector<1x128xf32> to vector<64x128xf32>
    %140 = arith.addf %135, %139 : vector<64x128xf32>
    %cst_110 = arith.constant 0.000000e+00 : f32
    %141 = vector.broadcast %cst_110 : f32 to vector<64x128xf32>
    %142 = arith.cmpf oge, %140, %141 : vector<64x128xf32>
    %cst_111 = arith.constant 0.00999999977 : f32
    %143 = vector.broadcast %cst_111 : f32 to vector<64x128xf32>
    %144 = arith.mulf %143, %140 : vector<64x128xf32>
    %145 = arith.select %142, %140, %144 : vector<64x128xi1>, vector<64x128xf32>
    %c4_i32 = arith.constant 4 : i32
    %c0_112 = arith.constant 0 : index
    %c0_113 = arith.constant 0 : index
    %c0_114 = arith.constant 0 : index
    %146 = vector.load %arg1[%c0_112, %c0_113, %c0_114] : memref<3x64x64xf32, #tpu.memory_space<vmem>>, vector<1x64x64xf32>
    %147 = vector.shape_cast %146 : vector<1x64x64xf32> to vector<64x64xf32>
    %cst_115 = arith.constant dense<0.000000e+00> : vector<64x128xf32>
    %148 = tpu.matmul %147, %145, %cst_115 {dimension_numbers = #tpu.dot_dimension_numbers<[1], [0], [0], [1], [0, 0, 1, 1], [], []>} : vector<64x64xf32>, vector<64x128xf32>, vector<64x128xf32> -> vector<64x128xf32>
    %c0_116 = arith.constant 0 : index
    %c0_117 = arith.constant 0 : index
    %c0_118 = arith.constant 0 : index
    %149 = vector.load %arg2[%c0_116, %c0_117, %c0_118] : memref<3x64x128xf32, #tpu.memory_space<vmem>>, vector<1x64x128xf32>
    %150 = vector.shape_cast %149 : vector<1x64x128xf32> to vector<64x128xf32>
    %151 = arith.addf %148, %150 : vector<64x128xf32>
    %152 = arith.maximumf %0, %151 : vector<64x128xf32>
    %c1_119 = arith.constant 1 : index
    %c0_120 = arith.constant 0 : index
    %c0_121 = arith.constant 0 : index
    %153 = vector.load %arg1[%c1_119, %c0_120, %c0_121] : memref<3x64x64xf32, #tpu.memory_space<vmem>>, vector<1x64x64xf32>
    %154 = vector.shape_cast %153 : vector<1x64x64xf32> to vector<64x64xf32>
    %cst_122 = arith.constant dense<0.000000e+00> : vector<64x128xf32>
    %155 = tpu.matmul %154, %145, %cst_122 {dimension_numbers = #tpu.dot_dimension_numbers<[1], [0], [0], [1], [0, 0, 1, 1], [], []>} : vector<64x64xf32>, vector<64x128xf32>, vector<64x128xf32> -> vector<64x128xf32>
    %c1_123 = arith.constant 1 : index
    %c0_124 = arith.constant 0 : index
    %c0_125 = arith.constant 0 : index
    %156 = vector.load %arg2[%c1_123, %c0_124, %c0_125] : memref<3x64x128xf32, #tpu.memory_space<vmem>>, vector<1x64x128xf32>
    %157 = vector.shape_cast %156 : vector<1x64x128xf32> to vector<64x128xf32>
    %158 = arith.addf %155, %157 : vector<64x128xf32>
    %159 = arith.maximumf %152, %158 : vector<64x128xf32>
    %c2_126 = arith.constant 2 : index
    %c0_127 = arith.constant 0 : index
    %c0_128 = arith.constant 0 : index
    %160 = vector.load %arg1[%c2_126, %c0_127, %c0_128] : memref<3x64x64xf32, #tpu.memory_space<vmem>>, vector<1x64x64xf32>
    %161 = vector.shape_cast %160 : vector<1x64x64xf32> to vector<64x64xf32>
    %cst_129 = arith.constant dense<0.000000e+00> : vector<64x128xf32>
    %162 = tpu.matmul %161, %145, %cst_129 {dimension_numbers = #tpu.dot_dimension_numbers<[1], [0], [0], [1], [0, 0, 1, 1], [], []>} : vector<64x64xf32>, vector<64x128xf32>, vector<64x128xf32> -> vector<64x128xf32>
    %c2_130 = arith.constant 2 : index
    %c0_131 = arith.constant 0 : index
    %c0_132 = arith.constant 0 : index
    %163 = vector.load %arg2[%c2_130, %c0_131, %c0_132] : memref<3x64x128xf32, #tpu.memory_space<vmem>>, vector<1x64x128xf32>
    %164 = vector.shape_cast %163 : vector<1x64x128xf32> to vector<64x128xf32>
    %165 = arith.addf %162, %164 : vector<64x128xf32>
    %166 = arith.maximumf %159, %165 : vector<64x128xf32>
    %167 = arith.addf %145, %166 : vector<64x128xf32>
    %168 = arith.index_cast %c4_i32 : i32 to index
    %c0_133 = arith.constant 0 : index
    %c0_134 = arith.constant 0 : index
    %169 = vector.load %arg4[%168, %c0_133, %c0_134] : memref<20x128x128xf32, #tpu.memory_space<vmem>>, vector<1x128x128xf32>
    %170 = vector.shape_cast %169 : vector<1x128x128xf32> to vector<128x128xf32>
    %cst_135 = arith.constant dense<0.000000e+00> : vector<64x128xf32>
    %171 = tpu.matmul %167, %170, %cst_135 {dimension_numbers = #tpu.dot_dimension_numbers<[1], [0], [0], [1], [0, 0, 1, 1], [], []>} : vector<64x128xf32>, vector<128x128xf32>, vector<64x128xf32> -> vector<64x128xf32>
    %172 = arith.index_cast %c4_i32 : i32 to index
    %c0_136 = arith.constant 0 : index
    %c0_137 = arith.constant 0 : index
    %173 = vector.load %arg5[%172, %c0_136, %c0_137] : memref<20x1x128xf32, #tpu.memory_space<vmem>>, vector<1x1x128xf32>
    %174 = vector.shape_cast %173 : vector<1x1x128xf32> to vector<1x128xf32>
    %175 = vector.broadcast %174 : vector<1x128xf32> to vector<64x128xf32>
    %176 = arith.addf %171, %175 : vector<64x128xf32>
    %cst_138 = arith.constant 0.000000e+00 : f32
    %177 = vector.broadcast %cst_138 : f32 to vector<64x128xf32>
    %178 = arith.cmpf oge, %176, %177 : vector<64x128xf32>
    %cst_139 = arith.constant 0.00999999977 : f32
    %179 = vector.broadcast %cst_139 : f32 to vector<64x128xf32>
    %180 = arith.mulf %179, %176 : vector<64x128xf32>
    %181 = arith.select %178, %176, %180 : vector<64x128xi1>, vector<64x128xf32>
    %c5_i32 = arith.constant 5 : i32
    %c0_140 = arith.constant 0 : index
    %c0_141 = arith.constant 0 : index
    %c0_142 = arith.constant 0 : index
    %182 = vector.load %arg1[%c0_140, %c0_141, %c0_142] : memref<3x64x64xf32, #tpu.memory_space<vmem>>, vector<1x64x64xf32>
    %183 = vector.shape_cast %182 : vector<1x64x64xf32> to vector<64x64xf32>
    %cst_143 = arith.constant dense<0.000000e+00> : vector<64x128xf32>
    %184 = tpu.matmul %183, %181, %cst_143 {dimension_numbers = #tpu.dot_dimension_numbers<[1], [0], [0], [1], [0, 0, 1, 1], [], []>} : vector<64x64xf32>, vector<64x128xf32>, vector<64x128xf32> -> vector<64x128xf32>
    %c0_144 = arith.constant 0 : index
    %c0_145 = arith.constant 0 : index
    %c0_146 = arith.constant 0 : index
    %185 = vector.load %arg2[%c0_144, %c0_145, %c0_146] : memref<3x64x128xf32, #tpu.memory_space<vmem>>, vector<1x64x128xf32>
    %186 = vector.shape_cast %185 : vector<1x64x128xf32> to vector<64x128xf32>
    %187 = arith.addf %184, %186 : vector<64x128xf32>
    %188 = arith.maximumf %0, %187 : vector<64x128xf32>
    %c1_147 = arith.constant 1 : index
    %c0_148 = arith.constant 0 : index
    %c0_149 = arith.constant 0 : index
    %189 = vector.load %arg1[%c1_147, %c0_148, %c0_149] : memref<3x64x64xf32, #tpu.memory_space<vmem>>, vector<1x64x64xf32>
    %190 = vector.shape_cast %189 : vector<1x64x64xf32> to vector<64x64xf32>
    %cst_150 = arith.constant dense<0.000000e+00> : vector<64x128xf32>
    %191 = tpu.matmul %190, %181, %cst_150 {dimension_numbers = #tpu.dot_dimension_numbers<[1], [0], [0], [1], [0, 0, 1, 1], [], []>} : vector<64x64xf32>, vector<64x128xf32>, vector<64x128xf32> -> vector<64x128xf32>
    %c1_151 = arith.constant 1 : index
    %c0_152 = arith.constant 0 : index
    %c0_153 = arith.constant 0 : index
    %192 = vector.load %arg2[%c1_151, %c0_152, %c0_153] : memref<3x64x128xf32, #tpu.memory_space<vmem>>, vector<1x64x128xf32>
    %193 = vector.shape_cast %192 : vector<1x64x128xf32> to vector<64x128xf32>
    %194 = arith.addf %191, %193 : vector<64x128xf32>
    %195 = arith.maximumf %188, %194 : vector<64x128xf32>
    %c2_154 = arith.constant 2 : index
    %c0_155 = arith.constant 0 : index
    %c0_156 = arith.constant 0 : index
    %196 = vector.load %arg1[%c2_154, %c0_155, %c0_156] : memref<3x64x64xf32, #tpu.memory_space<vmem>>, vector<1x64x64xf32>
    %197 = vector.shape_cast %196 : vector<1x64x64xf32> to vector<64x64xf32>
    %cst_157 = arith.constant dense<0.000000e+00> : vector<64x128xf32>
    %198 = tpu.matmul %197, %181, %cst_157 {dimension_numbers = #tpu.dot_dimension_numbers<[1], [0], [0], [1], [0, 0, 1, 1], [], []>} : vector<64x64xf32>, vector<64x128xf32>, vector<64x128xf32> -> vector<64x128xf32>
    %c2_158 = arith.constant 2 : index
    %c0_159 = arith.constant 0 : index
    %c0_160 = arith.constant 0 : index
    %199 = vector.load %arg2[%c2_158, %c0_159, %c0_160] : memref<3x64x128xf32, #tpu.memory_space<vmem>>, vector<1x64x128xf32>
    %200 = vector.shape_cast %199 : vector<1x64x128xf32> to vector<64x128xf32>
    %201 = arith.addf %198, %200 : vector<64x128xf32>
    %202 = arith.maximumf %195, %201 : vector<64x128xf32>
    %203 = arith.addf %181, %202 : vector<64x128xf32>
    %204 = arith.index_cast %c5_i32 : i32 to index
    %c0_161 = arith.constant 0 : index
    %c0_162 = arith.constant 0 : index
    %205 = vector.load %arg4[%204, %c0_161, %c0_162] : memref<20x128x128xf32, #tpu.memory_space<vmem>>, vector<1x128x128xf32>
    %206 = vector.shape_cast %205 : vector<1x128x128xf32> to vector<128x128xf32>
    %cst_163 = arith.constant dense<0.000000e+00> : vector<64x128xf32>
    %207 = tpu.matmul %203, %206, %cst_163 {dimension_numbers = #tpu.dot_dimension_numbers<[1], [0], [0], [1], [0, 0, 1, 1], [], []>} : vector<64x128xf32>, vector<128x128xf32>, vector<64x128xf32> -> vector<64x128xf32>
    %208 = arith.index_cast %c5_i32 : i32 to index
    %c0_164 = arith.constant 0 : index
    %c0_165 = arith.constant 0 : index
    %209 = vector.load %arg5[%208, %c0_164, %c0_165] : memref<20x1x128xf32, #tpu.memory_space<vmem>>, vector<1x1x128xf32>
    %210 = vector.shape_cast %209 : vector<1x1x128xf32> to vector<1x128xf32>
    %211 = vector.broadcast %210 : vector<1x128xf32> to vector<64x128xf32>
    %212 = arith.addf %207, %211 : vector<64x128xf32>
    %cst_166 = arith.constant 0.000000e+00 : f32
    %213 = vector.broadcast %cst_166 : f32 to vector<64x128xf32>
    %214 = arith.cmpf oge, %212, %213 : vector<64x128xf32>
    %cst_167 = arith.constant 0.00999999977 : f32
    %215 = vector.broadcast %cst_167 : f32 to vector<64x128xf32>
    %216 = arith.mulf %215, %212 : vector<64x128xf32>
    %217 = arith.select %214, %212, %216 : vector<64x128xi1>, vector<64x128xf32>
    %c6_i32 = arith.constant 6 : i32
    %c0_168 = arith.constant 0 : index
    %c0_169 = arith.constant 0 : index
    %c0_170 = arith.constant 0 : index
    %218 = vector.load %arg1[%c0_168, %c0_169, %c0_170] : memref<3x64x64xf32, #tpu.memory_space<vmem>>, vector<1x64x64xf32>
    %219 = vector.shape_cast %218 : vector<1x64x64xf32> to vector<64x64xf32>
    %cst_171 = arith.constant dense<0.000000e+00> : vector<64x128xf32>
    %220 = tpu.matmul %219, %217, %cst_171 {dimension_numbers = #tpu.dot_dimension_numbers<[1], [0], [0], [1], [0, 0, 1, 1], [], []>} : vector<64x64xf32>, vector<64x128xf32>, vector<64x128xf32> -> vector<64x128xf32>
    %c0_172 = arith.constant 0 : index
    %c0_173 = arith.constant 0 : index
    %c0_174 = arith.constant 0 : index
    %221 = vector.load %arg2[%c0_172, %c0_173, %c0_174] : memref<3x64x128xf32, #tpu.memory_space<vmem>>, vector<1x64x128xf32>
    %222 = vector.shape_cast %221 : vector<1x64x128xf32> to vector<64x128xf32>
    %223 = arith.addf %220, %222 : vector<64x128xf32>
    %224 = arith.maximumf %0, %223 : vector<64x128xf32>
    %c1_175 = arith.constant 1 : index
    %c0_176 = arith.constant 0 : index
    %c0_177 = arith.constant 0 : index
    %225 = vector.load %arg1[%c1_175, %c0_176, %c0_177] : memref<3x64x64xf32, #tpu.memory_space<vmem>>, vector<1x64x64xf32>
    %226 = vector.shape_cast %225 : vector<1x64x64xf32> to vector<64x64xf32>
    %cst_178 = arith.constant dense<0.000000e+00> : vector<64x128xf32>
    %227 = tpu.matmul %226, %217, %cst_178 {dimension_numbers = #tpu.dot_dimension_numbers<[1], [0], [0], [1], [0, 0, 1, 1], [], []>} : vector<64x64xf32>, vector<64x128xf32>, vector<64x128xf32> -> vector<64x128xf32>
    %c1_179 = arith.constant 1 : index
    %c0_180 = arith.constant 0 : index
    %c0_181 = arith.constant 0 : index
    %228 = vector.load %arg2[%c1_179, %c0_180, %c0_181] : memref<3x64x128xf32, #tpu.memory_space<vmem>>, vector<1x64x128xf32>
    %229 = vector.shape_cast %228 : vector<1x64x128xf32> to vector<64x128xf32>
    %230 = arith.addf %227, %229 : vector<64x128xf32>
    %231 = arith.maximumf %224, %230 : vector<64x128xf32>
    %c2_182 = arith.constant 2 : index
    %c0_183 = arith.constant 0 : index
    %c0_184 = arith.constant 0 : index
    %232 = vector.load %arg1[%c2_182, %c0_183, %c0_184] : memref<3x64x64xf32, #tpu.memory_space<vmem>>, vector<1x64x64xf32>
    %233 = vector.shape_cast %232 : vector<1x64x64xf32> to vector<64x64xf32>
    %cst_185 = arith.constant dense<0.000000e+00> : vector<64x128xf32>
    %234 = tpu.matmul %233, %217, %cst_185 {dimension_numbers = #tpu.dot_dimension_numbers<[1], [0], [0], [1], [0, 0, 1, 1], [], []>} : vector<64x64xf32>, vector<64x128xf32>, vector<64x128xf32> -> vector<64x128xf32>
    %c2_186 = arith.constant 2 : index
    %c0_187 = arith.constant 0 : index
    %c0_188 = arith.constant 0 : index
    %235 = vector.load %arg2[%c2_186, %c0_187, %c0_188] : memref<3x64x128xf32, #tpu.memory_space<vmem>>, vector<1x64x128xf32>
    %236 = vector.shape_cast %235 : vector<1x64x128xf32> to vector<64x128xf32>
    %237 = arith.addf %234, %236 : vector<64x128xf32>
    %238 = arith.maximumf %231, %237 : vector<64x128xf32>
    %239 = arith.addf %217, %238 : vector<64x128xf32>
    %240 = arith.index_cast %c6_i32 : i32 to index
    %c0_189 = arith.constant 0 : index
    %c0_190 = arith.constant 0 : index
    %241 = vector.load %arg4[%240, %c0_189, %c0_190] : memref<20x128x128xf32, #tpu.memory_space<vmem>>, vector<1x128x128xf32>
    %242 = vector.shape_cast %241 : vector<1x128x128xf32> to vector<128x128xf32>
    %cst_191 = arith.constant dense<0.000000e+00> : vector<64x128xf32>
    %243 = tpu.matmul %239, %242, %cst_191 {dimension_numbers = #tpu.dot_dimension_numbers<[1], [0], [0], [1], [0, 0, 1, 1], [], []>} : vector<64x128xf32>, vector<128x128xf32>, vector<64x128xf32> -> vector<64x128xf32>
    %244 = arith.index_cast %c6_i32 : i32 to index
    %c0_192 = arith.constant 0 : index
    %c0_193 = arith.constant 0 : index
    %245 = vector.load %arg5[%244, %c0_192, %c0_193] : memref<20x1x128xf32, #tpu.memory_space<vmem>>, vector<1x1x128xf32>
    %246 = vector.shape_cast %245 : vector<1x1x128xf32> to vector<1x128xf32>
    %247 = vector.broadcast %246 : vector<1x128xf32> to vector<64x128xf32>
    %248 = arith.addf %243, %247 : vector<64x128xf32>
    %cst_194 = arith.constant 0.000000e+00 : f32
    %249 = vector.broadcast %cst_194 : f32 to vector<64x128xf32>
    %250 = arith.cmpf oge, %248, %249 : vector<64x128xf32>
    %cst_195 = arith.constant 0.00999999977 : f32
    %251 = vector.broadcast %cst_195 : f32 to vector<64x128xf32>
    %252 = arith.mulf %251, %248 : vector<64x128xf32>
    %253 = arith.select %250, %248, %252 : vector<64x128xi1>, vector<64x128xf32>
    %c7_i32 = arith.constant 7 : i32
    %c0_196 = arith.constant 0 : index
    %c0_197 = arith.constant 0 : index
    %c0_198 = arith.constant 0 : index
    %254 = vector.load %arg1[%c0_196, %c0_197, %c0_198] : memref<3x64x64xf32, #tpu.memory_space<vmem>>, vector<1x64x64xf32>
    %255 = vector.shape_cast %254 : vector<1x64x64xf32> to vector<64x64xf32>
    %cst_199 = arith.constant dense<0.000000e+00> : vector<64x128xf32>
    %256 = tpu.matmul %255, %253, %cst_199 {dimension_numbers = #tpu.dot_dimension_numbers<[1], [0], [0], [1], [0, 0, 1, 1], [], []>} : vector<64x64xf32>, vector<64x128xf32>, vector<64x128xf32> -> vector<64x128xf32>
    %c0_200 = arith.constant 0 : index
    %c0_201 = arith.constant 0 : index
    %c0_202 = arith.constant 0 : index
    %257 = vector.load %arg2[%c0_200, %c0_201, %c0_202] : memref<3x64x128xf32, #tpu.memory_space<vmem>>, vector<1x64x128xf32>
    %258 = vector.shape_cast %257 : vector<1x64x128xf32> to vector<64x128xf32>
    %259 = arith.addf %256, %258 : vector<64x128xf32>
    %260 = arith.maximumf %0, %259 : vector<64x128xf32>
    %c1_203 = arith.constant 1 : index
    %c0_204 = arith.constant 0 : index
    %c0_205 = arith.constant 0 : index
    %261 = vector.load %arg1[%c1_203, %c0_204, %c0_205] : memref<3x64x64xf32, #tpu.memory_space<vmem>>, vector<1x64x64xf32>
    %262 = vector.shape_cast %261 : vector<1x64x64xf32> to vector<64x64xf32>
    %cst_206 = arith.constant dense<0.000000e+00> : vector<64x128xf32>
    %263 = tpu.matmul %262, %253, %cst_206 {dimension_numbers = #tpu.dot_dimension_numbers<[1], [0], [0], [1], [0, 0, 1, 1], [], []>} : vector<64x64xf32>, vector<64x128xf32>, vector<64x128xf32> -> vector<64x128xf32>
    %c1_207 = arith.constant 1 : index
    %c0_208 = arith.constant 0 : index
    %c0_209 = arith.constant 0 : index
    %264 = vector.load %arg2[%c1_207, %c0_208, %c0_209] : memref<3x64x128xf32, #tpu.memory_space<vmem>>, vector<1x64x128xf32>
    %265 = vector.shape_cast %264 : vector<1x64x128xf32> to vector<64x128xf32>
    %266 = arith.addf %263, %265 : vector<64x128xf32>
    %267 = arith.maximumf %260, %266 : vector<64x128xf32>
    %c2_210 = arith.constant 2 : index
    %c0_211 = arith.constant 0 : index
    %c0_212 = arith.constant 0 : index
    %268 = vector.load %arg1[%c2_210, %c0_211, %c0_212] : memref<3x64x64xf32, #tpu.memory_space<vmem>>, vector<1x64x64xf32>
    %269 = vector.shape_cast %268 : vector<1x64x64xf32> to vector<64x64xf32>
    %cst_213 = arith.constant dense<0.000000e+00> : vector<64x128xf32>
    %270 = tpu.matmul %269, %253, %cst_213 {dimension_numbers = #tpu.dot_dimension_numbers<[1], [0], [0], [1], [0, 0, 1, 1], [], []>} : vector<64x64xf32>, vector<64x128xf32>, vector<64x128xf32> -> vector<64x128xf32>
    %c2_214 = arith.constant 2 : index
    %c0_215 = arith.constant 0 : index
    %c0_216 = arith.constant 0 : index
    %271 = vector.load %arg2[%c2_214, %c0_215, %c0_216] : memref<3x64x128xf32, #tpu.memory_space<vmem>>, vector<1x64x128xf32>
    %272 = vector.shape_cast %271 : vector<1x64x128xf32> to vector<64x128xf32>
    %273 = arith.addf %270, %272 : vector<64x128xf32>
    %274 = arith.maximumf %267, %273 : vector<64x128xf32>
    %275 = arith.addf %253, %274 : vector<64x128xf32>
    %276 = arith.index_cast %c7_i32 : i32 to index
    %c0_217 = arith.constant 0 : index
    %c0_218 = arith.constant 0 : index
    %277 = vector.load %arg4[%276, %c0_217, %c0_218] : memref<20x128x128xf32, #tpu.memory_space<vmem>>, vector<1x128x128xf32>
    %278 = vector.shape_cast %277 : vector<1x128x128xf32> to vector<128x128xf32>
    %cst_219 = arith.constant dense<0.000000e+00> : vector<64x128xf32>
    %279 = tpu.matmul %275, %278, %cst_219 {dimension_numbers = #tpu.dot_dimension_numbers<[1], [0], [0], [1], [0, 0, 1, 1], [], []>} : vector<64x128xf32>, vector<128x128xf32>, vector<64x128xf32> -> vector<64x128xf32>
    %280 = arith.index_cast %c7_i32 : i32 to index
    %c0_220 = arith.constant 0 : index
    %c0_221 = arith.constant 0 : index
    %281 = vector.load %arg5[%280, %c0_220, %c0_221] : memref<20x1x128xf32, #tpu.memory_space<vmem>>, vector<1x1x128xf32>
    %282 = vector.shape_cast %281 : vector<1x1x128xf32> to vector<1x128xf32>
    %283 = vector.broadcast %282 : vector<1x128xf32> to vector<64x128xf32>
    %284 = arith.addf %279, %283 : vector<64x128xf32>
    %cst_222 = arith.constant 0.000000e+00 : f32
    %285 = vector.broadcast %cst_222 : f32 to vector<64x128xf32>
    %286 = arith.cmpf oge, %284, %285 : vector<64x128xf32>
    %cst_223 = arith.constant 0.00999999977 : f32
    %287 = vector.broadcast %cst_223 : f32 to vector<64x128xf32>
    %288 = arith.mulf %287, %284 : vector<64x128xf32>
    %289 = arith.select %286, %284, %288 : vector<64x128xi1>, vector<64x128xf32>
    %c8_i32 = arith.constant 8 : i32
    %c0_224 = arith.constant 0 : index
    %c0_225 = arith.constant 0 : index
    %c0_226 = arith.constant 0 : index
    %290 = vector.load %arg1[%c0_224, %c0_225, %c0_226] : memref<3x64x64xf32, #tpu.memory_space<vmem>>, vector<1x64x64xf32>
    %291 = vector.shape_cast %290 : vector<1x64x64xf32> to vector<64x64xf32>
    %cst_227 = arith.constant dense<0.000000e+00> : vector<64x128xf32>
    %292 = tpu.matmul %291, %289, %cst_227 {dimension_numbers = #tpu.dot_dimension_numbers<[1], [0], [0], [1], [0, 0, 1, 1], [], []>} : vector<64x64xf32>, vector<64x128xf32>, vector<64x128xf32> -> vector<64x128xf32>
    %c0_228 = arith.constant 0 : index
    %c0_229 = arith.constant 0 : index
    %c0_230 = arith.constant 0 : index
    %293 = vector.load %arg2[%c0_228, %c0_229, %c0_230] : memref<3x64x128xf32, #tpu.memory_space<vmem>>, vector<1x64x128xf32>
    %294 = vector.shape_cast %293 : vector<1x64x128xf32> to vector<64x128xf32>
    %295 = arith.addf %292, %294 : vector<64x128xf32>
    %296 = arith.maximumf %0, %295 : vector<64x128xf32>
    %c1_231 = arith.constant 1 : index
    %c0_232 = arith.constant 0 : index
    %c0_233 = arith.constant 0 : index
    %297 = vector.load %arg1[%c1_231, %c0_232, %c0_233] : memref<3x64x64xf32, #tpu.memory_space<vmem>>, vector<1x64x64xf32>
    %298 = vector.shape_cast %297 : vector<1x64x64xf32> to vector<64x64xf32>
    %cst_234 = arith.constant dense<0.000000e+00> : vector<64x128xf32>
    %299 = tpu.matmul %298, %289, %cst_234 {dimension_numbers = #tpu.dot_dimension_numbers<[1], [0], [0], [1], [0, 0, 1, 1], [], []>} : vector<64x64xf32>, vector<64x128xf32>, vector<64x128xf32> -> vector<64x128xf32>
    %c1_235 = arith.constant 1 : index
    %c0_236 = arith.constant 0 : index
    %c0_237 = arith.constant 0 : index
    %300 = vector.load %arg2[%c1_235, %c0_236, %c0_237] : memref<3x64x128xf32, #tpu.memory_space<vmem>>, vector<1x64x128xf32>
    %301 = vector.shape_cast %300 : vector<1x64x128xf32> to vector<64x128xf32>
    %302 = arith.addf %299, %301 : vector<64x128xf32>
    %303 = arith.maximumf %296, %302 : vector<64x128xf32>
    %c2_238 = arith.constant 2 : index
    %c0_239 = arith.constant 0 : index
    %c0_240 = arith.constant 0 : index
    %304 = vector.load %arg1[%c2_238, %c0_239, %c0_240] : memref<3x64x64xf32, #tpu.memory_space<vmem>>, vector<1x64x64xf32>
    %305 = vector.shape_cast %304 : vector<1x64x64xf32> to vector<64x64xf32>
    %cst_241 = arith.constant dense<0.000000e+00> : vector<64x128xf32>
    %306 = tpu.matmul %305, %289, %cst_241 {dimension_numbers = #tpu.dot_dimension_numbers<[1], [0], [0], [1], [0, 0, 1, 1], [], []>} : vector<64x64xf32>, vector<64x128xf32>, vector<64x128xf32> -> vector<64x128xf32>
    %c2_242 = arith.constant 2 : index
    %c0_243 = arith.constant 0 : index
    %c0_244 = arith.constant 0 : index
    %307 = vector.load %arg2[%c2_242, %c0_243, %c0_244] : memref<3x64x128xf32, #tpu.memory_space<vmem>>, vector<1x64x128xf32>
    %308 = vector.shape_cast %307 : vector<1x64x128xf32> to vector<64x128xf32>
    %309 = arith.addf %306, %308 : vector<64x128xf32>
    %310 = arith.maximumf %303, %309 : vector<64x128xf32>
    %311 = arith.addf %289, %310 : vector<64x128xf32>
    %312 = arith.index_cast %c8_i32 : i32 to index
    %c0_245 = arith.constant 0 : index
    %c0_246 = arith.constant 0 : index
    %313 = vector.load %arg4[%312, %c0_245, %c0_246] : memref<20x128x128xf32, #tpu.memory_space<vmem>>, vector<1x128x128xf32>
    %314 = vector.shape_cast %313 : vector<1x128x128xf32> to vector<128x128xf32>
    %cst_247 = arith.constant dense<0.000000e+00> : vector<64x128xf32>
    %315 = tpu.matmul %311, %314, %cst_247 {dimension_numbers = #tpu.dot_dimension_numbers<[1], [0], [0], [1], [0, 0, 1, 1], [], []>} : vector<64x128xf32>, vector<128x128xf32>, vector<64x128xf32> -> vector<64x128xf32>
    %316 = arith.index_cast %c8_i32 : i32 to index
    %c0_248 = arith.constant 0 : index
    %c0_249 = arith.constant 0 : index
    %317 = vector.load %arg5[%316, %c0_248, %c0_249] : memref<20x1x128xf32, #tpu.memory_space<vmem>>, vector<1x1x128xf32>
    %318 = vector.shape_cast %317 : vector<1x1x128xf32> to vector<1x128xf32>
    %319 = vector.broadcast %318 : vector<1x128xf32> to vector<64x128xf32>
    %320 = arith.addf %315, %319 : vector<64x128xf32>
    %cst_250 = arith.constant 0.000000e+00 : f32
    %321 = vector.broadcast %cst_250 : f32 to vector<64x128xf32>
    %322 = arith.cmpf oge, %320, %321 : vector<64x128xf32>
    %cst_251 = arith.constant 0.00999999977 : f32
    %323 = vector.broadcast %cst_251 : f32 to vector<64x128xf32>
    %324 = arith.mulf %323, %320 : vector<64x128xf32>
    %325 = arith.select %322, %320, %324 : vector<64x128xi1>, vector<64x128xf32>
    %c9_i32 = arith.constant 9 : i32
    %c0_252 = arith.constant 0 : index
    %c0_253 = arith.constant 0 : index
    %c0_254 = arith.constant 0 : index
    %326 = vector.load %arg1[%c0_252, %c0_253, %c0_254] : memref<3x64x64xf32, #tpu.memory_space<vmem>>, vector<1x64x64xf32>
    %327 = vector.shape_cast %326 : vector<1x64x64xf32> to vector<64x64xf32>
    %cst_255 = arith.constant dense<0.000000e+00> : vector<64x128xf32>
    %328 = tpu.matmul %327, %325, %cst_255 {dimension_numbers = #tpu.dot_dimension_numbers<[1], [0], [0], [1], [0, 0, 1, 1], [], []>} : vector<64x64xf32>, vector<64x128xf32>, vector<64x128xf32> -> vector<64x128xf32>
    %c0_256 = arith.constant 0 : index
    %c0_257 = arith.constant 0 : index
    %c0_258 = arith.constant 0 : index
    %329 = vector.load %arg2[%c0_256, %c0_257, %c0_258] : memref<3x64x128xf32, #tpu.memory_space<vmem>>, vector<1x64x128xf32>
    %330 = vector.shape_cast %329 : vector<1x64x128xf32> to vector<64x128xf32>
    %331 = arith.addf %328, %330 : vector<64x128xf32>
    %332 = arith.maximumf %0, %331 : vector<64x128xf32>
    %c1_259 = arith.constant 1 : index
    %c0_260 = arith.constant 0 : index
    %c0_261 = arith.constant 0 : index
    %333 = vector.load %arg1[%c1_259, %c0_260, %c0_261] : memref<3x64x64xf32, #tpu.memory_space<vmem>>, vector<1x64x64xf32>
    %334 = vector.shape_cast %333 : vector<1x64x64xf32> to vector<64x64xf32>
    %cst_262 = arith.constant dense<0.000000e+00> : vector<64x128xf32>
    %335 = tpu.matmul %334, %325, %cst_262 {dimension_numbers = #tpu.dot_dimension_numbers<[1], [0], [0], [1], [0, 0, 1, 1], [], []>} : vector<64x64xf32>, vector<64x128xf32>, vector<64x128xf32> -> vector<64x128xf32>
    %c1_263 = arith.constant 1 : index
    %c0_264 = arith.constant 0 : index
    %c0_265 = arith.constant 0 : index
    %336 = vector.load %arg2[%c1_263, %c0_264, %c0_265] : memref<3x64x128xf32, #tpu.memory_space<vmem>>, vector<1x64x128xf32>
    %337 = vector.shape_cast %336 : vector<1x64x128xf32> to vector<64x128xf32>
    %338 = arith.addf %335, %337 : vector<64x128xf32>
    %339 = arith.maximumf %332, %338 : vector<64x128xf32>
    %c2_266 = arith.constant 2 : index
    %c0_267 = arith.constant 0 : index
    %c0_268 = arith.constant 0 : index
    %340 = vector.load %arg1[%c2_266, %c0_267, %c0_268] : memref<3x64x64xf32, #tpu.memory_space<vmem>>, vector<1x64x64xf32>
    %341 = vector.shape_cast %340 : vector<1x64x64xf32> to vector<64x64xf32>
    %cst_269 = arith.constant dense<0.000000e+00> : vector<64x128xf32>
    %342 = tpu.matmul %341, %325, %cst_269 {dimension_numbers = #tpu.dot_dimension_numbers<[1], [0], [0], [1], [0, 0, 1, 1], [], []>} : vector<64x64xf32>, vector<64x128xf32>, vector<64x128xf32> -> vector<64x128xf32>
    %c2_270 = arith.constant 2 : index
    %c0_271 = arith.constant 0 : index
    %c0_272 = arith.constant 0 : index
    %343 = vector.load %arg2[%c2_270, %c0_271, %c0_272] : memref<3x64x128xf32, #tpu.memory_space<vmem>>, vector<1x64x128xf32>
    %344 = vector.shape_cast %343 : vector<1x64x128xf32> to vector<64x128xf32>
    %345 = arith.addf %342, %344 : vector<64x128xf32>
    %346 = arith.maximumf %339, %345 : vector<64x128xf32>
    %347 = arith.addf %325, %346 : vector<64x128xf32>
    %348 = arith.index_cast %c9_i32 : i32 to index
    %c0_273 = arith.constant 0 : index
    %c0_274 = arith.constant 0 : index
    %349 = vector.load %arg4[%348, %c0_273, %c0_274] : memref<20x128x128xf32, #tpu.memory_space<vmem>>, vector<1x128x128xf32>
    %350 = vector.shape_cast %349 : vector<1x128x128xf32> to vector<128x128xf32>
    %cst_275 = arith.constant dense<0.000000e+00> : vector<64x128xf32>
    %351 = tpu.matmul %347, %350, %cst_275 {dimension_numbers = #tpu.dot_dimension_numbers<[1], [0], [0], [1], [0, 0, 1, 1], [], []>} : vector<64x128xf32>, vector<128x128xf32>, vector<64x128xf32> -> vector<64x128xf32>
    %352 = arith.index_cast %c9_i32 : i32 to index
    %c0_276 = arith.constant 0 : index
    %c0_277 = arith.constant 0 : index
    %353 = vector.load %arg5[%352, %c0_276, %c0_277] : memref<20x1x128xf32, #tpu.memory_space<vmem>>, vector<1x1x128xf32>
    %354 = vector.shape_cast %353 : vector<1x1x128xf32> to vector<1x128xf32>
    %355 = vector.broadcast %354 : vector<1x128xf32> to vector<64x128xf32>
    %356 = arith.addf %351, %355 : vector<64x128xf32>
    %cst_278 = arith.constant 0.000000e+00 : f32
    %357 = vector.broadcast %cst_278 : f32 to vector<64x128xf32>
    %358 = arith.cmpf oge, %356, %357 : vector<64x128xf32>
    %cst_279 = arith.constant 0.00999999977 : f32
    %359 = vector.broadcast %cst_279 : f32 to vector<64x128xf32>
    %360 = arith.mulf %359, %356 : vector<64x128xf32>
    %361 = arith.select %358, %356, %360 : vector<64x128xi1>, vector<64x128xf32>
    %c10_i32 = arith.constant 10 : i32
    %c0_280 = arith.constant 0 : index
    %c0_281 = arith.constant 0 : index
    %c0_282 = arith.constant 0 : index
    %362 = vector.load %arg1[%c0_280, %c0_281, %c0_282] : memref<3x64x64xf32, #tpu.memory_space<vmem>>, vector<1x64x64xf32>
    %363 = vector.shape_cast %362 : vector<1x64x64xf32> to vector<64x64xf32>
    %cst_283 = arith.constant dense<0.000000e+00> : vector<64x128xf32>
    %364 = tpu.matmul %363, %361, %cst_283 {dimension_numbers = #tpu.dot_dimension_numbers<[1], [0], [0], [1], [0, 0, 1, 1], [], []>} : vector<64x64xf32>, vector<64x128xf32>, vector<64x128xf32> -> vector<64x128xf32>
    %c0_284 = arith.constant 0 : index
    %c0_285 = arith.constant 0 : index
    %c0_286 = arith.constant 0 : index
    %365 = vector.load %arg2[%c0_284, %c0_285, %c0_286] : memref<3x64x128xf32, #tpu.memory_space<vmem>>, vector<1x64x128xf32>
    %366 = vector.shape_cast %365 : vector<1x64x128xf32> to vector<64x128xf32>
    %367 = arith.addf %364, %366 : vector<64x128xf32>
    %368 = arith.maximumf %0, %367 : vector<64x128xf32>
    %c1_287 = arith.constant 1 : index
    %c0_288 = arith.constant 0 : index
    %c0_289 = arith.constant 0 : index
    %369 = vector.load %arg1[%c1_287, %c0_288, %c0_289] : memref<3x64x64xf32, #tpu.memory_space<vmem>>, vector<1x64x64xf32>
    %370 = vector.shape_cast %369 : vector<1x64x64xf32> to vector<64x64xf32>
    %cst_290 = arith.constant dense<0.000000e+00> : vector<64x128xf32>
    %371 = tpu.matmul %370, %361, %cst_290 {dimension_numbers = #tpu.dot_dimension_numbers<[1], [0], [0], [1], [0, 0, 1, 1], [], []>} : vector<64x64xf32>, vector<64x128xf32>, vector<64x128xf32> -> vector<64x128xf32>
    %c1_291 = arith.constant 1 : index
    %c0_292 = arith.constant 0 : index
    %c0_293 = arith.constant 0 : index
    %372 = vector.load %arg2[%c1_291, %c0_292, %c0_293] : memref<3x64x128xf32, #tpu.memory_space<vmem>>, vector<1x64x128xf32>
    %373 = vector.shape_cast %372 : vector<1x64x128xf32> to vector<64x128xf32>
    %374 = arith.addf %371, %373 : vector<64x128xf32>
    %375 = arith.maximumf %368, %374 : vector<64x128xf32>
    %c2_294 = arith.constant 2 : index
    %c0_295 = arith.constant 0 : index
    %c0_296 = arith.constant 0 : index
    %376 = vector.load %arg1[%c2_294, %c0_295, %c0_296] : memref<3x64x64xf32, #tpu.memory_space<vmem>>, vector<1x64x64xf32>
    %377 = vector.shape_cast %376 : vector<1x64x64xf32> to vector<64x64xf32>
    %cst_297 = arith.constant dense<0.000000e+00> : vector<64x128xf32>
    %378 = tpu.matmul %377, %361, %cst_297 {dimension_numbers = #tpu.dot_dimension_numbers<[1], [0], [0], [1], [0, 0, 1, 1], [], []>} : vector<64x64xf32>, vector<64x128xf32>, vector<64x128xf32> -> vector<64x128xf32>
    %c2_298 = arith.constant 2 : index
    %c0_299 = arith.constant 0 : index
    %c0_300 = arith.constant 0 : index
    %379 = vector.load %arg2[%c2_298, %c0_299, %c0_300] : memref<3x64x128xf32, #tpu.memory_space<vmem>>, vector<1x64x128xf32>
    %380 = vector.shape_cast %379 : vector<1x64x128xf32> to vector<64x128xf32>
    %381 = arith.addf %378, %380 : vector<64x128xf32>
    %382 = arith.maximumf %375, %381 : vector<64x128xf32>
    %383 = arith.addf %361, %382 : vector<64x128xf32>
    %384 = arith.index_cast %c10_i32 : i32 to index
    %c0_301 = arith.constant 0 : index
    %c0_302 = arith.constant 0 : index
    %385 = vector.load %arg4[%384, %c0_301, %c0_302] : memref<20x128x128xf32, #tpu.memory_space<vmem>>, vector<1x128x128xf32>
    %386 = vector.shape_cast %385 : vector<1x128x128xf32> to vector<128x128xf32>
    %cst_303 = arith.constant dense<0.000000e+00> : vector<64x128xf32>
    %387 = tpu.matmul %383, %386, %cst_303 {dimension_numbers = #tpu.dot_dimension_numbers<[1], [0], [0], [1], [0, 0, 1, 1], [], []>} : vector<64x128xf32>, vector<128x128xf32>, vector<64x128xf32> -> vector<64x128xf32>
    %388 = arith.index_cast %c10_i32 : i32 to index
    %c0_304 = arith.constant 0 : index
    %c0_305 = arith.constant 0 : index
    %389 = vector.load %arg5[%388, %c0_304, %c0_305] : memref<20x1x128xf32, #tpu.memory_space<vmem>>, vector<1x1x128xf32>
    %390 = vector.shape_cast %389 : vector<1x1x128xf32> to vector<1x128xf32>
    %391 = vector.broadcast %390 : vector<1x128xf32> to vector<64x128xf32>
    %392 = arith.addf %387, %391 : vector<64x128xf32>
    %cst_306 = arith.constant 0.000000e+00 : f32
    %393 = vector.broadcast %cst_306 : f32 to vector<64x128xf32>
    %394 = arith.cmpf oge, %392, %393 : vector<64x128xf32>
    %cst_307 = arith.constant 0.00999999977 : f32
    %395 = vector.broadcast %cst_307 : f32 to vector<64x128xf32>
    %396 = arith.mulf %395, %392 : vector<64x128xf32>
    %397 = arith.select %394, %392, %396 : vector<64x128xi1>, vector<64x128xf32>
    %c11_i32 = arith.constant 11 : i32
    %c0_308 = arith.constant 0 : index
    %c0_309 = arith.constant 0 : index
    %c0_310 = arith.constant 0 : index
    %398 = vector.load %arg1[%c0_308, %c0_309, %c0_310] : memref<3x64x64xf32, #tpu.memory_space<vmem>>, vector<1x64x64xf32>
    %399 = vector.shape_cast %398 : vector<1x64x64xf32> to vector<64x64xf32>
    %cst_311 = arith.constant dense<0.000000e+00> : vector<64x128xf32>
    %400 = tpu.matmul %399, %397, %cst_311 {dimension_numbers = #tpu.dot_dimension_numbers<[1], [0], [0], [1], [0, 0, 1, 1], [], []>} : vector<64x64xf32>, vector<64x128xf32>, vector<64x128xf32> -> vector<64x128xf32>
    %c0_312 = arith.constant 0 : index
    %c0_313 = arith.constant 0 : index
    %c0_314 = arith.constant 0 : index
    %401 = vector.load %arg2[%c0_312, %c0_313, %c0_314] : memref<3x64x128xf32, #tpu.memory_space<vmem>>, vector<1x64x128xf32>
    %402 = vector.shape_cast %401 : vector<1x64x128xf32> to vector<64x128xf32>
    %403 = arith.addf %400, %402 : vector<64x128xf32>
    %404 = arith.maximumf %0, %403 : vector<64x128xf32>
    %c1_315 = arith.constant 1 : index
    %c0_316 = arith.constant 0 : index
    %c0_317 = arith.constant 0 : index
    %405 = vector.load %arg1[%c1_315, %c0_316, %c0_317] : memref<3x64x64xf32, #tpu.memory_space<vmem>>, vector<1x64x64xf32>
    %406 = vector.shape_cast %405 : vector<1x64x64xf32> to vector<64x64xf32>
    %cst_318 = arith.constant dense<0.000000e+00> : vector<64x128xf32>
    %407 = tpu.matmul %406, %397, %cst_318 {dimension_numbers = #tpu.dot_dimension_numbers<[1], [0], [0], [1], [0, 0, 1, 1], [], []>} : vector<64x64xf32>, vector<64x128xf32>, vector<64x128xf32> -> vector<64x128xf32>
    %c1_319 = arith.constant 1 : index
    %c0_320 = arith.constant 0 : index
    %c0_321 = arith.constant 0 : index
    %408 = vector.load %arg2[%c1_319, %c0_320, %c0_321] : memref<3x64x128xf32, #tpu.memory_space<vmem>>, vector<1x64x128xf32>
    %409 = vector.shape_cast %408 : vector<1x64x128xf32> to vector<64x128xf32>
    %410 = arith.addf %407, %409 : vector<64x128xf32>
    %411 = arith.maximumf %404, %410 : vector<64x128xf32>
    %c2_322 = arith.constant 2 : index
    %c0_323 = arith.constant 0 : index
    %c0_324 = arith.constant 0 : index
    %412 = vector.load %arg1[%c2_322, %c0_323, %c0_324] : memref<3x64x64xf32, #tpu.memory_space<vmem>>, vector<1x64x64xf32>
    %413 = vector.shape_cast %412 : vector<1x64x64xf32> to vector<64x64xf32>
    %cst_325 = arith.constant dense<0.000000e+00> : vector<64x128xf32>
    %414 = tpu.matmul %413, %397, %cst_325 {dimension_numbers = #tpu.dot_dimension_numbers<[1], [0], [0], [1], [0, 0, 1, 1], [], []>} : vector<64x64xf32>, vector<64x128xf32>, vector<64x128xf32> -> vector<64x128xf32>
    %c2_326 = arith.constant 2 : index
    %c0_327 = arith.constant 0 : index
    %c0_328 = arith.constant 0 : index
    %415 = vector.load %arg2[%c2_326, %c0_327, %c0_328] : memref<3x64x128xf32, #tpu.memory_space<vmem>>, vector<1x64x128xf32>
    %416 = vector.shape_cast %415 : vector<1x64x128xf32> to vector<64x128xf32>
    %417 = arith.addf %414, %416 : vector<64x128xf32>
    %418 = arith.maximumf %411, %417 : vector<64x128xf32>
    %419 = arith.addf %397, %418 : vector<64x128xf32>
    %420 = arith.index_cast %c11_i32 : i32 to index
    %c0_329 = arith.constant 0 : index
    %c0_330 = arith.constant 0 : index
    %421 = vector.load %arg4[%420, %c0_329, %c0_330] : memref<20x128x128xf32, #tpu.memory_space<vmem>>, vector<1x128x128xf32>
    %422 = vector.shape_cast %421 : vector<1x128x128xf32> to vector<128x128xf32>
    %cst_331 = arith.constant dense<0.000000e+00> : vector<64x128xf32>
    %423 = tpu.matmul %419, %422, %cst_331 {dimension_numbers = #tpu.dot_dimension_numbers<[1], [0], [0], [1], [0, 0, 1, 1], [], []>} : vector<64x128xf32>, vector<128x128xf32>, vector<64x128xf32> -> vector<64x128xf32>
    %424 = arith.index_cast %c11_i32 : i32 to index
    %c0_332 = arith.constant 0 : index
    %c0_333 = arith.constant 0 : index
    %425 = vector.load %arg5[%424, %c0_332, %c0_333] : memref<20x1x128xf32, #tpu.memory_space<vmem>>, vector<1x1x128xf32>
    %426 = vector.shape_cast %425 : vector<1x1x128xf32> to vector<1x128xf32>
    %427 = vector.broadcast %426 : vector<1x128xf32> to vector<64x128xf32>
    %428 = arith.addf %423, %427 : vector<64x128xf32>
    %cst_334 = arith.constant 0.000000e+00 : f32
    %429 = vector.broadcast %cst_334 : f32 to vector<64x128xf32>
    %430 = arith.cmpf oge, %428, %429 : vector<64x128xf32>
    %cst_335 = arith.constant 0.00999999977 : f32
    %431 = vector.broadcast %cst_335 : f32 to vector<64x128xf32>
    %432 = arith.mulf %431, %428 : vector<64x128xf32>
    %433 = arith.select %430, %428, %432 : vector<64x128xi1>, vector<64x128xf32>
    %c12_i32 = arith.constant 12 : i32
    %c0_336 = arith.constant 0 : index
    %c0_337 = arith.constant 0 : index
    %c0_338 = arith.constant 0 : index
    %434 = vector.load %arg1[%c0_336, %c0_337, %c0_338] : memref<3x64x64xf32, #tpu.memory_space<vmem>>, vector<1x64x64xf32>
    %435 = vector.shape_cast %434 : vector<1x64x64xf32> to vector<64x64xf32>
    %cst_339 = arith.constant dense<0.000000e+00> : vector<64x128xf32>
    %436 = tpu.matmul %435, %433, %cst_339 {dimension_numbers = #tpu.dot_dimension_numbers<[1], [0], [0], [1], [0, 0, 1, 1], [], []>} : vector<64x64xf32>, vector<64x128xf32>, vector<64x128xf32> -> vector<64x128xf32>
    %c0_340 = arith.constant 0 : index
    %c0_341 = arith.constant 0 : index
    %c0_342 = arith.constant 0 : index
    %437 = vector.load %arg2[%c0_340, %c0_341, %c0_342] : memref<3x64x128xf32, #tpu.memory_space<vmem>>, vector<1x64x128xf32>
    %438 = vector.shape_cast %437 : vector<1x64x128xf32> to vector<64x128xf32>
    %439 = arith.addf %436, %438 : vector<64x128xf32>
    %440 = arith.maximumf %0, %439 : vector<64x128xf32>
    %c1_343 = arith.constant 1 : index
    %c0_344 = arith.constant 0 : index
    %c0_345 = arith.constant 0 : index
    %441 = vector.load %arg1[%c1_343, %c0_344, %c0_345] : memref<3x64x64xf32, #tpu.memory_space<vmem>>, vector<1x64x64xf32>
    %442 = vector.shape_cast %441 : vector<1x64x64xf32> to vector<64x64xf32>
    %cst_346 = arith.constant dense<0.000000e+00> : vector<64x128xf32>
    %443 = tpu.matmul %442, %433, %cst_346 {dimension_numbers = #tpu.dot_dimension_numbers<[1], [0], [0], [1], [0, 0, 1, 1], [], []>} : vector<64x64xf32>, vector<64x128xf32>, vector<64x128xf32> -> vector<64x128xf32>
    %c1_347 = arith.constant 1 : index
    %c0_348 = arith.constant 0 : index
    %c0_349 = arith.constant 0 : index
    %444 = vector.load %arg2[%c1_347, %c0_348, %c0_349] : memref<3x64x128xf32, #tpu.memory_space<vmem>>, vector<1x64x128xf32>
    %445 = vector.shape_cast %444 : vector<1x64x128xf32> to vector<64x128xf32>
    %446 = arith.addf %443, %445 : vector<64x128xf32>
    %447 = arith.maximumf %440, %446 : vector<64x128xf32>
    %c2_350 = arith.constant 2 : index
    %c0_351 = arith.constant 0 : index
    %c0_352 = arith.constant 0 : index
    %448 = vector.load %arg1[%c2_350, %c0_351, %c0_352] : memref<3x64x64xf32, #tpu.memory_space<vmem>>, vector<1x64x64xf32>
    %449 = vector.shape_cast %448 : vector<1x64x64xf32> to vector<64x64xf32>
    %cst_353 = arith.constant dense<0.000000e+00> : vector<64x128xf32>
    %450 = tpu.matmul %449, %433, %cst_353 {dimension_numbers = #tpu.dot_dimension_numbers<[1], [0], [0], [1], [0, 0, 1, 1], [], []>} : vector<64x64xf32>, vector<64x128xf32>, vector<64x128xf32> -> vector<64x128xf32>
    %c2_354 = arith.constant 2 : index
    %c0_355 = arith.constant 0 : index
    %c0_356 = arith.constant 0 : index
    %451 = vector.load %arg2[%c2_354, %c0_355, %c0_356] : memref<3x64x128xf32, #tpu.memory_space<vmem>>, vector<1x64x128xf32>
    %452 = vector.shape_cast %451 : vector<1x64x128xf32> to vector<64x128xf32>
    %453 = arith.addf %450, %452 : vector<64x128xf32>
    %454 = arith.maximumf %447, %453 : vector<64x128xf32>
    %455 = arith.addf %433, %454 : vector<64x128xf32>
    %456 = arith.index_cast %c12_i32 : i32 to index
    %c0_357 = arith.constant 0 : index
    %c0_358 = arith.constant 0 : index
    %457 = vector.load %arg4[%456, %c0_357, %c0_358] : memref<20x128x128xf32, #tpu.memory_space<vmem>>, vector<1x128x128xf32>
    %458 = vector.shape_cast %457 : vector<1x128x128xf32> to vector<128x128xf32>
    %cst_359 = arith.constant dense<0.000000e+00> : vector<64x128xf32>
    %459 = tpu.matmul %455, %458, %cst_359 {dimension_numbers = #tpu.dot_dimension_numbers<[1], [0], [0], [1], [0, 0, 1, 1], [], []>} : vector<64x128xf32>, vector<128x128xf32>, vector<64x128xf32> -> vector<64x128xf32>
    %460 = arith.index_cast %c12_i32 : i32 to index
    %c0_360 = arith.constant 0 : index
    %c0_361 = arith.constant 0 : index
    %461 = vector.load %arg5[%460, %c0_360, %c0_361] : memref<20x1x128xf32, #tpu.memory_space<vmem>>, vector<1x1x128xf32>
    %462 = vector.shape_cast %461 : vector<1x1x128xf32> to vector<1x128xf32>
    %463 = vector.broadcast %462 : vector<1x128xf32> to vector<64x128xf32>
    %464 = arith.addf %459, %463 : vector<64x128xf32>
    %cst_362 = arith.constant 0.000000e+00 : f32
    %465 = vector.broadcast %cst_362 : f32 to vector<64x128xf32>
    %466 = arith.cmpf oge, %464, %465 : vector<64x128xf32>
    %cst_363 = arith.constant 0.00999999977 : f32
    %467 = vector.broadcast %cst_363 : f32 to vector<64x128xf32>
    %468 = arith.mulf %467, %464 : vector<64x128xf32>
    %469 = arith.select %466, %464, %468 : vector<64x128xi1>, vector<64x128xf32>
    %c13_i32 = arith.constant 13 : i32
    %c0_364 = arith.constant 0 : index
    %c0_365 = arith.constant 0 : index
    %c0_366 = arith.constant 0 : index
    %470 = vector.load %arg1[%c0_364, %c0_365, %c0_366] : memref<3x64x64xf32, #tpu.memory_space<vmem>>, vector<1x64x64xf32>
    %471 = vector.shape_cast %470 : vector<1x64x64xf32> to vector<64x64xf32>
    %cst_367 = arith.constant dense<0.000000e+00> : vector<64x128xf32>
    %472 = tpu.matmul %471, %469, %cst_367 {dimension_numbers = #tpu.dot_dimension_numbers<[1], [0], [0], [1], [0, 0, 1, 1], [], []>} : vector<64x64xf32>, vector<64x128xf32>, vector<64x128xf32> -> vector<64x128xf32>
    %c0_368 = arith.constant 0 : index
    %c0_369 = arith.constant 0 : index
    %c0_370 = arith.constant 0 : index
    %473 = vector.load %arg2[%c0_368, %c0_369, %c0_370] : memref<3x64x128xf32, #tpu.memory_space<vmem>>, vector<1x64x128xf32>
    %474 = vector.shape_cast %473 : vector<1x64x128xf32> to vector<64x128xf32>
    %475 = arith.addf %472, %474 : vector<64x128xf32>
    %476 = arith.maximumf %0, %475 : vector<64x128xf32>
    %c1_371 = arith.constant 1 : index
    %c0_372 = arith.constant 0 : index
    %c0_373 = arith.constant 0 : index
    %477 = vector.load %arg1[%c1_371, %c0_372, %c0_373] : memref<3x64x64xf32, #tpu.memory_space<vmem>>, vector<1x64x64xf32>
    %478 = vector.shape_cast %477 : vector<1x64x64xf32> to vector<64x64xf32>
    %cst_374 = arith.constant dense<0.000000e+00> : vector<64x128xf32>
    %479 = tpu.matmul %478, %469, %cst_374 {dimension_numbers = #tpu.dot_dimension_numbers<[1], [0], [0], [1], [0, 0, 1, 1], [], []>} : vector<64x64xf32>, vector<64x128xf32>, vector<64x128xf32> -> vector<64x128xf32>
    %c1_375 = arith.constant 1 : index
    %c0_376 = arith.constant 0 : index
    %c0_377 = arith.constant 0 : index
    %480 = vector.load %arg2[%c1_375, %c0_376, %c0_377] : memref<3x64x128xf32, #tpu.memory_space<vmem>>, vector<1x64x128xf32>
    %481 = vector.shape_cast %480 : vector<1x64x128xf32> to vector<64x128xf32>
    %482 = arith.addf %479, %481 : vector<64x128xf32>
    %483 = arith.maximumf %476, %482 : vector<64x128xf32>
    %c2_378 = arith.constant 2 : index
    %c0_379 = arith.constant 0 : index
    %c0_380 = arith.constant 0 : index
    %484 = vector.load %arg1[%c2_378, %c0_379, %c0_380] : memref<3x64x64xf32, #tpu.memory_space<vmem>>, vector<1x64x64xf32>
    %485 = vector.shape_cast %484 : vector<1x64x64xf32> to vector<64x64xf32>
    %cst_381 = arith.constant dense<0.000000e+00> : vector<64x128xf32>
    %486 = tpu.matmul %485, %469, %cst_381 {dimension_numbers = #tpu.dot_dimension_numbers<[1], [0], [0], [1], [0, 0, 1, 1], [], []>} : vector<64x64xf32>, vector<64x128xf32>, vector<64x128xf32> -> vector<64x128xf32>
    %c2_382 = arith.constant 2 : index
    %c0_383 = arith.constant 0 : index
    %c0_384 = arith.constant 0 : index
    %487 = vector.load %arg2[%c2_382, %c0_383, %c0_384] : memref<3x64x128xf32, #tpu.memory_space<vmem>>, vector<1x64x128xf32>
    %488 = vector.shape_cast %487 : vector<1x64x128xf32> to vector<64x128xf32>
    %489 = arith.addf %486, %488 : vector<64x128xf32>
    %490 = arith.maximumf %483, %489 : vector<64x128xf32>
    %491 = arith.addf %469, %490 : vector<64x128xf32>
    %492 = arith.index_cast %c13_i32 : i32 to index
    %c0_385 = arith.constant 0 : index
    %c0_386 = arith.constant 0 : index
    %493 = vector.load %arg4[%492, %c0_385, %c0_386] : memref<20x128x128xf32, #tpu.memory_space<vmem>>, vector<1x128x128xf32>
    %494 = vector.shape_cast %493 : vector<1x128x128xf32> to vector<128x128xf32>
    %cst_387 = arith.constant dense<0.000000e+00> : vector<64x128xf32>
    %495 = tpu.matmul %491, %494, %cst_387 {dimension_numbers = #tpu.dot_dimension_numbers<[1], [0], [0], [1], [0, 0, 1, 1], [], []>} : vector<64x128xf32>, vector<128x128xf32>, vector<64x128xf32> -> vector<64x128xf32>
    %496 = arith.index_cast %c13_i32 : i32 to index
    %c0_388 = arith.constant 0 : index
    %c0_389 = arith.constant 0 : index
    %497 = vector.load %arg5[%496, %c0_388, %c0_389] : memref<20x1x128xf32, #tpu.memory_space<vmem>>, vector<1x1x128xf32>
    %498 = vector.shape_cast %497 : vector<1x1x128xf32> to vector<1x128xf32>
    %499 = vector.broadcast %498 : vector<1x128xf32> to vector<64x128xf32>
    %500 = arith.addf %495, %499 : vector<64x128xf32>
    %cst_390 = arith.constant 0.000000e+00 : f32
    %501 = vector.broadcast %cst_390 : f32 to vector<64x128xf32>
    %502 = arith.cmpf oge, %500, %501 : vector<64x128xf32>
    %cst_391 = arith.constant 0.00999999977 : f32
    %503 = vector.broadcast %cst_391 : f32 to vector<64x128xf32>
    %504 = arith.mulf %503, %500 : vector<64x128xf32>
    %505 = arith.select %502, %500, %504 : vector<64x128xi1>, vector<64x128xf32>
    %c14_i32 = arith.constant 14 : i32
    %c0_392 = arith.constant 0 : index
    %c0_393 = arith.constant 0 : index
    %c0_394 = arith.constant 0 : index
    %506 = vector.load %arg1[%c0_392, %c0_393, %c0_394] : memref<3x64x64xf32, #tpu.memory_space<vmem>>, vector<1x64x64xf32>
    %507 = vector.shape_cast %506 : vector<1x64x64xf32> to vector<64x64xf32>
    %cst_395 = arith.constant dense<0.000000e+00> : vector<64x128xf32>
    %508 = tpu.matmul %507, %505, %cst_395 {dimension_numbers = #tpu.dot_dimension_numbers<[1], [0], [0], [1], [0, 0, 1, 1], [], []>} : vector<64x64xf32>, vector<64x128xf32>, vector<64x128xf32> -> vector<64x128xf32>
    %c0_396 = arith.constant 0 : index
    %c0_397 = arith.constant 0 : index
    %c0_398 = arith.constant 0 : index
    %509 = vector.load %arg2[%c0_396, %c0_397, %c0_398] : memref<3x64x128xf32, #tpu.memory_space<vmem>>, vector<1x64x128xf32>
    %510 = vector.shape_cast %509 : vector<1x64x128xf32> to vector<64x128xf32>
    %511 = arith.addf %508, %510 : vector<64x128xf32>
    %512 = arith.maximumf %0, %511 : vector<64x128xf32>
    %c1_399 = arith.constant 1 : index
    %c0_400 = arith.constant 0 : index
    %c0_401 = arith.constant 0 : index
    %513 = vector.load %arg1[%c1_399, %c0_400, %c0_401] : memref<3x64x64xf32, #tpu.memory_space<vmem>>, vector<1x64x64xf32>
    %514 = vector.shape_cast %513 : vector<1x64x64xf32> to vector<64x64xf32>
    %cst_402 = arith.constant dense<0.000000e+00> : vector<64x128xf32>
    %515 = tpu.matmul %514, %505, %cst_402 {dimension_numbers = #tpu.dot_dimension_numbers<[1], [0], [0], [1], [0, 0, 1, 1], [], []>} : vector<64x64xf32>, vector<64x128xf32>, vector<64x128xf32> -> vector<64x128xf32>
    %c1_403 = arith.constant 1 : index
    %c0_404 = arith.constant 0 : index
    %c0_405 = arith.constant 0 : index
    %516 = vector.load %arg2[%c1_403, %c0_404, %c0_405] : memref<3x64x128xf32, #tpu.memory_space<vmem>>, vector<1x64x128xf32>
    %517 = vector.shape_cast %516 : vector<1x64x128xf32> to vector<64x128xf32>
    %518 = arith.addf %515, %517 : vector<64x128xf32>
    %519 = arith.maximumf %512, %518 : vector<64x128xf32>
    %c2_406 = arith.constant 2 : index
    %c0_407 = arith.constant 0 : index
    %c0_408 = arith.constant 0 : index
    %520 = vector.load %arg1[%c2_406, %c0_407, %c0_408] : memref<3x64x64xf32, #tpu.memory_space<vmem>>, vector<1x64x64xf32>
    %521 = vector.shape_cast %520 : vector<1x64x64xf32> to vector<64x64xf32>
    %cst_409 = arith.constant dense<0.000000e+00> : vector<64x128xf32>
    %522 = tpu.matmul %521, %505, %cst_409 {dimension_numbers = #tpu.dot_dimension_numbers<[1], [0], [0], [1], [0, 0, 1, 1], [], []>} : vector<64x64xf32>, vector<64x128xf32>, vector<64x128xf32> -> vector<64x128xf32>
    %c2_410 = arith.constant 2 : index
    %c0_411 = arith.constant 0 : index
    %c0_412 = arith.constant 0 : index
    %523 = vector.load %arg2[%c2_410, %c0_411, %c0_412] : memref<3x64x128xf32, #tpu.memory_space<vmem>>, vector<1x64x128xf32>
    %524 = vector.shape_cast %523 : vector<1x64x128xf32> to vector<64x128xf32>
    %525 = arith.addf %522, %524 : vector<64x128xf32>
    %526 = arith.maximumf %519, %525 : vector<64x128xf32>
    %527 = arith.addf %505, %526 : vector<64x128xf32>
    %528 = arith.index_cast %c14_i32 : i32 to index
    %c0_413 = arith.constant 0 : index
    %c0_414 = arith.constant 0 : index
    %529 = vector.load %arg4[%528, %c0_413, %c0_414] : memref<20x128x128xf32, #tpu.memory_space<vmem>>, vector<1x128x128xf32>
    %530 = vector.shape_cast %529 : vector<1x128x128xf32> to vector<128x128xf32>
    %cst_415 = arith.constant dense<0.000000e+00> : vector<64x128xf32>
    %531 = tpu.matmul %527, %530, %cst_415 {dimension_numbers = #tpu.dot_dimension_numbers<[1], [0], [0], [1], [0, 0, 1, 1], [], []>} : vector<64x128xf32>, vector<128x128xf32>, vector<64x128xf32> -> vector<64x128xf32>
    %532 = arith.index_cast %c14_i32 : i32 to index
    %c0_416 = arith.constant 0 : index
    %c0_417 = arith.constant 0 : index
    %533 = vector.load %arg5[%532, %c0_416, %c0_417] : memref<20x1x128xf32, #tpu.memory_space<vmem>>, vector<1x1x128xf32>
    %534 = vector.shape_cast %533 : vector<1x1x128xf32> to vector<1x128xf32>
    %535 = vector.broadcast %534 : vector<1x128xf32> to vector<64x128xf32>
    %536 = arith.addf %531, %535 : vector<64x128xf32>
    %cst_418 = arith.constant 0.000000e+00 : f32
    %537 = vector.broadcast %cst_418 : f32 to vector<64x128xf32>
    %538 = arith.cmpf oge, %536, %537 : vector<64x128xf32>
    %cst_419 = arith.constant 0.00999999977 : f32
    %539 = vector.broadcast %cst_419 : f32 to vector<64x128xf32>
    %540 = arith.mulf %539, %536 : vector<64x128xf32>
    %541 = arith.select %538, %536, %540 : vector<64x128xi1>, vector<64x128xf32>
    %c15_i32 = arith.constant 15 : i32
    %c0_420 = arith.constant 0 : index
    %c0_421 = arith.constant 0 : index
    %c0_422 = arith.constant 0 : index
    %542 = vector.load %arg1[%c0_420, %c0_421, %c0_422] : memref<3x64x64xf32, #tpu.memory_space<vmem>>, vector<1x64x64xf32>
    %543 = vector.shape_cast %542 : vector<1x64x64xf32> to vector<64x64xf32>
    %cst_423 = arith.constant dense<0.000000e+00> : vector<64x128xf32>
    %544 = tpu.matmul %543, %541, %cst_423 {dimension_numbers = #tpu.dot_dimension_numbers<[1], [0], [0], [1], [0, 0, 1, 1], [], []>} : vector<64x64xf32>, vector<64x128xf32>, vector<64x128xf32> -> vector<64x128xf32>
    %c0_424 = arith.constant 0 : index
    %c0_425 = arith.constant 0 : index
    %c0_426 = arith.constant 0 : index
    %545 = vector.load %arg2[%c0_424, %c0_425, %c0_426] : memref<3x64x128xf32, #tpu.memory_space<vmem>>, vector<1x64x128xf32>
    %546 = vector.shape_cast %545 : vector<1x64x128xf32> to vector<64x128xf32>
    %547 = arith.addf %544, %546 : vector<64x128xf32>
    %548 = arith.maximumf %0, %547 : vector<64x128xf32>
    %c1_427 = arith.constant 1 : index
    %c0_428 = arith.constant 0 : index
    %c0_429 = arith.constant 0 : index
    %549 = vector.load %arg1[%c1_427, %c0_428, %c0_429] : memref<3x64x64xf32, #tpu.memory_space<vmem>>, vector<1x64x64xf32>
    %550 = vector.shape_cast %549 : vector<1x64x64xf32> to vector<64x64xf32>
    %cst_430 = arith.constant dense<0.000000e+00> : vector<64x128xf32>
    %551 = tpu.matmul %550, %541, %cst_430 {dimension_numbers = #tpu.dot_dimension_numbers<[1], [0], [0], [1], [0, 0, 1, 1], [], []>} : vector<64x64xf32>, vector<64x128xf32>, vector<64x128xf32> -> vector<64x128xf32>
    %c1_431 = arith.constant 1 : index
    %c0_432 = arith.constant 0 : index
    %c0_433 = arith.constant 0 : index
    %552 = vector.load %arg2[%c1_431, %c0_432, %c0_433] : memref<3x64x128xf32, #tpu.memory_space<vmem>>, vector<1x64x128xf32>
    %553 = vector.shape_cast %552 : vector<1x64x128xf32> to vector<64x128xf32>
    %554 = arith.addf %551, %553 : vector<64x128xf32>
    %555 = arith.maximumf %548, %554 : vector<64x128xf32>
    %c2_434 = arith.constant 2 : index
    %c0_435 = arith.constant 0 : index
    %c0_436 = arith.constant 0 : index
    %556 = vector.load %arg1[%c2_434, %c0_435, %c0_436] : memref<3x64x64xf32, #tpu.memory_space<vmem>>, vector<1x64x64xf32>
    %557 = vector.shape_cast %556 : vector<1x64x64xf32> to vector<64x64xf32>
    %cst_437 = arith.constant dense<0.000000e+00> : vector<64x128xf32>
    %558 = tpu.matmul %557, %541, %cst_437 {dimension_numbers = #tpu.dot_dimension_numbers<[1], [0], [0], [1], [0, 0, 1, 1], [], []>} : vector<64x64xf32>, vector<64x128xf32>, vector<64x128xf32> -> vector<64x128xf32>
    %c2_438 = arith.constant 2 : index
    %c0_439 = arith.constant 0 : index
    %c0_440 = arith.constant 0 : index
    %559 = vector.load %arg2[%c2_438, %c0_439, %c0_440] : memref<3x64x128xf32, #tpu.memory_space<vmem>>, vector<1x64x128xf32>
    %560 = vector.shape_cast %559 : vector<1x64x128xf32> to vector<64x128xf32>
    %561 = arith.addf %558, %560 : vector<64x128xf32>
    %562 = arith.maximumf %555, %561 : vector<64x128xf32>
    %563 = arith.addf %541, %562 : vector<64x128xf32>
    %564 = arith.index_cast %c15_i32 : i32 to index
    %c0_441 = arith.constant 0 : index
    %c0_442 = arith.constant 0 : index
    %565 = vector.load %arg4[%564, %c0_441, %c0_442] : memref<20x128x128xf32, #tpu.memory_space<vmem>>, vector<1x128x128xf32>
    %566 = vector.shape_cast %565 : vector<1x128x128xf32> to vector<128x128xf32>
    %cst_443 = arith.constant dense<0.000000e+00> : vector<64x128xf32>
    %567 = tpu.matmul %563, %566, %cst_443 {dimension_numbers = #tpu.dot_dimension_numbers<[1], [0], [0], [1], [0, 0, 1, 1], [], []>} : vector<64x128xf32>, vector<128x128xf32>, vector<64x128xf32> -> vector<64x128xf32>
    %568 = arith.index_cast %c15_i32 : i32 to index
    %c0_444 = arith.constant 0 : index
    %c0_445 = arith.constant 0 : index
    %569 = vector.load %arg5[%568, %c0_444, %c0_445] : memref<20x1x128xf32, #tpu.memory_space<vmem>>, vector<1x1x128xf32>
    %570 = vector.shape_cast %569 : vector<1x1x128xf32> to vector<1x128xf32>
    %571 = vector.broadcast %570 : vector<1x128xf32> to vector<64x128xf32>
    %572 = arith.addf %567, %571 : vector<64x128xf32>
    %cst_446 = arith.constant 0.000000e+00 : f32
    %573 = vector.broadcast %cst_446 : f32 to vector<64x128xf32>
    %574 = arith.cmpf oge, %572, %573 : vector<64x128xf32>
    %cst_447 = arith.constant 0.00999999977 : f32
    %575 = vector.broadcast %cst_447 : f32 to vector<64x128xf32>
    %576 = arith.mulf %575, %572 : vector<64x128xf32>
    %577 = arith.select %574, %572, %576 : vector<64x128xi1>, vector<64x128xf32>
    %c16_i32 = arith.constant 16 : i32
    %c0_448 = arith.constant 0 : index
    %c0_449 = arith.constant 0 : index
    %c0_450 = arith.constant 0 : index
    %578 = vector.load %arg1[%c0_448, %c0_449, %c0_450] : memref<3x64x64xf32, #tpu.memory_space<vmem>>, vector<1x64x64xf32>
    %579 = vector.shape_cast %578 : vector<1x64x64xf32> to vector<64x64xf32>
    %cst_451 = arith.constant dense<0.000000e+00> : vector<64x128xf32>
    %580 = tpu.matmul %579, %577, %cst_451 {dimension_numbers = #tpu.dot_dimension_numbers<[1], [0], [0], [1], [0, 0, 1, 1], [], []>} : vector<64x64xf32>, vector<64x128xf32>, vector<64x128xf32> -> vector<64x128xf32>
    %c0_452 = arith.constant 0 : index
    %c0_453 = arith.constant 0 : index
    %c0_454 = arith.constant 0 : index
    %581 = vector.load %arg2[%c0_452, %c0_453, %c0_454] : memref<3x64x128xf32, #tpu.memory_space<vmem>>, vector<1x64x128xf32>
    %582 = vector.shape_cast %581 : vector<1x64x128xf32> to vector<64x128xf32>
    %583 = arith.addf %580, %582 : vector<64x128xf32>
    %584 = arith.maximumf %0, %583 : vector<64x128xf32>
    %c1_455 = arith.constant 1 : index
    %c0_456 = arith.constant 0 : index
    %c0_457 = arith.constant 0 : index
    %585 = vector.load %arg1[%c1_455, %c0_456, %c0_457] : memref<3x64x64xf32, #tpu.memory_space<vmem>>, vector<1x64x64xf32>
    %586 = vector.shape_cast %585 : vector<1x64x64xf32> to vector<64x64xf32>
    %cst_458 = arith.constant dense<0.000000e+00> : vector<64x128xf32>
    %587 = tpu.matmul %586, %577, %cst_458 {dimension_numbers = #tpu.dot_dimension_numbers<[1], [0], [0], [1], [0, 0, 1, 1], [], []>} : vector<64x64xf32>, vector<64x128xf32>, vector<64x128xf32> -> vector<64x128xf32>
    %c1_459 = arith.constant 1 : index
    %c0_460 = arith.constant 0 : index
    %c0_461 = arith.constant 0 : index
    %588 = vector.load %arg2[%c1_459, %c0_460, %c0_461] : memref<3x64x128xf32, #tpu.memory_space<vmem>>, vector<1x64x128xf32>
    %589 = vector.shape_cast %588 : vector<1x64x128xf32> to vector<64x128xf32>
    %590 = arith.addf %587, %589 : vector<64x128xf32>
    %591 = arith.maximumf %584, %590 : vector<64x128xf32>
    %c2_462 = arith.constant 2 : index
    %c0_463 = arith.constant 0 : index
    %c0_464 = arith.constant 0 : index
    %592 = vector.load %arg1[%c2_462, %c0_463, %c0_464] : memref<3x64x64xf32, #tpu.memory_space<vmem>>, vector<1x64x64xf32>
    %593 = vector.shape_cast %592 : vector<1x64x64xf32> to vector<64x64xf32>
    %cst_465 = arith.constant dense<0.000000e+00> : vector<64x128xf32>
    %594 = tpu.matmul %593, %577, %cst_465 {dimension_numbers = #tpu.dot_dimension_numbers<[1], [0], [0], [1], [0, 0, 1, 1], [], []>} : vector<64x64xf32>, vector<64x128xf32>, vector<64x128xf32> -> vector<64x128xf32>
    %c2_466 = arith.constant 2 : index
    %c0_467 = arith.constant 0 : index
    %c0_468 = arith.constant 0 : index
    %595 = vector.load %arg2[%c2_466, %c0_467, %c0_468] : memref<3x64x128xf32, #tpu.memory_space<vmem>>, vector<1x64x128xf32>
    %596 = vector.shape_cast %595 : vector<1x64x128xf32> to vector<64x128xf32>
    %597 = arith.addf %594, %596 : vector<64x128xf32>
    %598 = arith.maximumf %591, %597 : vector<64x128xf32>
    %599 = arith.addf %577, %598 : vector<64x128xf32>
    %600 = arith.index_cast %c16_i32 : i32 to index
    %c0_469 = arith.constant 0 : index
    %c0_470 = arith.constant 0 : index
    %601 = vector.load %arg4[%600, %c0_469, %c0_470] : memref<20x128x128xf32, #tpu.memory_space<vmem>>, vector<1x128x128xf32>
    %602 = vector.shape_cast %601 : vector<1x128x128xf32> to vector<128x128xf32>
    %cst_471 = arith.constant dense<0.000000e+00> : vector<64x128xf32>
    %603 = tpu.matmul %599, %602, %cst_471 {dimension_numbers = #tpu.dot_dimension_numbers<[1], [0], [0], [1], [0, 0, 1, 1], [], []>} : vector<64x128xf32>, vector<128x128xf32>, vector<64x128xf32> -> vector<64x128xf32>
    %604 = arith.index_cast %c16_i32 : i32 to index
    %c0_472 = arith.constant 0 : index
    %c0_473 = arith.constant 0 : index
    %605 = vector.load %arg5[%604, %c0_472, %c0_473] : memref<20x1x128xf32, #tpu.memory_space<vmem>>, vector<1x1x128xf32>
    %606 = vector.shape_cast %605 : vector<1x1x128xf32> to vector<1x128xf32>
    %607 = vector.broadcast %606 : vector<1x128xf32> to vector<64x128xf32>
    %608 = arith.addf %603, %607 : vector<64x128xf32>
    %cst_474 = arith.constant 0.000000e+00 : f32
    %609 = vector.broadcast %cst_474 : f32 to vector<64x128xf32>
    %610 = arith.cmpf oge, %608, %609 : vector<64x128xf32>
    %cst_475 = arith.constant 0.00999999977 : f32
    %611 = vector.broadcast %cst_475 : f32 to vector<64x128xf32>
    %612 = arith.mulf %611, %608 : vector<64x128xf32>
    %613 = arith.select %610, %608, %612 : vector<64x128xi1>, vector<64x128xf32>
    %c17_i32 = arith.constant 17 : i32
    %c0_476 = arith.constant 0 : index
    %c0_477 = arith.constant 0 : index
    %c0_478 = arith.constant 0 : index
    %614 = vector.load %arg1[%c0_476, %c0_477, %c0_478] : memref<3x64x64xf32, #tpu.memory_space<vmem>>, vector<1x64x64xf32>
    %615 = vector.shape_cast %614 : vector<1x64x64xf32> to vector<64x64xf32>
    %cst_479 = arith.constant dense<0.000000e+00> : vector<64x128xf32>
    %616 = tpu.matmul %615, %613, %cst_479 {dimension_numbers = #tpu.dot_dimension_numbers<[1], [0], [0], [1], [0, 0, 1, 1], [], []>} : vector<64x64xf32>, vector<64x128xf32>, vector<64x128xf32> -> vector<64x128xf32>
    %c0_480 = arith.constant 0 : index
    %c0_481 = arith.constant 0 : index
    %c0_482 = arith.constant 0 : index
    %617 = vector.load %arg2[%c0_480, %c0_481, %c0_482] : memref<3x64x128xf32, #tpu.memory_space<vmem>>, vector<1x64x128xf32>
    %618 = vector.shape_cast %617 : vector<1x64x128xf32> to vector<64x128xf32>
    %619 = arith.addf %616, %618 : vector<64x128xf32>
    %620 = arith.maximumf %0, %619 : vector<64x128xf32>
    %c1_483 = arith.constant 1 : index
    %c0_484 = arith.constant 0 : index
    %c0_485 = arith.constant 0 : index
    %621 = vector.load %arg1[%c1_483, %c0_484, %c0_485] : memref<3x64x64xf32, #tpu.memory_space<vmem>>, vector<1x64x64xf32>
    %622 = vector.shape_cast %621 : vector<1x64x64xf32> to vector<64x64xf32>
    %cst_486 = arith.constant dense<0.000000e+00> : vector<64x128xf32>
    %623 = tpu.matmul %622, %613, %cst_486 {dimension_numbers = #tpu.dot_dimension_numbers<[1], [0], [0], [1], [0, 0, 1, 1], [], []>} : vector<64x64xf32>, vector<64x128xf32>, vector<64x128xf32> -> vector<64x128xf32>
    %c1_487 = arith.constant 1 : index
    %c0_488 = arith.constant 0 : index
    %c0_489 = arith.constant 0 : index
    %624 = vector.load %arg2[%c1_487, %c0_488, %c0_489] : memref<3x64x128xf32, #tpu.memory_space<vmem>>, vector<1x64x128xf32>
    %625 = vector.shape_cast %624 : vector<1x64x128xf32> to vector<64x128xf32>
    %626 = arith.addf %623, %625 : vector<64x128xf32>
    %627 = arith.maximumf %620, %626 : vector<64x128xf32>
    %c2_490 = arith.constant 2 : index
    %c0_491 = arith.constant 0 : index
    %c0_492 = arith.constant 0 : index
    %628 = vector.load %arg1[%c2_490, %c0_491, %c0_492] : memref<3x64x64xf32, #tpu.memory_space<vmem>>, vector<1x64x64xf32>
    %629 = vector.shape_cast %628 : vector<1x64x64xf32> to vector<64x64xf32>
    %cst_493 = arith.constant dense<0.000000e+00> : vector<64x128xf32>
    %630 = tpu.matmul %629, %613, %cst_493 {dimension_numbers = #tpu.dot_dimension_numbers<[1], [0], [0], [1], [0, 0, 1, 1], [], []>} : vector<64x64xf32>, vector<64x128xf32>, vector<64x128xf32> -> vector<64x128xf32>
    %c2_494 = arith.constant 2 : index
    %c0_495 = arith.constant 0 : index
    %c0_496 = arith.constant 0 : index
    %631 = vector.load %arg2[%c2_494, %c0_495, %c0_496] : memref<3x64x128xf32, #tpu.memory_space<vmem>>, vector<1x64x128xf32>
    %632 = vector.shape_cast %631 : vector<1x64x128xf32> to vector<64x128xf32>
    %633 = arith.addf %630, %632 : vector<64x128xf32>
    %634 = arith.maximumf %627, %633 : vector<64x128xf32>
    %635 = arith.addf %613, %634 : vector<64x128xf32>
    %636 = arith.index_cast %c17_i32 : i32 to index
    %c0_497 = arith.constant 0 : index
    %c0_498 = arith.constant 0 : index
    %637 = vector.load %arg4[%636, %c0_497, %c0_498] : memref<20x128x128xf32, #tpu.memory_space<vmem>>, vector<1x128x128xf32>
    %638 = vector.shape_cast %637 : vector<1x128x128xf32> to vector<128x128xf32>
    %cst_499 = arith.constant dense<0.000000e+00> : vector<64x128xf32>
    %639 = tpu.matmul %635, %638, %cst_499 {dimension_numbers = #tpu.dot_dimension_numbers<[1], [0], [0], [1], [0, 0, 1, 1], [], []>} : vector<64x128xf32>, vector<128x128xf32>, vector<64x128xf32> -> vector<64x128xf32>
    %640 = arith.index_cast %c17_i32 : i32 to index
    %c0_500 = arith.constant 0 : index
    %c0_501 = arith.constant 0 : index
    %641 = vector.load %arg5[%640, %c0_500, %c0_501] : memref<20x1x128xf32, #tpu.memory_space<vmem>>, vector<1x1x128xf32>
    %642 = vector.shape_cast %641 : vector<1x1x128xf32> to vector<1x128xf32>
    %643 = vector.broadcast %642 : vector<1x128xf32> to vector<64x128xf32>
    %644 = arith.addf %639, %643 : vector<64x128xf32>
    %cst_502 = arith.constant 0.000000e+00 : f32
    %645 = vector.broadcast %cst_502 : f32 to vector<64x128xf32>
    %646 = arith.cmpf oge, %644, %645 : vector<64x128xf32>
    %cst_503 = arith.constant 0.00999999977 : f32
    %647 = vector.broadcast %cst_503 : f32 to vector<64x128xf32>
    %648 = arith.mulf %647, %644 : vector<64x128xf32>
    %649 = arith.select %646, %644, %648 : vector<64x128xi1>, vector<64x128xf32>
    %c18_i32 = arith.constant 18 : i32
    %c0_504 = arith.constant 0 : index
    %c0_505 = arith.constant 0 : index
    %c0_506 = arith.constant 0 : index
    %650 = vector.load %arg1[%c0_504, %c0_505, %c0_506] : memref<3x64x64xf32, #tpu.memory_space<vmem>>, vector<1x64x64xf32>
    %651 = vector.shape_cast %650 : vector<1x64x64xf32> to vector<64x64xf32>
    %cst_507 = arith.constant dense<0.000000e+00> : vector<64x128xf32>
    %652 = tpu.matmul %651, %649, %cst_507 {dimension_numbers = #tpu.dot_dimension_numbers<[1], [0], [0], [1], [0, 0, 1, 1], [], []>} : vector<64x64xf32>, vector<64x128xf32>, vector<64x128xf32> -> vector<64x128xf32>
    %c0_508 = arith.constant 0 : index
    %c0_509 = arith.constant 0 : index
    %c0_510 = arith.constant 0 : index
    %653 = vector.load %arg2[%c0_508, %c0_509, %c0_510] : memref<3x64x128xf32, #tpu.memory_space<vmem>>, vector<1x64x128xf32>
    %654 = vector.shape_cast %653 : vector<1x64x128xf32> to vector<64x128xf32>
    %655 = arith.addf %652, %654 : vector<64x128xf32>
    %656 = arith.maximumf %0, %655 : vector<64x128xf32>
    %c1_511 = arith.constant 1 : index
    %c0_512 = arith.constant 0 : index
    %c0_513 = arith.constant 0 : index
    %657 = vector.load %arg1[%c1_511, %c0_512, %c0_513] : memref<3x64x64xf32, #tpu.memory_space<vmem>>, vector<1x64x64xf32>
    %658 = vector.shape_cast %657 : vector<1x64x64xf32> to vector<64x64xf32>
    %cst_514 = arith.constant dense<0.000000e+00> : vector<64x128xf32>
    %659 = tpu.matmul %658, %649, %cst_514 {dimension_numbers = #tpu.dot_dimension_numbers<[1], [0], [0], [1], [0, 0, 1, 1], [], []>} : vector<64x64xf32>, vector<64x128xf32>, vector<64x128xf32> -> vector<64x128xf32>
    %c1_515 = arith.constant 1 : index
    %c0_516 = arith.constant 0 : index
    %c0_517 = arith.constant 0 : index
    %660 = vector.load %arg2[%c1_515, %c0_516, %c0_517] : memref<3x64x128xf32, #tpu.memory_space<vmem>>, vector<1x64x128xf32>
    %661 = vector.shape_cast %660 : vector<1x64x128xf32> to vector<64x128xf32>
    %662 = arith.addf %659, %661 : vector<64x128xf32>
    %663 = arith.maximumf %656, %662 : vector<64x128xf32>
    %c2_518 = arith.constant 2 : index
    %c0_519 = arith.constant 0 : index
    %c0_520 = arith.constant 0 : index
    %664 = vector.load %arg1[%c2_518, %c0_519, %c0_520] : memref<3x64x64xf32, #tpu.memory_space<vmem>>, vector<1x64x64xf32>
    %665 = vector.shape_cast %664 : vector<1x64x64xf32> to vector<64x64xf32>
    %cst_521 = arith.constant dense<0.000000e+00> : vector<64x128xf32>
    %666 = tpu.matmul %665, %649, %cst_521 {dimension_numbers = #tpu.dot_dimension_numbers<[1], [0], [0], [1], [0, 0, 1, 1], [], []>} : vector<64x64xf32>, vector<64x128xf32>, vector<64x128xf32> -> vector<64x128xf32>
    %c2_522 = arith.constant 2 : index
    %c0_523 = arith.constant 0 : index
    %c0_524 = arith.constant 0 : index
    %667 = vector.load %arg2[%c2_522, %c0_523, %c0_524] : memref<3x64x128xf32, #tpu.memory_space<vmem>>, vector<1x64x128xf32>
    %668 = vector.shape_cast %667 : vector<1x64x128xf32> to vector<64x128xf32>
    %669 = arith.addf %666, %668 : vector<64x128xf32>
    %670 = arith.maximumf %663, %669 : vector<64x128xf32>
    %671 = arith.addf %649, %670 : vector<64x128xf32>
    %672 = arith.index_cast %c18_i32 : i32 to index
    %c0_525 = arith.constant 0 : index
    %c0_526 = arith.constant 0 : index
    %673 = vector.load %arg4[%672, %c0_525, %c0_526] : memref<20x128x128xf32, #tpu.memory_space<vmem>>, vector<1x128x128xf32>
    %674 = vector.shape_cast %673 : vector<1x128x128xf32> to vector<128x128xf32>
    %cst_527 = arith.constant dense<0.000000e+00> : vector<64x128xf32>
    %675 = tpu.matmul %671, %674, %cst_527 {dimension_numbers = #tpu.dot_dimension_numbers<[1], [0], [0], [1], [0, 0, 1, 1], [], []>} : vector<64x128xf32>, vector<128x128xf32>, vector<64x128xf32> -> vector<64x128xf32>
    %676 = arith.index_cast %c18_i32 : i32 to index
    %c0_528 = arith.constant 0 : index
    %c0_529 = arith.constant 0 : index
    %677 = vector.load %arg5[%676, %c0_528, %c0_529] : memref<20x1x128xf32, #tpu.memory_space<vmem>>, vector<1x1x128xf32>
    %678 = vector.shape_cast %677 : vector<1x1x128xf32> to vector<1x128xf32>
    %679 = vector.broadcast %678 : vector<1x128xf32> to vector<64x128xf32>
    %680 = arith.addf %675, %679 : vector<64x128xf32>
    %cst_530 = arith.constant 0.000000e+00 : f32
    %681 = vector.broadcast %cst_530 : f32 to vector<64x128xf32>
    %682 = arith.cmpf oge, %680, %681 : vector<64x128xf32>
    %cst_531 = arith.constant 0.00999999977 : f32
    %683 = vector.broadcast %cst_531 : f32 to vector<64x128xf32>
    %684 = arith.mulf %683, %680 : vector<64x128xf32>
    %685 = arith.select %682, %680, %684 : vector<64x128xi1>, vector<64x128xf32>
    %c19_i32 = arith.constant 19 : i32
    %c0_532 = arith.constant 0 : index
    %c0_533 = arith.constant 0 : index
    %c0_534 = arith.constant 0 : index
    %686 = vector.load %arg1[%c0_532, %c0_533, %c0_534] : memref<3x64x64xf32, #tpu.memory_space<vmem>>, vector<1x64x64xf32>
    %687 = vector.shape_cast %686 : vector<1x64x64xf32> to vector<64x64xf32>
    %cst_535 = arith.constant dense<0.000000e+00> : vector<64x128xf32>
    %688 = tpu.matmul %687, %685, %cst_535 {dimension_numbers = #tpu.dot_dimension_numbers<[1], [0], [0], [1], [0, 0, 1, 1], [], []>} : vector<64x64xf32>, vector<64x128xf32>, vector<64x128xf32> -> vector<64x128xf32>
    %c0_536 = arith.constant 0 : index
    %c0_537 = arith.constant 0 : index
    %c0_538 = arith.constant 0 : index
    %689 = vector.load %arg2[%c0_536, %c0_537, %c0_538] : memref<3x64x128xf32, #tpu.memory_space<vmem>>, vector<1x64x128xf32>
    %690 = vector.shape_cast %689 : vector<1x64x128xf32> to vector<64x128xf32>
    %691 = arith.addf %688, %690 : vector<64x128xf32>
    %692 = arith.maximumf %0, %691 : vector<64x128xf32>
    %c1_539 = arith.constant 1 : index
    %c0_540 = arith.constant 0 : index
    %c0_541 = arith.constant 0 : index
    %693 = vector.load %arg1[%c1_539, %c0_540, %c0_541] : memref<3x64x64xf32, #tpu.memory_space<vmem>>, vector<1x64x64xf32>
    %694 = vector.shape_cast %693 : vector<1x64x64xf32> to vector<64x64xf32>
    %cst_542 = arith.constant dense<0.000000e+00> : vector<64x128xf32>
    %695 = tpu.matmul %694, %685, %cst_542 {dimension_numbers = #tpu.dot_dimension_numbers<[1], [0], [0], [1], [0, 0, 1, 1], [], []>} : vector<64x64xf32>, vector<64x128xf32>, vector<64x128xf32> -> vector<64x128xf32>
    %c1_543 = arith.constant 1 : index
    %c0_544 = arith.constant 0 : index
    %c0_545 = arith.constant 0 : index
    %696 = vector.load %arg2[%c1_543, %c0_544, %c0_545] : memref<3x64x128xf32, #tpu.memory_space<vmem>>, vector<1x64x128xf32>
    %697 = vector.shape_cast %696 : vector<1x64x128xf32> to vector<64x128xf32>
    %698 = arith.addf %695, %697 : vector<64x128xf32>
    %699 = arith.maximumf %692, %698 : vector<64x128xf32>
    %c2_546 = arith.constant 2 : index
    %c0_547 = arith.constant 0 : index
    %c0_548 = arith.constant 0 : index
    %700 = vector.load %arg1[%c2_546, %c0_547, %c0_548] : memref<3x64x64xf32, #tpu.memory_space<vmem>>, vector<1x64x64xf32>
    %701 = vector.shape_cast %700 : vector<1x64x64xf32> to vector<64x64xf32>
    %cst_549 = arith.constant dense<0.000000e+00> : vector<64x128xf32>
    %702 = tpu.matmul %701, %685, %cst_549 {dimension_numbers = #tpu.dot_dimension_numbers<[1], [0], [0], [1], [0, 0, 1, 1], [], []>} : vector<64x64xf32>, vector<64x128xf32>, vector<64x128xf32> -> vector<64x128xf32>
    %c2_550 = arith.constant 2 : index
    %c0_551 = arith.constant 0 : index
    %c0_552 = arith.constant 0 : index
    %703 = vector.load %arg2[%c2_550, %c0_551, %c0_552] : memref<3x64x128xf32, #tpu.memory_space<vmem>>, vector<1x64x128xf32>
    %704 = vector.shape_cast %703 : vector<1x64x128xf32> to vector<64x128xf32>
    %705 = arith.addf %702, %704 : vector<64x128xf32>
    %706 = arith.maximumf %699, %705 : vector<64x128xf32>
    %707 = arith.addf %685, %706 : vector<64x128xf32>
    %708 = arith.index_cast %c19_i32 : i32 to index
    %c0_553 = arith.constant 0 : index
    %c0_554 = arith.constant 0 : index
    %709 = vector.load %arg4[%708, %c0_553, %c0_554] : memref<20x128x128xf32, #tpu.memory_space<vmem>>, vector<1x128x128xf32>
    %710 = vector.shape_cast %709 : vector<1x128x128xf32> to vector<128x128xf32>
    %cst_555 = arith.constant dense<0.000000e+00> : vector<64x128xf32>
    %711 = tpu.matmul %707, %710, %cst_555 {dimension_numbers = #tpu.dot_dimension_numbers<[1], [0], [0], [1], [0, 0, 1, 1], [], []>} : vector<64x128xf32>, vector<128x128xf32>, vector<64x128xf32> -> vector<64x128xf32>
    %712 = arith.index_cast %c19_i32 : i32 to index
    %c0_556 = arith.constant 0 : index
    %c0_557 = arith.constant 0 : index
    %713 = vector.load %arg5[%712, %c0_556, %c0_557] : memref<20x1x128xf32, #tpu.memory_space<vmem>>, vector<1x1x128xf32>
    %714 = vector.shape_cast %713 : vector<1x1x128xf32> to vector<1x128xf32>
    %715 = vector.broadcast %714 : vector<1x128xf32> to vector<64x128xf32>
    %716 = arith.addf %711, %715 : vector<64x128xf32>
    %cst_558 = arith.constant 0.000000e+00 : f32
    %717 = vector.broadcast %cst_558 : f32 to vector<64x128xf32>
    %718 = arith.cmpf oge, %716, %717 : vector<64x128xf32>
    %cst_559 = arith.constant 0.00999999977 : f32
    %719 = vector.broadcast %cst_559 : f32 to vector<64x128xf32>
    %720 = arith.mulf %719, %716 : vector<64x128xf32>
    %721 = arith.select %718, %716, %720 : vector<64x128xi1>, vector<64x128xf32>
    %c20_i32 = arith.constant 20 : i32
    %c0_560 = arith.constant 0 : index
    %c0_561 = arith.constant 0 : index
    %722 = vector.load %arg6[%c0_560, %c0_561] : memref<128x128xf32, #tpu.memory_space<vmem>>, vector<128x128xf32>
    %cst_562 = arith.constant dense<0.000000e+00> : vector<64x128xf32>
    %723 = tpu.matmul %721, %722, %cst_562 {dimension_numbers = #tpu.dot_dimension_numbers<[1], [0], [0], [1], [0, 0, 1, 1], [], []>} : vector<64x128xf32>, vector<128x128xf32>, vector<64x128xf32> -> vector<64x128xf32>
    %c0_563 = arith.constant 0 : index
    %c0_564 = arith.constant 0 : index
    %724 = vector.load %arg7[%c0_563, %c0_564] : memref<1x128xf32, #tpu.memory_space<vmem>>, vector<1x128xf32>
    %725 = vector.broadcast %724 : vector<1x128xf32> to vector<64x128xf32>
    %726 = arith.addf %723, %725 : vector<64x128xf32>
    %c0_565 = arith.constant 0 : index
    %c0_566 = arith.constant 0 : index
    %727 = vector.load %arg8[%c0_565, %c0_566] : memref<64x128xf32, #tpu.memory_space<vmem>>, vector<64x128xf32>
    tpu.vector_store %arg8[%c0_565, %c0_566], %726 {strides = array<i32>} : memref<64x128xf32, #tpu.memory_space<vmem>>, vector<64x128xf32>,
    return
  }
}

</mosaic_0001>

<llo_original>
// kernel: custom-call.4
$region0: #{custom-call.4}
  %s0 = inlined_call_operand.vmem [shape: u32[192], index: 0, kind: output, shape index: {}]

// kernel: net_forward.1
$region0: #{net_forward.1}
  #allocation0 [shape = 'u32[]', space=smem, size = 0x4, offset = 0x4, fixed_abs, tag = 'smem constant byte address 0x4 - core index']
  #allocation1 [shape = 'u32[144,128]{1,0:T(1,128)}', space=vmem, size = 0x12000, scoped, tag = 'internal scratch']
  %s0 = inlined_call_operand.vmem [shape: f32[64,128], index: 0, kind: input, shape index: {}]
  %s1 = inlined_call_operand.vmem [shape: f32[3,64,64], index: 1, kind: input, shape index: {}]
  %s2 = inlined_call_operand.vmem [shape: f32[3,64,128], index: 2, kind: input, shape index: {}]
  %s3 = inlined_call_operand.vmem [shape: f32[64,128], index: 3, kind: input, shape index: {}]
  %s4 = inlined_call_operand.vmem [shape: f32[20,128,128], index: 4, kind: input, shape index: {}]
  %s5 = inlined_call_operand.vmem [shape: f32[20,1,128], index: 5, kind: input, shape index: {}]
  %s6 = inlined_call_operand.vmem [shape: f32[128,128], index: 6, kind: input, shape index: {}]
  %s7 = inlined_call_operand.vmem [shape: f32[1,128], index: 7, kind: input, shape index: {}]
  %s8 = inlined_call_operand.vmem [shape: f32[64,128], index: 8, kind: output, shape index: {}]
  %s9 = sld [smem:[#allocation0]]
  $region42: #{net_forward.1} parent=0
    _
  %s11 = ssub.s32 1, %s9
  %s12 = scalar_select 0, %s11, %s9
  // Predicated region
  $region2: #{net_forward.1} parent=0 // pred_check
    _
  $region3: #{net_forward.1} parent=0 // pred_check_branch
    %14 = sbr.rel (0) target = $region5
  $region4: #{net_forward.1} parent=0 // pred_region
    _
  $region5: #{net_forward.1} parent=0 // pred_fallthru
    _
  // Predicated region
  $region6: #{net_forward.1} parent=0 // pred_check
    _
  $region7: #{net_forward.1} parent=0 // pred_check_branch
    %16 = sbr.rel (0) target = $region9
  $region8: #{net_forward.1} parent=0 // pred_region
    _
  $region9: #{net_forward.1} parent=0 // pred_fallthru
    _
  // Predicated region
  $region10: #{net_forward.1} parent=0 // pred_check
    _
  $region11: #{net_forward.1} parent=0 // pred_check_branch
    %18 = sbr.rel (0) target = $region13
  $region12: #{net_forward.1} parent=0 // pred_region
    _
  $region13: #{net_forward.1} parent=0 // pred_fallthru
    _
  // Predicated region
  $region14: #{net_forward.1} parent=0 // pred_check
    _
  $region15: #{net_forward.1} parent=0 // pred_check_branch
    %20 = sbr.rel (0) target = $region17
  $region16: #{net_forward.1} parent=0 // pred_region
    _
  $region17: #{net_forward.1} parent=0 // pred_fallthru
    _
  // Predicated region
  $region18: #{net_forward.1} parent=0 // pred_check
    _
  $region19: #{net_forward.1} parent=0 // pred_check_branch
    %22 = sbr.rel (0) target = $region21
  $region20: #{net_forward.1} parent=0 // pred_region
    _
  $region21: #{net_forward.1} parent=0 // pred_fallthru
    _
  // Predicated region
  $region22: #{net_forward.1} parent=0 // pred_check
    _
  $region23: #{net_forward.1} parent=0 // pred_check_branch
    %24 = sbr.rel (0) target = $region25
  $region24: #{net_forward.1} parent=0 // pred_region
    _
  $region25: #{net_forward.1} parent=0 // pred_fallthru
    _
  // Predicated region
  $region26: #{net_forward.1} parent=0 // pred_check
    _
  $region27: #{net_forward.1} parent=0 // pred_check_branch
    %26 = sbr.rel (0) target = $region29
  $region28: #{net_forward.1} parent=0 // pred_region
    _
  $region29: #{net_forward.1} parent=0 // pred_fallthru
    _
  // Predicated region
  $region30: #{net_forward.1} parent=0 // pred_check
    _
  $region31: #{net_forward.1} parent=0 // pred_check_branch
    %28 = sbr.rel (0) target = $region33
  $region32: #{net_forward.1} parent=0 // pred_region
    _
  $region33: #{net_forward.1} parent=0 // pred_fallthru
    _
  %v29 = vld [vmem:[%s3] sm:$0xff]
  %v30 = vld [vmem:[%s3 + $0x8] sm:$0xff]
  %v31 = vld [vmem:[%s3 + $0x10] sm:$0xff]
  %v32 = vld [vmem:[%s3 + $0x18] sm:$0xff]
  %v33 = vld [vmem:[%s3 + $0x20] sm:$0xff]
  %v34 = vld [vmem:[%s3 + $0x28] sm:$0xff]
  %v35 = vld [vmem:[%s3 + $0x30] sm:$0xff]
  %v36 = vld [vmem:[%s3 + $0x38] sm:$0xff]
  %v37 = vld [vmem:[%s0] sm:$0xff]
  %v38 = vld [vmem:[%s0 + $0x8] sm:$0xff]
  %v39 = vld [vmem:[%s0 + $0x10] sm:$0xff]
  %v40 = vld [vmem:[%s0 + $0x18] sm:$0xff]
  %v41 = vld [vmem:[%s0 + $0x20] sm:$0xff]
  %v42 = vld [vmem:[%s0 + $0x28] sm:$0xff]
  %v43 = vld [vmem:[%s0 + $0x30] sm:$0xff]
  %v44 = vld [vmem:[%s0 + $0x38] sm:$0xff]
  %v45 = vld [vmem:[%s1] sm:$0xff]
  %v46 = vld [vmem:[%s1 + $0x8] sm:$0xff]
  %v47 = vld [vmem:[%s1 + $0x10] sm:$0xff]
  %v48 = vld [vmem:[%s1 + $0x18] sm:$0xff]
  %v49 = vld [vmem:[%s1 + $0x20] sm:$0xff]
  %v50 = vld [vmem:[%s1 + $0x28] sm:$0xff]
  %v51 = vld [vmem:[%s1 + $0x30] sm:$0xff]
  %v52 = vld [vmem:[%s1 + $0x38] sm:$0xff]
  %v53 = vld [vmem:[%s2] sm:$0xff]
  %v54 = vld [vmem:[%s2 + $0x8] sm:$0xff]
  %v55 = vld [vmem:[%s2 + $0x10] sm:$0xff]
  %v56 = vld [vmem:[%s2 + $0x18] sm:$0xff]
  %v57 = vld [vmem:[%s2 + $0x20] sm:$0xff]
  %v58 = vld [vmem:[%s2 + $0x28] sm:$0xff]
  %v59 = vld [vmem:[%s2 + $0x30] sm:$0xff]
  %v60 = vld [vmem:[%s2 + $0x38] sm:$0xff]
  %vm61 = vcmask 523264
  %v63 = vsel %vm61, %v45, 0
  %v66 = vsel %vm61, %v46, 0
  %v69 = vsel %vm61, %v47, 0
  %v72 = vsel %vm61, %v48, 0
  %v75 = vsel %vm61, %v49, 0
  %v78 = vsel %vm61, %v50, 0
  %v81 = vsel %vm61, %v51, 0
  %v84 = vsel %vm61, %v52, 0
  %86 = vmatprep.subr.mxu0 0.0
  %87 = vmatpush1.msra.mxu0 %v37
  %88 = vmatprep.subr.mxu0 0.0
  %89 = vmatpush1.msra.mxu0 %v38
  %90 = vmatprep.subr.mxu0 0.0
  %91 = vmatpush1.msra.mxu0 %v39
  %92 = vmatprep.subr.mxu0 0.0
  %93 = vmatpush1.msra.mxu0 %v40
  %94 = vmatprep.subr.mxu0 0.0
  %95 = vmatpush1.msra.mxu0 %v41
  %96 = vmatprep.subr.mxu0 0.0
  %97 = vmatpush1.msra.mxu0 %v42
  %98 = vmatprep.subr.mxu0 0.0
  %99 = vmatpush1.msra.mxu0 %v43
  %100 = vmatprep.subr.mxu0 0.0
  %101 = vmatpush1.msra.mxu0 %v44
  %102 = vmatprep.subr.mxu0 0.0
  %103 = vmatpush1.msra.mxu0 0.0
  %104 = vmatprep.subr.mxu0 0.0
  %105 = vmatpush1.msra.mxu0 0.0
  %106 = vmatprep.subr.mxu0 0.0
  %107 = vmatpush1.msra.mxu0 0.0
  %108 = vmatprep.subr.mxu0 0.0
  %109 = vmatpush1.msra.mxu0 0.0
  %110 = vmatprep.subr.mxu0 0.0
  %111 = vmatpush1.msra.mxu0 0.0
  %112 = vmatprep.subr.mxu0 0.0
  %113 = vmatpush1.msra.mxu0 0.0
  %114 = vmatprep.subr.mxu0 0.0
  %115 = vmatpush1.msra.mxu0 0.0
  %116 = vmatprep.subr.mxu0 0.0
  %117 = vmatpush1.msra.mxu0 0.0
  %118 = vmatprep.subr.mxu0 0.0
  %119 = vmatpush1.msra.mxu0 0.0
  %120 = vmatprep.subr.mxu0 0.0
  %121 = vmatpush1.msra.mxu0 0.0
  %122 = vmatprep.subr.mxu0 0.0
  %123 = vmatpush1.msra.mxu0 0.0
  %124 = vmatprep.subr.mxu0 0.0
  %125 = vmatpush1.msra.mxu0 0.0
  %126 = vmatprep.subr.mxu0 0.0
  %127 = vmatpush1.msra.mxu0 0.0
  %128 = vmatprep.subr.mxu0 0.0
  %129 = vmatpush1.msra.mxu0 0.0
  %130 = vmatprep.subr.mxu0 0.0
  %131 = vmatpush1.msra.mxu0 0.0
  %132 = vmatprep.subr.mxu0 0.0
  %133 = vmatpush1.msra.mxu0 0.0
  %134 = vmatprep.subr.mxu0 0.0
  %135 = vmatpush1.msra.mxu0 0.0
  %136 = vmatprep.subr.mxu0 0.0
  %137 = vmatpush1.msra.mxu0 0.0
  %138 = vmatprep.subr.mxu0 0.0
  %139 = vmatpush1.msra.mxu0 0.0
  %140 = vmatprep.subr.mxu0 0.0
  %141 = vmatpush1.msra.mxu0 0.0
  %142 = vmatprep.subr.mxu0 0.0
  %143 = vmatpush1.msra.mxu0 0.0
  %144 = vmatprep.subr.mxu0 0.0
  %145 = vmatpush1.msra.mxu0 0.0
  %146 = vmatprep.subr.mxu0 0.0
  %147 = vmatpush1.msra.mxu0 0.0
  %148 = vmatprep.subr.mxu0 0.0
  %149 = vmatpush1.msra.mxu0 0.0
  %150 = vmatprep.mubr.f32.mxu0 0.0
  %151 = vmatmul.mubr.f32.gmra.mrb[0].mxu0 %v63
  %v152 = vpop.f32.mrb[0].mxu0
  %v153 = vadd.f32 %v53, %v152
  %v154 = vpop.f32.mrb[0].mxu0
  %155 = vmatprep.mubr.f32.mxu0 0.0
  %156 = vmatmul.mubr.f32.gmra.mrb[0].mxu0 %v66
  %v157 = vpop.f32.mrb[0].mxu0
  %v158 = vadd.f32 %v54, %v157
  %v159 = vpop.f32.mrb[0].mxu0
  %160 = vmatprep.mubr.f32.mxu0 0.0
  %161 = vmatmul.mubr.f32.gmra.mrb[0].mxu0 %v69
  %v162 = vpop.f32.mrb[0].mxu0
  %v163 = vadd.f32 %v55, %v162
  %v164 = vpop.f32.mrb[0].mxu0
  %165 = vmatprep.mubr.f32.mxu0 0.0
  %166 = vmatmul.mubr.f32.gmra.mrb[0].mxu0 %v72
  %v167 = vpop.f32.mrb[0].mxu0
  %v168 = vadd.f32 %v56, %v167
  %v169 = vpop.f32.mrb[0].mxu0
  %170 = vmatprep.mubr.f32.mxu0 0.0
  %171 = vmatmul.mubr.f32.gmra.mrb[0].mxu0 %v75
  %v172 = vpop.f32.mrb[0].mxu0
  %v173 = vadd.f32 %v57, %v172
  %v174 = vpop.f32.mrb[0].mxu0
  %175 = vmatprep.mubr.f32.mxu0 0.0
  %176 = vmatmul.mubr.f32.gmra.mrb[0].mxu0 %v78
  %v177 = vpop.f32.mrb[0].mxu0
  %v178 = vadd.f32 %v58, %v177
  %v179 = vpop.f32.mrb[0].mxu0
  %180 = vmatprep.mubr.f32.mxu0 0.0
  %181 = vmatmul.mubr.f32.gmra.mrb[0].mxu0 %v81
  %v182 = vpop.f32.mrb[0].mxu0
  %v183 = vadd.f32 %v59, %v182
  %v184 = vpop.f32.mrb[0].mxu0
  %185 = vmatprep.mubr.f32.mxu0 0.0
  %186 = vmatmul.mubr.f32.gmra.mrb[0].mxu0 %v84
  %v187 = vpop.f32.mrb[0].mxu0
  %v188 = vadd.f32 %v60, %v187
  %v189 = vpop.f32.mrb[0].mxu0
  %190 = vdwg.mxu0
  %v191 = vmax.f32 %v29, %v153
  %v192 = vmax.f32 %v30, %v158
  %v193 = vmax.f32 %v31, %v163
  %v194 = vmax.f32 %v32, %v168
  %v195 = vmax.f32 %v33, %v173
  %v196 = vmax.f32 %v34, %v178
  %v197 = vmax.f32 %v35, %v183
  %v198 = vmax.f32 %v36, %v188
  %s199 = scalar_lea.vmem %s1, 64
  %v200 = vld [vmem:[%s199] sm:$0xff]
  %v201 = vld [vmem:[%s199 + $0x8] sm:$0xff]
  %v202 = vld [vmem:[%s199 + $0x10] sm:$0xff]
  %v203 = vld [vmem:[%s199 + $0x18] sm:$0xff]
  %v204 = vld [vmem:[%s199 + $0x20] sm:$0xff]
  %v205 = vld [vmem:[%s199 + $0x28] sm:$0xff]
  %v206 = vld [vmem:[%s199 + $0x30] sm:$0xff]
  %v207 = vld [vmem:[%s199 + $0x38] sm:$0xff]
  %s208 = scalar_lea.vmem %s2, 64
  %v209 = vld [vmem:[%s208] sm:$0xff]
  %v210 = vld [vmem:[%s208 + $0x8] sm:$0xff]
  %v211 = vld [vmem:[%s208 + $0x10] sm:$0xff]
  %v212 = vld [vmem:[%s208 + $0x18] sm:$0xff]
  %v213 = vld [vmem:[%s208 + $0x20] sm:$0xff]
  %v214 = vld [vmem:[%s208 + $0x28] sm:$0xff]
  %v215 = vld [vmem:[%s208 + $0x30] sm:$0xff]
  %v216 = vld [vmem:[%s208 + $0x38] sm:$0xff]
  %v218 = vsel %vm61, %v200, 0
  %v221 = vsel %vm61, %v201, 0
  %v224 = vsel %vm61, %v202, 0
  %v227 = vsel %vm61, %v203, 0
  %v230 = vsel %vm61, %v204, 0
  %v233 = vsel %vm61, %v205, 0
  %v236 = vsel %vm61, %v206, 0
  %v239 = vsel %vm61, %v207, 0
  %241 = vmatprep.subr.mxu0 0.0
  %242 = vmatpush1.msra.mxu0 %v37
  %243 = vmatprep.subr.mxu0 0.0
  %244 = vmatpush1.msra.mxu0 %v38
  %245 = vmatprep.subr.mxu0 0.0
  %246 = vmatpush1.msra.mxu0 %v39
  %247 = vmatprep.subr.mxu0 0.0
  %248 = vmatpush1.msra.mxu0 %v40
  %249 = vmatprep.subr.mxu0 0.0
  %250 = vmatpush1.msra.mxu0 %v41
  %251 = vmatprep.subr.mxu0 0.0
  %252 = vmatpush1.msra.mxu0 %v42
  %253 = vmatprep.subr.mxu0 0.0
  %254 = vmatpush1.msra.mxu0 %v43
  %255 = vmatprep.subr.mxu0 0.0
  %256 = vmatpush1.msra.mxu0 %v44
  %257 = vmatprep.subr.mxu0 0.0
  %258 = vmatpush1.msra.mxu0 0.0
  %259 = vmatprep.subr.mxu0 0.0
  %260 = vmatpush1.msra.mxu0 0.0
  %261 = vmatprep.subr.mxu0 0.0
  %262 = vmatpush1.msra.mxu0 0.0
  %263 = vmatprep.subr.mxu0 0.0
  %264 = vmatpush1.msra.mxu0 0.0
  %265 = vmatprep.subr.mxu0 0.0
  %266 = vmatpush1.msra.mxu0 0.0
  %267 = vmatprep.subr.mxu0 0.0
  %268 = vmatpush1.msra.mxu0 0.0
  %269 = vmatprep.subr.mxu0 0.0
  %270 = vmatpush1.msra.mxu0 0.0
  %271 = vmatprep.subr.mxu0 0.0
  %272 = vmatpush1.msra.mxu0 0.0
  %273 = vmatprep.subr.mxu0 0.0
  %274 = vmatpush1.msra.mxu0 0.0
  %275 = vmatprep.subr.mxu0 0.0
  %276 = vmatpush1.msra.mxu0 0.0
  %277 = vmatprep.subr.mxu0 0.0
  %278 = vmatpush1.msra.mxu0 0.0
  %279 = vmatprep.subr.mxu0 0.0
  %280 = vmatpush1.msra.mxu0 0.0
  %281 = vmatprep.subr.mxu0 0.0
  %282 = vmatpush1.msra.mxu0 0.0
  %283 = vmatprep.subr.mxu0 0.0
  %284 = vmatpush1.msra.mxu0 0.0
  %285 = vmatprep.subr.mxu0 0.0
  %286 = vmatpush1.msra.mxu0 0.0
  %287 = vmatprep.subr.mxu0 0.0
  %288 = vmatpush1.msra.mxu0 0.0
  %289 = vmatprep.subr.mxu0 0.0
  %290 = vmatpush1.msra.mxu0 0.0
  %291 = vmatprep.subr.mxu0 0.0
  %292 = vmatpush1.msra.mxu0 0.0
  %293 = vmatprep.subr.mxu0 0.0
  %294 = vmatpush1.msra.mxu0 0.0
  %295 = vmatprep.subr.mxu0 0.0
  %296 = vmatpush1.msra.mxu0 0.0
  %297 = vmatprep.subr.mxu0 0.0
  %298 = vmatpush1.msra.mxu0 0.0
  %299 = vmatprep.subr.mxu0 0.0
  %300 = vmatpush1.msra.mxu0 0.0
  %301 = vmatprep.subr.mxu0 0.0
  %302 = vmatpush1.msra.mxu0 0.0
  %303 = vmatprep.subr.mxu0 0.0
  %304 = vmatpush1.msra.mxu0 0.0
  %305 = vmatprep.mubr.f32.mxu0 0.0
  %306 = vmatmul.mubr.f32.gmra.mrb[0].mxu0 %v218
  %v307 = vpop.f32.mrb[0].mxu0
  %v308 = vadd.f32 %v209, %v307
  %v309 = vpop.f32.mrb[0].mxu0
  %310 = vmatprep.mubr.f32.mxu0 0.0
  %311 = vmatmul.mubr.f32.gmra.mrb[0].mxu0 %v221
  %v312 = vpop.f32.mrb[0].mxu0
  %v313 = vadd.f32 %v210, %v312
  %v314 = vpop.f32.mrb[0].mxu0
  %315 = vmatprep.mubr.f32.mxu0 0.0
  %316 = vmatmul.mubr.f32.gmra.mrb[0].mxu0 %v224
  %v317 = vpop.f32.mrb[0].mxu0
  %v318 = vadd.f32 %v211, %v317
  %v319 = vpop.f32.mrb[0].mxu0
  %320 = vmatprep.mubr.f32.mxu0 0.0
  %321 = vmatmul.mubr.f32.gmra.mrb[0].mxu0 %v227
  %v322 = vpop.f32.mrb[0].mxu0
  %v323 = vadd.f32 %v212, %v322
  %v324 = vpop.f32.mrb[0].mxu0
  %325 = vmatprep.mubr.f32.mxu0 0.0
  %326 = vmatmul.mubr.f32.gmra.mrb[0].mxu0 %v230
  %v327 = vpop.f32.mrb[0].mxu0
  %v328 = vadd.f32 %v213, %v327
  %v329 = vpop.f32.mrb[0].mxu0
  %330 = vmatprep.mubr.f32.mxu0 0.0
  %331 = vmatmul.mubr.f32.gmra.mrb[0].mxu0 %v233
  %v332 = vpop.f32.mrb[0].mxu0
  %v333 = vadd.f32 %v214, %v332
  %v334 = vpop.f32.mrb[0].mxu0
  %335 = vmatprep.mubr.f32.mxu0 0.0
  %336 = vmatmul.mubr.f32.gmra.mrb[0].mxu0 %v236
  %v337 = vpop.f32.mrb[0].mxu0
  %v338 = vadd.f32 %v215, %v337
  %v339 = vpop.f32.mrb[0].mxu0
  %340 = vmatprep.mubr.f32.mxu0 0.0
  %341 = vmatmul.mubr.f32.gmra.mrb[0].mxu0 %v239
  %v342 = vpop.f32.mrb[0].mxu0
  %v343 = vadd.f32 %v216, %v342
  %v344 = vpop.f32.mrb[0].mxu0
  %345 = vdwg.mxu0
  %v346 = vmax.f32 %v191, %v308
  %v347 = vmax.f32 %v192, %v313
  %v348 = vmax.f32 %v193, %v318
  %v349 = vmax.f32 %v194, %v323
  %v350 = vmax.f32 %v195, %v328
  %v351 = vmax.f32 %v196, %v333
  %v352 = vmax.f32 %v197, %v338
  %v353 = vmax.f32 %v198, %v343
  %s354 = scalar_lea.vmem %s1, 128
  %v355 = vld [vmem:[%s354] sm:$0xff]
  %v356 = vld [vmem:[%s354 + $0x8] sm:$0xff]
  %v357 = vld [vmem:[%s354 + $0x10] sm:$0xff]
  %v358 = vld [vmem:[%s354 + $0x18] sm:$0xff]
  %v359 = vld [vmem:[%s354 + $0x20] sm:$0xff]
  %v360 = vld [vmem:[%s354 + $0x28] sm:$0xff]
  %v361 = vld [vmem:[%s354 + $0x30] sm:$0xff]
  %v362 = vld [vmem:[%s354 + $0x38] sm:$0xff]
  %s363 = scalar_lea.vmem %s2, 128
  %v364 = vld [vmem:[%s363] sm:$0xff]
  %v365 = vld [vmem:[%s363 + $0x8] sm:$0xff]
  %v366 = vld [vmem:[%s363 + $0x10] sm:$0xff]
  %v367 = vld [vmem:[%s363 + $0x18] sm:$0xff]
  %v368 = vld [vmem:[%s363 + $0x20] sm:$0xff]
  %v369 = vld [vmem:[%s363 + $0x28] sm:$0xff]
  %v370 = vld [vmem:[%s363 + $0x30] sm:$0xff]
  %v371 = vld [vmem:[%s363 + $0x38] sm:$0xff]
  %v373 = vsel %vm61, %v355, 0
  %v376 = vsel %vm61, %v356, 0
  %v379 = vsel %vm61, %v357, 0
  %v382 = vsel %vm61, %v358, 0
  %v385 = vsel %vm61, %v359, 0
  %v388 = vsel %vm61, %v360, 0
  %v391 = vsel %vm61, %v361, 0
  %v394 = vsel %vm61, %v362, 0
  %396 = vmatprep.subr.mxu0 0.0
  %397 = vmatpush1.msra.mxu0 %v37
  %398 = vmatprep.subr.mxu0 0.0
  %399 = vmatpush1.msra.mxu0 %v38
  %400 = vmatprep.subr.mxu0 0.0
  %401 = vmatpush1.msra.mxu0 %v39
  %402 = vmatprep.subr.mxu0 0.0
  %403 = vmatpush1.msra.mxu0 %v40
  %404 = vmatprep.subr.mxu0 0.0
  %405 = vmatpush1.msra.mxu0 %v41
  %406 = vmatprep.subr.mxu0 0.0
  %407 = vmatpush1.msra.mxu0 %v42
  %408 = vmatprep.subr.mxu0 0.0
  %409 = vmatpush1.msra.mxu0 %v43
  %410 = vmatprep.subr.mxu0 0.0
  %411 = vmatpush1.msra.mxu0 %v44
  %412 = vmatprep.subr.mxu0 0.0
  %413 = vmatpush1.msra.mxu0 0.0
  %414 = vmatprep.subr.mxu0 0.0
  %415 = vmatpush1.msra.mxu0 0.0
  %416 = vmatprep.subr.mxu0 0.0
  %417 = vmatpush1.msra.mxu0 0.0
  %418 = vmatprep.subr.mxu0 0.0
  %419 = vmatpush1.msra.mxu0 0.0
  %420 = vmatprep.subr.mxu0 0.0
  %421 = vmatpush1.msra.mxu0 0.0
  %422 = vmatprep.subr.mxu0 0.0
  %423 = vmatpush1.msra.mxu0 0.0
  %424 = vmatprep.subr.mxu0 0.0
  %425 = vmatpush1.msra.mxu0 0.0
  %426 = vmatprep.subr.mxu0 0.0
  %427 = vmatpush1.msra.mxu0 0.0
  %428 = vmatprep.subr.mxu0 0.0
  %429 = vmatpush1.msra.mxu0 0.0
  %430 = vmatprep.subr.mxu0 0.0
  %431 = vmatpush1.msra.mxu0 0.0
  %432 = vmatprep.subr.mxu0 0.0
  %433 = vmatpush1.msra.mxu0 0.0
  %434 = vmatprep.subr.mxu0 0.0
  %435 = vmatpush1.msra.mxu0 0.0
  %436 = vmatprep.subr.mxu0 0.0
  %437 = vmatpush1.msra.mxu0 0.0
  %438 = vmatprep.subr.mxu0 0.0
  %439 = vmatpush1.msra.mxu0 0.0
  %440 = vmatprep.subr.mxu0 0.0
  %441 = vmatpush1.msra.mxu0 0.0
  %442 = vmatprep.subr.mxu0 0.0
  %443 = vmatpush1.msra.mxu0 0.0
  %444 = vmatprep.subr.mxu0 0.0
  %445 = vmatpush1.msra.mxu0 0.0
  %446 = vmatprep.subr.mxu0 0.0
  %447 = vmatpush1.msra.mxu0 0.0
  %448 = vmatprep.subr.mxu0 0.0
  %449 = vmatpush1.msra.mxu0 0.0
  %450 = vmatprep.subr.mxu0 0.0
  %451 = vmatpush1.msra.mxu0 0.0
  %452 = vmatprep.subr.mxu0 0.0
  %453 = vmatpush1.msra.mxu0 0.0
  %454 = vmatprep.subr.mxu0 0.0
  %455 = vmatpush1.msra.mxu0 0.0
  %456 = vmatprep.subr.mxu0 0.0
  %457 = vmatpush1.msra.mxu0 0.0
  %458 = vmatprep.subr.mxu0 0.0
  %459 = vmatpush1.msra.mxu0 0.0
  %460 = vmatprep.mubr.f32.mxu0 0.0
  %461 = vmatmul.mubr.f32.gmra.mrb[0].mxu0 %v373
  %v462 = vpop.f32.mrb[0].mxu0
  %v463 = vadd.f32 %v364, %v462
  %v464 = vpop.f32.mrb[0].mxu0
  %465 = vmatprep.mubr.f32.mxu0 0.0
  %466 = vmatmul.mubr.f32.gmra.mrb[0].mxu0 %v376
  %v467 = vpop.f32.mrb[0].mxu0
  %v468 = vadd.f32 %v365, %v467
  %v469 = vpop.f32.mrb[0].mxu0
  %470 = vmatprep.mubr.f32.mxu0 0.0
  %471 = vmatmul.mubr.f32.gmra.mrb[0].mxu0 %v379
  %v472 = vpop.f32.mrb[0].mxu0
  %v473 = vadd.f32 %v366, %v472
  %v474 = vpop.f32.mrb[0].mxu0
  %475 = vmatprep.mubr.f32.mxu0 0.0
  %476 = vmatmul.mubr.f32.gmra.mrb[0].mxu0 %v382
  %v477 = vpop.f32.mrb[0].mxu0
  %v478 = vadd.f32 %v367, %v477
  %v479 = vpop.f32.mrb[0].mxu0
  %480 = vmatprep.mubr.f32.mxu0 0.0
  %481 = vmatmul.mubr.f32.gmra.mrb[0].mxu0 %v385
  %v482 = vpop.f32.mrb[0].mxu0
  %v483 = vadd.f32 %v368, %v482
  %v484 = vpop.f32.mrb[0].mxu0
  %485 = vmatprep.mubr.f32.mxu0 0.0
  %486 = vmatmul.mubr.f32.gmra.mrb[0].mxu0 %v388
  %v487 = vpop.f32.mrb[0].mxu0
  %v488 = vadd.f32 %v369, %v487
  %v489 = vpop.f32.mrb[0].mxu0
  %490 = vmatprep.mubr.f32.mxu0 0.0
  %491 = vmatmul.mubr.f32.gmra.mrb[0].mxu0 %v391
  %v492 = vpop.f32.mrb[0].mxu0
  %v493 = vadd.f32 %v370, %v492
  %v494 = vpop.f32.mrb[0].mxu0
  %495 = vmatprep.mubr.f32.mxu0 0.0
  %496 = vmatmul.mubr.f32.gmra.mrb[0].mxu0 %v394
  %v497 = vpop.f32.mrb[0].mxu0
  %v498 = vadd.f32 %v371, %v497
  %v499 = vpop.f32.mrb[0].mxu0
  %500 = vdwg.mxu0
  %v501 = vmax.f32 %v346, %v463
  %v502 = vmax.f32 %v347, %v468
  %v503 = vmax.f32 %v348, %v473
  %v504 = vmax.f32 %v349, %v478
  %v505 = vmax.f32 %v350, %v483
  %v506 = vmax.f32 %v351, %v488
  %v507 = vmax.f32 %v352, %v493
  %v508 = vmax.f32 %v353, %v498
  %v509 = vadd.f32 %v37, %v501
  %v510 = vadd.f32 %v38, %v502
  %v511 = vadd.f32 %v39, %v503
  %v512 = vadd.f32 %v40, %v504
  %v513 = vadd.f32 %v41, %v505
  %v514 = vadd.f32 %v42, %v506
  %v515 = vadd.f32 %v43, %v507
  %v516 = vadd.f32 %v44, %v508
  %v517 = vld [vmem:[%s4] sm:$0xff]
  %v518 = vld [vmem:[%s4 + $0x8] sm:$0xff]
  %v519 = vld [vmem:[%s4 + $0x10] sm:$0xff]
  %v520 = vld [vmem:[%s4 + $0x18] sm:$0xff]
  %v521 = vld [vmem:[%s4 + $0x20] sm:$0xff]
  %v522 = vld [vmem:[%s4 + $0x28] sm:$0xff]
  %v523 = vld [vmem:[%s4 + $0x30] sm:$0xff]
  %v524 = vld [vmem:[%s4 + $0x38] sm:$0xff]
  %v525 = vld [vmem:[%s4 + $0x40] sm:$0xff]
  %v526 = vld [vmem:[%s4 + $0x48] sm:$0xff]
  %v527 = vld [vmem:[%s4 + $0x50] sm:$0xff]
  %v528 = vld [vmem:[%s4 + $0x58] sm:$0xff]
  %v529 = vld [vmem:[%s4 + $0x60] sm:$0xff]
  %v530 = vld [vmem:[%s4 + $0x68] sm:$0xff]
  %v531 = vld [vmem:[%s4 + $0x70] sm:$0xff]
  %v532 = vld [vmem:[%s4 + $0x78] sm:$0xff]
  %v533 = vld [vmem:[%s5] sm:$0x1]
  %v535 = vlaneseq
  %v536 = vshrl.u32 %v535, 7
  %v537 = vsub.s32 0, %v536
  %v538 = vrot.slane %v533, %v537
  %540 = vmatprep.subr.mxu0 0.0
  %541 = vmatpush1.msra.mxu0 %v517
  %542 = vmatprep.subr.mxu0 0.0
  %543 = vmatpush1.msra.mxu0 %v518
  %544 = vmatprep.subr.mxu0 0.0
  %545 = vmatpush1.msra.mxu0 %v519
  %546 = vmatprep.subr.mxu0 0.0
  %547 = vmatpush1.msra.mxu0 %v520
  %548 = vmatprep.subr.mxu0 0.0
  %549 = vmatpush1.msra.mxu0 %v521
  %550 = vmatprep.subr.mxu0 0.0
  %551 = vmatpush1.msra.mxu0 %v522
  %552 = vmatprep.subr.mxu0 0.0
  %553 = vmatpush1.msra.mxu0 %v523
  %554 = vmatprep.subr.mxu0 0.0
  %555 = vmatpush1.msra.mxu0 %v524
  %556 = vmatprep.subr.mxu0 0.0
  %557 = vmatpush1.msra.mxu0 %v525
  %558 = vmatprep.subr.mxu0 0.0
  %559 = vmatpush1.msra.mxu0 %v526
  %560 = vmatprep.subr.mxu0 0.0
  %561 = vmatpush1.msra.mxu0 %v527
  %562 = vmatprep.subr.mxu0 0.0
  %563 = vmatpush1.msra.mxu0 %v528
  %564 = vmatprep.subr.mxu0 0.0
  %565 = vmatpush1.msra.mxu0 %v529
  %566 = vmatprep.subr.mxu0 0.0
  %567 = vmatpush1.msra.mxu0 %v530
  %568 = vmatprep.subr.mxu0 0.0
  %569 = vmatpush1.msra.mxu0 %v531
  %570 = vmatprep.subr.mxu0 0.0
  %571 = vmatpush1.msra.mxu0 %v532
  %572 = vmatprep.subr.mxu0 0.0
  %573 = vmatpush1.msra.mxu0 0.0
  %574 = vmatprep.subr.mxu0 0.0
  %575 = vmatpush1.msra.mxu0 0.0
  %576 = vmatprep.subr.mxu0 0.0
  %577 = vmatpush1.msra.mxu0 0.0
  %578 = vmatprep.subr.mxu0 0.0
  %579 = vmatpush1.msra.mxu0 0.0
  %580 = vmatprep.subr.mxu0 0.0
  %581 = vmatpush1.msra.mxu0 0.0
  %582 = vmatprep.subr.mxu0 0.0
  %583 = vmatpush1.msra.mxu0 0.0
  %584 = vmatprep.subr.mxu0 0.0
  %585 = vmatpush1.msra.mxu0 0.0
  %586 = vmatprep.subr.mxu0 0.0
  %587 = vmatpush1.msra.mxu0 0.0
  %588 = vmatprep.subr.mxu0 0.0
  %589 = vmatpush1.msra.mxu0 0.0
  %590 = vmatprep.subr.mxu0 0.0
  %591 = vmatpush1.msra.mxu0 0.0
  %592 = vmatprep.subr.mxu0 0.0
  %593 = vmatpush1.msra.mxu0 0.0
  %594 = vmatprep.subr.mxu0 0.0
  %595 = vmatpush1.msra.mxu0 0.0
  %596 = vmatprep.subr.mxu0 0.0
  %597 = vmatpush1.msra.mxu0 0.0
  %598 = vmatprep.subr.mxu0 0.0
  %599 = vmatpush1.msra.mxu0 0.0
  %600 = vmatprep.subr.mxu0 0.0
  %601 = vmatpush1.msra.mxu0 0.0
  %602 = vmatprep.subr.mxu0 0.0
  %603 = vmatpush1.msra.mxu0 0.0
  %604 = vmatprep.mubr.f32.mxu0 0.0
  %605 = vmatmul.mubr.f32.gmra.mrb[0].mxu0 %v509
  %v606 = vpop.f32.mrb[0].mxu0
  %v607 = vadd.f32 %v538, %v606
  %v608 = vpop.f32.mrb[0].mxu0
  %609 = vmatprep.mubr.f32.mxu0 0.0
  %610 = vmatmul.mubr.f32.gmra.mrb[0].mxu0 %v510
  %v611 = vpop.f32.mrb[0].mxu0
  %v612 = vadd.f32 %v538, %v611
  %v613 = vpop.f32.mrb[0].mxu0
  %614 = vmatprep.mubr.f32.mxu0 0.0
  %615 = vmatmul.mubr.f32.gmra.mrb[0].mxu0 %v511
  %v616 = vpop.f32.mrb[0].mxu0
  %v617 = vadd.f32 %v538, %v616
  %v618 = vpop.f32.mrb[0].mxu0
  %619 = vmatprep.mubr.f32.mxu0 0.0
  %620 = vmatmul.mubr.f32.gmra.mrb[0].mxu0 %v512
  %v621 = vpop.f32.mrb[0].mxu0
  %v622 = vadd.f32 %v538, %v621
  %v623 = vpop.f32.mrb[0].mxu0
  %624 = vmatprep.mubr.f32.mxu0 0.0
  %625 = vmatmul.mubr.f32.gmra.mrb[0].mxu0 %v513
  %v626 = vpop.f32.mrb[0].mxu0
  %v627 = vadd.f32 %v538, %v626
  %v628 = vpop.f32.mrb[0].mxu0
  %629 = vmatprep.mubr.f32.mxu0 0.0
  %630 = vmatmul.mubr.f32.gmra.mrb[0].mxu0 %v514
  %v631 = vpop.f32.mrb[0].mxu0
  %v632 = vadd.f32 %v538, %v631
  %v633 = vpop.f32.mrb[0].mxu0
  %634 = vmatprep.mubr.f32.mxu0 0.0
  %635 = vmatmul.mubr.f32.gmra.mrb[0].mxu0 %v515
  %v636 = vpop.f32.mrb[0].mxu0
  %v637 = vadd.f32 %v538, %v636
  %v638 = vpop.f32.mrb[0].mxu0
  %639 = vmatprep.mubr.f32.mxu0 0.0
  %640 = vmatmul.mubr.f32.gmra.mrb[0].mxu0 %v516
  %v641 = vpop.f32.mrb[0].mxu0
  %v642 = vadd.f32 %v538, %v641
  %v643 = vpop.f32.mrb[0].mxu0
  %644 = vdwg.mxu0
  %vm645 = vcmp.ge.f32.partialorder %v607, 0.0
  %vm646 = vcmp.ge.f32.partialorder %v612, 0.0
  %vm647 = vcmp.ge.f32.partialorder %v617, 0.0
  %vm648 = vcmp.ge.f32.partialorder %v622, 0.0
  %vm649 = vcmp.ge.f32.partialorder %v627, 0.0
  %vm650 = vcmp.ge.f32.partialorder %v632, 0.0
  %vm651 = vcmp.ge.f32.partialorder %v637, 0.0
  %vm652 = vcmp.ge.f32.partialorder %v642, 0.0
  %v653 = vmul.f32 %v607, 0.01
  %v654 = vmul.f32 %v612, 0.01
  %v655 = vmul.f32 %v617, 0.01
  %v656 = vmul.f32 %v622, 0.01
  %v657 = vmul.f32 %v627, 0.01
  %v658 = vmul.f32 %v632, 0.01
  %v659 = vmul.f32 %v637, 0.01
  %v660 = vmul.f32 %v642, 0.01
  %v661 = vsel %vm645, %v607, %v653
  %v662 = vsel %vm646, %v612, %v654
  %v663 = vsel %vm647, %v617, %v655
  %v664 = vsel %vm648, %v622, %v656
  %v665 = vsel %vm649, %v627, %v657
  %v666 = vsel %vm650, %v632, %v658
  %v667 = vsel %vm651, %v637, %v659
  %v668 = vsel %vm652, %v642, %v660
  %669 = vmatprep.subr.mxu0 0.0
  %670 = vmatpush1.msra.mxu0 %v661
  %671 = vmatprep.subr.mxu0 0.0
  %672 = vmatpush1.msra.mxu0 %v662
  %673 = vmatprep.subr.mxu0 0.0
  %674 = vmatpush1.msra.mxu0 %v663
  %675 = vmatprep.subr.mxu0 0.0
  %676 = vmatpush1.msra.mxu0 %v664
  %677 = vmatprep.subr.mxu0 0.0
  %678 = vmatpush1.msra.mxu0 %v665
  %679 = vmatprep.subr.mxu0 0.0
  %680 = vmatpush1.msra.mxu0 %v666
  %681 = vmatprep.subr.mxu0 0.0
  %682 = vmatpush1.msra.mxu0 %v667
  %683 = vmatprep.subr.mxu0 0.0
  %684 = vmatpush1.msra.mxu0 %v668
  %685 = vmatprep.subr.mxu0 0.0
  %686 = vmatpush1.msra.mxu0 0.0
  %687 = vmatprep.subr.mxu0 0.0
  %688 = vmatpush1.msra.mxu0 0.0
  %689 = vmatprep.subr.mxu0 0.0
  %690 = vmatpush1.msra.mxu0 0.0
  %691 = vmatprep.subr.mxu0 0.0
  %692 = vmatpush1.msra.mxu0 0.0
  %693 = vmatprep.subr.mxu0 0.0
  %694 = vmatpush1.msra.mxu0 0.0
  %695 = vmatprep.subr.mxu0 0.0
  %696 = vmatpush1.msra.mxu0 0.0
  %697 = vmatprep.subr.mxu0 0.0
  %698 = vmatpush1.msra.mxu0 0.0
  %699 = vmatprep.subr.mxu0 0.0
  %700 = vmatpush1.msra.mxu0 0.0
  %701 = vmatprep.subr.mxu0 0.0
  %702 = vmatpush1.msra.mxu0 0.0
  %703 = vmatprep.subr.mxu0 0.0
  %704 = vmatpush1.msra.mxu0 0.0
  %705 = vmatprep.subr.mxu0 0.0
  %706 = vmatpush1.msra.mxu0 0.0
  %707 = vmatprep.subr.mxu0 0.0
  %708 = vmatpush1.msra.mxu0 0.0
  %709 = vmatprep.subr.mxu0 0.0
  %710 = vmatpush1.msra.mxu0 0.0
  %711 = vmatprep.subr.mxu0 0.0
  %712 = vmatpush1.msra.mxu0 0.0
  %713 = vmatprep.subr.mxu0 0.0
  %714 = vmatpush1.msra.mxu0 0.0
  %715 = vmatprep.subr.mxu0 0.0
  %716 = vmatpush1.msra.mxu0 0.0
  %717 = vmatprep.subr.mxu0 0.0
  %718 = vmatpush1.msra.mxu0 0.0
  %719 = vmatprep.subr.mxu0 0.0
  %720 = vmatpush1.msra.mxu0 0.0
  %721 = vmatprep.subr.mxu0 0.0
  %722 = vmatpush1.msra.mxu0 0.0
  %723 = vmatprep.subr.mxu0 0.0
  %724 = vmatpush1.msra.mxu0 0.0
  %725 = vmatprep.subr.mxu0 0.0
  %726 = vmatpush1.msra.mxu0 0.0
  %727 = vmatprep.subr.mxu0 0.0
  %728 = vmatpush1.msra.mxu0 0.0
  %729 = vmatprep.subr.mxu0 0.0
  %730 = vmatpush1.msra.mxu0 0.0
  %731 = vmatprep.subr.mxu0 0.0
  %732 = vmatpush1.msra.mxu0 0.0
  %733 = vmatprep.mubr.f32.mxu0 0.0
  %734 = vmatmul.mubr.f32.gmra.mrb[0].mxu0 %v63
  %v735 = vpop.f32.mrb[0].mxu0
  %v736 = vadd.f32 %v53, %v735
  %v737 = vpop.f32.mrb[0].mxu0
  %738 = vmatprep.mubr.f32.mxu0 0.0
  %739 = vmatmul.mubr.f32.gmra.mrb[0].mxu0 %v66
  %v740 = vpop.f32.mrb[0].mxu0
  %v741 = vadd.f32 %v54, %v740
  %v742 = vpop.f32.mrb[0].mxu0
  %743 = vmatprep.mubr.f32.mxu0 0.0
  %744 = vmatmul.mubr.f32.gmra.mrb[0].mxu0 %v69
  %v745 = vpop.f32.mrb[0].mxu0
  %v746 = vadd.f32 %v55, %v745
  %v747 = vpop.f32.mrb[0].mxu0
  %748 = vmatprep.mubr.f32.mxu0 0.0
  %749 = vmatmul.mubr.f32.gmra.mrb[0].mxu0 %v72
  %v750 = vpop.f32.mrb[0].mxu0
  %v751 = vadd.f32 %v56, %v750
  %v752 = vpop.f32.mrb[0].mxu0
  %753 = vmatprep.mubr.f32.mxu0 0.0
  %754 = vmatmul.mubr.f32.gmra.mrb[0].mxu0 %v75
  %v755 = vpop.f32.mrb[0].mxu0
  %v756 = vadd.f32 %v57, %v755
  %v757 = vpop.f32.mrb[0].mxu0
  %758 = vmatprep.mubr.f32.mxu0 0.0
  %759 = vmatmul.mubr.f32.gmra.mrb[0].mxu0 %v78
  %v760 = vpop.f32.mrb[0].mxu0
  %v761 = vadd.f32 %v58, %v760
  %v762 = vpop.f32.mrb[0].mxu0
  %763 = vmatprep.mubr.f32.mxu0 0.0
  %764 = vmatmul.mubr.f32.gmra.mrb[0].mxu0 %v81
  %v765 = vpop.f32.mrb[0].mxu0
  %v766 = vadd.f32 %v59, %v765
  %v767 = vpop.f32.mrb[0].mxu0
  %768 = vmatprep.mubr.f32.mxu0 0.0
  %769 = vmatmul.mubr.f32.gmra.mrb[0].mxu0 %v84
  %v770 = vpop.f32.mrb[0].mxu0
  %v771 = vadd.f32 %v60, %v770
  %v772 = vpop.f32.mrb[0].mxu0
  %773 = vdwg.mxu0
  %v774 = vmax.f32 %v29, %v736
  %v775 = vmax.f32 %v30, %v741
  %v776 = vmax.f32 %v31, %v746
  %v777 = vmax.f32 %v32, %v751
  %v778 = vmax.f32 %v33, %v756
  %v779 = vmax.f32 %v34, %v761
  %v780 = vmax.f32 %v35, %v766
  %v781 = vmax.f32 %v36, %v771
  %782 = vmatprep.subr.mxu0 0.0
  %783 = vmatpush1.msra.mxu0 %v661
  %784 = vmatprep.subr.mxu0 0.0
  %785 = vmatpush1.msra.mxu0 %v662
  %786 = vmatprep.subr.mxu0 0.0
  %787 = vmatpush1.msra.mxu0 %v663
  %788 = vmatprep.subr.mxu0 0.0
  %789 = vmatpush1.msra.mxu0 %v664
  %790 = vmatprep.subr.mxu0 0.0
  %791 = vmatpush1.msra.mxu0 %v665
  %792 = vmatprep.subr.mxu0 0.0
  %793 = vmatpush1.msra.mxu0 %v666
  %794 = vmatprep.subr.mxu0 0.0
  %795 = vmatpush1.msra.mxu0 %v667
  %796 = vmatprep.subr.mxu0 0.0
  %797 = vmatpush1.msra.mxu0 %v668
  %798 = vmatprep.subr.mxu0 0.0
  %799 = vmatpush1.msra.mxu0 0.0
  %800 = vmatprep.subr.mxu0 0.0
  %801 = vmatpush1.msra.mxu0 0.0
  %802 = vmatprep.subr.mxu0 0.0
  %803 = vmatpush1.msra.mxu0 0.0
  %804 = vmatprep.subr.mxu0 0.0
  %805 = vmatpush1.msra.mxu0 0.0
  %806 = vmatprep.subr.mxu0 0.0
  %807 = vmatpush1.msra.mxu0 0.0
  %808 = vmatprep.subr.mxu0 0.0
  %809 = vmatpush1.msra.mxu0 0.0
  %810 = vmatprep.subr.mxu0 0.0
  %811 = vmatpush1.msra.mxu0 0.0
  %812 = vmatprep.subr.mxu0 0.0
  %813 = vmatpush1.msra.mxu0 0.0
  %814 = vmatprep.subr.mxu0 0.0
  %815 = vmatpush1.msra.mxu0 0.0
  %816 = vmatprep.subr.mxu0 0.0
  %817 = vmatpush1.msra.mxu0 0.0
  %818 = vmatprep.subr.mxu0 0.0
  %819 = vmatpush1.msra.mxu0 0.0
  %820 = vmatprep.subr.mxu0 0.0
  %821 = vmatpush1.msra.mxu0 0.0
  %822 = vmatprep.subr.mxu0 0.0
  %823 = vmatpush1.msra.mxu0 0.0
  %824 = vmatprep.subr.mxu0 0.0
  %825 = vmatpush1.msra.mxu0 0.0
  %826 = vmatprep.subr.mxu0 0.0
  %827 = vmatpush1.msra.mxu0 0.0
  %828 = vmatprep.subr.mxu0 0.0
  %829 = vmatpush1.msra.mxu0 0.0
  %830 = vmatprep.subr.mxu0 0.0
  %831 = vmatpush1.msra.mxu0 0.0
  %832 = vmatprep.subr.mxu0 0.0
  %833 = vmatpush1.msra.mxu0 0.0
  %834 = vmatprep.subr.mxu0 0.0
  %835 = vmatpush1.msra.mxu0 0.0
  %836 = vmatprep.subr.mxu0 0.0
  %837 = vmatpush1.msra.mxu0 0.0
  %838 = vmatprep.subr.mxu0 0.0
  %839 = vmatpush1.msra.mxu0 0.0
  %840 = vmatprep.subr.mxu0 0.0
  %841 = vmatpush1.msra.mxu0 0.0
  %842 = vmatprep.subr.mxu0 0.0
  %843 = vmatpush1.msra.mxu0 0.0
  %844 = vmatprep.subr.mxu0 0.0
  %845 = vmatpush1.msra.mxu0 0.0
  %846 = vmatprep.mubr.f32.mxu0 0.0
  %847 = vmatmul.mubr.f32.gmra.mrb[0].mxu0 %v218
  %v848 = vpop.f32.mrb[0].mxu0
  %v849 = vadd.f32 %v209, %v848
  %v850 = vpop.f32.mrb[0].mxu0
  %851 = vmatprep.mubr.f32.mxu0 0.0
  %852 = vmatmul.mubr.f32.gmra.mrb[0].mxu0 %v221
  %v853 = vpop.f32.mrb[0].mxu0
  %v854 = vadd.f32 %v210, %v853
  %v855 = vpop.f32.mrb[0].mxu0
  %856 = vmatprep.mubr.f32.mxu0 0.0
  %857 = vmatmul.mubr.f32.gmra.mrb[0].mxu0 %v224
  %v858 = vpop.f32.mrb[0].mxu0
  %v859 = vadd.f32 %v211, %v858
  %v860 = vpop.f32.mrb[0].mxu0
  %861 = vmatprep.mubr.f32.mxu0 0.0
  %862 = vmatmul.mubr.f32.gmra.mrb[0].mxu0 %v227
  %v863 = vpop.f32.mrb[0].mxu0
  %v864 = vadd.f32 %v212, %v863
  %v865 = vpop.f32.mrb[0].mxu0
  %866 = vmatprep.mubr.f32.mxu0 0.0
  %867 = vmatmul.mubr.f32.gmra.mrb[0].mxu0 %v230
  %v868 = vpop.f32.mrb[0].mxu0
  %v869 = vadd.f32 %v213, %v868
  %v870 = vpop.f32.mrb[0].mxu0
  %871 = vmatprep.mubr.f32.mxu0 0.0
  %872 = vmatmul.mubr.f32.gmra.mrb[0].mxu0 %v233
  %v873 = vpop.f32.mrb[0].mxu0
  %v874 = vadd.f32 %v214, %v873
  %v875 = vpop.f32.mrb[0].mxu0
  %876 = vmatprep.mubr.f32.mxu0 0.0
  %877 = vmatmul.mubr.f32.gmra.mrb[0].mxu0 %v236
  %v878 = vpop.f32.mrb[0].mxu0
  %v879 = vadd.f32 %v215, %v878
  %v880 = vpop.f32.mrb[0].mxu0
  %881 = vmatprep.mubr.f32.mxu0 0.0
  %882 = vmatmul.mubr.f32.gmra.mrb[0].mxu0 %v239
  %v883 = vpop.f32.mrb[0].mxu0
  %v884 = vadd.f32 %v216, %v883
  %v885 = vpop.f32.mrb[0].mxu0
  %886 = vdwg.mxu0
  %v887 = vmax.f32 %v774, %v849
  %v888 = vmax.f32 %v775, %v854
  %v889 = vmax.f32 %v776, %v859
  %v890 = vmax.f32 %v777, %v864
  %v891 = vmax.f32 %v778, %v869
  %v892 = vmax.f32 %v779, %v874
  %v893 = vmax.f32 %v780, %v879
  %v894 = vmax.f32 %v781, %v884
  %895 = vmatprep.subr.mxu0 0.0
  %896 = vmatpush1.msra.mxu0 %v661
  %897 = vmatprep.subr.mxu0 0.0
  %898 = vmatpush1.msra.mxu0 %v662
  %899 = vmatprep.subr.mxu0 0.0
  %900 = vmatpush1.msra.mxu0 %v663
  %901 = vmatprep.subr.mxu0 0.0
  %902 = vmatpush1.msra.mxu0 %v664
  %903 = vmatprep.subr.mxu0 0.0
  %904 = vmatpush1.msra.mxu0 %v665
  %905 = vmatprep.subr.mxu0 0.0
  %906 = vmatpush1.msra.mxu0 %v666
  %907 = vmatprep.subr.mxu0 0.0
  %908 = vmatpush1.msra.mxu0 %v667
  %909 = vmatprep.subr.mxu0 0.0
  %910 = vmatpush1.msra.mxu0 %v668
  %911 = vmatprep.subr.mxu0 0.0
  %912 = vmatpush1.msra.mxu0 0.0
  %913 = vmatprep.subr.mxu0 0.0
  %914 = vmatpush1.msra.mxu0 0.0
  %915 = vmatprep.subr.mxu0 0.0
  %916 = vmatpush1.msra.mxu0 0.0
  %917 = vmatprep.subr.mxu0 0.0
  %918 = vmatpush1.msra.mxu0 0.0
  %919 = vmatprep.subr.mxu0 0.0
  %920 = vmatpush1.msra.mxu0 0.0
  %921 = vmatprep.subr.mxu0 0.0
  %922 = vmatpush1.msra.mxu0 0.0
  %923 = vmatprep.subr.mxu0 0.0
  %924 = vmatpush1.msra.mxu0 0.0
  %925 = vmatprep.subr.mxu0 0.0
  %926 = vmatpush1.msra.mxu0 0.0
  %927 = vmatprep.subr.mxu0 0.0
  %928 = vmatpush1.msra.mxu0 0.0
  %929 = vmatprep.subr.mxu0 0.0
  %930 = vmatpush1.msra.mxu0 0.0
  %931 = vmatprep.subr.mxu0 0.0
  %932 = vmatpush1.msra.mxu0 0.0
  %933 = vmatprep.subr.mxu0 0.0
  %934 = vmatpush1.msra.mxu0 0.0
  %935 = vmatprep.subr.mxu0 0.0
  %936 = vmatpush1.msra.mxu0 0.0
  %937 = vmatprep.subr.mxu0 0.0
  %938 = vmatpush1.msra.mxu0 0.0
  %939 = vmatprep.subr.mxu0 0.0
  %940 = vmatpush1.msra.mxu0 0.0
  %941 = vmatprep.subr.mxu0 0.0
  %942 = vmatpush1.msra.mxu0 0.0
  %943 = vmatprep.subr.mxu0 0.0
  %944 = vmatpush1.msra.mxu0 0.0
  %945 = vmatprep.subr.mxu0 0.0
  %946 = vmatpush1.msra.mxu0 0.0
  %947 = vmatprep.subr.mxu0 0.0
  %948 = vmatpush1.msra.mxu0 0.0
  %949 = vmatprep.subr.mxu0 0.0
  %950 = vmatpush1.msra.mxu0 0.0
  %951 = vmatprep.subr.mxu0 0.0
  %952 = vmatpush1.msra.mxu0 0.0
  %953 = vmatprep.subr.mxu0 0.0
  %954 = vmatpush1.msra.mxu0 0.0
  %955 = vmatprep.subr.mxu0 0.0
  %956 = vmatpush1.msra.mxu0 0.0
  %957 = vmatprep.subr.mxu0 0.0
  %958 = vmatpush1.msra.mxu0 0.0
  %959 = vmatprep.mubr.f32.mxu0 0.0
  %960 = vmatmul.mubr.f32.gmra.mrb[0].mxu0 %v373
  %v961 = vpop.f32.mrb[0].mxu0
  %v962 = vadd.f32 %v364, %v961
  %v963 = vpop.f32.mrb[0].mxu0
  %964 = vmatprep.mubr.f32.mxu0 0.0
  %965 = vmatmul.mubr.f32.gmra.mrb[0].mxu0 %v376
  %v966 = vpop.f32.mrb[0].mxu0
  %v967 = vadd.f32 %v365, %v966
  %v968 = vpop.f32.mrb[0].mxu0
  %969 = vmatprep.mubr.f32.mxu0 0.0
  %970 = vmatmul.mubr.f32.gmra.mrb[0].mxu0 %v379
  %v971 = vpop.f32.mrb[0].mxu0
  %v972 = vadd.f32 %v366, %v971
  %v973 = vpop.f32.mrb[0].mxu0
  %974 = vmatprep.mubr.f32.mxu0 0.0
  %975 = vmatmul.mubr.f32.gmra.mrb[0].mxu0 %v382
  %v976 = vpop.f32.mrb[0].mxu0
  %v977 = vadd.f32 %v367, %v976
  %v978 = vpop.f32.mrb[0].mxu0
  %979 = vmatprep.mubr.f32.mxu0 0.0
  %980 = vmatmul.mubr.f32.gmra.mrb[0].mxu0 %v385
  %v981 = vpop.f32.mrb[0].mxu0
  %v982 = vadd.f32 %v368, %v981
  %v983 = vpop.f32.mrb[0].mxu0
  %984 = vmatprep.mubr.f32.mxu0 0.0
  %985 = vmatmul.mubr.f32.gmra.mrb[0].mxu0 %v388
  %v986 = vpop.f32.mrb[0].mxu0
  %v987 = vadd.f32 %v369, %v986
  %v988 = vpop.f32.mrb[0].mxu0
  %989 = vmatprep.mubr.f32.mxu0 0.0
  %990 = vmatmul.mubr.f32.gmra.mrb[0].mxu0 %v391
  %v991 = vpop.f32.mrb[0].mxu0
  %v992 = vadd.f32 %v370, %v991
  %v993 = vpop.f32.mrb[0].mxu0
  %994 = vmatprep.mubr.f32.mxu0 0.0
  %995 = vmatmul.mubr.f32.gmra.mrb[0].mxu0 %v394
  %v996 = vpop.f32.mrb[0].mxu0
  %v997 = vadd.f32 %v371, %v996
  %v998 = vpop.f32.mrb[0].mxu0
  %999 = vdwg.mxu0
  %v1000 = vmax.f32 %v887, %v962
  %v1001 = vmax.f32 %v888, %v967
  %v1002 = vmax.f32 %v889, %v972
  %v1003 = vmax.f32 %v890, %v977
  %v1004 = vmax.f32 %v891, %v982
  %v1005 = vmax.f32 %v892, %v987
  %v1006 = vmax.f32 %v893, %v992
  %v1007 = vmax.f32 %v894, %v997
  %v1008 = vadd.f32 %v661, %v1000
  %v1009 = vadd.f32 %v662, %v1001
  %v1010 = vadd.f32 %v663, %v1002
  %v1011 = vadd.f32 %v664, %v1003
  %v1012 = vadd.f32 %v665, %v1004
  %v1013 = vadd.f32 %v666, %v1005
  %v1014 = vadd.f32 %v667, %v1006
  %v1015 = vadd.f32 %v668, %v1007
  %s1016 = scalar_lea.vmem %s4, 128
  %v1017 = vld [vmem:[%s1016] sm:$0xff]
  %v1018 = vld [vmem:[%s1016 + $0x8] sm:$0xff]
  %v1019 = vld [vmem:[%s1016 + $0x10] sm:$0xff]
  %v1020 = vld [vmem:[%s1016 + $0x18] sm:$0xff]
  %v1021 = vld [vmem:[%s1016 + $0x20] sm:$0xff]
  %v1022 = vld [vmem:[%s1016 + $0x28] sm:$0xff]
  %v1023 = vld [vmem:[%s1016 + $0x30] sm:$0xff]
  %v1024 = vld [vmem:[%s1016 + $0x38] sm:$0xff]
  %v1025 = vld [vmem:[%s1016 + $0x40] sm:$0xff]
  %v1026 = vld [vmem:[%s1016 + $0x48] sm:$0xff]
  %v1027 = vld [vmem:[%s1016 + $0x50] sm:$0xff]
  %v1028 = vld [vmem:[%s1016 + $0x58] sm:$0xff]
  %v1029 = vld [vmem:[%s1016 + $0x60] sm:$0xff]
  %v1030 = vld [vmem:[%s1016 + $0x68] sm:$0xff]
  %v1031 = vld [vmem:[%s1016 + $0x70] sm:$0xff]
  %v1032 = vld [vmem:[%s1016 + $0x78] sm:$0xff]
  %s1033 = scalar_lea.vmem %s5, 1
  %v1034 = vld [vmem:[%s1033] sm:$0x1]
  %v1036 = vlaneseq
  %v1037 = vshrl.u32 %v1036, 7
  %v1038 = vsub.s32 0, %v1037
  %v1039 = vrot.slane %v1034, %v1038
  %1041 = vmatprep.subr.mxu0 0.0
  %1042 = vmatpush1.msra.mxu0 %v1017
  %1043 = vmatprep.subr.mxu0 0.0
  %1044 = vmatpush1.msra.mxu0 %v1018
  %1045 = vmatprep.subr.mxu0 0.0
  %1046 = vmatpush1.msra.mxu0 %v1019
  %1047 = vmatprep.subr.mxu0 0.0
  %1048 = vmatpush1.msra.mxu0 %v1020
  %1049 = vmatprep.subr.mxu0 0.0
  %1050 = vmatpush1.msra.mxu0 %v1021
  %1051 = vmatprep.subr.mxu0 0.0
  %1052 = vmatpush1.msra.mxu0 %v1022
  %1053 = vmatprep.subr.mxu0 0.0
  %1054 = vmatpush1.msra.mxu0 %v1023
  %1055 = vmatprep.subr.mxu0 0.0
  %1056 = vmatpush1.msra.mxu0 %v1024
  %1057 = vmatprep.subr.mxu0 0.0
  %1058 = vmatpush1.msra.mxu0 %v1025
  %1059 = vmatprep.subr.mxu0 0.0
  %1060 = vmatpush1.msra.mxu0 %v1026
  %1061 = vmatprep.subr.mxu0 0.0
  %1062 = vmatpush1.msra.mxu0 %v1027
  %1063 = vmatprep.subr.mxu0 0.0
  %1064 = vmatpush1.msra.mxu0 %v1028
  %1065 = vmatprep.subr.mxu0 0.0
  %1066 = vmatpush1.msra.mxu0 %v1029
  %1067 = vmatprep.subr.mxu0 0.0
  %1068 = vmatpush1.msra.mxu0 %v1030
  %1069 = vmatprep.subr.mxu0 0.0
  %1070 = vmatpush1.msra.mxu0 %v1031
  %1071 = vmatprep.subr.mxu0 0.0
  %1072 = vmatpush1.msra.mxu0 %v1032
  %1073 = vmatprep.subr.mxu0 0.0
  %1074 = vmatpush1.msra.mxu0 0.0
  %1075 = vmatprep.subr.mxu0 0.0
  %1076 = vmatpush1.msra.mxu0 0.0
  %1077 = vmatprep.subr.mxu0 0.0
  %1078 = vmatpush1.msra.mxu0 0.0
  %1079 = vmatprep.subr.mxu0 0.0
  %1080 = vmatpush1.msra.mxu0 0.0
  %1081 = vmatprep.subr.mxu0 0.0
  %1082 = vmatpush1.msra.mxu0 0.0
  %1083 = vmatprep.subr.mxu0 0.0
  %1084 = vmatpush1.msra.mxu0 0.0
  %1085 = vmatprep.subr.mxu0 0.0
  %1086 = vmatpush1.msra.mxu0 0.0
  %1087 = vmatprep.subr.mxu0 0.0
  %1088 = vmatpush1.msra.mxu0 0.0
  %1089 = vmatprep.subr.mxu0 0.0
  %1090 = vmatpush1.msra.mxu0 0.0
  %1091 = vmatprep.subr.mxu0 0.0
  %1092 = vmatpush1.msra.mxu0 0.0
  %1093 = vmatprep.subr.mxu0 0.0
  %1094 = vmatpush1.msra.mxu0 0.0
  %1095 = vmatprep.subr.mxu0 0.0
  %1096 = vmatpush1.msra.mxu0 0.0
  %1097 = vmatprep.subr.mxu0 0.0
  %1098 = vmatpush1.msra.mxu0 0.0
  %1099 = vmatprep.subr.mxu0 0.0
  %1100 = vmatpush1.msra.mxu0 0.0
  %1101 = vmatprep.subr.mxu0 0.0
  %1102 = vmatpush1.msra.mxu0 0.0
  %1103 = vmatprep.subr.mxu0 0.0
  %1104 = vmatpush1.msra.mxu0 0.0
  %1105 = vmatprep.mubr.f32.mxu0 0.0
  %1106 = vmatmul.mubr.f32.gmra.mrb[0].mxu0 %v1008
  %v1107 = vpop.f32.mrb[0].mxu0
  %v1108 = vadd.f32 %v1039, %v1107
  %v1109 = vpop.f32.mrb[0].mxu0
  %1110 = vmatprep.mubr.f32.mxu0 0.0
  %1111 = vmatmul.mubr.f32.gmra.mrb[0].mxu0 %v1009
  %v1112 = vpop.f32.mrb[0].mxu0
  %v1113 = vadd.f32 %v1039, %v1112
  %v1114 = vpop.f32.mrb[0].mxu0
  %1115 = vmatprep.mubr.f32.mxu0 0.0
  %1116 = vmatmul.mubr.f32.gmra.mrb[0].mxu0 %v1010
  %v1117 = vpop.f32.mrb[0].mxu0
  %v1118 = vadd.f32 %v1039, %v1117
  %v1119 = vpop.f32.mrb[0].mxu0
  %1120 = vmatprep.mubr.f32.mxu0 0.0
  %1121 = vmatmul.mubr.f32.gmra.mrb[0].mxu0 %v1011
  %v1122 = vpop.f32.mrb[0].mxu0
  %v1123 = vadd.f32 %v1039, %v1122
  %v1124 = vpop.f32.mrb[0].mxu0
  %1125 = vmatprep.mubr.f32.mxu0 0.0
  %1126 = vmatmul.mubr.f32.gmra.mrb[0].mxu0 %v1012
  %v1127 = vpop.f32.mrb[0].mxu0
  %v1128 = vadd.f32 %v1039, %v1127
  %v1129 = vpop.f32.mrb[0].mxu0
  %1130 = vmatprep.mubr.f32.mxu0 0.0
  %1131 = vmatmul.mubr.f32.gmra.mrb[0].mxu0 %v1013
  %v1132 = vpop.f32.mrb[0].mxu0
  %v1133 = vadd.f32 %v1039, %v1132
  %v1134 = vpop.f32.mrb[0].mxu0
  %1135 = vmatprep.mubr.f32.mxu0 0.0
  %1136 = vmatmul.mubr.f32.gmra.mrb[0].mxu0 %v1014
  %v1137 = vpop.f32.mrb[0].mxu0
  %v1138 = vadd.f32 %v1039, %v1137
  %v1139 = vpop.f32.mrb[0].mxu0
  %1140 = vmatprep.mubr.f32.mxu0 0.0
  %1141 = vmatmul.mubr.f32.gmra.mrb[0].mxu0 %v1015
  %v1142 = vpop.f32.mrb[0].mxu0
  %v1143 = vadd.f32 %v1039, %v1142
  %v1144 = vpop.f32.mrb[0].mxu0
  %1145 = vdwg.mxu0
  %vm1146 = vcmp.ge.f32.partialorder %v1108, 0.0
  %vm1147 = vcmp.ge.f32.partialorder %v1113, 0.0
  %vm1148 = vcmp.ge.f32.partialorder %v1118, 0.0
  %vm1149 = vcmp.ge.f32.partialorder %v1123, 0.0
  %vm1150 = vcmp.ge.f32.partialorder %v1128, 0.0
  %vm1151 = vcmp.ge.f32.partialorder %v1133, 0.0
  %vm1152 = vcmp.ge.f32.partialorder %v1138, 0.0
  %vm1153 = vcmp.ge.f32.partialorder %v1143, 0.0
  %v1154 = vmul.f32 %v1108, 0.01
  %v1155 = vmul.f32 %v1113, 0.01
  %v1156 = vmul.f32 %v1118, 0.01
  %v1157 = vmul.f32 %v1123, 0.01
  %v1158 = vmul.f32 %v1128, 0.01
  %v1159 = vmul.f32 %v1133, 0.01
  %v1160 = vmul.f32 %v1138, 0.01
  %v1161 = vmul.f32 %v1143, 0.01
  %v1162 = vsel %vm1146, %v1108, %v1154
  %v1163 = vsel %vm1147, %v1113, %v1155
  %v1164 = vsel %vm1148, %v1118, %v1156
  %v1165 = vsel %vm1149, %v1123, %v1157
  %v1166 = vsel %vm1150, %v1128, %v1158
  %v1167 = vsel %vm1151, %v1133, %v1159
  %v1168 = vsel %vm1152, %v1138, %v1160
  %v1169 = vsel %vm1153, %v1143, %v1161
  %1170 = vmatprep.subr.mxu0 0.0
  %1171 = vmatpush1.msra.mxu0 %v1162
  %1172 = vmatprep.subr.mxu0 0.0
  %1173 = vmatpush1.msra.mxu0 %v1163
  %1174 = vmatprep.subr.mxu0 0.0
  %1175 = vmatpush1.msra.mxu0 %v1164
  %1176 = vmatprep.subr.mxu0 0.0
  %1177 = vmatpush1.msra.mxu0 %v1165
  %1178 = vmatprep.subr.mxu0 0.0
  %1179 = vmatpush1.msra.mxu0 %v1166
  %1180 = vmatprep.subr.mxu0 0.0
  %1181 = vmatpush1.msra.mxu0 %v1167
  %1182 = vmatprep.subr.mxu0 0.0
  %1183 = vmatpush1.msra.mxu0 %v1168
  %1184 = vmatprep.subr.mxu0 0.0
  %1185 = vmatpush1.msra.mxu0 %v1169
  %1186 = vmatprep.subr.mxu0 0.0
  %1187 = vmatpush1.msra.mxu0 0.0
  %1188 = vmatprep.subr.mxu0 0.0
  %1189 = vmatpush1.msra.mxu0 0.0
  %1190 = vmatprep.subr.mxu0 0.0
  %1191 = vmatpush1.msra.mxu0 0.0
  %1192 = vmatprep.subr.mxu0 0.0
  %1193 = vmatpush1.msra.mxu0 0.0
  %1194 = vmatprep.subr.mxu0 0.0
  %1195 = vmatpush1.msra.mxu0 0.0
  %1196 = vmatprep.subr.mxu0 0.0
  %1197 = vmatpush1.msra.mxu0 0.0
  %1198 = vmatprep.subr.mxu0 0.0
  %1199 = vmatpush1.msra.mxu0 0.0
  %1200 = vmatprep.subr.mxu0 0.0
  %1201 = vmatpush1.msra.mxu0 0.0
  %1202 = vmatprep.subr.mxu0 0.0
  %1203 = vmatpush1.msra.mxu0 0.0
  %1204 = vmatprep.subr.mxu0 0.0
  %1205 = vmatpush1.msra.mxu0 0.0
  %1206 = vmatprep.subr.mxu0 0.0
  %1207 = vmatpush1.msra.mxu0 0.0
  %1208 = vmatprep.subr.mxu0 0.0
  %1209 = vmatpush1.msra.mxu0 0.0
  %1210 = vmatprep.subr.mxu0 0.0
  %1211 = vmatpush1.msra.mxu0 0.0
  %1212 = vmatprep.subr.mxu0 0.0
  %1213 = vmatpush1.msra.mxu0 0.0
  %1214 = vmatprep.subr.mxu0 0.0
  %1215 = vmatpush1.msra.mxu0 0.0
  %1216 = vmatprep.subr.mxu0 0.0
  %1217 = vmatpush1.msra.mxu0 0.0
  %1218 = vmatprep.subr.mxu0 0.0
  %1219 = vmatpush1.msra.mxu0 0.0
  %1220 = vmatprep.subr.mxu0 0.0
  %1221 = vmatpush1.msra.mxu0 0.0
  %1222 = vmatprep.subr.mxu0 0.0
  %1223 = vmatpush1.msra.mxu0 0.0
  %1224 = vmatprep.subr.mxu0 0.0
  %1225 = vmatpush1.msra.mxu0 0.0
  %1226 = vmatprep.subr.mxu0 0.0
  %1227 = vmatpush1.msra.mxu0 0.0
  %1228 = vmatprep.subr.mxu0 0.0
  %1229 = vmatpush1.msra.mxu0 0.0
  %1230 = vmatprep.subr.mxu0 0.0
  %1231 = vmatpush1.msra.mxu0 0.0
  %1232 = vmatprep.subr.mxu0 0.0
  %1233 = vmatpush1.msra.mxu0 0.0
  %1234 = vmatprep.mubr.f32.mxu0 0.0
  %1235 = vmatmul.mubr.f32.gmra.mrb[0].mxu0 %v63
  %v1236 = vpop.f32.mrb[0].mxu0
  %v1237 = vadd.f32 %v53, %v1236
  %v1238 = vpop.f32.mrb[0].mxu0
  %1239 = vmatprep.mubr.f32.mxu0 0.0
  %1240 = vmatmul.mubr.f32.gmra.mrb[0].mxu0 %v66
  %v1241 = vpop.f32.mrb[0].mxu0
  %v1242 = vadd.f32 %v54, %v1241
  %v1243 = vpop.f32.mrb[0].mxu0
  %1244 = vmatprep.mubr.f32.mxu0 0.0
  %1245 = vmatmul.mubr.f32.gmra.mrb[0].mxu0 %v69
  %v1246 = vpop.f32.mrb[0].mxu0
  %v1247 = vadd.f32 %v55, %v1246
  %v1248 = vpop.f32.mrb[0].mxu0
  %1249 = vmatprep.mubr.f32.mxu0 0.0
  %1250 = vmatmul.mubr.f32.gmra.mrb[0].mxu0 %v72
  %v1251 = vpop.f32.mrb[0].mxu0
  %v1252 = vadd.f32 %v56, %v1251
  %v1253 = vpop.f32.mrb[0].mxu0
  %1254 = vmatprep.mubr.f32.mxu0 0.0
  %1255 = vmatmul.mubr.f32.gmra.mrb[0].mxu0 %v75
  %v1256 = vpop.f32.mrb[0].mxu0
  %v1257 = vadd.f32 %v57, %v1256
  %v1258 = vpop.f32.mrb[0].mxu0
  %1259 = vmatprep.mubr.f32.mxu0 0.0
  %1260 = vmatmul.mubr.f32.gmra.mrb[0].mxu0 %v78
  %v1261 = vpop.f32.mrb[0].mxu0
  %v1262 = vadd.f32 %v58, %v1261
  %v1263 = vpop.f32.mrb[0].mxu0
  %1264 = vmatprep.mubr.f32.mxu0 0.0
  %1265 = vmatmul.mubr.f32.gmra.mrb[0].mxu0 %v81
  %v1266 = vpop.f32.mrb[0].mxu0
  %v1267 = vadd.f32 %v59, %v1266
  %v1268 = vpop.f32.mrb[0].mxu0
  %1269 = vmatprep.mubr.f32.mxu0 0.0
  %1270 = vmatmul.mubr.f32.gmra.mrb[0].mxu0 %v84
  %v1271 = vpop.f32.mrb[0].mxu0
  %v1272 = vadd.f32 %v60, %v1271
  %v1273 = vpop.f32.mrb[0].mxu0
  %1274 = vdwg.mxu0
  %v1275 = vmax.f32 %v29, %v1237
  %v1276 = vmax.f32 %v30, %v1242
  %v1277 = vmax.f32 %v31, %v1247
  %v1278 = vmax.f32 %v32, %v1252
  %v1279 = vmax.f32 %v33, %v1257
  %v1280 = vmax.f32 %v34, %v1262
  %v1281 = vmax.f32 %v35, %v1267
  %v1282 = vmax.f32 %v36, %v1272
  %1283 = vmatprep.subr.mxu0 0.0
  %1284 = vmatpush1.msra.mxu0 %v1162
  %1285 = vmatprep.subr.mxu0 0.0
  %1286 = vmatpush1.msra.mxu0 %v1163
  %1287 = vmatprep.subr.mxu0 0.0
  %1288 = vmatpush1.msra.mxu0 %v1164
  %1289 = vmatprep.subr.mxu0 0.0
  %1290 = vmatpush1.msra.mxu0 %v1165
  %1291 = vmatprep.subr.mxu0 0.0
  %1292 = vmatpush1.msra.mxu0 %v1166
  %1293 = vmatprep.subr.mxu0 0.0
  %1294 = vmatpush1.msra.mxu0 %v1167
  %1295 = vmatprep.subr.mxu0 0.0
  %1296 = vmatpush1.msra.mxu0 %v1168
  %1297 = vmatprep.subr.mxu0 0.0
  %1298 = vmatpush1.msra.mxu0 %v1169
  %1299 = vmatprep.subr.mxu0 0.0
  %1300 = vmatpush1.msra.mxu0 0.0
  %1301 = vmatprep.subr.mxu0 0.0
  %1302 = vmatpush1.msra.mxu0 0.0
  %1303 = vmatprep.subr.mxu0 0.0
  %1304 = vmatpush1.msra.mxu0 0.0
  %1305 = vmatprep.subr.mxu0 0.0
  %1306 = vmatpush1.msra.mxu0 0.0
  %1307 = vmatprep.subr.mxu0 0.0
  %1308 = vmatpush1.msra.mxu0 0.0
  %1309 = vmatprep.subr.mxu0 0.0
  %1310 = vmatpush1.msra.mxu0 0.0
  %1311 = vmatprep.subr.mxu0 0.0
  %1312 = vmatpush1.msra.mxu0 0.0
  %1313 = vmatprep.subr.mxu0 0.0
  %1314 = vmatpush1.msra.mxu0 0.0
  %1315 = vmatprep.subr.mxu0 0.0
  %1316 = vmatpush1.msra.mxu0 0.0
  %1317 = vmatprep.subr.mxu0 0.0
  %1318 = vmatpush1.msra.mxu0 0.0
  %1319 = vmatprep.subr.mxu0 0.0
  %1320 = vmatpush1.msra.mxu0 0.0
  %1321 = vmatprep.subr.mxu0 0.0
  %1322 = vmatpush1.msra.mxu0 0.0
  %1323 = vmatprep.subr.mxu0 0.0
  %1324 = vmatpush1.msra.mxu0 0.0
  %1325 = vmatprep.subr.mxu0 0.0
  %1326 = vmatpush1.msra.mxu0 0.0
  %1327 = vmatprep.subr.mxu0 0.0
  %1328 = vmatpush1.msra.mxu0 0.0
  %1329 = vmatprep.subr.mxu0 0.0
  %1330 = vmatpush1.msra.mxu0 0.0
  %1331 = vmatprep.subr.mxu0 0.0
  %1332 = vmatpush1.msra.mxu0 0.0
  %1333 = vmatprep.subr.mxu0 0.0
  %1334 = vmatpush1.msra.mxu0 0.0
  %1335 = vmatprep.subr.mxu0 0.0
  %1336 = vmatpush1.msra.mxu0 0.0
  %1337 = vmatprep.subr.mxu0 0.0
  %1338 = vmatpush1.msra.mxu0 0.0
  %1339 = vmatprep.subr.mxu0 0.0
  %1340 = vmatpush1.msra.mxu0 0.0
  %1341 = vmatprep.subr.mxu0 0.0
  %1342 = vmatpush1.msra.mxu0 0.0
  %1343 = vmatprep.subr.mxu0 0.0
  %1344 = vmatpush1.msra.mxu0 0.0
  %1345 = vmatprep.subr.mxu0 0.0
  %1346 = vmatpush1.msra.mxu0 0.0
  %1347 = vmatprep.mubr.f32.mxu0 0.0
  %1348 = vmatmul.mubr.f32.gmra.mrb[0].mxu0 %v218
  %v1349 = vpop.f32.mrb[0].mxu0
  %v1350 = vadd.f32 %v209, %v1349
  %v1351 = vpop.f32.mrb[0].mxu0
  %1352 = vmatprep.mubr.f32.mxu0 0.0
  %1353 = vmatmul.mubr.f32.gmra.mrb[0].mxu0 %v221
  %v1354 = vpop.f32.mrb[0].mxu0
  %v1355 = vadd.f32 %v210, %v1354
  %v1356 = vpop.f32.mrb[0].mxu0
  %1357 = vmatprep.mubr.f32.mxu0 0.0
  %1358 = vmatmul.mubr.f32.gmra.mrb[0].mxu0 %v224
  %v1359 = vpop.f32.mrb[0].mxu0
  %v1360 = vadd.f32 %v211, %v1359
  %v1361 = vpop.f32.mrb[0].mxu0
  %1362 = vmatprep.mubr.f32.mxu0 0.0
  %1363 = vmatmul.mubr.f32.gmra.mrb[0].mxu0 %v227
  %v1364 = vpop.f32.mrb[0].mxu0
  %v1365 = vadd.f32 %v212, %v1364
  %v1366 = vpop.f32.mrb[0].mxu0
  %1367 = vmatprep.mubr.f32.mxu0 0.0
  %1368 = vmatmul.mubr.f32.gmra.mrb[0].mxu0 %v230
  %v1369 = vpop.f32.mrb[0].mxu0
  %v1370 = vadd.f32 %v213, %v1369
  %v1371 = vpop.f32.mrb[0].mxu0
  %1372 = vmatprep.mubr.f32.mxu0 0.0
  %1373 = vmatmul.mubr.f32.gmra.mrb[0].mxu0 %v233
  %v1374 = vpop.f32.mrb[0].mxu0
  %v1375 = vadd.f32 %v214, %v1374
  %v1376 = vpop.f32.mrb[0].mxu0
  %1377 = vmatprep.mubr.f32.mxu0 0.0
  %1378 = vmatmul.mubr.f32.gmra.mrb[0].mxu0 %v236
  %v1379 = vpop.f32.mrb[0].mxu0
  %v1380 = vadd.f32 %v215, %v1379
  %v1381 = vpop.f32.mrb[0].mxu0
  %1382 = vmatprep.mubr.f32.mxu0 0.0
  %1383 = vmatmul.mubr.f32.gmra.mrb[0].mxu0 %v239
  %v1384 = vpop.f32.mrb[0].mxu0
  %v1385 = vadd.f32 %v216, %v1384
  %v1386 = vpop.f32.mrb[0].mxu0
  %1387 = vdwg.mxu0
  %v1388 = vmax.f32 %v1275, %v1350
  %v1389 = vmax.f32 %v1276, %v1355
  %v1390 = vmax.f32 %v1277, %v1360
  %v1391 = vmax.f32 %v1278, %v1365
  %v1392 = vmax.f32 %v1279, %v1370
  %v1393 = vmax.f32 %v1280, %v1375
  %v1394 = vmax.f32 %v1281, %v1380
  %v1395 = vmax.f32 %v1282, %v1385
  %1396 = vmatprep.subr.mxu0 0.0
  %1397 = vmatpush1.msra.mxu0 %v1162
  %1398 = vmatprep.subr.mxu0 0.0
  %1399 = vmatpush1.msra.mxu0 %v1163
  %1400 = vmatprep.subr.mxu0 0.0
  %1401 = vmatpush1.msra.mxu0 %v1164
  %1402 = vmatprep.subr.mxu0 0.0
  %1403 = vmatpush1.msra.mxu0 %v1165
  %1404 = vmatprep.subr.mxu0 0.0
  %1405 = vmatpush1.msra.mxu0 %v1166
  %1406 = vmatprep.subr.mxu0 0.0
  %1407 = vmatpush1.msra.mxu0 %v1167
  %1408 = vmatprep.subr.mxu0 0.0
  %1409 = vmatpush1.msra.mxu0 %v1168
  %1410 = vmatprep.subr.mxu0 0.0
  %1411 = vmatpush1.msra.mxu0 %v1169
  %1412 = vmatprep.subr.mxu0 0.0
  %1413 = vmatpush1.msra.mxu0 0.0
  %1414 = vmatprep.subr.mxu0 0.0
  %1415 = vmatpush1.msra.mxu0 0.0
  %1416 = vmatprep.subr.mxu0 0.0
  %1417 = vmatpush1.msra.mxu0 0.0
  %1418 = vmatprep.subr.mxu0 0.0
  %1419 = vmatpush1.msra.mxu0 0.0
  %1420 = vmatprep.subr.mxu0 0.0
  %1421 = vmatpush1.msra.mxu0 0.0
  %1422 = vmatprep.subr.mxu0 0.0
  %1423 = vmatpush1.msra.mxu0 0.0
  %1424 = vmatprep.subr.mxu0 0.0
  %1425 = vmatpush1.msra.mxu0 0.0
  %1426 = vmatprep.subr.mxu0 0.0
  %1427 = vmatpush1.msra.mxu0 0.0
  %1428 = vmatprep.subr.mxu0 0.0
  %1429 = vmatpush1.msra.mxu0 0.0
  %1430 = vmatprep.subr.mxu0 0.0
  %1431 = vmatpush1.msra.mxu0 0.0
  %1432 = vmatprep.subr.mxu0 0.0
  %1433 = vmatpush1.msra.mxu0 0.0
  %1434 = vmatprep.subr.mxu0 0.0
  %1435 = vmatpush1.msra.mxu0 0.0
  %1436 = vmatprep.subr.mxu0 0.0
  %1437 = vmatpush1.msra.mxu0 0.0
  %1438 = vmatprep.subr.mxu0 0.0
  %1439 = vmatpush1.msra.mxu0 0.0
  %1440 = vmatprep.subr.mxu0 0.0
  %1441 = vmatpush1.msra.mxu0 0.0
  %1442 = vmatprep.subr.mxu0 0.0
  %1443 = vmatpush1.msra.mxu0 0.0
  %1444 = vmatprep.subr.mxu0 0.0
  %1445 = vmatpush1.msra.mxu0 0.0
  %1446 = vmatprep.subr.mxu0 0.0
  %1447 = vmatpush1.msra.mxu0 0.0
  %1448 = vmatprep.subr.mxu0 0.0
  %1449 = vmatpush1.msra.mxu0 0.0
  %1450 = vmatprep.subr.mxu0 0.0
  %1451 = vmatpush1.msra.mxu0 0.0
  %1452 = vmatprep.subr.mxu0 0.0
  %1453 = vmatpush1.msra.mxu0 0.0
  %1454 = vmatprep.subr.mxu0 0.0
  %1455 = vmatpush1.msra.mxu0 0.0
  %1456 = vmatprep.subr.mxu0 0.0
  %1457 = vmatpush1.msra.mxu0 0.0
  %1458 = vmatprep.subr.mxu0 0.0
  %1459 = vmatpush1.msra.mxu0 0.0
  %1460 = vmatprep.mubr.f32.mxu0 0.0
  %1461 = vmatmul.mubr.f32.gmra.mrb[0].mxu0 %v373
  %v1462 = vpop.f32.mrb[0].mxu0
  %v1463 = vadd.f32 %v364, %v1462
  %v1464 = vpop.f32.mrb[0].mxu0
  %1465 = vmatprep.mubr.f32.mxu0 0.0
  %1466 = vmatmul.mubr.f32.gmra.mrb[0].mxu0 %v376
  %v1467 = vpop.f32.mrb[0].mxu0
  %v1468 = vadd.f32 %v365, %v1467
  %v1469 = vpop.f32.mrb[0].mxu0
  %1470 = vmatprep.mubr.f32.mxu0 0.0
  %1471 = vmatmul.mubr.f32.gmra.mrb[0].mxu0 %v379
  %v1472 = vpop.f32.mrb[0].mxu0
  %v1473 = vadd.f32 %v366, %v1472
  %v1474 = vpop.f32.mrb[0].mxu0
  %1475 = vmatprep.mubr.f32.mxu0 0.0
  %1476 = vmatmul.mubr.f32.gmra.mrb[0].mxu0 %v382
  %v1477 = vpop.f32.mrb[0].mxu0
  %v1478 = vadd.f32 %v367, %v1477
  %v1479 = vpop.f32.mrb[0].mxu0
  %1480 = vmatprep.mubr.f32.mxu0 0.0
  %1481 = vmatmul.mubr.f32.gmra.mrb[0].mxu0 %v385
  %v1482 = vpop.f32.mrb[0].mxu0
  %v1483 = vadd.f32 %v368, %v1482
  %v1484 = vpop.f32.mrb[0].mxu0
  %1485 = vmatprep.mubr.f32.mxu0 0.0
  %1486 = vmatmul.mubr.f32.gmra.mrb[0].mxu0 %v388
  %v1487 = vpop.f32.mrb[0].mxu0
  %v1488 = vadd.f32 %v369, %v1487
  %v1489 = vpop.f32.mrb[0].mxu0
  %1490 = vmatprep.mubr.f32.mxu0 0.0
  %1491 = vmatmul.mubr.f32.gmra.mrb[0].mxu0 %v391
  %v1492 = vpop.f32.mrb[0].mxu0
  %v1493 = vadd.f32 %v370, %v1492
  %v1494 = vpop.f32.mrb[0].mxu0
  %1495 = vmatprep.mubr.f32.mxu0 0.0
  %1496 = vmatmul.mubr.f32.gmra.mrb[0].mxu0 %v394
  %v1497 = vpop.f32.mrb[0].mxu0
  %v1498 = vadd.f32 %v371, %v1497
  %v1499 = vpop.f32.mrb[0].mxu0
  %1500 = vdwg.mxu0
  %v1501 = vmax.f32 %v1388, %v1463
  %v1502 = vmax.f32 %v1389, %v1468
  %v1503 = vmax.f32 %v1390, %v1473
  %v1504 = vmax.f32 %v1391, %v1478
  %v1505 = vmax.f32 %v1392, %v1483
  %v1506 = vmax.f32 %v1393, %v1488
  %v1507 = vmax.f32 %v1394, %v1493
  %v1508 = vmax.f32 %v1395, %v1498
  %v1509 = vadd.f32 %v1162, %v1501
  %v1510 = vadd.f32 %v1163, %v1502
  %v1511 = vadd.f32 %v1164, %v1503
  %v1512 = vadd.f32 %v1165, %v1504
  %v1513 = vadd.f32 %v1166, %v1505
  %v1514 = vadd.f32 %v1167, %v1506
  %v1515 = vadd.f32 %v1168, %v1507
  %v1516 = vadd.f32 %v1169, %v1508
  %s1517 = scalar_lea.vmem %s4, 256
  %v1518 = vld [vmem:[%s1517] sm:$0xff]
  %v1519 = vld [vmem:[%s1517 + $0x8] sm:$0xff]
  %v1520 = vld [vmem:[%s1517 + $0x10] sm:$0xff]
  %v1521 = vld [vmem:[%s1517 + $0x18] sm:$0xff]
  %v1522 = vld [vmem:[%s1517 + $0x20] sm:$0xff]
  %v1523 = vld [vmem:[%s1517 + $0x28] sm:$0xff]
  %v1524 = vld [vmem:[%s1517 + $0x30] sm:$0xff]
  %v1525 = vld [vmem:[%s1517 + $0x38] sm:$0xff]
  %v1526 = vld [vmem:[%s1517 + $0x40] sm:$0xff]
  %v1527 = vld [vmem:[%s1517 + $0x48] sm:$0xff]
  %v1528 = vld [vmem:[%s1517 + $0x50] sm:$0xff]
  %v1529 = vld [vmem:[%s1517 + $0x58] sm:$0xff]
  %v1530 = vld [vmem:[%s1517 + $0x60] sm:$0xff]
  %v1531 = vld [vmem:[%s1517 + $0x68] sm:$0xff]
  %v1532 = vld [vmem:[%s1517 + $0x70] sm:$0xff]
  %v1533 = vld [vmem:[%s1517 + $0x78] sm:$0xff]
  %s1534 = scalar_lea.vmem %s5, 2
  %v1535 = vld [vmem:[%s1534] sm:$0x1]
  %v1537 = vlaneseq
  %v1538 = vshrl.u32 %v1537, 7
  %v1539 = vsub.s32 0, %v1538
  %v1540 = vrot.slane %v1535, %v1539
  %1542 = vmatprep.subr.mxu0 0.0
  %1543 = vmatpush1.msra.mxu0 %v1518
  %1544 = vmatprep.subr.mxu0 0.0
  %1545 = vmatpush1.msra.mxu0 %v1519
  %1546 = vmatprep.subr.mxu0 0.0
  %1547 = vmatpush1.msra.mxu0 %v1520
  %1548 = vmatprep.subr.mxu0 0.0
  %1549 = vmatpush1.msra.mxu0 %v1521
  %1550 = vmatprep.subr.mxu0 0.0
  %1551 = vmatpush1.msra.mxu0 %v1522
  %1552 = vmatprep.subr.mxu0 0.0
  %1553 = vmatpush1.msra.mxu0 %v1523
  %1554 = vmatprep.subr.mxu0 0.0
  %1555 = vmatpush1.msra.mxu0 %v1524
  %1556 = vmatprep.subr.mxu0 0.0
  %1557 = vmatpush1.msra.mxu0 %v1525
  %1558 = vmatprep.subr.mxu0 0.0
  %1559 = vmatpush1.msra.mxu0 %v1526
  %1560 = vmatprep.subr.mxu0 0.0
  %1561 = vmatpush1.msra.mxu0 %v1527
  %1562 = vmatprep.subr.mxu0 0.0
  %1563 = vmatpush1.msra.mxu0 %v1528
  %1564 = vmatprep.subr.mxu0 0.0
  %1565 = vmatpush1.msra.mxu0 %v1529
  %1566 = vmatprep.subr.mxu0 0.0
  %1567 = vmatpush1.msra.mxu0 %v1530
  %1568 = vmatprep.subr.mxu0 0.0
  %1569 = vmatpush1.msra.mxu0 %v1531
  %1570 = vmatprep.subr.mxu0 0.0
  %1571 = vmatpush1.msra.mxu0 %v1532
  %1572 = vmatprep.subr.mxu0 0.0
  %1573 = vmatpush1.msra.mxu0 %v1533
  %1574 = vmatprep.subr.mxu0 0.0
  %1575 = vmatpush1.msra.mxu0 0.0
  %1576 = vmatprep.subr.mxu0 0.0
  %1577 = vmatpush1.msra.mxu0 0.0
  %1578 = vmatprep.subr.mxu0 0.0
  %1579 = vmatpush1.msra.mxu0 0.0
  %1580 = vmatprep.subr.mxu0 0.0
  %1581 = vmatpush1.msra.mxu0 0.0
  %1582 = vmatprep.subr.mxu0 0.0
  %1583 = vmatpush1.msra.mxu0 0.0
  %1584 = vmatprep.subr.mxu0 0.0
  %1585 = vmatpush1.msra.mxu0 0.0
  %1586 = vmatprep.subr.mxu0 0.0
  %1587 = vmatpush1.msra.mxu0 0.0
  %1588 = vmatprep.subr.mxu0 0.0
  %1589 = vmatpush1.msra.mxu0 0.0
  %1590 = vmatprep.subr.mxu0 0.0
  %1591 = vmatpush1.msra.mxu0 0.0
  %1592 = vmatprep.subr.mxu0 0.0
  %1593 = vmatpush1.msra.mxu0 0.0
  %1594 = vmatprep.subr.mxu0 0.0
  %1595 = vmatpush1.msra.mxu0 0.0
  %1596 = vmatprep.subr.mxu0 0.0
  %1597 = vmatpush1.msra.mxu0 0.0
  %1598 = vmatprep.subr.mxu0 0.0
  %1599 = vmatpush1.msra.mxu0 0.0
  %1600 = vmatprep.subr.mxu0 0.0
  %1601 = vmatpush1.msra.mxu0 0.0
  %1602 = vmatprep.subr.mxu0 0.0
  %1603 = vmatpush1.msra.mxu0 0.0
  %1604 = vmatprep.subr.mxu0 0.0
  %1605 = vmatpush1.msra.mxu0 0.0
  %1606 = vmatprep.mubr.f32.mxu0 0.0
  %1607 = vmatmul.mubr.f32.gmra.mrb[0].mxu0 %v1509
  %v1608 = vpop.f32.mrb[0].mxu0
  %v1609 = vadd.f32 %v1540, %v1608
  %v1610 = vpop.f32.mrb[0].mxu0
  %1611 = vmatprep.mubr.f32.mxu0 0.0
  %1612 = vmatmul.mubr.f32.gmra.mrb[0].mxu0 %v1510
  %v1613 = vpop.f32.mrb[0].mxu0
  %v1614 = vadd.f32 %v1540, %v1613
  %v1615 = vpop.f32.mrb[0].mxu0
  %1616 = vmatprep.mubr.f32.mxu0 0.0
  %1617 = vmatmul.mubr.f32.gmra.mrb[0].mxu0 %v1511
  %v1618 = vpop.f32.mrb[0].mxu0
  %v1619 = vadd.f32 %v1540, %v1618
  %v1620 = vpop.f32.mrb[0].mxu0
  %1621 = vmatprep.mubr.f32.mxu0 0.0
  %1622 = vmatmul.mubr.f32.gmra.mrb[0].mxu0 %v1512
  %v1623 = vpop.f32.mrb[0].mxu0
  %v1624 = vadd.f32 %v1540, %v1623
  %v1625 = vpop.f32.mrb[0].mxu0
  %1626 = vmatprep.mubr.f32.mxu0 0.0
  %1627 = vmatmul.mubr.f32.gmra.mrb[0].mxu0 %v1513
  %v1628 = vpop.f32.mrb[0].mxu0
  %v1629 = vadd.f32 %v1540, %v1628
  %v1630 = vpop.f32.mrb[0].mxu0
  %1631 = vmatprep.mubr.f32.mxu0 0.0
  %1632 = vmatmul.mubr.f32.gmra.mrb[0].mxu0 %v1514
  %v1633 = vpop.f32.mrb[0].mxu0
  %v1634 = vadd.f32 %v1540, %v1633
  %v1635 = vpop.f32.mrb[0].mxu0
  %1636 = vmatprep.mubr.f32.mxu0 0.0
  %1637 = vmatmul.mubr.f32.gmra.mrb[0].mxu0 %v1515
  %v1638 = vpop.f32.mrb[0].mxu0
  %v1639 = vadd.f32 %v1540, %v1638
  %v1640 = vpop.f32.mrb[0].mxu0
  %1641 = vmatprep.mubr.f32.mxu0 0.0
  %1642 = vmatmul.mubr.f32.gmra.mrb[0].mxu0 %v1516
  %v1643 = vpop.f32.mrb[0].mxu0
  %v1644 = vadd.f32 %v1540, %v1643
  %v1645 = vpop.f32.mrb[0].mxu0
  %1646 = vdwg.mxu0
  %vm1647 = vcmp.ge.f32.partialorder %v1609, 0.0
  %vm1648 = vcmp.ge.f32.partialorder %v1614, 0.0
  %vm1649 = vcmp.ge.f32.partialorder %v1619, 0.0
  %vm1650 = vcmp.ge.f32.partialorder %v1624, 0.0
  %vm1651 = vcmp.ge.f32.partialorder %v1629, 0.0
  %vm1652 = vcmp.ge.f32.partialorder %v1634, 0.0
  %vm1653 = vcmp.ge.f32.partialorder %v1639, 0.0
  %vm1654 = vcmp.ge.f32.partialorder %v1644, 0.0
  %v1655 = vmul.f32 %v1609, 0.01
  %v1656 = vmul.f32 %v1614, 0.01
  %v1657 = vmul.f32 %v1619, 0.01
  %v1658 = vmul.f32 %v1624, 0.01
  %v1659 = vmul.f32 %v1629, 0.01
  %v1660 = vmul.f32 %v1634, 0.01
  %v1661 = vmul.f32 %v1639, 0.01
  %v1662 = vmul.f32 %v1644, 0.01
  %v1663 = vsel %vm1647, %v1609, %v1655
  %v1664 = vsel %vm1648, %v1614, %v1656
  %v1665 = vsel %vm1649, %v1619, %v1657
  %v1666 = vsel %vm1650, %v1624, %v1658
  %v1667 = vsel %vm1651, %v1629, %v1659
  %v1668 = vsel %vm1652, %v1634, %v1660
  %v1669 = vsel %vm1653, %v1639, %v1661
  %v1670 = vsel %vm1654, %v1644, %v1662
  %1671 = vmatprep.subr.mxu0 0.0
  %1672 = vmatpush1.msra.mxu0 %v1663
  %1673 = vmatprep.subr.mxu0 0.0
  %1674 = vmatpush1.msra.mxu0 %v1664
  %1675 = vmatprep.subr.mxu0 0.0
  %1676 = vmatpush1.msra.mxu0 %v1665
  %1677 = vmatprep.subr.mxu0 0.0
  %1678 = vmatpush1.msra.mxu0 %v1666
  %1679 = vmatprep.subr.mxu0 0.0
  %1680 = vmatpush1.msra.mxu0 %v1667
  %1681 = vmatprep.subr.mxu0 0.0
  %1682 = vmatpush1.msra.mxu0 %v1668
  %1683 = vmatprep.subr.mxu0 0.0
  %1684 = vmatpush1.msra.mxu0 %v1669
  %1685 = vmatprep.subr.mxu0 0.0
  %1686 = vmatpush1.msra.mxu0 %v1670
  %1687 = vmatprep.subr.mxu0 0.0
  %1688 = vmatpush1.msra.mxu0 0.0
  %1689 = vmatprep.subr.mxu0 0.0
  %1690 = vmatpush1.msra.mxu0 0.0
  %1691 = vmatprep.subr.mxu0 0.0
  %1692 = vmatpush1.msra.mxu0 0.0
  %1693 = vmatprep.subr.mxu0 0.0
  %1694 = vmatpush1.msra.mxu0 0.0
  %1695 = vmatprep.subr.mxu0 0.0
  %1696 = vmatpush1.msra.mxu0 0.0
  %1697 = vmatprep.subr.mxu0 0.0
  %1698 = vmatpush1.msra.mxu0 0.0
  %1699 = vmatprep.subr.mxu0 0.0
  %1700 = vmatpush1.msra.mxu0 0.0
  %1701 = vmatprep.subr.mxu0 0.0
  %1702 = vmatpush1.msra.mxu0 0.0
  %1703 = vmatprep.subr.mxu0 0.0
  %1704 = vmatpush1.msra.mxu0 0.0
  %1705 = vmatprep.subr.mxu0 0.0
  %1706 = vmatpush1.msra.mxu0 0.0
  %1707 = vmatprep.subr.mxu0 0.0
  %1708 = vmatpush1.msra.mxu0 0.0
  %1709 = vmatprep.subr.mxu0 0.0
  %1710 = vmatpush1.msra.mxu0 0.0
  %1711 = vmatprep.subr.mxu0 0.0
  %1712 = vmatpush1.msra.mxu0 0.0
  %1713 = vmatprep.subr.mxu0 0.0
  %1714 = vmatpush1.msra.mxu0 0.0
  %1715 = vmatprep.subr.mxu0 0.0
  %1716 = vmatpush1.msra.mxu0 0.0
  %1717 = vmatprep.subr.mxu0 0.0
  %1718 = vmatpush1.msra.mxu0 0.0
  %1719 = vmatprep.subr.mxu0 0.0
  %1720 = vmatpush1.msra.mxu0 0.0
  %1721 = vmatprep.subr.mxu0 0.0
  %1722 = vmatpush1.msra.mxu0 0.0
  %1723 = vmatprep.subr.mxu0 0.0
  %1724 = vmatpush1.msra.mxu0 0.0
  %1725 = vmatprep.subr.mxu0 0.0
  %1726 = vmatpush1.msra.mxu0 0.0
  %1727 = vmatprep.subr.mxu0 0.0
  %1728 = vmatpush1.msra.mxu0 0.0
  %1729 = vmatprep.subr.mxu0 0.0
  %1730 = vmatpush1.msra.mxu0 0.0
  %1731 = vmatprep.subr.mxu0 0.0
  %1732 = vmatpush1.msra.mxu0 0.0
  %1733 = vmatprep.subr.mxu0 0.0
  %1734 = vmatpush1.msra.mxu0 0.0
  %1735 = vmatprep.mubr.f32.mxu0 0.0
  %1736 = vmatmul.mubr.f32.gmra.mrb[0].mxu0 %v63
  %v1737 = vpop.f32.mrb[0].mxu0
  %v1738 = vadd.f32 %v53, %v1737
  %v1739 = vpop.f32.mrb[0].mxu0
  %1740 = vmatprep.mubr.f32.mxu0 0.0
  %1741 = vmatmul.mubr.f32.gmra.mrb[0].mxu0 %v66
  %v1742 = vpop.f32.mrb[0].mxu0
  %v1743 = vadd.f32 %v54, %v1742
  %v1744 = vpop.f32.mrb[0].mxu0
  %1745 = vmatprep.mubr.f32.mxu0 0.0
  %1746 = vmatmul.mubr.f32.gmra.mrb[0].mxu0 %v69
  %v1747 = vpop.f32.mrb[0].mxu0
  %v1748 = vadd.f32 %v55, %v1747
  %v1749 = vpop.f32.mrb[0].mxu0
  %1750 = vmatprep.mubr.f32.mxu0 0.0
  %1751 = vmatmul.mubr.f32.gmra.mrb[0].mxu0 %v72
  %v1752 = vpop.f32.mrb[0].mxu0
  %v1753 = vadd.f32 %v56, %v1752
  %v1754 = vpop.f32.mrb[0].mxu0
  %1755 = vmatprep.mubr.f32.mxu0 0.0
  %1756 = vmatmul.mubr.f32.gmra.mrb[0].mxu0 %v75
  %v1757 = vpop.f32.mrb[0].mxu0
  %v1758 = vadd.f32 %v57, %v1757
  %v1759 = vpop.f32.mrb[0].mxu0
  %1760 = vmatprep.mubr.f32.mxu0 0.0
  %1761 = vmatmul.mubr.f32.gmra.mrb[0].mxu0 %v78
  %v1762 = vpop.f32.mrb[0].mxu0
  %v1763 = vadd.f32 %v58, %v1762
  %v1764 = vpop.f32.mrb[0].mxu0
  %1765 = vmatprep.mubr.f32.mxu0 0.0
  %1766 = vmatmul.mubr.f32.gmra.mrb[0].mxu0 %v81
  %v1767 = vpop.f32.mrb[0].mxu0
  %v1768 = vadd.f32 %v59, %v1767
  %v1769 = vpop.f32.mrb[0].mxu0
  %1770 = vmatprep.mubr.f32.mxu0 0.0
  %1771 = vmatmul.mubr.f32.gmra.mrb[0].mxu0 %v84
  %v1772 = vpop.f32.mrb[0].mxu0
  %v1773 = vadd.f32 %v60, %v1772
  %v1774 = vpop.f32.mrb[0].mxu0
  %1775 = vdwg.mxu0
  %v1776 = vmax.f32 %v29, %v1738
  %v1777 = vmax.f32 %v30, %v1743
  %v1778 = vmax.f32 %v31, %v1748
  %v1779 = vmax.f32 %v32, %v1753
  %v1780 = vmax.f32 %v33, %v1758
  %v1781 = vmax.f32 %v34, %v1763
  %v1782 = vmax.f32 %v35, %v1768
  %v1783 = vmax.f32 %v36, %v1773
  %1784 = vmatprep.subr.mxu0 0.0
  %1785 = vmatpush1.msra.mxu0 %v1663
  %1786 = vmatprep.subr.mxu0 0.0
  %1787 = vmatpush1.msra.mxu0 %v1664
  %1788 = vmatprep.subr.mxu0 0.0
  %1789 = vmatpush1.msra.mxu0 %v1665
  %1790 = vmatprep.subr.mxu0 0.0
  %1791 = vmatpush1.msra.mxu0 %v1666
  %1792 = vmatprep.subr.mxu0 0.0
  %1793 = vmatpush1.msra.mxu0 %v1667
  %1794 = vmatprep.subr.mxu0 0.0
  %1795 = vmatpush1.msra.mxu0 %v1668
  %1796 = vmatprep.subr.mxu0 0.0
  %1797 = vmatpush1.msra.mxu0 %v1669
  %1798 = vmatprep.subr.mxu0 0.0
  %1799 = vmatpush1.msra.mxu0 %v1670
  %1800 = vmatprep.subr.mxu0 0.0
  %1801 = vmatpush1.msra.mxu0 0.0
  %1802 = vmatprep.subr.mxu0 0.0
  %1803 = vmatpush1.msra.mxu0 0.0
  %1804 = vmatprep.subr.mxu0 0.0
  %1805 = vmatpush1.msra.mxu0 0.0
  %1806 = vmatprep.subr.mxu0 0.0
  %1807 = vmatpush1.msra.mxu0 0.0
  %1808 = vmatprep.subr.mxu0 0.0
  %1809 = vmatpush1.msra.mxu0 0.0
  %1810 = vmatprep.subr.mxu0 0.0
  %1811 = vmatpush1.msra.mxu0 0.0
  %1812 = vmatprep.subr.mxu0 0.0
  %1813 = vmatpush1.msra.mxu0 0.0
  %1814 = vmatprep.subr.mxu0 0.0
  %1815 = vmatpush1.msra.mxu0 0.0
  %1816 = vmatprep.subr.mxu0 0.0
  %1817 = vmatpush1.msra.mxu0 0.0
  %1818 = vmatprep.subr.mxu0 0.0
  %1819 = vmatpush1.msra.mxu0 0.0
  %1820 = vmatprep.subr.mxu0 0.0
  %1821 = vmatpush1.msra.mxu0 0.0
  %1822 = vmatprep.subr.mxu0 0.0
  %1823 = vmatpush1.msra.mxu0 0.0
  %1824 = vmatprep.subr.mxu0 0.0
  %1825 = vmatpush1.msra.mxu0 0.0
  %1826 = vmatprep.subr.mxu0 0.0
  %1827 = vmatpush1.msra.mxu0 0.0
  %1828 = vmatprep.subr.mxu0 0.0
  %1829 = vmatpush1.msra.mxu0 0.0
  %1830 = vmatprep.subr.mxu0 0.0
  %1831 = vmatpush1.msra.mxu0 0.0
  %1832 = vmatprep.subr.mxu0 0.0
  %1833 = vmatpush1.msra.mxu0 0.0
  %1834 = vmatprep.subr.mxu0 0.0
  %1835 = vmatpush1.msra.mxu0 0.0
  %1836 = vmatprep.subr.mxu0 0.0
  %1837 = vmatpush1.msra.mxu0 0.0
  %1838 = vmatprep.subr.mxu0 0.0
  %1839 = vmatpush1.msra.mxu0 0.0
  %1840 = vmatprep.subr.mxu0 0.0
  %1841 = vmatpush1.msra.mxu0 0.0
  %1842 = vmatprep.subr.mxu0 0.0
  %1843 = vmatpush1.msra.mxu0 0.0
  %1844 = vmatprep.subr.mxu0 0.0
  %1845 = vmatpush1.msra.mxu0 0.0
  %1846 = vmatprep.subr.mxu0 0.0
  %1847 = vmatpush1.msra.mxu0 0.0
  %1848 = vmatprep.mubr.f32.mxu0 0.0
  %1849 = vmatmul.mubr.f32.gmra.mrb[0].mxu0 %v218
  %v1850 = vpop.f32.mrb[0].mxu0
  %v1851 = vadd.f32 %v209, %v1850
  %v1852 = vpop.f32.mrb[0].mxu0
  %1853 = vmatprep.mubr.f32.mxu0 0.0
  %1854 = vmatmul.mubr.f32.gmra.mrb[0].mxu0 %v221
  %v1855 = vpop.f32.mrb[0].mxu0
  %v1856 = vadd.f32 %v210, %v1855
  %v1857 = vpop.f32.mrb[0].mxu0
  %1858 = vmatprep.mubr.f32.mxu0 0.0
  %1859 = vmatmul.mubr.f32.gmra.mrb[0].mxu0 %v224
  %v1860 = vpop.f32.mrb[0].mxu0
  %v1861 = vadd.f32 %v211, %v1860
  %v1862 = vpop.f32.mrb[0].mxu0
  %1863 = vmatprep.mubr.f32.mxu0 0.0
  %1864 = vmatmul.mubr.f32.gmra.mrb[0].mxu0 %v227
  %v1865 = vpop.f32.mrb[0].mxu0
  %v1866 = vadd.f32 %v212, %v1865
  %v1867 = vpop.f32.mrb[0].mxu0
  %1868 = vmatprep.mubr.f32.mxu0 0.0
  %1869 = vmatmul.mubr.f32.gmra.mrb[0].mxu0 %v230
  %v1870 = vpop.f32.mrb[0].mxu0
  %v1871 = vadd.f32 %v213, %v1870
  %v1872 = vpop.f32.mrb[0].mxu0
  %1873 = vmatprep.mubr.f32.mxu0 0.0
  %1874 = vmatmul.mubr.f32.gmra.mrb[0].mxu0 %v233
  %v1875 = vpop.f32.mrb[0].mxu0
  %v1876 = vadd.f32 %v214, %v1875
  %v1877 = vpop.f32.mrb[0].mxu0
  %1878 = vmatprep.mubr.f32.mxu0 0.0
  %1879 = vmatmul.mubr.f32.gmra.mrb[0].mxu0 %v236
  %v1880 = vpop.f32.mrb[0].mxu0
  %v1881 = vadd.f32 %v215, %v1880
  %v1882 = vpop.f32.mrb[0].mxu0
  %1883 = vmatprep.mubr.f32.mxu0 0.0
  %1884 = vmatmul.mubr.f32.gmra.mrb[0].mxu0 %v239
  %v1885 = vpop.f32.mrb[0].mxu0
  %v1886 = vadd.f32 %v216, %v1885
  %v1887 = vpop.f32.mrb[0].mxu0
  %1888 = vdwg.mxu0
  %v1889 = vmax.f32 %v1776, %v1851
  %v1890 = vmax.f32 %v1777, %v1856
  %v1891 = vmax.f32 %v1778, %v1861
  %v1892 = vmax.f32 %v1779, %v1866
  %v1893 = vmax.f32 %v1780, %v1871
  %v1894 = vmax.f32 %v1781, %v1876
  %v1895 = vmax.f32 %v1782, %v1881
  %v1896 = vmax.f32 %v1783, %v1886
  %1897 = vmatprep.subr.mxu0 0.0
  %1898 = vmatpush1.msra.mxu0 %v1663
  %1899 = vmatprep.subr.mxu0 0.0
  %1900 = vmatpush1.msra.mxu0 %v1664
  %1901 = vmatprep.subr.mxu0 0.0
  %1902 = vmatpush1.msra.mxu0 %v1665
  %1903 = vmatprep.subr.mxu0 0.0
  %1904 = vmatpush1.msra.mxu0 %v1666
  %1905 = vmatprep.subr.mxu0 0.0
  %1906 = vmatpush1.msra.mxu0 %v1667
  %1907 = vmatprep.subr.mxu0 0.0
  %1908 = vmatpush1.msra.mxu0 %v1668
  %1909 = vmatprep.subr.mxu0 0.0
  %1910 = vmatpush1.msra.mxu0 %v1669
  %1911 = vmatprep.subr.mxu0 0.0
  %1912 = vmatpush1.msra.mxu0 %v1670
  %1913 = vmatprep.subr.mxu0 0.0
  %1914 = vmatpush1.msra.mxu0 0.0
  %1915 = vmatprep.subr.mxu0 0.0
  %1916 = vmatpush1.msra.mxu0 0.0
  %1917 = vmatprep.subr.mxu0 0.0
  %1918 = vmatpush1.msra.mxu0 0.0
  %1919 = vmatprep.subr.mxu0 0.0
  %1920 = vmatpush1.msra.mxu0 0.0
  %1921 = vmatprep.subr.mxu0 0.0
  %1922 = vmatpush1.msra.mxu0 0.0
  %1923 = vmatprep.subr.mxu0 0.0
  %1924 = vmatpush1.msra.mxu0 0.0
  %1925 = vmatprep.subr.mxu0 0.0
  %1926 = vmatpush1.msra.mxu0 0.0
  %1927 = vmatprep.subr.mxu0 0.0
  %1928 = vmatpush1.msra.mxu0 0.0
  %1929 = vmatprep.subr.mxu0 0.0
  %1930 = vmatpush1.msra.mxu0 0.0
  %1931 = vmatprep.subr.mxu0 0.0
  %1932 = vmatpush1.msra.mxu0 0.0
  %1933 = vmatprep.subr.mxu0 0.0
  %1934 = vmatpush1.msra.mxu0 0.0
  %1935 = vmatprep.subr.mxu0 0.0
  %1936 = vmatpush1.msra.mxu0 0.0
  %1937 = vmatprep.subr.mxu0 0.0
  %1938 = vmatpush1.msra.mxu0 0.0
  %1939 = vmatprep.subr.mxu0 0.0
  %1940 = vmatpush1.msra.mxu0 0.0
  %1941 = vmatprep.subr.mxu0 0.0
  %1942 = vmatpush1.msra.mxu0 0.0
  %1943 = vmatprep.subr.mxu0 0.0
  %1944 = vmatpush1.msra.mxu0 0.0
  %1945 = vmatprep.subr.mxu0 0.0
  %1946 = vmatpush1.msra.mxu0 0.0
  %1947 = vmatprep.subr.mxu0 0.0
  %1948 = vmatpush1.msra.mxu0 0.0
  %1949 = vmatprep.subr.mxu0 0.0
  %1950 = vmatpush1.msra.mxu0 0.0
  %1951 = vmatprep.subr.mxu0 0.0
  %1952 = vmatpush1.msra.mxu0 0.0
  %1953 = vmatprep.subr.mxu0 0.0
  %1954 = vmatpush1.msra.mxu0 0.0
  %1955 = vmatprep.subr.mxu0 0.0
  %1956 = vmatpush1.msra.mxu0 0.0
  %1957 = vmatprep.subr.mxu0 0.0
  %1958 = vmatpush1.msra.mxu0 0.0
  %1959 = vmatprep.subr.mxu0 0.0
  %1960 = vmatpush1.msra.mxu0 0.0
  %1961 = vmatprep.mubr.f32.mxu0 0.0
  %1962 = vmatmul.mubr.f32.gmra.mrb[0].mxu0 %v373
  %v1963 = vpop.f32.mrb[0].mxu0
  %v1964 = vadd.f32 %v364, %v1963
  %v1965 = vpop.f32.mrb[0].mxu0
  %1966 = vmatprep.mubr.f32.mxu0 0.0
  %1967 = vmatmul.mubr.f32.gmra.mrb[0].mxu0 %v376
  %v1968 = vpop.f32.mrb[0].mxu0
  %v1969 = vadd.f32 %v365, %v1968
  %v1970 = vpop.f32.mrb[0].mxu0
  %1971 = vmatprep.mubr.f32.mxu0 0.0
  %1972 = vmatmul.mubr.f32.gmra.mrb[0].mxu0 %v379
  %v1973 = vpop.f32.mrb[0].mxu0
  %v1974 = vadd.f32 %v366, %v1973
  %v1975 = vpop.f32.mrb[0].mxu0
  %1976 = vmatprep.mubr.f32.mxu0 0.0
  %1977 = vmatmul.mubr.f32.gmra.mrb[0].mxu0 %v382
  %v1978 = vpop.f32.mrb[0].mxu0
  %v1979 = vadd.f32 %v367, %v1978
  %v1980 = vpop.f32.mrb[0].mxu0
  %1981 = vmatprep.mubr.f32.mxu0 0.0
  %1982 = vmatmul.mubr.f32.gmra.mrb[0].mxu0 %v385
  %v1983 = vpop.f32.mrb[0].mxu0
  %v1984 = vadd.f32 %v368, %v1983
  %v1985 = vpop.f32.mrb[0].mxu0
  %1986 = vmatprep.mubr.f32.mxu0 0.0
  %1987 = vmatmul.mubr.f32.gmra.mrb[0].mxu0 %v388
  %v1988 = vpop.f32.mrb[0].mxu0
  %v1989 = vadd.f32 %v369, %v1988
  %v1990 = vpop.f32.mrb[0].mxu0
  %1991 = vmatprep.mubr.f32.mxu0 0.0
  %1992 = vmatmul.mubr.f32.gmra.mrb[0].mxu0 %v391
  %v1993 = vpop.f32.mrb[0].mxu0
  %v1994 = vadd.f32 %v370, %v1993
  %v1995 = vpop.f32.mrb[0].mxu0
  %1996 = vmatprep.mubr.f32.mxu0 0.0
  %1997 = vmatmul.mubr.f32.gmra.mrb[0].mxu0 %v394
  %v1998 = vpop.f32.mrb[0].mxu0
  %v1999 = vadd.f32 %v371, %v1998
  %v2000 = vpop.f32.mrb[0].mxu0
  %2001 = vdwg.mxu0
  %v2002 = vmax.f32 %v1889, %v1964
  %v2003 = vmax.f32 %v1890, %v1969
  %v2004 = vmax.f32 %v1891, %v1974
  %v2005 = vmax.f32 %v1892, %v1979
  %v2006 = vmax.f32 %v1893, %v1984
  %v2007 = vmax.f32 %v1894, %v1989
  %v2008 = vmax.f32 %v1895, %v1994
  %v2009 = vmax.f32 %v1896, %v1999
  %v2010 = vadd.f32 %v1663, %v2002
  %v2011 = vadd.f32 %v1664, %v2003
  %v2012 = vadd.f32 %v1665, %v2004
  %v2013 = vadd.f32 %v1666, %v2005
  %v2014 = vadd.f32 %v1667, %v2006
  %v2015 = vadd.f32 %v1668, %v2007
  %v2016 = vadd.f32 %v1669, %v2008
  %v2017 = vadd.f32 %v1670, %v2009
  %s2018 = scalar_lea.vmem %s4, 384
  %v2019 = vld [vmem:[%s2018] sm:$0xff]
  %v2020 = vld [vmem:[%s2018 + $0x8] sm:$0xff]
  %v2021 = vld [vmem:[%s2018 + $0x10] sm:$0xff]
  %v2022 = vld [vmem:[%s2018 + $0x18] sm:$0xff]
  %v2023 = vld [vmem:[%s2018 + $0x20] sm:$0xff]
  %v2024 = vld [vmem:[%s2018 + $0x28] sm:$0xff]
  %v2025 = vld [vmem:[%s2018 + $0x30] sm:$0xff]
  %v2026 = vld [vmem:[%s2018 + $0x38] sm:$0xff]
  %v2027 = vld [vmem:[%s2018 + $0x40] sm:$0xff]
  %v2028 = vld [vmem:[%s2018 + $0x48] sm:$0xff]
  %v2029 = vld [vmem:[%s2018 + $0x50] sm:$0xff]
  %v2030 = vld [vmem:[%s2018 + $0x58] sm:$0xff]
  %v2031 = vld [vmem:[%s2018 + $0x60] sm:$0xff]
  %v2032 = vld [vmem:[%s2018 + $0x68] sm:$0xff]
  %v2033 = vld [vmem:[%s2018 + $0x70] sm:$0xff]
  %v2034 = vld [vmem:[%s2018 + $0x78] sm:$0xff]
  %s2035 = scalar_lea.vmem %s5, 3
  %v2036 = vld [vmem:[%s2035] sm:$0x1]
  %v2038 = vlaneseq
  %v2039 = vshrl.u32 %v2038, 7
  %v2040 = vsub.s32 0, %v2039
  %v2041 = vrot.slane %v2036, %v2040
  %2043 = vmatprep.subr.mxu0 0.0
  %2044 = vmatpush1.msra.mxu0 %v2019
  %2045 = vmatprep.subr.mxu0 0.0
  %2046 = vmatpush1.msra.mxu0 %v2020
  %2047 = vmatprep.subr.mxu0 0.0
  %2048 = vmatpush1.msra.mxu0 %v2021
  %2049 = vmatprep.subr.mxu0 0.0
  %2050 = vmatpush1.msra.mxu0 %v2022
  %2051 = vmatprep.subr.mxu0 0.0
  %2052 = vmatpush1.msra.mxu0 %v2023
  %2053 = vmatprep.subr.mxu0 0.0
  %2054 = vmatpush1.msra.mxu0 %v2024
  %2055 = vmatprep.subr.mxu0 0.0
  %2056 = vmatpush1.msra.mxu0 %v2025
  %2057 = vmatprep.subr.mxu0 0.0
  %2058 = vmatpush1.msra.mxu0 %v2026
  %2059 = vmatprep.subr.mxu0 0.0
  %2060 = vmatpush1.msra.mxu0 %v2027
  %2061 = vmatprep.subr.mxu0 0.0
  %2062 = vmatpush1.msra.mxu0 %v2028
  %2063 = vmatprep.subr.mxu0 0.0
  %2064 = vmatpush1.msra.mxu0 %v2029
  %2065 = vmatprep.subr.mxu0 0.0
  %2066 = vmatpush1.msra.mxu0 %v2030
  %2067 = vmatprep.subr.mxu0 0.0
  %2068 = vmatpush1.msra.mxu0 %v2031
  %2069 = vmatprep.subr.mxu0 0.0
  %2070 = vmatpush1.msra.mxu0 %v2032
  %2071 = vmatprep.subr.mxu0 0.0
  %2072 = vmatpush1.msra.mxu0 %v2033
  %2073 = vmatprep.subr.mxu0 0.0
  %2074 = vmatpush1.msra.mxu0 %v2034
  %2075 = vmatprep.subr.mxu0 0.0
  %2076 = vmatpush1.msra.mxu0 0.0
  %2077 = vmatprep.subr.mxu0 0.0
  %2078 = vmatpush1.msra.mxu0 0.0
  %2079 = vmatprep.subr.mxu0 0.0
  %2080 = vmatpush1.msra.mxu0 0.0
  %2081 = vmatprep.subr.mxu0 0.0
  %2082 = vmatpush1.msra.mxu0 0.0
  %2083 = vmatprep.subr.mxu0 0.0
  %2084 = vmatpush1.msra.mxu0 0.0
  %2085 = vmatprep.subr.mxu0 0.0
  %2086 = vmatpush1.msra.mxu0 0.0
  %2087 = vmatprep.subr.mxu0 0.0
  %2088 = vmatpush1.msra.mxu0 0.0
  %2089 = vmatprep.subr.mxu0 0.0
  %2090 = vmatpush1.msra.mxu0 0.0
  %2091 = vmatprep.subr.mxu0 0.0
  %2092 = vmatpush1.msra.mxu0 0.0
  %2093 = vmatprep.subr.mxu0 0.0
  %2094 = vmatpush1.msra.mxu0 0.0
  %2095 = vmatprep.subr.mxu0 0.0
  %2096 = vmatpush1.msra.mxu0 0.0
  %2097 = vmatprep.subr.mxu0 0.0
  %2098 = vmatpush1.msra.mxu0 0.0
  %2099 = vmatprep.subr.mxu0 0.0
  %2100 = vmatpush1.msra.mxu0 0.0
  %2101 = vmatprep.subr.mxu0 0.0
  %2102 = vmatpush1.msra.mxu0 0.0
  %2103 = vmatprep.subr.mxu0 0.0
  %2104 = vmatpush1.msra.mxu0 0.0
  %2105 = vmatprep.subr.mxu0 0.0
  %2106 = vmatpush1.msra.mxu0 0.0
  %2107 = vmatprep.mubr.f32.mxu0 0.0
  %2108 = vmatmul.mubr.f32.gmra.mrb[0].mxu0 %v2010
  %v2109 = vpop.f32.mrb[0].mxu0
  %v2110 = vadd.f32 %v2041, %v2109
  %v2111 = vpop.f32.mrb[0].mxu0
  %2112 = vmatprep.mubr.f32.mxu0 0.0
  %2113 = vmatmul.mubr.f32.gmra.mrb[0].mxu0 %v2011
  %v2114 = vpop.f32.mrb[0].mxu0
  %v2115 = vadd.f32 %v2041, %v2114
  %v2116 = vpop.f32.mrb[0].mxu0
  %2117 = vmatprep.mubr.f32.mxu0 0.0
  %2118 = vmatmul.mubr.f32.gmra.mrb[0].mxu0 %v2012
  %v2119 = vpop.f32.mrb[0].mxu0
  %v2120 = vadd.f32 %v2041, %v2119
  %v2121 = vpop.f32.mrb[0].mxu0
  %2122 = vmatprep.mubr.f32.mxu0 0.0
  %2123 = vmatmul.mubr.f32.gmra.mrb[0].mxu0 %v2013
  %v2124 = vpop.f32.mrb[0].mxu0
  %v2125 = vadd.f32 %v2041, %v2124
  %v2126 = vpop.f32.mrb[0].mxu0
  %2127 = vmatprep.mubr.f32.mxu0 0.0
  %2128 = vmatmul.mubr.f32.gmra.mrb[0].mxu0 %v2014
  %v2129 = vpop.f32.mrb[0].mxu0
  %v2130 = vadd.f32 %v2041, %v2129
  %v2131 = vpop.f32.mrb[0].mxu0
  %2132 = vmatprep.mubr.f32.mxu0 0.0
  %2133 = vmatmul.mubr.f32.gmra.mrb[0].mxu0 %v2015
  %v2134 = vpop.f32.mrb[0].mxu0
  %v2135 = vadd.f32 %v2041, %v2134
  %v2136 = vpop.f32.mrb[0].mxu0
  %2137 = vmatprep.mubr.f32.mxu0 0.0
  %2138 = vmatmul.mubr.f32.gmra.mrb[0].mxu0 %v2016
  %v2139 = vpop.f32.mrb[0].mxu0
  %v2140 = vadd.f32 %v2041, %v2139
  %v2141 = vpop.f32.mrb[0].mxu0
  %2142 = vmatprep.mubr.f32.mxu0 0.0
  %2143 = vmatmul.mubr.f32.gmra.mrb[0].mxu0 %v2017
  %v2144 = vpop.f32.mrb[0].mxu0
  %v2145 = vadd.f32 %v2041, %v2144
  %v2146 = vpop.f32.mrb[0].mxu0
  %2147 = vdwg.mxu0
  %vm2148 = vcmp.ge.f32.partialorder %v2110, 0.0
  %vm2149 = vcmp.ge.f32.partialorder %v2115, 0.0
  %vm2150 = vcmp.ge.f32.partialorder %v2120, 0.0
  %vm2151 = vcmp.ge.f32.partialorder %v2125, 0.0
  %vm2152 = vcmp.ge.f32.partialorder %v2130, 0.0
  %vm2153 = vcmp.ge.f32.partialorder %v2135, 0.0
  %vm2154 = vcmp.ge.f32.partialorder %v2140, 0.0
  %vm2155 = vcmp.ge.f32.partialorder %v2145, 0.0
  %v2156 = vmul.f32 %v2110, 0.01
  %v2157 = vmul.f32 %v2115, 0.01
  %v2158 = vmul.f32 %v2120, 0.01
  %v2159 = vmul.f32 %v2125, 0.01
  %v2160 = vmul.f32 %v2130, 0.01
  %v2161 = vmul.f32 %v2135, 0.01
  %v2162 = vmul.f32 %v2140, 0.01
  %v2163 = vmul.f32 %v2145, 0.01
  %v2164 = vsel %vm2148, %v2110, %v2156
  %v2165 = vsel %vm2149, %v2115, %v2157
  %v2166 = vsel %vm2150, %v2120, %v2158
  %v2167 = vsel %vm2151, %v2125, %v2159
  %v2168 = vsel %vm2152, %v2130, %v2160
  %v2169 = vsel %vm2153, %v2135, %v2161
  %v2170 = vsel %vm2154, %v2140, %v2162
  %v2171 = vsel %vm2155, %v2145, %v2163
  %2172 = vmatprep.subr.mxu0 0.0
  %2173 = vmatpush1.msra.mxu0 %v2164
  %2174 = vmatprep.subr.mxu0 0.0
  %2175 = vmatpush1.msra.mxu0 %v2165
  %2176 = vmatprep.subr.mxu0 0.0
  %2177 = vmatpush1.msra.mxu0 %v2166
  %2178 = vmatprep.subr.mxu0 0.0
  %2179 = vmatpush1.msra.mxu0 %v2167
  %2180 = vmatprep.subr.mxu0 0.0
  %2181 = vmatpush1.msra.mxu0 %v2168
  %2182 = vmatprep.subr.mxu0 0.0
  %2183 = vmatpush1.msra.mxu0 %v2169
  %2184 = vmatprep.subr.mxu0 0.0
  %2185 = vmatpush1.msra.mxu0 %v2170
  %2186 = vmatprep.subr.mxu0 0.0
  %2187 = vmatpush1.msra.mxu0 %v2171
  %2188 = vmatprep.subr.mxu0 0.0
  %2189 = vmatpush1.msra.mxu0 0.0
  %2190 = vmatprep.subr.mxu0 0.0
  %2191 = vmatpush1.msra.mxu0 0.0
  %2192 = vmatprep.subr.mxu0 0.0
  %2193 = vmatpush1.msra.mxu0 0.0
  %2194 = vmatprep.subr.mxu0 0.0
  %2195 = vmatpush1.msra.mxu0 0.0
  %2196 = vmatprep.subr.mxu0 0.0
  %2197 = vmatpush1.msra.mxu0 0.0
  %2198 = vmatprep.subr.mxu0 0.0
  %2199 = vmatpush1.msra.mxu0 0.0
  %2200 = vmatprep.subr.mxu0 0.0
  %2201 = vmatpush1.msra.mxu0 0.0
  %2202 = vmatprep.subr.mxu0 0.0
  %2203 = vmatpush1.msra.mxu0 0.0
  %2204 = vmatprep.subr.mxu0 0.0
  %2205 = vmatpush1.msra.mxu0 0.0
  %2206 = vmatprep.subr.mxu0 0.0
  %2207 = vmatpush1.msra.mxu0 0.0
  %2208 = vmatprep.subr.mxu0 0.0
  %2209 = vmatpush1.msra.mxu0 0.0
  %2210 = vmatprep.subr.mxu0 0.0
  %2211 = vmatpush1.msra.mxu0 0.0
  %2212 = vmatprep.subr.mxu0 0.0
  %2213 = vmatpush1.msra.mxu0 0.0
  %2214 = vmatprep.subr.mxu0 0.0
  %2215 = vmatpush1.msra.mxu0 0.0
  %2216 = vmatprep.subr.mxu0 0.0
  %2217 = vmatpush1.msra.mxu0 0.0
  %2218 = vmatprep.subr.mxu0 0.0
  %2219 = vmatpush1.msra.mxu0 0.0
  %2220 = vmatprep.subr.mxu0 0.0
  %2221 = vmatpush1.msra.mxu0 0.0
  %2222 = vmatprep.subr.mxu0 0.0
  %2223 = vmatpush1.msra.mxu0 0.0
  %2224 = vmatprep.subr.mxu0 0.0
  %2225 = vmatpush1.msra.mxu0 0.0
  %2226 = vmatprep.subr.mxu0 0.0
  %2227 = vmatpush1.msra.mxu0 0.0
  %2228 = vmatprep.subr.mxu0 0.0
  %2229 = vmatpush1.msra.mxu0 0.0
  %2230 = vmatprep.subr.mxu0 0.0
  %2231 = vmatpush1.msra.mxu0 0.0
  %2232 = vmatprep.subr.mxu0 0.0
  %2233 = vmatpush1.msra.mxu0 0.0
  %2234 = vmatprep.subr.mxu0 0.0
  %2235 = vmatpush1.msra.mxu0 0.0
  %2236 = vmatprep.mubr.f32.mxu0 0.0
  %2237 = vmatmul.mubr.f32.gmra.mrb[0].mxu0 %v63
  %v2238 = vpop.f32.mrb[0].mxu0
  %v2239 = vadd.f32 %v53, %v2238
  %v2240 = vpop.f32.mrb[0].mxu0
  %2241 = vmatprep.mubr.f32.mxu0 0.0
  %2242 = vmatmul.mubr.f32.gmra.mrb[0].mxu0 %v66
  %v2243 = vpop.f32.mrb[0].mxu0
  %v2244 = vadd.f32 %v54, %v2243
  %v2245 = vpop.f32.mrb[0].mxu0
  %2246 = vmatprep.mubr.f32.mxu0 0.0
  %2247 = vmatmul.mubr.f32.gmra.mrb[0].mxu0 %v69
  %v2248 = vpop.f32.mrb[0].mxu0
  %v2249 = vadd.f32 %v55, %v2248
  %v2250 = vpop.f32.mrb[0].mxu0
  %2251 = vmatprep.mubr.f32.mxu0 0.0
  %2252 = vmatmul.mubr.f32.gmra.mrb[0].mxu0 %v72
  %v2253 = vpop.f32.mrb[0].mxu0
  %v2254 = vadd.f32 %v56, %v2253
  %v2255 = vpop.f32.mrb[0].mxu0
  %2256 = vmatprep.mubr.f32.mxu0 0.0
  %2257 = vmatmul.mubr.f32.gmra.mrb[0].mxu0 %v75
  %v2258 = vpop.f32.mrb[0].mxu0
  %v2259 = vadd.f32 %v57, %v2258
  %v2260 = vpop.f32.mrb[0].mxu0
  %2261 = vmatprep.mubr.f32.mxu0 0.0
  %2262 = vmatmul.mubr.f32.gmra.mrb[0].mxu0 %v78
  %v2263 = vpop.f32.mrb[0].mxu0
  %v2264 = vadd.f32 %v58, %v2263
  %v2265 = vpop.f32.mrb[0].mxu0
  %2266 = vmatprep.mubr.f32.mxu0 0.0
  %2267 = vmatmul.mubr.f32.gmra.mrb[0].mxu0 %v81
  %v2268 = vpop.f32.mrb[0].mxu0
  %v2269 = vadd.f32 %v59, %v2268
  %v2270 = vpop.f32.mrb[0].mxu0
  %2271 = vmatprep.mubr.f32.mxu0 0.0
  %2272 = vmatmul.mubr.f32.gmra.mrb[0].mxu0 %v84
  %v2273 = vpop.f32.mrb[0].mxu0
  %v2274 = vadd.f32 %v60, %v2273
  %v2275 = vpop.f32.mrb[0].mxu0
  %2276 = vdwg.mxu0
  %v2277 = vmax.f32 %v29, %v2239
  %v2278 = vmax.f32 %v30, %v2244
  %v2279 = vmax.f32 %v31, %v2249
  %v2280 = vmax.f32 %v32, %v2254
  %v2281 = vmax.f32 %v33, %v2259
  %v2282 = vmax.f32 %v34, %v2264
  %v2283 = vmax.f32 %v35, %v2269
  %v2284 = vmax.f32 %v36, %v2274
  %2285 = vmatprep.subr.mxu0 0.0
  %2286 = vmatpush1.msra.mxu0 %v2164
  %2287 = vmatprep.subr.mxu0 0.0
  %2288 = vmatpush1.msra.mxu0 %v2165
  %2289 = vmatprep.subr.mxu0 0.0
  %2290 = vmatpush1.msra.mxu0 %v2166
  %2291 = vmatprep.subr.mxu0 0.0
  %2292 = vmatpush1.msra.mxu0 %v2167
  %2293 = vmatprep.subr.mxu0 0.0
  %2294 = vmatpush1.msra.mxu0 %v2168
  %2295 = vmatprep.subr.mxu0 0.0
  %2296 = vmatpush1.msra.mxu0 %v2169
  %2297 = vmatprep.subr.mxu0 0.0
  %2298 = vmatpush1.msra.mxu0 %v2170
  %2299 = vmatprep.subr.mxu0 0.0
  %2300 = vmatpush1.msra.mxu0 %v2171
  %2301 = vmatprep.subr.mxu0 0.0
  %2302 = vmatpush1.msra.mxu0 0.0
  %2303 = vmatprep.subr.mxu0 0.0
  %2304 = vmatpush1.msra.mxu0 0.0
  %2305 = vmatprep.subr.mxu0 0.0
  %2306 = vmatpush1.msra.mxu0 0.0
  %2307 = vmatprep.subr.mxu0 0.0
  %2308 = vmatpush1.msra.mxu0 0.0
  %2309 = vmatprep.subr.mxu0 0.0
  %2310 = vmatpush1.msra.mxu0 0.0
  %2311 = vmatprep.subr.mxu0 0.0
  %2312 = vmatpush1.msra.mxu0 0.0
  %2313 = vmatprep.subr.mxu0 0.0
  %2314 = vmatpush1.msra.mxu0 0.0
  %2315 = vmatprep.subr.mxu0 0.0
  %2316 = vmatpush1.msra.mxu0 0.0
  %2317 = vmatprep.subr.mxu0 0.0
  %2318 = vmatpush1.msra.mxu0 0.0
  %2319 = vmatprep.subr.mxu0 0.0
  %2320 = vmatpush1.msra.mxu0 0.0
  %2321 = vmatprep.subr.mxu0 0.0
  %2322 = vmatpush1.msra.mxu0 0.0
  %2323 = vmatprep.subr.mxu0 0.0
  %2324 = vmatpush1.msra.mxu0 0.0
  %2325 = vmatprep.subr.mxu0 0.0
  %2326 = vmatpush1.msra.mxu0 0.0
  %2327 = vmatprep.subr.mxu0 0.0
  %2328 = vmatpush1.msra.mxu0 0.0
  %2329 = vmatprep.subr.mxu0 0.0
  %2330 = vmatpush1.msra.mxu0 0.0
  %2331 = vmatprep.subr.mxu0 0.0
  %2332 = vmatpush1.msra.mxu0 0.0
  %2333 = vmatprep.subr.mxu0 0.0
  %2334 = vmatpush1.msra.mxu0 0.0
  %2335 = vmatprep.subr.mxu0 0.0
  %2336 = vmatpush1.msra.mxu0 0.0
  %2337 = vmatprep.subr.mxu0 0.0
  %2338 = vmatpush1.msra.mxu0 0.0
  %2339 = vmatprep.subr.mxu0 0.0
  %2340 = vmatpush1.msra.mxu0 0.0
  %2341 = vmatprep.subr.mxu0 0.0
  %2342 = vmatpush1.msra.mxu0 0.0
  %2343 = vmatprep.subr.mxu0 0.0
  %2344 = vmatpush1.msra.mxu0 0.0
  %2345 = vmatprep.subr.mxu0 0.0
  %2346 = vmatpush1.msra.mxu0 0.0
  %2347 = vmatprep.subr.mxu0 0.0
  %2348 = vmatpush1.msra.mxu0 0.0
  %2349 = vmatprep.mubr.f32.mxu0 0.0
  %2350 = vmatmul.mubr.f32.gmra.mrb[0].mxu0 %v218
  %v2351 = vpop.f32.mrb[0].mxu0
  %v2352 = vadd.f32 %v209, %v2351
  %v2353 = vpop.f32.mrb[0].mxu0
  %2354 = vmatprep.mubr.f32.mxu0 0.0
  %2355 = vmatmul.mubr.f32.gmra.mrb[0].mxu0 %v221
  %v2356 = vpop.f32.mrb[0].mxu0
  %v2357 = vadd.f32 %v210, %v2356
  %v2358 = vpop.f32.mrb[0].mxu0
  %2359 = vmatprep.mubr.f32.mxu0 0.0
  %2360 = vmatmul.mubr.f32.gmra.mrb[0].mxu0 %v224
  %v2361 = vpop.f32.mrb[0].mxu0
  %v2362 = vadd.f32 %v211, %v2361
  %v2363 = vpop.f32.mrb[0].mxu0
  %2364 = vmatprep.mubr.f32.mxu0 0.0
  %2365 = vmatmul.mubr.f32.gmra.mrb[0].mxu0 %v227
  %v2366 = vpop.f32.mrb[0].mxu0
  %v2367 = vadd.f32 %v212, %v2366
  %v2368 = vpop.f32.mrb[0].mxu0
  %2369 = vmatprep.mubr.f32.mxu0 0.0
  %2370 = vmatmul.mubr.f32.gmra.mrb[0].mxu0 %v230
  %v2371 = vpop.f32.mrb[0].mxu0
  %v2372 = vadd.f32 %v213, %v2371
  %v2373 = vpop.f32.mrb[0].mxu0
  %2374 = vmatprep.mubr.f32.mxu0 0.0
  %2375 = vmatmul.mubr.f32.gmra.mrb[0].mxu0 %v233
  %v2376 = vpop.f32.mrb[0].mxu0
  %v2377 = vadd.f32 %v214, %v2376
  %v2378 = vpop.f32.mrb[0].mxu0
  %2379 = vmatprep.mubr.f32.mxu0 0.0
  %2380 = vmatmul.mubr.f32.gmra.mrb[0].mxu0 %v236
  %v2381 = vpop.f32.mrb[0].mxu0
  %v2382 = vadd.f32 %v215, %v2381
  %v2383 = vpop.f32.mrb[0].mxu0
  %2384 = vmatprep.mubr.f32.mxu0 0.0
  %2385 = vmatmul.mubr.f32.gmra.mrb[0].mxu0 %v239
  %v2386 = vpop.f32.mrb[0].mxu0
  %v2387 = vadd.f32 %v216, %v2386
  %v2388 = vpop.f32.mrb[0].mxu0
  %2389 = vdwg.mxu0
  %v2390 = vmax.f32 %v2277, %v2352
  %v2391 = vmax.f32 %v2278, %v2357
  %v2392 = vmax.f32 %v2279, %v2362
  %v2393 = vmax.f32 %v2280, %v2367
  %v2394 = vmax.f32 %v2281, %v2372
  %v2395 = vmax.f32 %v2282, %v2377
  %v2396 = vmax.f32 %v2283, %v2382
  %v2397 = vmax.f32 %v2284, %v2387
  %2398 = vmatprep.subr.mxu0 0.0
  %2399 = vmatpush1.msra.mxu0 %v2164
  %2400 = vmatprep.subr.mxu0 0.0
  %2401 = vmatpush1.msra.mxu0 %v2165
  %2402 = vmatprep.subr.mxu0 0.0
  %2403 = vmatpush1.msra.mxu0 %v2166
  %2404 = vmatprep.subr.mxu0 0.0
  %2405 = vmatpush1.msra.mxu0 %v2167
  %2406 = vmatprep.subr.mxu0 0.0
  %2407 = vmatpush1.msra.mxu0 %v2168
  %2408 = vmatprep.subr.mxu0 0.0
  %2409 = vmatpush1.msra.mxu0 %v2169
  %2410 = vmatprep.subr.mxu0 0.0
  %2411 = vmatpush1.msra.mxu0 %v2170
  %2412 = vmatprep.subr.mxu0 0.0
  %2413 = vmatpush1.msra.mxu0 %v2171
  %2414 = vmatprep.subr.mxu0 0.0
  %2415 = vmatpush1.msra.mxu0 0.0
  %2416 = vmatprep.subr.mxu0 0.0
  %2417 = vmatpush1.msra.mxu0 0.0
  %2418 = vmatprep.subr.mxu0 0.0
  %2419 = vmatpush1.msra.mxu0 0.0
  %2420 = vmatprep.subr.mxu0 0.0
  %2421 = vmatpush1.msra.mxu0 0.0
  %2422 = vmatprep.subr.mxu0 0.0
  %2423 = vmatpush1.msra.mxu0 0.0
  %2424 = vmatprep.subr.mxu0 0.0
  %2425 = vmatpush1.msra.mxu0 0.0
  %2426 = vmatprep.subr.mxu0 0.0
  %2427 = vmatpush1.msra.mxu0 0.0
  %2428 = vmatprep.subr.mxu0 0.0
  %2429 = vmatpush1.msra.mxu0 0.0
  %2430 = vmatprep.subr.mxu0 0.0
  %2431 = vmatpush1.msra.mxu0 0.0
  %2432 = vmatprep.subr.mxu0 0.0
  %2433 = vmatpush1.msra.mxu0 0.0
  %2434 = vmatprep.subr.mxu0 0.0
  %2435 = vmatpush1.msra.mxu0 0.0
  %2436 = vmatprep.subr.mxu0 0.0
  %2437 = vmatpush1.msra.mxu0 0.0
  %2438 = vmatprep.subr.mxu0 0.0
  %2439 = vmatpush1.msra.mxu0 0.0
  %2440 = vmatprep.subr.mxu0 0.0
  %2441 = vmatpush1.msra.mxu0 0.0
  %2442 = vmatprep.subr.mxu0 0.0
  %2443 = vmatpush1.msra.mxu0 0.0
  %2444 = vmatprep.subr.mxu0 0.0
  %2445 = vmatpush1.msra.mxu0 0.0
  %2446 = vmatprep.subr.mxu0 0.0
  %2447 = vmatpush1.msra.mxu0 0.0
  %2448 = vmatprep.subr.mxu0 0.0
  %2449 = vmatpush1.msra.mxu0 0.0
  %2450 = vmatprep.subr.mxu0 0.0
  %2451 = vmatpush1.msra.mxu0 0.0
  %2452 = vmatprep.subr.mxu0 0.0
  %2453 = vmatpush1.msra.mxu0 0.0
  %2454 = vmatprep.subr.mxu0 0.0
  %2455 = vmatpush1.msra.mxu0 0.0
  %2456 = vmatprep.subr.mxu0 0.0
  %2457 = vmatpush1.msra.mxu0 0.0
  %2458 = vmatprep.subr.mxu0 0.0
  %2459 = vmatpush1.msra.mxu0 0.0
  %2460 = vmatprep.subr.mxu0 0.0
  %2461 = vmatpush1.msra.mxu0 0.0
  %2462 = vmatprep.mubr.f32.mxu0 0.0
  %2463 = vmatmul.mubr.f32.gmra.mrb[0].mxu0 %v373
  %v2464 = vpop.f32.mrb[0].mxu0
  %v2465 = vadd.f32 %v364, %v2464
  %v2466 = vpop.f32.mrb[0].mxu0
  %2467 = vmatprep.mubr.f32.mxu0 0.0
  %2468 = vmatmul.mubr.f32.gmra.mrb[0].mxu0 %v376
  %v2469 = vpop.f32.mrb[0].mxu0
  %v2470 = vadd.f32 %v365, %v2469
  %v2471 = vpop.f32.mrb[0].mxu0
  %2472 = vmatprep.mubr.f32.mxu0 0.0
  %2473 = vmatmul.mubr.f32.gmra.mrb[0].mxu0 %v379
  %v2474 = vpop.f32.mrb[0].mxu0
  %v2475 = vadd.f32 %v366, %v2474
  %v2476 = vpop.f32.mrb[0].mxu0
  %2477 = vmatprep.mubr.f32.mxu0 0.0
  %2478 = vmatmul.mubr.f32.gmra.mrb[0].mxu0 %v382
  %v2479 = vpop.f32.mrb[0].mxu0
  %v2480 = vadd.f32 %v367, %v2479
  %v2481 = vpop.f32.mrb[0].mxu0
  %2482 = vmatprep.mubr.f32.mxu0 0.0
  %2483 = vmatmul.mubr.f32.gmra.mrb[0].mxu0 %v385
  %v2484 = vpop.f32.mrb[0].mxu0
  %v2485 = vadd.f32 %v368, %v2484
  %v2486 = vpop.f32.mrb[0].mxu0
  %2487 = vmatprep.mubr.f32.mxu0 0.0
  %2488 = vmatmul.mubr.f32.gmra.mrb[0].mxu0 %v388
  %v2489 = vpop.f32.mrb[0].mxu0
  %v2490 = vadd.f32 %v369, %v2489
  %v2491 = vpop.f32.mrb[0].mxu0
  %2492 = vmatprep.mubr.f32.mxu0 0.0
  %2493 = vmatmul.mubr.f32.gmra.mrb[0].mxu0 %v391
  %v2494 = vpop.f32.mrb[0].mxu0
  %v2495 = vadd.f32 %v370, %v2494
  %v2496 = vpop.f32.mrb[0].mxu0
  %2497 = vmatprep.mubr.f32.mxu0 0.0
  %2498 = vmatmul.mubr.f32.gmra.mrb[0].mxu0 %v394
  %v2499 = vpop.f32.mrb[0].mxu0
  %v2500 = vadd.f32 %v371, %v2499
  %v2501 = vpop.f32.mrb[0].mxu0
  %2502 = vdwg.mxu0
  %v2503 = vmax.f32 %v2390, %v2465
  %v2504 = vmax.f32 %v2391, %v2470
  %v2505 = vmax.f32 %v2392, %v2475
  %v2506 = vmax.f32 %v2393, %v2480
  %v2507 = vmax.f32 %v2394, %v2485
  %v2508 = vmax.f32 %v2395, %v2490
  %v2509 = vmax.f32 %v2396, %v2495
  %v2510 = vmax.f32 %v2397, %v2500
  %v2511 = vadd.f32 %v2164, %v2503
  %v2512 = vadd.f32 %v2165, %v2504
  %v2513 = vadd.f32 %v2166, %v2505
  %v2514 = vadd.f32 %v2167, %v2506
  %v2515 = vadd.f32 %v2168, %v2507
  %v2516 = vadd.f32 %v2169, %v2508
  %v2517 = vadd.f32 %v2170, %v2509
  %v2518 = vadd.f32 %v2171, %v2510
  %s2519 = scalar_lea.vmem %s4, 512
  %v2520 = vld [vmem:[%s2519] sm:$0xff]
  %v2521 = vld [vmem:[%s2519 + $0x8] sm:$0xff]
  %v2522 = vld [vmem:[%s2519 + $0x10] sm:$0xff]
  %v2523 = vld [vmem:[%s2519 + $0x18] sm:$0xff]
  %v2524 = vld [vmem:[%s2519 + $0x20] sm:$0xff]
  %v2525 = vld [vmem:[%s2519 + $0x28] sm:$0xff]
  %v2526 = vld [vmem:[%s2519 + $0x30] sm:$0xff]
  %v2527 = vld [vmem:[%s2519 + $0x38] sm:$0xff]
  %v2528 = vld [vmem:[%s2519 + $0x40] sm:$0xff]
  %v2529 = vld [vmem:[%s2519 + $0x48] sm:$0xff]
  %v2530 = vld [vmem:[%s2519 + $0x50] sm:$0xff]
  %v2531 = vld [vmem:[%s2519 + $0x58] sm:$0xff]
  %v2532 = vld [vmem:[%s2519 + $0x60] sm:$0xff]
  %v2533 = vld [vmem:[%s2519 + $0x68] sm:$0xff]
  %v2534 = vld [vmem:[%s2519 + $0x70] sm:$0xff]
  %v2535 = vld [vmem:[%s2519 + $0x78] sm:$0xff]
  %s2536 = scalar_lea.vmem %s5, 4
  %v2537 = vld [vmem:[%s2536] sm:$0x1]
  %v2539 = vlaneseq
  %v2540 = vshrl.u32 %v2539, 7
  %v2541 = vsub.s32 0, %v2540
  %v2542 = vrot.slane %v2537, %v2541
  %2544 = vmatprep.subr.mxu0 0.0
  %2545 = vmatpush1.msra.mxu0 %v2520
  %2546 = vmatprep.subr.mxu0 0.0
  %2547 = vmatpush1.msra.mxu0 %v2521
  %2548 = vmatprep.subr.mxu0 0.0
  %2549 = vmatpush1.msra.mxu0 %v2522
  %2550 = vmatprep.subr.mxu0 0.0
  %2551 = vmatpush1.msra.mxu0 %v2523
  %2552 = vmatprep.subr.mxu0 0.0
  %2553 = vmatpush1.msra.mxu0 %v2524
  %2554 = vmatprep.subr.mxu0 0.0
  %2555 = vmatpush1.msra.mxu0 %v2525
  %2556 = vmatprep.subr.mxu0 0.0
  %2557 = vmatpush1.msra.mxu0 %v2526
  %2558 = vmatprep.subr.mxu0 0.0
  %2559 = vmatpush1.msra.mxu0 %v2527
  %2560 = vmatprep.subr.mxu0 0.0
  %2561 = vmatpush1.msra.mxu0 %v2528
  %2562 = vmatprep.subr.mxu0 0.0
  %2563 = vmatpush1.msra.mxu0 %v2529
  %2564 = vmatprep.subr.mxu0 0.0
  %2565 = vmatpush1.msra.mxu0 %v2530
  %2566 = vmatprep.subr.mxu0 0.0
  %2567 = vmatpush1.msra.mxu0 %v2531
  %2568 = vmatprep.subr.mxu0 0.0
  %2569 = vmatpush1.msra.mxu0 %v2532
  %2570 = vmatprep.subr.mxu0 0.0
  %2571 = vmatpush1.msra.mxu0 %v2533
  %2572 = vmatprep.subr.mxu0 0.0
  %2573 = vmatpush1.msra.mxu0 %v2534
  %2574 = vmatprep.subr.mxu0 0.0
  %2575 = vmatpush1.msra.mxu0 %v2535
  %2576 = vmatprep.subr.mxu0 0.0
  %2577 = vmatpush1.msra.mxu0 0.0
  %2578 = vmatprep.subr.mxu0 0.0
  %2579 = vmatpush1.msra.mxu0 0.0
  %2580 = vmatprep.subr.mxu0 0.0
  %2581 = vmatpush1.msra.mxu0 0.0
  %2582 = vmatprep.subr.mxu0 0.0
  %2583 = vmatpush1.msra.mxu0 0.0
  %2584 = vmatprep.subr.mxu0 0.0
  %2585 = vmatpush1.msra.mxu0 0.0
  %2586 = vmatprep.subr.mxu0 0.0
  %2587 = vmatpush1.msra.mxu0 0.0
  %2588 = vmatprep.subr.mxu0 0.0
  %2589 = vmatpush1.msra.mxu0 0.0
  %2590 = vmatprep.subr.mxu0 0.0
  %2591 = vmatpush1.msra.mxu0 0.0
  %2592 = vmatprep.subr.mxu0 0.0
  %2593 = vmatpush1.msra.mxu0 0.0
  %2594 = vmatprep.subr.mxu0 0.0
  %2595 = vmatpush1.msra.mxu0 0.0
  %2596 = vmatprep.subr.mxu0 0.0
  %2597 = vmatpush1.msra.mxu0 0.0
  %2598 = vmatprep.subr.mxu0 0.0
  %2599 = vmatpush1.msra.mxu0 0.0
  %2600 = vmatprep.subr.mxu0 0.0
  %2601 = vmatpush1.msra.mxu0 0.0
  %2602 = vmatprep.subr.mxu0 0.0
  %2603 = vmatpush1.msra.mxu0 0.0
  %2604 = vmatprep.subr.mxu0 0.0
  %2605 = vmatpush1.msra.mxu0 0.0
  %2606 = vmatprep.subr.mxu0 0.0
  %2607 = vmatpush1.msra.mxu0 0.0
  %2608 = vmatprep.mubr.f32.mxu0 0.0
  %2609 = vmatmul.mubr.f32.gmra.mrb[0].mxu0 %v2511
  %v2610 = vpop.f32.mrb[0].mxu0
  %v2611 = vadd.f32 %v2542, %v2610
  %v2612 = vpop.f32.mrb[0].mxu0
  %2613 = vmatprep.mubr.f32.mxu0 0.0
  %2614 = vmatmul.mubr.f32.gmra.mrb[0].mxu0 %v2512
  %v2615 = vpop.f32.mrb[0].mxu0
  %v2616 = vadd.f32 %v2542, %v2615
  %v2617 = vpop.f32.mrb[0].mxu0
  %2618 = vmatprep.mubr.f32.mxu0 0.0
  %2619 = vmatmul.mubr.f32.gmra.mrb[0].mxu0 %v2513
  %v2620 = vpop.f32.mrb[0].mxu0
  %v2621 = vadd.f32 %v2542, %v2620
  %v2622 = vpop.f32.mrb[0].mxu0
  %2623 = vmatprep.mubr.f32.mxu0 0.0
  %2624 = vmatmul.mubr.f32.gmra.mrb[0].mxu0 %v2514
  %v2625 = vpop.f32.mrb[0].mxu0
  %v2626 = vadd.f32 %v2542, %v2625
  %v2627 = vpop.f32.mrb[0].mxu0
  %2628 = vmatprep.mubr.f32.mxu0 0.0
  %2629 = vmatmul.mubr.f32.gmra.mrb[0].mxu0 %v2515
  %v2630 = vpop.f32.mrb[0].mxu0
  %v2631 = vadd.f32 %v2542, %v2630
  %v2632 = vpop.f32.mrb[0].mxu0
  %2633 = vmatprep.mubr.f32.mxu0 0.0
  %2634 = vmatmul.mubr.f32.gmra.mrb[0].mxu0 %v2516
  %v2635 = vpop.f32.mrb[0].mxu0
  %v2636 = vadd.f32 %v2542, %v2635
  %v2637 = vpop.f32.mrb[0].mxu0
  %2638 = vmatprep.mubr.f32.mxu0 0.0
  %2639 = vmatmul.mubr.f32.gmra.mrb[0].mxu0 %v2517
  %v2640 = vpop.f32.mrb[0].mxu0
  %v2641 = vadd.f32 %v2542, %v2640
  %v2642 = vpop.f32.mrb[0].mxu0
  %2643 = vmatprep.mubr.f32.mxu0 0.0
  %2644 = vmatmul.mubr.f32.gmra.mrb[0].mxu0 %v2518
  %v2645 = vpop.f32.mrb[0].mxu0
  %v2646 = vadd.f32 %v2542, %v2645
  %v2647 = vpop.f32.mrb[0].mxu0
  %2648 = vdwg.mxu0
  %vm2649 = vcmp.ge.f32.partialorder %v2611, 0.0
  %vm2650 = vcmp.ge.f32.partialorder %v2616, 0.0
  %vm2651 = vcmp.ge.f32.partialorder %v2621, 0.0
  %vm2652 = vcmp.ge.f32.partialorder %v2626, 0.0
  %vm2653 = vcmp.ge.f32.partialorder %v2631, 0.0
  %vm2654 = vcmp.ge.f32.partialorder %v2636, 0.0
  %vm2655 = vcmp.ge.f32.partialorder %v2641, 0.0
  %vm2656 = vcmp.ge.f32.partialorder %v2646, 0.0
  %v2657 = vmul.f32 %v2611, 0.01
  %v2658 = vmul.f32 %v2616, 0.01
  %v2659 = vmul.f32 %v2621, 0.01
  %v2660 = vmul.f32 %v2626, 0.01
  %v2661 = vmul.f32 %v2631, 0.01
  %v2662 = vmul.f32 %v2636, 0.01
  %v2663 = vmul.f32 %v2641, 0.01
  %v2664 = vmul.f32 %v2646, 0.01
  %v2665 = vsel %vm2649, %v2611, %v2657
  %v2666 = vsel %vm2650, %v2616, %v2658
  %v2667 = vsel %vm2651, %v2621, %v2659
  %v2668 = vsel %vm2652, %v2626, %v2660
  %v2669 = vsel %vm2653, %v2631, %v2661
  %v2670 = vsel %vm2654, %v2636, %v2662
  %v2671 = vsel %vm2655, %v2641, %v2663
  %v2672 = vsel %vm2656, %v2646, %v2664
  %2673 = vmatprep.subr.mxu0 0.0
  %2674 = vmatpush1.msra.mxu0 %v2665
  %2675 = vmatprep.subr.mxu0 0.0
  %2676 = vmatpush1.msra.mxu0 %v2666
  %2677 = vmatprep.subr.mxu0 0.0
  %2678 = vmatpush1.msra.mxu0 %v2667
  %2679 = vmatprep.subr.mxu0 0.0
  %2680 = vmatpush1.msra.mxu0 %v2668
  %2681 = vmatprep.subr.mxu0 0.0
  %2682 = vmatpush1.msra.mxu0 %v2669
  %2683 = vmatprep.subr.mxu0 0.0
  %2684 = vmatpush1.msra.mxu0 %v2670
  %2685 = vmatprep.subr.mxu0 0.0
  %2686 = vmatpush1.msra.mxu0 %v2671
  %2687 = vmatprep.subr.mxu0 0.0
  %2688 = vmatpush1.msra.mxu0 %v2672
  %2689 = vmatprep.subr.mxu0 0.0
  %2690 = vmatpush1.msra.mxu0 0.0
  %2691 = vmatprep.subr.mxu0 0.0
  %2692 = vmatpush1.msra.mxu0 0.0
  %2693 = vmatprep.subr.mxu0 0.0
  %2694 = vmatpush1.msra.mxu0 0.0
  %2695 = vmatprep.subr.mxu0 0.0
  %2696 = vmatpush1.msra.mxu0 0.0
  %2697 = vmatprep.subr.mxu0 0.0
  %2698 = vmatpush1.msra.mxu0 0.0
  %2699 = vmatprep.subr.mxu0 0.0
  %2700 = vmatpush1.msra.mxu0 0.0
  %2701 = vmatprep.subr.mxu0 0.0
  %2702 = vmatpush1.msra.mxu0 0.0
  %2703 = vmatprep.subr.mxu0 0.0
  %2704 = vmatpush1.msra.mxu0 0.0
  %2705 = vmatprep.subr.mxu0 0.0
  %2706 = vmatpush1.msra.mxu0 0.0
  %2707 = vmatprep.subr.mxu0 0.0
  %2708 = vmatpush1.msra.mxu0 0.0
  %2709 = vmatprep.subr.mxu0 0.0
  %2710 = vmatpush1.msra.mxu0 0.0
  %2711 = vmatprep.subr.mxu0 0.0
  %2712 = vmatpush1.msra.mxu0 0.0
  %2713 = vmatprep.subr.mxu0 0.0
  %2714 = vmatpush1.msra.mxu0 0.0
  %2715 = vmatprep.subr.mxu0 0.0
  %2716 = vmatpush1.msra.mxu0 0.0
  %2717 = vmatprep.subr.mxu0 0.0
  %2718 = vmatpush1.msra.mxu0 0.0
  %2719 = vmatprep.subr.mxu0 0.0
  %2720 = vmatpush1.msra.mxu0 0.0
  %2721 = vmatprep.subr.mxu0 0.0
  %2722 = vmatpush1.msra.mxu0 0.0
  %2723 = vmatprep.subr.mxu0 0.0
  %2724 = vmatpush1.msra.mxu0 0.0
  %2725 = vmatprep.subr.mxu0 0.0
  %2726 = vmatpush1.msra.mxu0 0.0
  %2727 = vmatprep.subr.mxu0 0.0
  %2728 = vmatpush1.msra.mxu0 0.0
  %2729 = vmatprep.subr.mxu0 0.0
  %2730 = vmatpush1.msra.mxu0 0.0
  %2731 = vmatprep.subr.mxu0 0.0
  %2732 = vmatpush1.msra.mxu0 0.0
  %2733 = vmatprep.subr.mxu0 0.0
  %2734 = vmatpush1.msra.mxu0 0.0
  %2735 = vmatprep.subr.mxu0 0.0
  %2736 = vmatpush1.msra.mxu0 0.0
  %2737 = vmatprep.mubr.f32.mxu0 0.0
  %2738 = vmatmul.mubr.f32.gmra.mrb[0].mxu0 %v63
  %v2739 = vpop.f32.mrb[0].mxu0
  %v2740 = vadd.f32 %v53, %v2739
  %v2741 = vpop.f32.mrb[0].mxu0
  %2742 = vmatprep.mubr.f32.mxu0 0.0
  %2743 = vmatmul.mubr.f32.gmra.mrb[0].mxu0 %v66
  %v2744 = vpop.f32.mrb[0].mxu0
  %v2745 = vadd.f32 %v54, %v2744
  %v2746 = vpop.f32.mrb[0].mxu0
  %2747 = vmatprep.mubr.f32.mxu0 0.0
  %2748 = vmatmul.mubr.f32.gmra.mrb[0].mxu0 %v69
  %v2749 = vpop.f32.mrb[0].mxu0
  %v2750 = vadd.f32 %v55, %v2749
  %v2751 = vpop.f32.mrb[0].mxu0
  %2752 = vmatprep.mubr.f32.mxu0 0.0
  %2753 = vmatmul.mubr.f32.gmra.mrb[0].mxu0 %v72
  %v2754 = vpop.f32.mrb[0].mxu0
  %v2755 = vadd.f32 %v56, %v2754
  %v2756 = vpop.f32.mrb[0].mxu0
  %2757 = vmatprep.mubr.f32.mxu0 0.0
  %2758 = vmatmul.mubr.f32.gmra.mrb[0].mxu0 %v75
  %v2759 = vpop.f32.mrb[0].mxu0
  %v2760 = vadd.f32 %v57, %v2759
  %v2761 = vpop.f32.mrb[0].mxu0
  %2762 = vmatprep.mubr.f32.mxu0 0.0
  %2763 = vmatmul.mubr.f32.gmra.mrb[0].mxu0 %v78
  %v2764 = vpop.f32.mrb[0].mxu0
  %v2765 = vadd.f32 %v58, %v2764
  %v2766 = vpop.f32.mrb[0].mxu0
  %2767 = vmatprep.mubr.f32.mxu0 0.0
  %2768 = vmatmul.mubr.f32.gmra.mrb[0].mxu0 %v81
  %v2769 = vpop.f32.mrb[0].mxu0
  %v2770 = vadd.f32 %v59, %v2769
  %v2771 = vpop.f32.mrb[0].mxu0
  %2772 = vmatprep.mubr.f32.mxu0 0.0
  %2773 = vmatmul.mubr.f32.gmra.mrb[0].mxu0 %v84
  %v2774 = vpop.f32.mrb[0].mxu0
  %v2775 = vadd.f32 %v60, %v2774
  %v2776 = vpop.f32.mrb[0].mxu0
  %2777 = vdwg.mxu0
  %v2778 = vmax.f32 %v29, %v2740
  %v2779 = vmax.f32 %v30, %v2745
  %v2780 = vmax.f32 %v31, %v2750
  %v2781 = vmax.f32 %v32, %v2755
  %v2782 = vmax.f32 %v33, %v2760
  %v2783 = vmax.f32 %v34, %v2765
  %v2784 = vmax.f32 %v35, %v2770
  %v2785 = vmax.f32 %v36, %v2775
  %2786 = vmatprep.subr.mxu0 0.0
  %2787 = vmatpush1.msra.mxu0 %v2665
  %2788 = vmatprep.subr.mxu0 0.0
  %2789 = vmatpush1.msra.mxu0 %v2666
  %2790 = vmatprep.subr.mxu0 0.0
  %2791 = vmatpush1.msra.mxu0 %v2667
  %2792 = vmatprep.subr.mxu0 0.0
  %2793 = vmatpush1.msra.mxu0 %v2668
  %2794 = vmatprep.subr.mxu0 0.0
  %2795 = vmatpush1.msra.mxu0 %v2669
  %2796 = vmatprep.subr.mxu0 0.0
  %2797 = vmatpush1.msra.mxu0 %v2670
  %2798 = vmatprep.subr.mxu0 0.0
  %2799 = vmatpush1.msra.mxu0 %v2671
  %2800 = vmatprep.subr.mxu0 0.0
  %2801 = vmatpush1.msra.mxu0 %v2672
  %2802 = vmatprep.subr.mxu0 0.0
  %2803 = vmatpush1.msra.mxu0 0.0
  %2804 = vmatprep.subr.mxu0 0.0
  %2805 = vmatpush1.msra.mxu0 0.0
  %2806 = vmatprep.subr.mxu0 0.0
  %2807 = vmatpush1.msra.mxu0 0.0
  %2808 = vmatprep.subr.mxu0 0.0
  %2809 = vmatpush1.msra.mxu0 0.0
  %2810 = vmatprep.subr.mxu0 0.0
  %2811 = vmatpush1.msra.mxu0 0.0
  %2812 = vmatprep.subr.mxu0 0.0
  %2813 = vmatpush1.msra.mxu0 0.0
  %2814 = vmatprep.subr.mxu0 0.0
  %2815 = vmatpush1.msra.mxu0 0.0
  %2816 = vmatprep.subr.mxu0 0.0
  %2817 = vmatpush1.msra.mxu0 0.0
  %2818 = vmatprep.subr.mxu0 0.0
  %2819 = vmatpush1.msra.mxu0 0.0
  %2820 = vmatprep.subr.mxu0 0.0
  %2821 = vmatpush1.msra.mxu0 0.0
  %2822 = vmatprep.subr.mxu0 0.0
  %2823 = vmatpush1.msra.mxu0 0.0
  %2824 = vmatprep.subr.mxu0 0.0
  %2825 = vmatpush1.msra.mxu0 0.0
  %2826 = vmatprep.subr.mxu0 0.0
  %2827 = vmatpush1.msra.mxu0 0.0
  %2828 = vmatprep.subr.mxu0 0.0
  %2829 = vmatpush1.msra.mxu0 0.0
  %2830 = vmatprep.subr.mxu0 0.0
  %2831 = vmatpush1.msra.mxu0 0.0
  %2832 = vmatprep.subr.mxu0 0.0
  %2833 = vmatpush1.msra.mxu0 0.0
  %2834 = vmatprep.subr.mxu0 0.0
  %2835 = vmatpush1.msra.mxu0 0.0
  %2836 = vmatprep.subr.mxu0 0.0
  %2837 = vmatpush1.msra.mxu0 0.0
  %2838 = vmatprep.subr.mxu0 0.0
  %2839 = vmatpush1.msra.mxu0 0.0
  %2840 = vmatprep.subr.mxu0 0.0
  %2841 = vmatpush1.msra.mxu0 0.0
  %2842 = vmatprep.subr.mxu0 0.0
  %2843 = vmatpush1.msra.mxu0 0.0
  %2844 = vmatprep.subr.mxu0 0.0
  %2845 = vmatpush1.msra.mxu0 0.0
  %2846 = vmatprep.subr.mxu0 0.0
  %2847 = vmatpush1.msra.mxu0 0.0
  %2848 = vmatprep.subr.mxu0 0.0
  %2849 = vmatpush1.msra.mxu0 0.0
  %2850 = vmatprep.mubr.f32.mxu0 0.0
  %2851 = vmatmul.mubr.f32.gmra.mrb[0].mxu0 %v218
  %v2852 = vpop.f32.mrb[0].mxu0
  %v2853 = vadd.f32 %v209, %v2852
  %v2854 = vpop.f32.mrb[0].mxu0
  %2855 = vmatprep.mubr.f32.mxu0 0.0
  %2856 = vmatmul.mubr.f32.gmra.mrb[0].mxu0 %v221
  %v2857 = vpop.f32.mrb[0].mxu0
  %v2858 = vadd.f32 %v210, %v2857
  %v2859 = vpop.f32.mrb[0].mxu0
  %2860 = vmatprep.mubr.f32.mxu0 0.0
  %2861 = vmatmul.mubr.f32.gmra.mrb[0].mxu0 %v224
  %v2862 = vpop.f32.mrb[0].mxu0
  %v2863 = vadd.f32 %v211, %v2862
  %v2864 = vpop.f32.mrb[0].mxu0
  %2865 = vmatprep.mubr.f32.mxu0 0.0
  %2866 = vmatmul.mubr.f32.gmra.mrb[0].mxu0 %v227
  %v2867 = vpop.f32.mrb[0].mxu0
  %v2868 = vadd.f32 %v212, %v2867
  %v2869 = vpop.f32.mrb[0].mxu0
  %2870 = vmatprep.mubr.f32.mxu0 0.0
  %2871 = vmatmul.mubr.f32.gmra.mrb[0].mxu0 %v230
  %v2872 = vpop.f32.mrb[0].mxu0
  %v2873 = vadd.f32 %v213, %v2872
  %v2874 = vpop.f32.mrb[0].mxu0
  %2875 = vmatprep.mubr.f32.mxu0 0.0
  %2876 = vmatmul.mubr.f32.gmra.mrb[0].mxu0 %v233
  %v2877 = vpop.f32.mrb[0].mxu0
  %v2878 = vadd.f32 %v214, %v2877
  %v2879 = vpop.f32.mrb[0].mxu0
  %2880 = vmatprep.mubr.f32.mxu0 0.0
  %2881 = vmatmul.mubr.f32.gmra.mrb[0].mxu0 %v236
  %v2882 = vpop.f32.mrb[0].mxu0
  %v2883 = vadd.f32 %v215, %v2882
  %v2884 = vpop.f32.mrb[0].mxu0
  %2885 = vmatprep.mubr.f32.mxu0 0.0
  %2886 = vmatmul.mubr.f32.gmra.mrb[0].mxu0 %v239
  %v2887 = vpop.f32.mrb[0].mxu0
  %v2888 = vadd.f32 %v216, %v2887
  %v2889 = vpop.f32.mrb[0].mxu0
  %2890 = vdwg.mxu0
  %v2891 = vmax.f32 %v2778, %v2853
  %v2892 = vmax.f32 %v2779, %v2858
  %v2893 = vmax.f32 %v2780, %v2863
  %v2894 = vmax.f32 %v2781, %v2868
  %v2895 = vmax.f32 %v2782, %v2873
  %v2896 = vmax.f32 %v2783, %v2878
  %v2897 = vmax.f32 %v2784, %v2883
  %v2898 = vmax.f32 %v2785, %v2888
  %2899 = vmatprep.subr.mxu0 0.0
  %2900 = vmatpush1.msra.mxu0 %v2665
  %2901 = vmatprep.subr.mxu0 0.0
  %2902 = vmatpush1.msra.mxu0 %v2666
  %2903 = vmatprep.subr.mxu0 0.0
  %2904 = vmatpush1.msra.mxu0 %v2667
  %2905 = vmatprep.subr.mxu0 0.0
  %2906 = vmatpush1.msra.mxu0 %v2668
  %2907 = vmatprep.subr.mxu0 0.0
  %2908 = vmatpush1.msra.mxu0 %v2669
  %2909 = vmatprep.subr.mxu0 0.0
  %2910 = vmatpush1.msra.mxu0 %v2670
  %2911 = vmatprep.subr.mxu0 0.0
  %2912 = vmatpush1.msra.mxu0 %v2671
  %2913 = vmatprep.subr.mxu0 0.0
  %2914 = vmatpush1.msra.mxu0 %v2672
  %2915 = vmatprep.subr.mxu0 0.0
  %2916 = vmatpush1.msra.mxu0 0.0
  %2917 = vmatprep.subr.mxu0 0.0
  %2918 = vmatpush1.msra.mxu0 0.0
  %2919 = vmatprep.subr.mxu0 0.0
  %2920 = vmatpush1.msra.mxu0 0.0
  %2921 = vmatprep.subr.mxu0 0.0
  %2922 = vmatpush1.msra.mxu0 0.0
  %2923 = vmatprep.subr.mxu0 0.0
  %2924 = vmatpush1.msra.mxu0 0.0
  %2925 = vmatprep.subr.mxu0 0.0
  %2926 = vmatpush1.msra.mxu0 0.0
  %2927 = vmatprep.subr.mxu0 0.0
  %2928 = vmatpush1.msra.mxu0 0.0
  %2929 = vmatprep.subr.mxu0 0.0
  %2930 = vmatpush1.msra.mxu0 0.0
  %2931 = vmatprep.subr.mxu0 0.0
  %2932 = vmatpush1.msra.mxu0 0.0
  %2933 = vmatprep.subr.mxu0 0.0
  %2934 = vmatpush1.msra.mxu0 0.0
  %2935 = vmatprep.subr.mxu0 0.0
  %2936 = vmatpush1.msra.mxu0 0.0
  %2937 = vmatprep.subr.mxu0 0.0
  %2938 = vmatpush1.msra.mxu0 0.0
  %2939 = vmatprep.subr.mxu0 0.0
  %2940 = vmatpush1.msra.mxu0 0.0
  %2941 = vmatprep.subr.mxu0 0.0
  %2942 = vmatpush1.msra.mxu0 0.0
  %2943 = vmatprep.subr.mxu0 0.0
  %2944 = vmatpush1.msra.mxu0 0.0
  %2945 = vmatprep.subr.mxu0 0.0
  %2946 = vmatpush1.msra.mxu0 0.0
  %2947 = vmatprep.subr.mxu0 0.0
  %2948 = vmatpush1.msra.mxu0 0.0
  %2949 = vmatprep.subr.mxu0 0.0
  %2950 = vmatpush1.msra.mxu0 0.0
  %2951 = vmatprep.subr.mxu0 0.0
  %2952 = vmatpush1.msra.mxu0 0.0
  %2953 = vmatprep.subr.mxu0 0.0
  %2954 = vmatpush1.msra.mxu0 0.0
  %2955 = vmatprep.subr.mxu0 0.0
  %2956 = vmatpush1.msra.mxu0 0.0
  %2957 = vmatprep.subr.mxu0 0.0
  %2958 = vmatpush1.msra.mxu0 0.0
  %2959 = vmatprep.subr.mxu0 0.0
  %2960 = vmatpush1.msra.mxu0 0.0
  %2961 = vmatprep.subr.mxu0 0.0
  %2962 = vmatpush1.msra.mxu0 0.0
  %2963 = vmatprep.mubr.f32.mxu0 0.0
  %2964 = vmatmul.mubr.f32.gmra.mrb[0].mxu0 %v373
  %v2965 = vpop.f32.mrb[0].mxu0
  %v2966 = vadd.f32 %v364, %v2965
  %v2967 = vpop.f32.mrb[0].mxu0
  %2968 = vmatprep.mubr.f32.mxu0 0.0
  %2969 = vmatmul.mubr.f32.gmra.mrb[0].mxu0 %v376
  %v2970 = vpop.f32.mrb[0].mxu0
  %v2971 = vadd.f32 %v365, %v2970
  %v2972 = vpop.f32.mrb[0].mxu0
  %2973 = vmatprep.mubr.f32.mxu0 0.0
  %2974 = vmatmul.mubr.f32.gmra.mrb[0].mxu0 %v379
  %v2975 = vpop.f32.mrb[0].mxu0
  %v2976 = vadd.f32 %v366, %v2975
  %v2977 = vpop.f32.mrb[0].mxu0
  %2978 = vmatprep.mubr.f32.mxu0 0.0
  %2979 = vmatmul.mubr.f32.gmra.mrb[0].mxu0 %v382
  %v2980 = vpop.f32.mrb[0].mxu0
  %v2981 = vadd.f32 %v367, %v2980
  %v2982 = vpop.f32.mrb[0].mxu0
  %2983 = vmatprep.mubr.f32.mxu0 0.0
  %2984 = vmatmul.mubr.f32.gmra.mrb[0].mxu0 %v385
  %v2985 = vpop.f32.mrb[0].mxu0
  %v2986 = vadd.f32 %v368, %v2985
  %v2987 = vpop.f32.mrb[0].mxu0
  %2988 = vmatprep.mubr.f32.mxu0 0.0
  %2989 = vmatmul.mubr.f32.gmra.mrb[0].mxu0 %v388
  %v2990 = vpop.f32.mrb[0].mxu0
  %v2991 = vadd.f32 %v369, %v2990
  %v2992 = vpop.f32.mrb[0].mxu0
  %2993 = vmatprep.mubr.f32.mxu0 0.0
  %2994 = vmatmul.mubr.f32.gmra.mrb[0].mxu0 %v391
  %v2995 = vpop.f32.mrb[0].mxu0
  %v2996 = vadd.f32 %v370, %v2995
  %v2997 = vpop.f32.mrb[0].mxu0
  %2998 = vmatprep.mubr.f32.mxu0 0.0
  %2999 = vmatmul.mubr.f32.gmra.mrb[0].mxu0 %v394
  %v3000 = vpop.f32.mrb[0].mxu0
  %v3001 = vadd.f32 %v371, %v3000
  %v3002 = vpop.f32.mrb[0].mxu0
  %3003 = vdwg.mxu0
  %v3004 = vmax.f32 %v2891, %v2966
  %v3005 = vmax.f32 %v2892, %v2971
  %v3006 = vmax.f32 %v2893, %v2976
  %v3007 = vmax.f32 %v2894, %v2981
  %v3008 = vmax.f32 %v2895, %v2986
  %v3009 = vmax.f32 %v2896, %v2991
  %v3010 = vmax.f32 %v2897, %v2996
  %v3011 = vmax.f32 %v2898, %v3001
  %v3012 = vadd.f32 %v2665, %v3004
  %v3013 = vadd.f32 %v2666, %v3005
  %v3014 = vadd.f32 %v2667, %v3006
  %v3015 = vadd.f32 %v2668, %v3007
  %v3016 = vadd.f32 %v2669, %v3008
  %v3017 = vadd.f32 %v2670, %v3009
  %v3018 = vadd.f32 %v2671, %v3010
  %v3019 = vadd.f32 %v2672, %v3011
  %s3020 = scalar_lea.vmem %s4, 640
  %v3021 = vld [vmem:[%s3020] sm:$0xff]
  %v3022 = vld [vmem:[%s3020 + $0x8] sm:$0xff]
  %v3023 = vld [vmem:[%s3020 + $0x10] sm:$0xff]
  %v3024 = vld [vmem:[%s3020 + $0x18] sm:$0xff]
  %v3025 = vld [vmem:[%s3020 + $0x20] sm:$0xff]
  %v3026 = vld [vmem:[%s3020 + $0x28] sm:$0xff]
  %v3027 = vld [vmem:[%s3020 + $0x30] sm:$0xff]
  %v3028 = vld [vmem:[%s3020 + $0x38] sm:$0xff]
  %v3029 = vld [vmem:[%s3020 + $0x40] sm:$0xff]
  %v3030 = vld [vmem:[%s3020 + $0x48] sm:$0xff]
  %v3031 = vld [vmem:[%s3020 + $0x50] sm:$0xff]
  %v3032 = vld [vmem:[%s3020 + $0x58] sm:$0xff]
  %v3033 = vld [vmem:[%s3020 + $0x60] sm:$0xff]
  %v3034 = vld [vmem:[%s3020 + $0x68] sm:$0xff]
  %v3035 = vld [vmem:[%s3020 + $0x70] sm:$0xff]
  %v3036 = vld [vmem:[%s3020 + $0x78] sm:$0xff]
  %s3037 = scalar_lea.vmem %s5, 5
  %v3038 = vld [vmem:[%s3037] sm:$0x1]
  %v3040 = vlaneseq
  %v3041 = vshrl.u32 %v3040, 7
  %v3042 = vsub.s32 0, %v3041
  %v3043 = vrot.slane %v3038, %v3042
  %3045 = vmatprep.subr.mxu0 0.0
  %3046 = vmatpush1.msra.mxu0 %v3021
  %3047 = vmatprep.subr.mxu0 0.0
  %3048 = vmatpush1.msra.mxu0 %v3022
  %3049 = vmatprep.subr.mxu0 0.0
  %3050 = vmatpush1.msra.mxu0 %v3023
  %3051 = vmatprep.subr.mxu0 0.0
  %3052 = vmatpush1.msra.mxu0 %v3024
  %3053 = vmatprep.subr.mxu0 0.0
  %3054 = vmatpush1.msra.mxu0 %v3025
  %3055 = vmatprep.subr.mxu0 0.0
  %3056 = vmatpush1.msra.mxu0 %v3026
  %3057 = vmatprep.subr.mxu0 0.0
  %3058 = vmatpush1.msra.mxu0 %v3027
  %3059 = vmatprep.subr.mxu0 0.0
  %3060 = vmatpush1.msra.mxu0 %v3028
  %3061 = vmatprep.subr.mxu0 0.0
  %3062 = vmatpush1.msra.mxu0 %v3029
  %3063 = vmatprep.subr.mxu0 0.0
  %3064 = vmatpush1.msra.mxu0 %v3030
  %3065 = vmatprep.subr.mxu0 0.0
  %3066 = vmatpush1.msra.mxu0 %v3031
  %3067 = vmatprep.subr.mxu0 0.0
  %3068 = vmatpush1.msra.mxu0 %v3032
  %3069 = vmatprep.subr.mxu0 0.0
  %3070 = vmatpush1.msra.mxu0 %v3033
  %3071 = vmatprep.subr.mxu0 0.0
  %3072 = vmatpush1.msra.mxu0 %v3034
  %3073 = vmatprep.subr.mxu0 0.0
  %3074 = vmatpush1.msra.mxu0 %v3035
  %3075 = vmatprep.subr.mxu0 0.0
  %3076 = vmatpush1.msra.mxu0 %v3036
  %3077 = vmatprep.subr.mxu0 0.0
  %3078 = vmatpush1.msra.mxu0 0.0
  %3079 = vmatprep.subr.mxu0 0.0
  %3080 = vmatpush1.msra.mxu0 0.0
  %3081 = vmatprep.subr.mxu0 0.0
  %3082 = vmatpush1.msra.mxu0 0.0
  %3083 = vmatprep.subr.mxu0 0.0
  %3084 = vmatpush1.msra.mxu0 0.0
  %3085 = vmatprep.subr.mxu0 0.0
  %3086 = vmatpush1.msra.mxu0 0.0
  %3087 = vmatprep.subr.mxu0 0.0
  %3088 = vmatpush1.msra.mxu0 0.0
  %3089 = vmatprep.subr.mxu0 0.0
  %3090 = vmatpush1.msra.mxu0 0.0
  %3091 = vmatprep.subr.mxu0 0.0
  %3092 = vmatpush1.msra.mxu0 0.0
  %3093 = vmatprep.subr.mxu0 0.0
  %3094 = vmatpush1.msra.mxu0 0.0
  %3095 = vmatprep.subr.mxu0 0.0
  %3096 = vmatpush1.msra.mxu0 0.0
  %3097 = vmatprep.subr.mxu0 0.0
  %3098 = vmatpush1.msra.mxu0 0.0
  %3099 = vmatprep.subr.mxu0 0.0
  %3100 = vmatpush1.msra.mxu0 0.0
  %3101 = vmatprep.subr.mxu0 0.0
  %3102 = vmatpush1.msra.mxu0 0.0
  %3103 = vmatprep.subr.mxu0 0.0
  %3104 = vmatpush1.msra.mxu0 0.0
  %3105 = vmatprep.subr.mxu0 0.0
  %3106 = vmatpush1.msra.mxu0 0.0
  %3107 = vmatprep.subr.mxu0 0.0
  %3108 = vmatpush1.msra.mxu0 0.0
  %3109 = vmatprep.mubr.f32.mxu0 0.0
  %3110 = vmatmul.mubr.f32.gmra.mrb[0].mxu0 %v3012
  %v3111 = vpop.f32.mrb[0].mxu0
  %v3112 = vadd.f32 %v3043, %v3111
  %v3113 = vpop.f32.mrb[0].mxu0
  %3114 = vmatprep.mubr.f32.mxu0 0.0
  %3115 = vmatmul.mubr.f32.gmra.mrb[0].mxu0 %v3013
  %v3116 = vpop.f32.mrb[0].mxu0
  %v3117 = vadd.f32 %v3043, %v3116
  %v3118 = vpop.f32.mrb[0].mxu0
  %3119 = vmatprep.mubr.f32.mxu0 0.0
  %3120 = vmatmul.mubr.f32.gmra.mrb[0].mxu0 %v3014
  %v3121 = vpop.f32.mrb[0].mxu0
  %v3122 = vadd.f32 %v3043, %v3121
  %v3123 = vpop.f32.mrb[0].mxu0
  %3124 = vmatprep.mubr.f32.mxu0 0.0
  %3125 = vmatmul.mubr.f32.gmra.mrb[0].mxu0 %v3015
  %v3126 = vpop.f32.mrb[0].mxu0
  %v3127 = vadd.f32 %v3043, %v3126
  %v3128 = vpop.f32.mrb[0].mxu0
  %3129 = vmatprep.mubr.f32.mxu0 0.0
  %3130 = vmatmul.mubr.f32.gmra.mrb[0].mxu0 %v3016
  %v3131 = vpop.f32.mrb[0].mxu0
  %v3132 = vadd.f32 %v3043, %v3131
  %v3133 = vpop.f32.mrb[0].mxu0
  %3134 = vmatprep.mubr.f32.mxu0 0.0
  %3135 = vmatmul.mubr.f32.gmra.mrb[0].mxu0 %v3017
  %v3136 = vpop.f32.mrb[0].mxu0
  %v3137 = vadd.f32 %v3043, %v3136
  %v3138 = vpop.f32.mrb[0].mxu0
  %3139 = vmatprep.mubr.f32.mxu0 0.0
  %3140 = vmatmul.mubr.f32.gmra.mrb[0].mxu0 %v3018
  %v3141 = vpop.f32.mrb[0].mxu0
  %v3142 = vadd.f32 %v3043, %v3141
  %v3143 = vpop.f32.mrb[0].mxu0
  %3144 = vmatprep.mubr.f32.mxu0 0.0
  %3145 = vmatmul.mubr.f32.gmra.mrb[0].mxu0 %v3019
  %v3146 = vpop.f32.mrb[0].mxu0
  %v3147 = vadd.f32 %v3043, %v3146
  %v3148 = vpop.f32.mrb[0].mxu0
  %3149 = vdwg.mxu0
  %vm3150 = vcmp.ge.f32.partialorder %v3112, 0.0
  %vm3151 = vcmp.ge.f32.partialorder %v3117, 0.0
  %vm3152 = vcmp.ge.f32.partialorder %v3122, 0.0
  %vm3153 = vcmp.ge.f32.partialorder %v3127, 0.0
  %vm3154 = vcmp.ge.f32.partialorder %v3132, 0.0
  %vm3155 = vcmp.ge.f32.partialorder %v3137, 0.0
  %vm3156 = vcmp.ge.f32.partialorder %v3142, 0.0
  %vm3157 = vcmp.ge.f32.partialorder %v3147, 0.0
  %v3158 = vmul.f32 %v3112, 0.01
  %v3159 = vmul.f32 %v3117, 0.01
  %v3160 = vmul.f32 %v3122, 0.01
  %v3161 = vmul.f32 %v3127, 0.01
  %v3162 = vmul.f32 %v3132, 0.01
  %v3163 = vmul.f32 %v3137, 0.01
  %v3164 = vmul.f32 %v3142, 0.01
  %v3165 = vmul.f32 %v3147, 0.01
  %v3166 = vsel %vm3150, %v3112, %v3158
  %v3167 = vsel %vm3151, %v3117, %v3159
  %v3168 = vsel %vm3152, %v3122, %v3160
  %v3169 = vsel %vm3153, %v3127, %v3161
  %v3170 = vsel %vm3154, %v3132, %v3162
  %v3171 = vsel %vm3155, %v3137, %v3163
  %v3172 = vsel %vm3156, %v3142, %v3164
  %v3173 = vsel %vm3157, %v3147, %v3165
  %3174 = vmatprep.subr.mxu0 0.0
  %3175 = vmatpush1.msra.mxu0 %v3166
  %3176 = vmatprep.subr.mxu0 0.0
  %3177 = vmatpush1.msra.mxu0 %v3167
  %3178 = vmatprep.subr.mxu0 0.0
  %3179 = vmatpush1.msra.mxu0 %v3168
  %3180 = vmatprep.subr.mxu0 0.0
  %3181 = vmatpush1.msra.mxu0 %v3169
  %3182 = vmatprep.subr.mxu0 0.0
  %3183 = vmatpush1.msra.mxu0 %v3170
  %3184 = vmatprep.subr.mxu0 0.0
  %3185 = vmatpush1.msra.mxu0 %v3171
  %3186 = vmatprep.subr.mxu0 0.0
  %3187 = vmatpush1.msra.mxu0 %v3172
  %3188 = vmatprep.subr.mxu0 0.0
  %3189 = vmatpush1.msra.mxu0 %v3173
  %3190 = vmatprep.subr.mxu0 0.0
  %3191 = vmatpush1.msra.mxu0 0.0
  %3192 = vmatprep.subr.mxu0 0.0
  %3193 = vmatpush1.msra.mxu0 0.0
  %3194 = vmatprep.subr.mxu0 0.0
  %3195 = vmatpush1.msra.mxu0 0.0
  %3196 = vmatprep.subr.mxu0 0.0
  %3197 = vmatpush1.msra.mxu0 0.0
  %3198 = vmatprep.subr.mxu0 0.0
  %3199 = vmatpush1.msra.mxu0 0.0
  %3200 = vmatprep.subr.mxu0 0.0
  %3201 = vmatpush1.msra.mxu0 0.0
  %3202 = vmatprep.subr.mxu0 0.0
  %3203 = vmatpush1.msra.mxu0 0.0
  %3204 = vmatprep.subr.mxu0 0.0
  %3205 = vmatpush1.msra.mxu0 0.0
  %3206 = vmatprep.subr.mxu0 0.0
  %3207 = vmatpush1.msra.mxu0 0.0
  %3208 = vmatprep.subr.mxu0 0.0
  %3209 = vmatpush1.msra.mxu0 0.0
  %3210 = vmatprep.subr.mxu0 0.0
  %3211 = vmatpush1.msra.mxu0 0.0
  %3212 = vmatprep.subr.mxu0 0.0
  %3213 = vmatpush1.msra.mxu0 0.0
  %3214 = vmatprep.subr.mxu0 0.0
  %3215 = vmatpush1.msra.mxu0 0.0
  %3216 = vmatprep.subr.mxu0 0.0
  %3217 = vmatpush1.msra.mxu0 0.0
  %3218 = vmatprep.subr.mxu0 0.0
  %3219 = vmatpush1.msra.mxu0 0.0
  %3220 = vmatprep.subr.mxu0 0.0
  %3221 = vmatpush1.msra.mxu0 0.0
  %3222 = vmatprep.subr.mxu0 0.0
  %3223 = vmatpush1.msra.mxu0 0.0
  %3224 = vmatprep.subr.mxu0 0.0
  %3225 = vmatpush1.msra.mxu0 0.0
  %3226 = vmatprep.subr.mxu0 0.0
  %3227 = vmatpush1.msra.mxu0 0.0
  %3228 = vmatprep.subr.mxu0 0.0
  %3229 = vmatpush1.msra.mxu0 0.0
  %3230 = vmatprep.subr.mxu0 0.0
  %3231 = vmatpush1.msra.mxu0 0.0
  %3232 = vmatprep.subr.mxu0 0.0
  %3233 = vmatpush1.msra.mxu0 0.0
  %3234 = vmatprep.subr.mxu0 0.0
  %3235 = vmatpush1.msra.mxu0 0.0
  %3236 = vmatprep.subr.mxu0 0.0
  %3237 = vmatpush1.msra.mxu0 0.0
  %3238 = vmatprep.mubr.f32.mxu0 0.0
  %3239 = vmatmul.mubr.f32.gmra.mrb[0].mxu0 %v63
  %v3240 = vpop.f32.mrb[0].mxu0
  %v3241 = vadd.f32 %v53, %v3240
  %v3242 = vpop.f32.mrb[0].mxu0
  %3243 = vmatprep.mubr.f32.mxu0 0.0
  %3244 = vmatmul.mubr.f32.gmra.mrb[0].mxu0 %v66
  %v3245 = vpop.f32.mrb[0].mxu0
  %v3246 = vadd.f32 %v54, %v3245
  %v3247 = vpop.f32.mrb[0].mxu0
  %3248 = vmatprep.mubr.f32.mxu0 0.0
  %3249 = vmatmul.mubr.f32.gmra.mrb[0].mxu0 %v69
  %v3250 = vpop.f32.mrb[0].mxu0
  %v3251 = vadd.f32 %v55, %v3250
  %v3252 = vpop.f32.mrb[0].mxu0
  %3253 = vmatprep.mubr.f32.mxu0 0.0
  %3254 = vmatmul.mubr.f32.gmra.mrb[0].mxu0 %v72
  %v3255 = vpop.f32.mrb[0].mxu0
  %v3256 = vadd.f32 %v56, %v3255
  %v3257 = vpop.f32.mrb[0].mxu0
  %3258 = vmatprep.mubr.f32.mxu0 0.0
  %3259 = vmatmul.mubr.f32.gmra.mrb[0].mxu0 %v75
  %v3260 = vpop.f32.mrb[0].mxu0
  %v3261 = vadd.f32 %v57, %v3260
  %v3262 = vpop.f32.mrb[0].mxu0
  %3263 = vmatprep.mubr.f32.mxu0 0.0
  %3264 = vmatmul.mubr.f32.gmra.mrb[0].mxu0 %v78
  %v3265 = vpop.f32.mrb[0].mxu0
  %v3266 = vadd.f32 %v58, %v3265
  %v3267 = vpop.f32.mrb[0].mxu0
  %3268 = vmatprep.mubr.f32.mxu0 0.0
  %3269 = vmatmul.mubr.f32.gmra.mrb[0].mxu0 %v81
  %v3270 = vpop.f32.mrb[0].mxu0
  %v3271 = vadd.f32 %v59, %v3270
  %v3272 = vpop.f32.mrb[0].mxu0
  %3273 = vmatprep.mubr.f32.mxu0 0.0
  %3274 = vmatmul.mubr.f32.gmra.mrb[0].mxu0 %v84
  %v3275 = vpop.f32.mrb[0].mxu0
  %v3276 = vadd.f32 %v60, %v3275
  %v3277 = vpop.f32.mrb[0].mxu0
  %3278 = vdwg.mxu0
  %v3279 = vmax.f32 %v29, %v3241
  %v3280 = vmax.f32 %v30, %v3246
  %v3281 = vmax.f32 %v31, %v3251
  %v3282 = vmax.f32 %v32, %v3256
  %v3283 = vmax.f32 %v33, %v3261
  %v3284 = vmax.f32 %v34, %v3266
  %v3285 = vmax.f32 %v35, %v3271
  %v3286 = vmax.f32 %v36, %v3276
  %3287 = vmatprep.subr.mxu0 0.0
  %3288 = vmatpush1.msra.mxu0 %v3166
  %3289 = vmatprep.subr.mxu0 0.0
  %3290 = vmatpush1.msra.mxu0 %v3167
  %3291 = vmatprep.subr.mxu0 0.0
  %3292 = vmatpush1.msra.mxu0 %v3168
  %3293 = vmatprep.subr.mxu0 0.0
  %3294 = vmatpush1.msra.mxu0 %v3169
  %3295 = vmatprep.subr.mxu0 0.0
  %3296 = vmatpush1.msra.mxu0 %v3170
  %3297 = vmatprep.subr.mxu0 0.0
  %3298 = vmatpush1.msra.mxu0 %v3171
  %3299 = vmatprep.subr.mxu0 0.0
  %3300 = vmatpush1.msra.mxu0 %v3172
  %3301 = vmatprep.subr.mxu0 0.0
  %3302 = vmatpush1.msra.mxu0 %v3173
  %3303 = vmatprep.subr.mxu0 0.0
  %3304 = vmatpush1.msra.mxu0 0.0
  %3305 = vmatprep.subr.mxu0 0.0
  %3306 = vmatpush1.msra.mxu0 0.0
  %3307 = vmatprep.subr.mxu0 0.0
  %3308 = vmatpush1.msra.mxu0 0.0
  %3309 = vmatprep.subr.mxu0 0.0
  %3310 = vmatpush1.msra.mxu0 0.0
  %3311 = vmatprep.subr.mxu0 0.0
  %3312 = vmatpush1.msra.mxu0 0.0
  %3313 = vmatprep.subr.mxu0 0.0
  %3314 = vmatpush1.msra.mxu0 0.0
  %3315 = vmatprep.subr.mxu0 0.0
  %3316 = vmatpush1.msra.mxu0 0.0
  %3317 = vmatprep.subr.mxu0 0.0
  %3318 = vmatpush1.msra.mxu0 0.0
  %3319 = vmatprep.subr.mxu0 0.0
  %3320 = vmatpush1.msra.mxu0 0.0
  %3321 = vmatprep.subr.mxu0 0.0
  %3322 = vmatpush1.msra.mxu0 0.0
  %3323 = vmatprep.subr.mxu0 0.0
  %3324 = vmatpush1.msra.mxu0 0.0
  %3325 = vmatprep.subr.mxu0 0.0
  %3326 = vmatpush1.msra.mxu0 0.0
  %3327 = vmatprep.subr.mxu0 0.0
  %3328 = vmatpush1.msra.mxu0 0.0
  %3329 = vmatprep.subr.mxu0 0.0
  %3330 = vmatpush1.msra.mxu0 0.0
  %3331 = vmatprep.subr.mxu0 0.0
  %3332 = vmatpush1.msra.mxu0 0.0
  %3333 = vmatprep.subr.mxu0 0.0
  %3334 = vmatpush1.msra.mxu0 0.0
  %3335 = vmatprep.subr.mxu0 0.0
  %3336 = vmatpush1.msra.mxu0 0.0
  %3337 = vmatprep.subr.mxu0 0.0
  %3338 = vmatpush1.msra.mxu0 0.0
  %3339 = vmatprep.subr.mxu0 0.0
  %3340 = vmatpush1.msra.mxu0 0.0
  %3341 = vmatprep.subr.mxu0 0.0
  %3342 = vmatpush1.msra.mxu0 0.0
  %3343 = vmatprep.subr.mxu0 0.0
  %3344 = vmatpush1.msra.mxu0 0.0
  %3345 = vmatprep.subr.mxu0 0.0
  %3346 = vmatpush1.msra.mxu0 0.0
  %3347 = vmatprep.subr.mxu0 0.0
  %3348 = vmatpush1.msra.mxu0 0.0
  %3349 = vmatprep.subr.mxu0 0.0
  %3350 = vmatpush1.msra.mxu0 0.0
  %3351 = vmatprep.mubr.f32.mxu0 0.0
  %3352 = vmatmul.mubr.f32.gmra.mrb[0].mxu0 %v218
  %v3353 = vpop.f32.mrb[0].mxu0
  %v3354 = vadd.f32 %v209, %v3353
  %v3355 = vpop.f32.mrb[0].mxu0
  %3356 = vmatprep.mubr.f32.mxu0 0.0
  %3357 = vmatmul.mubr.f32.gmra.mrb[0].mxu0 %v221
  %v3358 = vpop.f32.mrb[0].mxu0
  %v3359 = vadd.f32 %v210, %v3358
  %v3360 = vpop.f32.mrb[0].mxu0
  %3361 = vmatprep.mubr.f32.mxu0 0.0
  %3362 = vmatmul.mubr.f32.gmra.mrb[0].mxu0 %v224
  %v3363 = vpop.f32.mrb[0].mxu0
  %v3364 = vadd.f32 %v211, %v3363
  %v3365 = vpop.f32.mrb[0].mxu0
  %3366 = vmatprep.mubr.f32.mxu0 0.0
  %3367 = vmatmul.mubr.f32.gmra.mrb[0].mxu0 %v227
  %v3368 = vpop.f32.mrb[0].mxu0
  %v3369 = vadd.f32 %v212, %v3368
  %v3370 = vpop.f32.mrb[0].mxu0
  %3371 = vmatprep.mubr.f32.mxu0 0.0
  %3372 = vmatmul.mubr.f32.gmra.mrb[0].mxu0 %v230
  %v3373 = vpop.f32.mrb[0].mxu0
  %v3374 = vadd.f32 %v213, %v3373
  %v3375 = vpop.f32.mrb[0].mxu0
  %3376 = vmatprep.mubr.f32.mxu0 0.0
  %3377 = vmatmul.mubr.f32.gmra.mrb[0].mxu0 %v233
  %v3378 = vpop.f32.mrb[0].mxu0
  %v3379 = vadd.f32 %v214, %v3378
  %v3380 = vpop.f32.mrb[0].mxu0
  %3381 = vmatprep.mubr.f32.mxu0 0.0
  %3382 = vmatmul.mubr.f32.gmra.mrb[0].mxu0 %v236
  %v3383 = vpop.f32.mrb[0].mxu0
  %v3384 = vadd.f32 %v215, %v3383
  %v3385 = vpop.f32.mrb[0].mxu0
  %3386 = vmatprep.mubr.f32.mxu0 0.0
  %3387 = vmatmul.mubr.f32.gmra.mrb[0].mxu0 %v239
  %v3388 = vpop.f32.mrb[0].mxu0
  %v3389 = vadd.f32 %v216, %v3388
  %v3390 = vpop.f32.mrb[0].mxu0
  %3391 = vdwg.mxu0
  %v3392 = vmax.f32 %v3279, %v3354
  %v3393 = vmax.f32 %v3280, %v3359
  %v3394 = vmax.f32 %v3281, %v3364
  %v3395 = vmax.f32 %v3282, %v3369
  %v3396 = vmax.f32 %v3283, %v3374
  %v3397 = vmax.f32 %v3284, %v3379
  %v3398 = vmax.f32 %v3285, %v3384
  %v3399 = vmax.f32 %v3286, %v3389
  %3400 = vmatprep.subr.mxu0 0.0
  %3401 = vmatpush1.msra.mxu0 %v3166
  %3402 = vmatprep.subr.mxu0 0.0
  %3403 = vmatpush1.msra.mxu0 %v3167
  %3404 = vmatprep.subr.mxu0 0.0
  %3405 = vmatpush1.msra.mxu0 %v3168
  %3406 = vmatprep.subr.mxu0 0.0
  %3407 = vmatpush1.msra.mxu0 %v3169
  %3408 = vmatprep.subr.mxu0 0.0
  %3409 = vmatpush1.msra.mxu0 %v3170
  %3410 = vmatprep.subr.mxu0 0.0
  %3411 = vmatpush1.msra.mxu0 %v3171
  %3412 = vmatprep.subr.mxu0 0.0
  %3413 = vmatpush1.msra.mxu0 %v3172
  %3414 = vmatprep.subr.mxu0 0.0
  %3415 = vmatpush1.msra.mxu0 %v3173
  %3416 = vmatprep.subr.mxu0 0.0
  %3417 = vmatpush1.msra.mxu0 0.0
  %3418 = vmatprep.subr.mxu0 0.0
  %3419 = vmatpush1.msra.mxu0 0.0
  %3420 = vmatprep.subr.mxu0 0.0
  %3421 = vmatpush1.msra.mxu0 0.0
  %3422 = vmatprep.subr.mxu0 0.0
  %3423 = vmatpush1.msra.mxu0 0.0
  %3424 = vmatprep.subr.mxu0 0.0
  %3425 = vmatpush1.msra.mxu0 0.0
  %3426 = vmatprep.subr.mxu0 0.0
  %3427 = vmatpush1.msra.mxu0 0.0
  %3428 = vmatprep.subr.mxu0 0.0
  %3429 = vmatpush1.msra.mxu0 0.0
  %3430 = vmatprep.subr.mxu0 0.0
  %3431 = vmatpush1.msra.mxu0 0.0
  %3432 = vmatprep.subr.mxu0 0.0
  %3433 = vmatpush1.msra.mxu0 0.0
  %3434 = vmatprep.subr.mxu0 0.0
  %3435 = vmatpush1.msra.mxu0 0.0
  %3436 = vmatprep.subr.mxu0 0.0
  %3437 = vmatpush1.msra.mxu0 0.0
  %3438 = vmatprep.subr.mxu0 0.0
  %3439 = vmatpush1.msra.mxu0 0.0
  %3440 = vmatprep.subr.mxu0 0.0
  %3441 = vmatpush1.msra.mxu0 0.0
  %3442 = vmatprep.subr.mxu0 0.0
  %3443 = vmatpush1.msra.mxu0 0.0
  %3444 = vmatprep.subr.mxu0 0.0
  %3445 = vmatpush1.msra.mxu0 0.0
  %3446 = vmatprep.subr.mxu0 0.0
  %3447 = vmatpush1.msra.mxu0 0.0
  %3448 = vmatprep.subr.mxu0 0.0
  %3449 = vmatpush1.msra.mxu0 0.0
  %3450 = vmatprep.subr.mxu0 0.0
  %3451 = vmatpush1.msra.mxu0 0.0
  %3452 = vmatprep.subr.mxu0 0.0
  %3453 = vmatpush1.msra.mxu0 0.0
  %3454 = vmatprep.subr.mxu0 0.0
  %3455 = vmatpush1.msra.mxu0 0.0
  %3456 = vmatprep.subr.mxu0 0.0
  %3457 = vmatpush1.msra.mxu0 0.0
  %3458 = vmatprep.subr.mxu0 0.0
  %3459 = vmatpush1.msra.mxu0 0.0
  %3460 = vmatprep.subr.mxu0 0.0
  %3461 = vmatpush1.msra.mxu0 0.0
  %3462 = vmatprep.subr.mxu0 0.0
  %3463 = vmatpush1.msra.mxu0 0.0
  %3464 = vmatprep.mubr.f32.mxu0 0.0
  %3465 = vmatmul.mubr.f32.gmra.mrb[0].mxu0 %v373
  %v3466 = vpop.f32.mrb[0].mxu0
  %v3467 = vadd.f32 %v364, %v3466
  %v3468 = vpop.f32.mrb[0].mxu0
  %3469 = vmatprep.mubr.f32.mxu0 0.0
  %3470 = vmatmul.mubr.f32.gmra.mrb[0].mxu0 %v376
  %v3471 = vpop.f32.mrb[0].mxu0
  %v3472 = vadd.f32 %v365, %v3471
  %v3473 = vpop.f32.mrb[0].mxu0
  %3474 = vmatprep.mubr.f32.mxu0 0.0
  %3475 = vmatmul.mubr.f32.gmra.mrb[0].mxu0 %v379
  %v3476 = vpop.f32.mrb[0].mxu0
  %v3477 = vadd.f32 %v366, %v3476
  %v3478 = vpop.f32.mrb[0].mxu0
  %3479 = vmatprep.mubr.f32.mxu0 0.0
  %3480 = vmatmul.mubr.f32.gmra.mrb[0].mxu0 %v382
  %v3481 = vpop.f32.mrb[0].mxu0
  %v3482 = vadd.f32 %v367, %v3481
  %v3483 = vpop.f32.mrb[0].mxu0
  %3484 = vmatprep.mubr.f32.mxu0 0.0
  %3485 = vmatmul.mubr.f32.gmra.mrb[0].mxu0 %v385
  %v3486 = vpop.f32.mrb[0].mxu0
  %v3487 = vadd.f32 %v368, %v3486
  %v3488 = vpop.f32.mrb[0].mxu0
  %3489 = vmatprep.mubr.f32.mxu0 0.0
  %3490 = vmatmul.mubr.f32.gmra.mrb[0].mxu0 %v388
  %v3491 = vpop.f32.mrb[0].mxu0
  %v3492 = vadd.f32 %v369, %v3491
  %v3493 = vpop.f32.mrb[0].mxu0
  %3494 = vmatprep.mubr.f32.mxu0 0.0
  %3495 = vmatmul.mubr.f32.gmra.mrb[0].mxu0 %v391
  %v3496 = vpop.f32.mrb[0].mxu0
  %v3497 = vadd.f32 %v370, %v3496
  %v3498 = vpop.f32.mrb[0].mxu0
  %3499 = vmatprep.mubr.f32.mxu0 0.0
  %3500 = vmatmul.mubr.f32.gmra.mrb[0].mxu0 %v394
  %v3501 = vpop.f32.mrb[0].mxu0
  %v3502 = vadd.f32 %v371, %v3501
  %v3503 = vpop.f32.mrb[0].mxu0
  %3504 = vdwg.mxu0
  %v3505 = vmax.f32 %v3392, %v3467
  %v3506 = vmax.f32 %v3393, %v3472
  %v3507 = vmax.f32 %v3394, %v3477
  %v3508 = vmax.f32 %v3395, %v3482
  %v3509 = vmax.f32 %v3396, %v3487
  %v3510 = vmax.f32 %v3397, %v3492
  %v3511 = vmax.f32 %v3398, %v3497
  %v3512 = vmax.f32 %v3399, %v3502
  %v3513 = vadd.f32 %v3166, %v3505
  %v3514 = vadd.f32 %v3167, %v3506
  %v3515 = vadd.f32 %v3168, %v3507
  %v3516 = vadd.f32 %v3169, %v3508
  %v3517 = vadd.f32 %v3170, %v3509
  %v3518 = vadd.f32 %v3171, %v3510
  %v3519 = vadd.f32 %v3172, %v3511
  %v3520 = vadd.f32 %v3173, %v3512
  %s3521 = scalar_lea.vmem %s4, 768
  %v3522 = vld [vmem:[%s3521] sm:$0xff]
  %v3523 = vld [vmem:[%s3521 + $0x8] sm:$0xff]
  %v3524 = vld [vmem:[%s3521 + $0x10] sm:$0xff]
  %v3525 = vld [vmem:[%s3521 + $0x18] sm:$0xff]
  %v3526 = vld [vmem:[%s3521 + $0x20] sm:$0xff]
  %v3527 = vld [vmem:[%s3521 + $0x28] sm:$0xff]
  %v3528 = vld [vmem:[%s3521 + $0x30] sm:$0xff]
  %v3529 = vld [vmem:[%s3521 + $0x38] sm:$0xff]
  %v3530 = vld [vmem:[%s3521 + $0x40] sm:$0xff]
  %v3531 = vld [vmem:[%s3521 + $0x48] sm:$0xff]
  %v3532 = vld [vmem:[%s3521 + $0x50] sm:$0xff]
  %v3533 = vld [vmem:[%s3521 + $0x58] sm:$0xff]
  %v3534 = vld [vmem:[%s3521 + $0x60] sm:$0xff]
  %v3535 = vld [vmem:[%s3521 + $0x68] sm:$0xff]
  %v3536 = vld [vmem:[%s3521 + $0x70] sm:$0xff]
  %v3537 = vld [vmem:[%s3521 + $0x78] sm:$0xff]
  %s3538 = scalar_lea.vmem %s5, 6
  %v3539 = vld [vmem:[%s3538] sm:$0x1]
  %v3541 = vlaneseq
  %v3542 = vshrl.u32 %v3541, 7
  %v3543 = vsub.s32 0, %v3542
  %v3544 = vrot.slane %v3539, %v3543
  %3546 = vmatprep.subr.mxu0 0.0
  %3547 = vmatpush1.msra.mxu0 %v3522
  %3548 = vmatprep.subr.mxu0 0.0
  %3549 = vmatpush1.msra.mxu0 %v3523
  %3550 = vmatprep.subr.mxu0 0.0
  %3551 = vmatpush1.msra.mxu0 %v3524
  %3552 = vmatprep.subr.mxu0 0.0
  %3553 = vmatpush1.msra.mxu0 %v3525
  %3554 = vmatprep.subr.mxu0 0.0
  %3555 = vmatpush1.msra.mxu0 %v3526
  %3556 = vmatprep.subr.mxu0 0.0
  %3557 = vmatpush1.msra.mxu0 %v3527
  %3558 = vmatprep.subr.mxu0 0.0
  %3559 = vmatpush1.msra.mxu0 %v3528
  %3560 = vmatprep.subr.mxu0 0.0
  %3561 = vmatpush1.msra.mxu0 %v3529
  %3562 = vmatprep.subr.mxu0 0.0
  %3563 = vmatpush1.msra.mxu0 %v3530
  %3564 = vmatprep.subr.mxu0 0.0
  %3565 = vmatpush1.msra.mxu0 %v3531
  %3566 = vmatprep.subr.mxu0 0.0
  %3567 = vmatpush1.msra.mxu0 %v3532
  %3568 = vmatprep.subr.mxu0 0.0
  %3569 = vmatpush1.msra.mxu0 %v3533
  %3570 = vmatprep.subr.mxu0 0.0
  %3571 = vmatpush1.msra.mxu0 %v3534
  %3572 = vmatprep.subr.mxu0 0.0
  %3573 = vmatpush1.msra.mxu0 %v3535
  %3574 = vmatprep.subr.mxu0 0.0
  %3575 = vmatpush1.msra.mxu0 %v3536
  %3576 = vmatprep.subr.mxu0 0.0
  %3577 = vmatpush1.msra.mxu0 %v3537
  %3578 = vmatprep.subr.mxu0 0.0
  %3579 = vmatpush1.msra.mxu0 0.0
  %3580 = vmatprep.subr.mxu0 0.0
  %3581 = vmatpush1.msra.mxu0 0.0
  %3582 = vmatprep.subr.mxu0 0.0
  %3583 = vmatpush1.msra.mxu0 0.0
  %3584 = vmatprep.subr.mxu0 0.0
  %3585 = vmatpush1.msra.mxu0 0.0
  %3586 = vmatprep.subr.mxu0 0.0
  %3587 = vmatpush1.msra.mxu0 0.0
  %3588 = vmatprep.subr.mxu0 0.0
  %3589 = vmatpush1.msra.mxu0 0.0
  %3590 = vmatprep.subr.mxu0 0.0
  %3591 = vmatpush1.msra.mxu0 0.0
  %3592 = vmatprep.subr.mxu0 0.0
  %3593 = vmatpush1.msra.mxu0 0.0
  %3594 = vmatprep.subr.mxu0 0.0
  %3595 = vmatpush1.msra.mxu0 0.0
  %3596 = vmatprep.subr.mxu0 0.0
  %3597 = vmatpush1.msra.mxu0 0.0
  %3598 = vmatprep.subr.mxu0 0.0
  %3599 = vmatpush1.msra.mxu0 0.0
  %3600 = vmatprep.subr.mxu0 0.0
  %3601 = vmatpush1.msra.mxu0 0.0
  %3602 = vmatprep.subr.mxu0 0.0
  %3603 = vmatpush1.msra.mxu0 0.0
  %3604 = vmatprep.subr.mxu0 0.0
  %3605 = vmatpush1.msra.mxu0 0.0
  %3606 = vmatprep.subr.mxu0 0.0
  %3607 = vmatpush1.msra.mxu0 0.0
  %3608 = vmatprep.subr.mxu0 0.0
  %3609 = vmatpush1.msra.mxu0 0.0
  %3610 = vmatprep.mubr.f32.mxu0 0.0
  %3611 = vmatmul.mubr.f32.gmra.mrb[0].mxu0 %v3513
  %v3612 = vpop.f32.mrb[0].mxu0
  %v3613 = vadd.f32 %v3544, %v3612
  %v3614 = vpop.f32.mrb[0].mxu0
  %3615 = vmatprep.mubr.f32.mxu0 0.0
  %3616 = vmatmul.mubr.f32.gmra.mrb[0].mxu0 %v3514
  %v3617 = vpop.f32.mrb[0].mxu0
  %v3618 = vadd.f32 %v3544, %v3617
  %v3619 = vpop.f32.mrb[0].mxu0
  %3620 = vmatprep.mubr.f32.mxu0 0.0
  %3621 = vmatmul.mubr.f32.gmra.mrb[0].mxu0 %v3515
  %v3622 = vpop.f32.mrb[0].mxu0
  %v3623 = vadd.f32 %v3544, %v3622
  %v3624 = vpop.f32.mrb[0].mxu0
  %3625 = vmatprep.mubr.f32.mxu0 0.0
  %3626 = vmatmul.mubr.f32.gmra.mrb[0].mxu0 %v3516
  %v3627 = vpop.f32.mrb[0].mxu0
  %v3628 = vadd.f32 %v3544, %v3627
  %v3629 = vpop.f32.mrb[0].mxu0
  %3630 = vmatprep.mubr.f32.mxu0 0.0
  %3631 = vmatmul.mubr.f32.gmra.mrb[0].mxu0 %v3517
  %v3632 = vpop.f32.mrb[0].mxu0
  %v3633 = vadd.f32 %v3544, %v3632
  %v3634 = vpop.f32.mrb[0].mxu0
  %3635 = vmatprep.mubr.f32.mxu0 0.0
  %3636 = vmatmul.mubr.f32.gmra.mrb[0].mxu0 %v3518
  %v3637 = vpop.f32.mrb[0].mxu0
  %v3638 = vadd.f32 %v3544, %v3637
  %v3639 = vpop.f32.mrb[0].mxu0
  %3640 = vmatprep.mubr.f32.mxu0 0.0
  %3641 = vmatmul.mubr.f32.gmra.mrb[0].mxu0 %v3519
  %v3642 = vpop.f32.mrb[0].mxu0
  %v3643 = vadd.f32 %v3544, %v3642
  %v3644 = vpop.f32.mrb[0].mxu0
  %3645 = vmatprep.mubr.f32.mxu0 0.0
  %3646 = vmatmul.mubr.f32.gmra.mrb[0].mxu0 %v3520
  %v3647 = vpop.f32.mrb[0].mxu0
  %v3648 = vadd.f32 %v3544, %v3647
  %v3649 = vpop.f32.mrb[0].mxu0
  %3650 = vdwg.mxu0
  %vm3651 = vcmp.ge.f32.partialorder %v3613, 0.0
  %vm3652 = vcmp.ge.f32.partialorder %v3618, 0.0
  %vm3653 = vcmp.ge.f32.partialorder %v3623, 0.0
  %vm3654 = vcmp.ge.f32.partialorder %v3628, 0.0
  %vm3655 = vcmp.ge.f32.partialorder %v3633, 0.0
  %vm3656 = vcmp.ge.f32.partialorder %v3638, 0.0
  %vm3657 = vcmp.ge.f32.partialorder %v3643, 0.0
  %vm3658 = vcmp.ge.f32.partialorder %v3648, 0.0
  %v3659 = vmul.f32 %v3613, 0.01
  %v3660 = vmul.f32 %v3618, 0.01
  %v3661 = vmul.f32 %v3623, 0.01
  %v3662 = vmul.f32 %v3628, 0.01
  %v3663 = vmul.f32 %v3633, 0.01
  %v3664 = vmul.f32 %v3638, 0.01
  %v3665 = vmul.f32 %v3643, 0.01
  %v3666 = vmul.f32 %v3648, 0.01
  %v3667 = vsel %vm3651, %v3613, %v3659
  %v3668 = vsel %vm3652, %v3618, %v3660
  %v3669 = vsel %vm3653, %v3623, %v3661
  %v3670 = vsel %vm3654, %v3628, %v3662
  %v3671 = vsel %vm3655, %v3633, %v3663
  %v3672 = vsel %vm3656, %v3638, %v3664
  %v3673 = vsel %vm3657, %v3643, %v3665
  %v3674 = vsel %vm3658, %v3648, %v3666
  %3675 = vmatprep.subr.mxu0 0.0
  %3676 = vmatpush1.msra.mxu0 %v3667
  %3677 = vmatprep.subr.mxu0 0.0
  %3678 = vmatpush1.msra.mxu0 %v3668
  %3679 = vmatprep.subr.mxu0 0.0
  %3680 = vmatpush1.msra.mxu0 %v3669
  %3681 = vmatprep.subr.mxu0 0.0
  %3682 = vmatpush1.msra.mxu0 %v3670
  %3683 = vmatprep.subr.mxu0 0.0
  %3684 = vmatpush1.msra.mxu0 %v3671
  %3685 = vmatprep.subr.mxu0 0.0
  %3686 = vmatpush1.msra.mxu0 %v3672
  %3687 = vmatprep.subr.mxu0 0.0
  %3688 = vmatpush1.msra.mxu0 %v3673
  %3689 = vmatprep.subr.mxu0 0.0
  %3690 = vmatpush1.msra.mxu0 %v3674
  %3691 = vmatprep.subr.mxu0 0.0
  %3692 = vmatpush1.msra.mxu0 0.0
  %3693 = vmatprep.subr.mxu0 0.0
  %3694 = vmatpush1.msra.mxu0 0.0
  %3695 = vmatprep.subr.mxu0 0.0
  %3696 = vmatpush1.msra.mxu0 0.0
  %3697 = vmatprep.subr.mxu0 0.0
  %3698 = vmatpush1.msra.mxu0 0.0
  %3699 = vmatprep.subr.mxu0 0.0
  %3700 = vmatpush1.msra.mxu0 0.0
  %3701 = vmatprep.subr.mxu0 0.0
  %3702 = vmatpush1.msra.mxu0 0.0
  %3703 = vmatprep.subr.mxu0 0.0
  %3704 = vmatpush1.msra.mxu0 0.0
  %3705 = vmatprep.subr.mxu0 0.0
  %3706 = vmatpush1.msra.mxu0 0.0
  %3707 = vmatprep.subr.mxu0 0.0
  %3708 = vmatpush1.msra.mxu0 0.0
  %3709 = vmatprep.subr.mxu0 0.0
  %3710 = vmatpush1.msra.mxu0 0.0
  %3711 = vmatprep.subr.mxu0 0.0
  %3712 = vmatpush1.msra.mxu0 0.0
  %3713 = vmatprep.subr.mxu0 0.0
  %3714 = vmatpush1.msra.mxu0 0.0
  %3715 = vmatprep.subr.mxu0 0.0
  %3716 = vmatpush1.msra.mxu0 0.0
  %3717 = vmatprep.subr.mxu0 0.0
  %3718 = vmatpush1.msra.mxu0 0.0
  %3719 = vmatprep.subr.mxu0 0.0
  %3720 = vmatpush1.msra.mxu0 0.0
  %3721 = vmatprep.subr.mxu0 0.0
  %3722 = vmatpush1.msra.mxu0 0.0
  %3723 = vmatprep.subr.mxu0 0.0
  %3724 = vmatpush1.msra.mxu0 0.0
  %3725 = vmatprep.subr.mxu0 0.0
  %3726 = vmatpush1.msra.mxu0 0.0
  %3727 = vmatprep.subr.mxu0 0.0
  %3728 = vmatpush1.msra.mxu0 0.0
  %3729 = vmatprep.subr.mxu0 0.0
  %3730 = vmatpush1.msra.mxu0 0.0
  %3731 = vmatprep.subr.mxu0 0.0
  %3732 = vmatpush1.msra.mxu0 0.0
  %3733 = vmatprep.subr.mxu0 0.0
  %3734 = vmatpush1.msra.mxu0 0.0
  %3735 = vmatprep.subr.mxu0 0.0
  %3736 = vmatpush1.msra.mxu0 0.0
  %3737 = vmatprep.subr.mxu0 0.0
  %3738 = vmatpush1.msra.mxu0 0.0
  %3739 = vmatprep.mubr.f32.mxu0 0.0
  %3740 = vmatmul.mubr.f32.gmra.mrb[0].mxu0 %v63
  %v3741 = vpop.f32.mrb[0].mxu0
  %v3742 = vadd.f32 %v53, %v3741
  %v3743 = vpop.f32.mrb[0].mxu0
  %3744 = vmatprep.mubr.f32.mxu0 0.0
  %3745 = vmatmul.mubr.f32.gmra.mrb[0].mxu0 %v66
  %v3746 = vpop.f32.mrb[0].mxu0
  %v3747 = vadd.f32 %v54, %v3746
  %v3748 = vpop.f32.mrb[0].mxu0
  %3749 = vmatprep.mubr.f32.mxu0 0.0
  %3750 = vmatmul.mubr.f32.gmra.mrb[0].mxu0 %v69
  %v3751 = vpop.f32.mrb[0].mxu0
  %v3752 = vadd.f32 %v55, %v3751
  %v3753 = vpop.f32.mrb[0].mxu0
  %3754 = vmatprep.mubr.f32.mxu0 0.0
  %3755 = vmatmul.mubr.f32.gmra.mrb[0].mxu0 %v72
  %v3756 = vpop.f32.mrb[0].mxu0
  %v3757 = vadd.f32 %v56, %v3756
  %v3758 = vpop.f32.mrb[0].mxu0
  %3759 = vmatprep.mubr.f32.mxu0 0.0
  %3760 = vmatmul.mubr.f32.gmra.mrb[0].mxu0 %v75
  %v3761 = vpop.f32.mrb[0].mxu0
  %v3762 = vadd.f32 %v57, %v3761
  %v3763 = vpop.f32.mrb[0].mxu0
  %3764 = vmatprep.mubr.f32.mxu0 0.0
  %3765 = vmatmul.mubr.f32.gmra.mrb[0].mxu0 %v78
  %v3766 = vpop.f32.mrb[0].mxu0
  %v3767 = vadd.f32 %v58, %v3766
  %v3768 = vpop.f32.mrb[0].mxu0
  %3769 = vmatprep.mubr.f32.mxu0 0.0
  %3770 = vmatmul.mubr.f32.gmra.mrb[0].mxu0 %v81
  %v3771 = vpop.f32.mrb[0].mxu0
  %v3772 = vadd.f32 %v59, %v3771
  %v3773 = vpop.f32.mrb[0].mxu0
  %3774 = vmatprep.mubr.f32.mxu0 0.0
  %3775 = vmatmul.mubr.f32.gmra.mrb[0].mxu0 %v84
  %v3776 = vpop.f32.mrb[0].mxu0
  %v3777 = vadd.f32 %v60, %v3776
  %v3778 = vpop.f32.mrb[0].mxu0
  %3779 = vdwg.mxu0
  %v3780 = vmax.f32 %v29, %v3742
  %v3781 = vmax.f32 %v30, %v3747
  %v3782 = vmax.f32 %v31, %v3752
  %v3783 = vmax.f32 %v32, %v3757
  %v3784 = vmax.f32 %v33, %v3762
  %v3785 = vmax.f32 %v34, %v3767
  %v3786 = vmax.f32 %v35, %v3772
  %v3787 = vmax.f32 %v36, %v3777
  %3788 = vmatprep.subr.mxu0 0.0
  %3789 = vmatpush1.msra.mxu0 %v3667
  %3790 = vmatprep.subr.mxu0 0.0
  %3791 = vmatpush1.msra.mxu0 %v3668
  %3792 = vmatprep.subr.mxu0 0.0
  %3793 = vmatpush1.msra.mxu0 %v3669
  %3794 = vmatprep.subr.mxu0 0.0
  %3795 = vmatpush1.msra.mxu0 %v3670
  %3796 = vmatprep.subr.mxu0 0.0
  %3797 = vmatpush1.msra.mxu0 %v3671
  %3798 = vmatprep.subr.mxu0 0.0
  %3799 = vmatpush1.msra.mxu0 %v3672
  %3800 = vmatprep.subr.mxu0 0.0
  %3801 = vmatpush1.msra.mxu0 %v3673
  %3802 = vmatprep.subr.mxu0 0.0
  %3803 = vmatpush1.msra.mxu0 %v3674
  %3804 = vmatprep.subr.mxu0 0.0
  %3805 = vmatpush1.msra.mxu0 0.0
  %3806 = vmatprep.subr.mxu0 0.0
  %3807 = vmatpush1.msra.mxu0 0.0
  %3808 = vmatprep.subr.mxu0 0.0
  %3809 = vmatpush1.msra.mxu0 0.0
  %3810 = vmatprep.subr.mxu0 0.0
  %3811 = vmatpush1.msra.mxu0 0.0
  %3812 = vmatprep.subr.mxu0 0.0
  %3813 = vmatpush1.msra.mxu0 0.0
  %3814 = vmatprep.subr.mxu0 0.0
  %3815 = vmatpush1.msra.mxu0 0.0
  %3816 = vmatprep.subr.mxu0 0.0
  %3817 = vmatpush1.msra.mxu0 0.0
  %3818 = vmatprep.subr.mxu0 0.0
  %3819 = vmatpush1.msra.mxu0 0.0
  %3820 = vmatprep.subr.mxu0 0.0
  %3821 = vmatpush1.msra.mxu0 0.0
  %3822 = vmatprep.subr.mxu0 0.0
  %3823 = vmatpush1.msra.mxu0 0.0
  %3824 = vmatprep.subr.mxu0 0.0
  %3825 = vmatpush1.msra.mxu0 0.0
  %3826 = vmatprep.subr.mxu0 0.0
  %3827 = vmatpush1.msra.mxu0 0.0
  %3828 = vmatprep.subr.mxu0 0.0
  %3829 = vmatpush1.msra.mxu0 0.0
  %3830 = vmatprep.subr.mxu0 0.0
  %3831 = vmatpush1.msra.mxu0 0.0
  %3832 = vmatprep.subr.mxu0 0.0
  %3833 = vmatpush1.msra.mxu0 0.0
  %3834 = vmatprep.subr.mxu0 0.0
  %3835 = vmatpush1.msra.mxu0 0.0
  %3836 = vmatprep.subr.mxu0 0.0
  %3837 = vmatpush1.msra.mxu0 0.0
  %3838 = vmatprep.subr.mxu0 0.0
  %3839 = vmatpush1.msra.mxu0 0.0
  %3840 = vmatprep.subr.mxu0 0.0
  %3841 = vmatpush1.msra.mxu0 0.0
  %3842 = vmatprep.subr.mxu0 0.0
  %3843 = vmatpush1.msra.mxu0 0.0
  %3844 = vmatprep.subr.mxu0 0.0
  %3845 = vmatpush1.msra.mxu0 0.0
  %3846 = vmatprep.subr.mxu0 0.0
  %3847 = vmatpush1.msra.mxu0 0.0
  %3848 = vmatprep.subr.mxu0 0.0
  %3849 = vmatpush1.msra.mxu0 0.0
  %3850 = vmatprep.subr.mxu0 0.0
  %3851 = vmatpush1.msra.mxu0 0.0
  %3852 = vmatprep.mubr.f32.mxu0 0.0
  %3853 = vmatmul.mubr.f32.gmra.mrb[0].mxu0 %v218
  %v3854 = vpop.f32.mrb[0].mxu0
  %v3855 = vadd.f32 %v209, %v3854
  %v3856 = vpop.f32.mrb[0].mxu0
  %3857 = vmatprep.mubr.f32.mxu0 0.0
  %3858 = vmatmul.mubr.f32.gmra.mrb[0].mxu0 %v221
  %v3859 = vpop.f32.mrb[0].mxu0
  %v3860 = vadd.f32 %v210, %v3859
  %v3861 = vpop.f32.mrb[0].mxu0
  %3862 = vmatprep.mubr.f32.mxu0 0.0
  %3863 = vmatmul.mubr.f32.gmra.mrb[0].mxu0 %v224
  %v3864 = vpop.f32.mrb[0].mxu0
  %v3865 = vadd.f32 %v211, %v3864
  %v3866 = vpop.f32.mrb[0].mxu0
  %3867 = vmatprep.mubr.f32.mxu0 0.0
  %3868 = vmatmul.mubr.f32.gmra.mrb[0].mxu0 %v227
  %v3869 = vpop.f32.mrb[0].mxu0
  %v3870 = vadd.f32 %v212, %v3869
  %v3871 = vpop.f32.mrb[0].mxu0
  %3872 = vmatprep.mubr.f32.mxu0 0.0
  %3873 = vmatmul.mubr.f32.gmra.mrb[0].mxu0 %v230
  %v3874 = vpop.f32.mrb[0].mxu0
  %v3875 = vadd.f32 %v213, %v3874
  %v3876 = vpop.f32.mrb[0].mxu0
  %3877 = vmatprep.mubr.f32.mxu0 0.0
  %3878 = vmatmul.mubr.f32.gmra.mrb[0].mxu0 %v233
  %v3879 = vpop.f32.mrb[0].mxu0
  %v3880 = vadd.f32 %v214, %v3879
  %v3881 = vpop.f32.mrb[0].mxu0
  %3882 = vmatprep.mubr.f32.mxu0 0.0
  %3883 = vmatmul.mubr.f32.gmra.mrb[0].mxu0 %v236
  %v3884 = vpop.f32.mrb[0].mxu0
  %v3885 = vadd.f32 %v215, %v3884
  %v3886 = vpop.f32.mrb[0].mxu0
  %3887 = vmatprep.mubr.f32.mxu0 0.0
  %3888 = vmatmul.mubr.f32.gmra.mrb[0].mxu0 %v239
  %v3889 = vpop.f32.mrb[0].mxu0
  %v3890 = vadd.f32 %v216, %v3889
  %v3891 = vpop.f32.mrb[0].mxu0
  %3892 = vdwg.mxu0
  %v3893 = vmax.f32 %v3780, %v3855
  %v3894 = vmax.f32 %v3781, %v3860
  %v3895 = vmax.f32 %v3782, %v3865
  %v3896 = vmax.f32 %v3783, %v3870
  %v3897 = vmax.f32 %v3784, %v3875
  %v3898 = vmax.f32 %v3785, %v3880
  %v3899 = vmax.f32 %v3786, %v3885
  %v3900 = vmax.f32 %v3787, %v3890
  %3901 = vmatprep.subr.mxu0 0.0
  %3902 = vmatpush1.msra.mxu0 %v3667
  %3903 = vmatprep.subr.mxu0 0.0
  %3904 = vmatpush1.msra.mxu0 %v3668
  %3905 = vmatprep.subr.mxu0 0.0
  %3906 = vmatpush1.msra.mxu0 %v3669
  %3907 = vmatprep.subr.mxu0 0.0
  %3908 = vmatpush1.msra.mxu0 %v3670
  %3909 = vmatprep.subr.mxu0 0.0
  %3910 = vmatpush1.msra.mxu0 %v3671
  %3911 = vmatprep.subr.mxu0 0.0
  %3912 = vmatpush1.msra.mxu0 %v3672
  %3913 = vmatprep.subr.mxu0 0.0
  %3914 = vmatpush1.msra.mxu0 %v3673
  %3915 = vmatprep.subr.mxu0 0.0
  %3916 = vmatpush1.msra.mxu0 %v3674
  %3917 = vmatprep.subr.mxu0 0.0
  %3918 = vmatpush1.msra.mxu0 0.0
  %3919 = vmatprep.subr.mxu0 0.0
  %3920 = vmatpush1.msra.mxu0 0.0
  %3921 = vmatprep.subr.mxu0 0.0
  %3922 = vmatpush1.msra.mxu0 0.0
  %3923 = vmatprep.subr.mxu0 0.0
  %3924 = vmatpush1.msra.mxu0 0.0
  %3925 = vmatprep.subr.mxu0 0.0
  %3926 = vmatpush1.msra.mxu0 0.0
  %3927 = vmatprep.subr.mxu0 0.0
  %3928 = vmatpush1.msra.mxu0 0.0
  %3929 = vmatprep.subr.mxu0 0.0
  %3930 = vmatpush1.msra.mxu0 0.0
  %3931 = vmatprep.subr.mxu0 0.0
  %3932 = vmatpush1.msra.mxu0 0.0
  %3933 = vmatprep.subr.mxu0 0.0
  %3934 = vmatpush1.msra.mxu0 0.0
  %3935 = vmatprep.subr.mxu0 0.0
  %3936 = vmatpush1.msra.mxu0 0.0
  %3937 = vmatprep.subr.mxu0 0.0
  %3938 = vmatpush1.msra.mxu0 0.0
  %3939 = vmatprep.subr.mxu0 0.0
  %3940 = vmatpush1.msra.mxu0 0.0
  %3941 = vmatprep.subr.mxu0 0.0
  %3942 = vmatpush1.msra.mxu0 0.0
  %3943 = vmatprep.subr.mxu0 0.0
  %3944 = vmatpush1.msra.mxu0 0.0
  %3945 = vmatprep.subr.mxu0 0.0
  %3946 = vmatpush1.msra.mxu0 0.0
  %3947 = vmatprep.subr.mxu0 0.0
  %3948 = vmatpush1.msra.mxu0 0.0
  %3949 = vmatprep.subr.mxu0 0.0
  %3950 = vmatpush1.msra.mxu0 0.0
  %3951 = vmatprep.subr.mxu0 0.0
  %3952 = vmatpush1.msra.mxu0 0.0
  %3953 = vmatprep.subr.mxu0 0.0
  %3954 = vmatpush1.msra.mxu0 0.0
  %3955 = vmatprep.subr.mxu0 0.0
  %3956 = vmatpush1.msra.mxu0 0.0
  %3957 = vmatprep.subr.mxu0 0.0
  %3958 = vmatpush1.msra.mxu0 0.0
  %3959 = vmatprep.subr.mxu0 0.0
  %3960 = vmatpush1.msra.mxu0 0.0
  %3961 = vmatprep.subr.mxu0 0.0
  %3962 = vmatpush1.msra.mxu0 0.0
  %3963 = vmatprep.subr.mxu0 0.0
  %3964 = vmatpush1.msra.mxu0 0.0
  %3965 = vmatprep.mubr.f32.mxu0 0.0
  %3966 = vmatmul.mubr.f32.gmra.mrb[0].mxu0 %v373
  %v3967 = vpop.f32.mrb[0].mxu0
  %v3968 = vadd.f32 %v364, %v3967
  %v3969 = vpop.f32.mrb[0].mxu0
  %3970 = vmatprep.mubr.f32.mxu0 0.0
  %3971 = vmatmul.mubr.f32.gmra.mrb[0].mxu0 %v376
  %v3972 = vpop.f32.mrb[0].mxu0
  %v3973 = vadd.f32 %v365, %v3972
  %v3974 = vpop.f32.mrb[0].mxu0
  %3975 = vmatprep.mubr.f32.mxu0 0.0
  %3976 = vmatmul.mubr.f32.gmra.mrb[0].mxu0 %v379
  %v3977 = vpop.f32.mrb[0].mxu0
  %v3978 = vadd.f32 %v366, %v3977
  %v3979 = vpop.f32.mrb[0].mxu0
  %3980 = vmatprep.mubr.f32.mxu0 0.0
  %3981 = vmatmul.mubr.f32.gmra.mrb[0].mxu0 %v382
  %v3982 = vpop.f32.mrb[0].mxu0
  %v3983 = vadd.f32 %v367, %v3982
  %v3984 = vpop.f32.mrb[0].mxu0
  %3985 = vmatprep.mubr.f32.mxu0 0.0
  %3986 = vmatmul.mubr.f32.gmra.mrb[0].mxu0 %v385
  %v3987 = vpop.f32.mrb[0].mxu0
  %v3988 = vadd.f32 %v368, %v3987
  %v3989 = vpop.f32.mrb[0].mxu0
  %3990 = vmatprep.mubr.f32.mxu0 0.0
  %3991 = vmatmul.mubr.f32.gmra.mrb[0].mxu0 %v388
  %v3992 = vpop.f32.mrb[0].mxu0
  %v3993 = vadd.f32 %v369, %v3992
  %v3994 = vpop.f32.mrb[0].mxu0
  %3995 = vmatprep.mubr.f32.mxu0 0.0
  %3996 = vmatmul.mubr.f32.gmra.mrb[0].mxu0 %v391
  %v3997 = vpop.f32.mrb[0].mxu0
  %v3998 = vadd.f32 %v370, %v3997
  %v3999 = vpop.f32.mrb[0].mxu0
  %4000 = vmatprep.mubr.f32.mxu0 0.0
  %4001 = vmatmul.mubr.f32.gmra.mrb[0].mxu0 %v394
  %v4002 = vpop.f32.mrb[0].mxu0
  %v4003 = vadd.f32 %v371, %v4002
  %v4004 = vpop.f32.mrb[0].mxu0
  %4005 = vdwg.mxu0
  %v4006 = vmax.f32 %v3893, %v3968
  %v4007 = vmax.f32 %v3894, %v3973
  %v4008 = vmax.f32 %v3895, %v3978
  %v4009 = vmax.f32 %v3896, %v3983
  %v4010 = vmax.f32 %v3897, %v3988
  %v4011 = vmax.f32 %v3898, %v3993
  %v4012 = vmax.f32 %v3899, %v3998
  %v4013 = vmax.f32 %v3900, %v4003
  %v4014 = vadd.f32 %v3667, %v4006
  %v4015 = vadd.f32 %v3668, %v4007
  %v4016 = vadd.f32 %v3669, %v4008
  %v4017 = vadd.f32 %v3670, %v4009
  %v4018 = vadd.f32 %v3671, %v4010
  %v4019 = vadd.f32 %v3672, %v4011
  %v4020 = vadd.f32 %v3673, %v4012
  %v4021 = vadd.f32 %v3674, %v4013
  %s4022 = scalar_lea.vmem %s4, 896
  %v4023 = vld [vmem:[%s4022] sm:$0xff]
  %v4024 = vld [vmem:[%s4022 + $0x8] sm:$0xff]
  %v4025 = vld [vmem:[%s4022 + $0x10] sm:$0xff]
  %v4026 = vld [vmem:[%s4022 + $0x18] sm:$0xff]
  %v4027 = vld [vmem:[%s4022 + $0x20] sm:$0xff]
  %v4028 = vld [vmem:[%s4022 + $0x28] sm:$0xff]
  %v4029 = vld [vmem:[%s4022 + $0x30] sm:$0xff]
  %v4030 = vld [vmem:[%s4022 + $0x38] sm:$0xff]
  %v4031 = vld [vmem:[%s4022 + $0x40] sm:$0xff]
  %v4032 = vld [vmem:[%s4022 + $0x48] sm:$0xff]
  %v4033 = vld [vmem:[%s4022 + $0x50] sm:$0xff]
  %v4034 = vld [vmem:[%s4022 + $0x58] sm:$0xff]
  %v4035 = vld [vmem:[%s4022 + $0x60] sm:$0xff]
  %v4036 = vld [vmem:[%s4022 + $0x68] sm:$0xff]
  %v4037 = vld [vmem:[%s4022 + $0x70] sm:$0xff]
  %v4038 = vld [vmem:[%s4022 + $0x78] sm:$0xff]
  %s4039 = scalar_lea.vmem %s5, 7
  %v4040 = vld [vmem:[%s4039] sm:$0x1]
  %v4042 = vlaneseq
  %v4043 = vshrl.u32 %v4042, 7
  %v4044 = vsub.s32 0, %v4043
  %v4045 = vrot.slane %v4040, %v4044
  %4047 = vmatprep.subr.mxu0 0.0
  %4048 = vmatpush1.msra.mxu0 %v4023
  %4049 = vmatprep.subr.mxu0 0.0
  %4050 = vmatpush1.msra.mxu0 %v4024
  %4051 = vmatprep.subr.mxu0 0.0
  %4052 = vmatpush1.msra.mxu0 %v4025
  %4053 = vmatprep.subr.mxu0 0.0
  %4054 = vmatpush1.msra.mxu0 %v4026
  %4055 = vmatprep.subr.mxu0 0.0
  %4056 = vmatpush1.msra.mxu0 %v4027
  %4057 = vmatprep.subr.mxu0 0.0
  %4058 = vmatpush1.msra.mxu0 %v4028
  %4059 = vmatprep.subr.mxu0 0.0
  %4060 = vmatpush1.msra.mxu0 %v4029
  %4061 = vmatprep.subr.mxu0 0.0
  %4062 = vmatpush1.msra.mxu0 %v4030
  %4063 = vmatprep.subr.mxu0 0.0
  %4064 = vmatpush1.msra.mxu0 %v4031
  %4065 = vmatprep.subr.mxu0 0.0
  %4066 = vmatpush1.msra.mxu0 %v4032
  %4067 = vmatprep.subr.mxu0 0.0
  %4068 = vmatpush1.msra.mxu0 %v4033
  %4069 = vmatprep.subr.mxu0 0.0
  %4070 = vmatpush1.msra.mxu0 %v4034
  %4071 = vmatprep.subr.mxu0 0.0
  %4072 = vmatpush1.msra.mxu0 %v4035
  %4073 = vmatprep.subr.mxu0 0.0
  %4074 = vmatpush1.msra.mxu0 %v4036
  %4075 = vmatprep.subr.mxu0 0.0
  %4076 = vmatpush1.msra.mxu0 %v4037
  %4077 = vmatprep.subr.mxu0 0.0
  %4078 = vmatpush1.msra.mxu0 %v4038
  %4079 = vmatprep.subr.mxu0 0.0
  %4080 = vmatpush1.msra.mxu0 0.0
  %4081 = vmatprep.subr.mxu0 0.0
  %4082 = vmatpush1.msra.mxu0 0.0
  %4083 = vmatprep.subr.mxu0 0.0
  %4084 = vmatpush1.msra.mxu0 0.0
  %4085 = vmatprep.subr.mxu0 0.0
  %4086 = vmatpush1.msra.mxu0 0.0
  %4087 = vmatprep.subr.mxu0 0.0
  %4088 = vmatpush1.msra.mxu0 0.0
  %4089 = vmatprep.subr.mxu0 0.0
  %4090 = vmatpush1.msra.mxu0 0.0
  %4091 = vmatprep.subr.mxu0 0.0
  %4092 = vmatpush1.msra.mxu0 0.0
  %4093 = vmatprep.subr.mxu0 0.0
  %4094 = vmatpush1.msra.mxu0 0.0
  %4095 = vmatprep.subr.mxu0 0.0
  %4096 = vmatpush1.msra.mxu0 0.0
  %4097 = vmatprep.subr.mxu0 0.0
  %4098 = vmatpush1.msra.mxu0 0.0
  %4099 = vmatprep.subr.mxu0 0.0
  %4100 = vmatpush1.msra.mxu0 0.0
  %4101 = vmatprep.subr.mxu0 0.0
  %4102 = vmatpush1.msra.mxu0 0.0
  %4103 = vmatprep.subr.mxu0 0.0
  %4104 = vmatpush1.msra.mxu0 0.0
  %4105 = vmatprep.subr.mxu0 0.0
  %4106 = vmatpush1.msra.mxu0 0.0
  %4107 = vmatprep.subr.mxu0 0.0
  %4108 = vmatpush1.msra.mxu0 0.0
  %4109 = vmatprep.subr.mxu0 0.0
  %4110 = vmatpush1.msra.mxu0 0.0
  %4111 = vmatprep.mubr.f32.mxu0 0.0
  %4112 = vmatmul.mubr.f32.gmra.mrb[0].mxu0 %v4014
  %v4113 = vpop.f32.mrb[0].mxu0
  %v4114 = vadd.f32 %v4045, %v4113
  %v4115 = vpop.f32.mrb[0].mxu0
  %4116 = vmatprep.mubr.f32.mxu0 0.0
  %4117 = vmatmul.mubr.f32.gmra.mrb[0].mxu0 %v4015
  %v4118 = vpop.f32.mrb[0].mxu0
  %v4119 = vadd.f32 %v4045, %v4118
  %v4120 = vpop.f32.mrb[0].mxu0
  %4121 = vmatprep.mubr.f32.mxu0 0.0
  %4122 = vmatmul.mubr.f32.gmra.mrb[0].mxu0 %v4016
  %v4123 = vpop.f32.mrb[0].mxu0
  %v4124 = vadd.f32 %v4045, %v4123
  %v4125 = vpop.f32.mrb[0].mxu0
  %4126 = vmatprep.mubr.f32.mxu0 0.0
  %4127 = vmatmul.mubr.f32.gmra.mrb[0].mxu0 %v4017
  %v4128 = vpop.f32.mrb[0].mxu0
  %v4129 = vadd.f32 %v4045, %v4128
  %v4130 = vpop.f32.mrb[0].mxu0
  %4131 = vmatprep.mubr.f32.mxu0 0.0
  %4132 = vmatmul.mubr.f32.gmra.mrb[0].mxu0 %v4018
  %v4133 = vpop.f32.mrb[0].mxu0
  %v4134 = vadd.f32 %v4045, %v4133
  %v4135 = vpop.f32.mrb[0].mxu0
  %4136 = vmatprep.mubr.f32.mxu0 0.0
  %4137 = vmatmul.mubr.f32.gmra.mrb[0].mxu0 %v4019
  %v4138 = vpop.f32.mrb[0].mxu0
  %v4139 = vadd.f32 %v4045, %v4138
  %v4140 = vpop.f32.mrb[0].mxu0
  %4141 = vmatprep.mubr.f32.mxu0 0.0
  %4142 = vmatmul.mubr.f32.gmra.mrb[0].mxu0 %v4020
  %v4143 = vpop.f32.mrb[0].mxu0
  %v4144 = vadd.f32 %v4045, %v4143
  %v4145 = vpop.f32.mrb[0].mxu0
  %4146 = vmatprep.mubr.f32.mxu0 0.0
  %4147 = vmatmul.mubr.f32.gmra.mrb[0].mxu0 %v4021
  %v4148 = vpop.f32.mrb[0].mxu0
  %v4149 = vadd.f32 %v4045, %v4148
  %v4150 = vpop.f32.mrb[0].mxu0
  %4151 = vdwg.mxu0
  %vm4152 = vcmp.ge.f32.partialorder %v4114, 0.0
  %vm4153 = vcmp.ge.f32.partialorder %v4119, 0.0
  %vm4154 = vcmp.ge.f32.partialorder %v4124, 0.0
  %vm4155 = vcmp.ge.f32.partialorder %v4129, 0.0
  %vm4156 = vcmp.ge.f32.partialorder %v4134, 0.0
  %vm4157 = vcmp.ge.f32.partialorder %v4139, 0.0
  %vm4158 = vcmp.ge.f32.partialorder %v4144, 0.0
  %vm4159 = vcmp.ge.f32.partialorder %v4149, 0.0
  %v4160 = vmul.f32 %v4114, 0.01
  %v4161 = vmul.f32 %v4119, 0.01
  %v4162 = vmul.f32 %v4124, 0.01
  %v4163 = vmul.f32 %v4129, 0.01
  %v4164 = vmul.f32 %v4134, 0.01
  %v4165 = vmul.f32 %v4139, 0.01
  %v4166 = vmul.f32 %v4144, 0.01
  %v4167 = vmul.f32 %v4149, 0.01
  %v4168 = vsel %vm4152, %v4114, %v4160
  %v4169 = vsel %vm4153, %v4119, %v4161
  %v4170 = vsel %vm4154, %v4124, %v4162
  %v4171 = vsel %vm4155, %v4129, %v4163
  %v4172 = vsel %vm4156, %v4134, %v4164
  %v4173 = vsel %vm4157, %v4139, %v4165
  %v4174 = vsel %vm4158, %v4144, %v4166
  %v4175 = vsel %vm4159, %v4149, %v4167
  %4176 = vmatprep.subr.mxu0 0.0
  %4177 = vmatpush1.msra.mxu0 %v4168
  %4178 = vmatprep.subr.mxu0 0.0
  %4179 = vmatpush1.msra.mxu0 %v4169
  %4180 = vmatprep.subr.mxu0 0.0
  %4181 = vmatpush1.msra.mxu0 %v4170
  %4182 = vmatprep.subr.mxu0 0.0
  %4183 = vmatpush1.msra.mxu0 %v4171
  %4184 = vmatprep.subr.mxu0 0.0
  %4185 = vmatpush1.msra.mxu0 %v4172
  %4186 = vmatprep.subr.mxu0 0.0
  %4187 = vmatpush1.msra.mxu0 %v4173
  %4188 = vmatprep.subr.mxu0 0.0
  %4189 = vmatpush1.msra.mxu0 %v4174
  %4190 = vmatprep.subr.mxu0 0.0
  %4191 = vmatpush1.msra.mxu0 %v4175
  %4192 = vmatprep.subr.mxu0 0.0
  %4193 = vmatpush1.msra.mxu0 0.0
  %4194 = vmatprep.subr.mxu0 0.0
  %4195 = vmatpush1.msra.mxu0 0.0
  %4196 = vmatprep.subr.mxu0 0.0
  %4197 = vmatpush1.msra.mxu0 0.0
  %4198 = vmatprep.subr.mxu0 0.0
  %4199 = vmatpush1.msra.mxu0 0.0
  %4200 = vmatprep.subr.mxu0 0.0
  %4201 = vmatpush1.msra.mxu0 0.0
  %4202 = vmatprep.subr.mxu0 0.0
  %4203 = vmatpush1.msra.mxu0 0.0
  %4204 = vmatprep.subr.mxu0 0.0
  %4205 = vmatpush1.msra.mxu0 0.0
  %4206 = vmatprep.subr.mxu0 0.0
  %4207 = vmatpush1.msra.mxu0 0.0
  %4208 = vmatprep.subr.mxu0 0.0
  %4209 = vmatpush1.msra.mxu0 0.0
  %4210 = vmatprep.subr.mxu0 0.0
  %4211 = vmatpush1.msra.mxu0 0.0
  %4212 = vmatprep.subr.mxu0 0.0
  %4213 = vmatpush1.msra.mxu0 0.0
  %4214 = vmatprep.subr.mxu0 0.0
  %4215 = vmatpush1.msra.mxu0 0.0
  %4216 = vmatprep.subr.mxu0 0.0
  %4217 = vmatpush1.msra.mxu0 0.0
  %4218 = vmatprep.subr.mxu0 0.0
  %4219 = vmatpush1.msra.mxu0 0.0
  %4220 = vmatprep.subr.mxu0 0.0
  %4221 = vmatpush1.msra.mxu0 0.0
  %4222 = vmatprep.subr.mxu0 0.0
  %4223 = vmatpush1.msra.mxu0 0.0
  %4224 = vmatprep.subr.mxu0 0.0
  %4225 = vmatpush1.msra.mxu0 0.0
  %4226 = vmatprep.subr.mxu0 0.0
  %4227 = vmatpush1.msra.mxu0 0.0
  %4228 = vmatprep.subr.mxu0 0.0
  %4229 = vmatpush1.msra.mxu0 0.0
  %4230 = vmatprep.subr.mxu0 0.0
  %4231 = vmatpush1.msra.mxu0 0.0
  %4232 = vmatprep.subr.mxu0 0.0
  %4233 = vmatpush1.msra.mxu0 0.0
  %4234 = vmatprep.subr.mxu0 0.0
  %4235 = vmatpush1.msra.mxu0 0.0
  %4236 = vmatprep.subr.mxu0 0.0
  %4237 = vmatpush1.msra.mxu0 0.0
  %4238 = vmatprep.subr.mxu0 0.0
  %4239 = vmatpush1.msra.mxu0 0.0
  %4240 = vmatprep.mubr.f32.mxu0 0.0
  %4241 = vmatmul.mubr.f32.gmra.mrb[0].mxu0 %v63
  %v4242 = vpop.f32.mrb[0].mxu0
  %v4243 = vadd.f32 %v53, %v4242
  %v4244 = vpop.f32.mrb[0].mxu0
  %4245 = vmatprep.mubr.f32.mxu0 0.0
  %4246 = vmatmul.mubr.f32.gmra.mrb[0].mxu0 %v66
  %v4247 = vpop.f32.mrb[0].mxu0
  %v4248 = vadd.f32 %v54, %v4247
  %v4249 = vpop.f32.mrb[0].mxu0
  %4250 = vmatprep.mubr.f32.mxu0 0.0
  %4251 = vmatmul.mubr.f32.gmra.mrb[0].mxu0 %v69
  %v4252 = vpop.f32.mrb[0].mxu0
  %v4253 = vadd.f32 %v55, %v4252
  %v4254 = vpop.f32.mrb[0].mxu0
  %4255 = vmatprep.mubr.f32.mxu0 0.0
  %4256 = vmatmul.mubr.f32.gmra.mrb[0].mxu0 %v72
  %v4257 = vpop.f32.mrb[0].mxu0
  %v4258 = vadd.f32 %v56, %v4257
  %v4259 = vpop.f32.mrb[0].mxu0
  %4260 = vmatprep.mubr.f32.mxu0 0.0
  %4261 = vmatmul.mubr.f32.gmra.mrb[0].mxu0 %v75
  %v4262 = vpop.f32.mrb[0].mxu0
  %v4263 = vadd.f32 %v57, %v4262
  %v4264 = vpop.f32.mrb[0].mxu0
  %4265 = vmatprep.mubr.f32.mxu0 0.0
  %4266 = vmatmul.mubr.f32.gmra.mrb[0].mxu0 %v78
  %v4267 = vpop.f32.mrb[0].mxu0
  %v4268 = vadd.f32 %v58, %v4267
  %v4269 = vpop.f32.mrb[0].mxu0
  %4270 = vmatprep.mubr.f32.mxu0 0.0
  %4271 = vmatmul.mubr.f32.gmra.mrb[0].mxu0 %v81
  %v4272 = vpop.f32.mrb[0].mxu0
  %v4273 = vadd.f32 %v59, %v4272
  %v4274 = vpop.f32.mrb[0].mxu0
  %4275 = vmatprep.mubr.f32.mxu0 0.0
  %4276 = vmatmul.mubr.f32.gmra.mrb[0].mxu0 %v84
  %v4277 = vpop.f32.mrb[0].mxu0
  %v4278 = vadd.f32 %v60, %v4277
  %v4279 = vpop.f32.mrb[0].mxu0
  %4280 = vdwg.mxu0
  %v4281 = vmax.f32 %v29, %v4243
  %v4282 = vmax.f32 %v30, %v4248
  %v4283 = vmax.f32 %v31, %v4253
  %v4284 = vmax.f32 %v32, %v4258
  %v4285 = vmax.f32 %v33, %v4263
  %v4286 = vmax.f32 %v34, %v4268
  %v4287 = vmax.f32 %v35, %v4273
  %v4288 = vmax.f32 %v36, %v4278
  %4289 = vmatprep.subr.mxu0 0.0
  %4290 = vmatpush1.msra.mxu0 %v4168
  %4291 = vmatprep.subr.mxu0 0.0
  %4292 = vmatpush1.msra.mxu0 %v4169
  %4293 = vmatprep.subr.mxu0 0.0
  %4294 = vmatpush1.msra.mxu0 %v4170
  %4295 = vmatprep.subr.mxu0 0.0
  %4296 = vmatpush1.msra.mxu0 %v4171
  %4297 = vmatprep.subr.mxu0 0.0
  %4298 = vmatpush1.msra.mxu0 %v4172
  %4299 = vmatprep.subr.mxu0 0.0
  %4300 = vmatpush1.msra.mxu0 %v4173
  %4301 = vmatprep.subr.mxu0 0.0
  %4302 = vmatpush1.msra.mxu0 %v4174
  %4303 = vmatprep.subr.mxu0 0.0
  %4304 = vmatpush1.msra.mxu0 %v4175
  %4305 = vmatprep.subr.mxu0 0.0
  %4306 = vmatpush1.msra.mxu0 0.0
  %4307 = vmatprep.subr.mxu0 0.0
  %4308 = vmatpush1.msra.mxu0 0.0
  %4309 = vmatprep.subr.mxu0 0.0
  %4310 = vmatpush1.msra.mxu0 0.0
  %4311 = vmatprep.subr.mxu0 0.0
  %4312 = vmatpush1.msra.mxu0 0.0
  %4313 = vmatprep.subr.mxu0 0.0
  %4314 = vmatpush1.msra.mxu0 0.0
  %4315 = vmatprep.subr.mxu0 0.0
  %4316 = vmatpush1.msra.mxu0 0.0
  %4317 = vmatprep.subr.mxu0 0.0
  %4318 = vmatpush1.msra.mxu0 0.0
  %4319 = vmatprep.subr.mxu0 0.0
  %4320 = vmatpush1.msra.mxu0 0.0
  %4321 = vmatprep.subr.mxu0 0.0
  %4322 = vmatpush1.msra.mxu0 0.0
  %4323 = vmatprep.subr.mxu0 0.0
  %4324 = vmatpush1.msra.mxu0 0.0
  %4325 = vmatprep.subr.mxu0 0.0
  %4326 = vmatpush1.msra.mxu0 0.0
  %4327 = vmatprep.subr.mxu0 0.0
  %4328 = vmatpush1.msra.mxu0 0.0
  %4329 = vmatprep.subr.mxu0 0.0
  %4330 = vmatpush1.msra.mxu0 0.0
  %4331 = vmatprep.subr.mxu0 0.0
  %4332 = vmatpush1.msra.mxu0 0.0
  %4333 = vmatprep.subr.mxu0 0.0
  %4334 = vmatpush1.msra.mxu0 0.0
  %4335 = vmatprep.subr.mxu0 0.0
  %4336 = vmatpush1.msra.mxu0 0.0
  %4337 = vmatprep.subr.mxu0 0.0
  %4338 = vmatpush1.msra.mxu0 0.0
  %4339 = vmatprep.subr.mxu0 0.0
  %4340 = vmatpush1.msra.mxu0 0.0
  %4341 = vmatprep.subr.mxu0 0.0
  %4342 = vmatpush1.msra.mxu0 0.0
  %4343 = vmatprep.subr.mxu0 0.0
  %4344 = vmatpush1.msra.mxu0 0.0
  %4345 = vmatprep.subr.mxu0 0.0
  %4346 = vmatpush1.msra.mxu0 0.0
  %4347 = vmatprep.subr.mxu0 0.0
  %4348 = vmatpush1.msra.mxu0 0.0
  %4349 = vmatprep.subr.mxu0 0.0
  %4350 = vmatpush1.msra.mxu0 0.0
  %4351 = vmatprep.subr.mxu0 0.0
  %4352 = vmatpush1.msra.mxu0 0.0
  %4353 = vmatprep.mubr.f32.mxu0 0.0
  %4354 = vmatmul.mubr.f32.gmra.mrb[0].mxu0 %v218
  %v4355 = vpop.f32.mrb[0].mxu0
  %v4356 = vadd.f32 %v209, %v4355
  %v4357 = vpop.f32.mrb[0].mxu0
  %4358 = vmatprep.mubr.f32.mxu0 0.0
  %4359 = vmatmul.mubr.f32.gmra.mrb[0].mxu0 %v221
  %v4360 = vpop.f32.mrb[0].mxu0
  %v4361 = vadd.f32 %v210, %v4360
  %v4362 = vpop.f32.mrb[0].mxu0
  %4363 = vmatprep.mubr.f32.mxu0 0.0
  %4364 = vmatmul.mubr.f32.gmra.mrb[0].mxu0 %v224
  %v4365 = vpop.f32.mrb[0].mxu0
  %v4366 = vadd.f32 %v211, %v4365
  %v4367 = vpop.f32.mrb[0].mxu0
  %4368 = vmatprep.mubr.f32.mxu0 0.0
  %4369 = vmatmul.mubr.f32.gmra.mrb[0].mxu0 %v227
  %v4370 = vpop.f32.mrb[0].mxu0
  %v4371 = vadd.f32 %v212, %v4370
  %v4372 = vpop.f32.mrb[0].mxu0
  %4373 = vmatprep.mubr.f32.mxu0 0.0
  %4374 = vmatmul.mubr.f32.gmra.mrb[0].mxu0 %v230
  %v4375 = vpop.f32.mrb[0].mxu0
  %v4376 = vadd.f32 %v213, %v4375
  %v4377 = vpop.f32.mrb[0].mxu0
  %4378 = vmatprep.mubr.f32.mxu0 0.0
  %4379 = vmatmul.mubr.f32.gmra.mrb[0].mxu0 %v233
  %v4380 = vpop.f32.mrb[0].mxu0
  %v4381 = vadd.f32 %v214, %v4380
  %v4382 = vpop.f32.mrb[0].mxu0
  %4383 = vmatprep.mubr.f32.mxu0 0.0
  %4384 = vmatmul.mubr.f32.gmra.mrb[0].mxu0 %v236
  %v4385 = vpop.f32.mrb[0].mxu0
  %v4386 = vadd.f32 %v215, %v4385
  %v4387 = vpop.f32.mrb[0].mxu0
  %4388 = vmatprep.mubr.f32.mxu0 0.0
  %4389 = vmatmul.mubr.f32.gmra.mrb[0].mxu0 %v239
  %v4390 = vpop.f32.mrb[0].mxu0
  %v4391 = vadd.f32 %v216, %v4390
  %v4392 = vpop.f32.mrb[0].mxu0
  %4393 = vdwg.mxu0
  %v4394 = vmax.f32 %v4281, %v4356
  %v4395 = vmax.f32 %v4282, %v4361
  %v4396 = vmax.f32 %v4283, %v4366
  %v4397 = vmax.f32 %v4284, %v4371
  %v4398 = vmax.f32 %v4285, %v4376
  %v4399 = vmax.f32 %v4286, %v4381
  %v4400 = vmax.f32 %v4287, %v4386
  %v4401 = vmax.f32 %v4288, %v4391
  %4402 = vmatprep.subr.mxu0 0.0
  %4403 = vmatpush1.msra.mxu0 %v4168
  %4404 = vmatprep.subr.mxu0 0.0
  %4405 = vmatpush1.msra.mxu0 %v4169
  %4406 = vmatprep.subr.mxu0 0.0
  %4407 = vmatpush1.msra.mxu0 %v4170
  %4408 = vmatprep.subr.mxu0 0.0
  %4409 = vmatpush1.msra.mxu0 %v4171
  %4410 = vmatprep.subr.mxu0 0.0
  %4411 = vmatpush1.msra.mxu0 %v4172
  %4412 = vmatprep.subr.mxu0 0.0
  %4413 = vmatpush1.msra.mxu0 %v4173
  %4414 = vmatprep.subr.mxu0 0.0
  %4415 = vmatpush1.msra.mxu0 %v4174
  %4416 = vmatprep.subr.mxu0 0.0
  %4417 = vmatpush1.msra.mxu0 %v4175
  %4418 = vmatprep.subr.mxu0 0.0
  %4419 = vmatpush1.msra.mxu0 0.0
  %4420 = vmatprep.subr.mxu0 0.0
  %4421 = vmatpush1.msra.mxu0 0.0
  %4422 = vmatprep.subr.mxu0 0.0
  %4423 = vmatpush1.msra.mxu0 0.0
  %4424 = vmatprep.subr.mxu0 0.0
  %4425 = vmatpush1.msra.mxu0 0.0
  %4426 = vmatprep.subr.mxu0 0.0
  %4427 = vmatpush1.msra.mxu0 0.0
  %4428 = vmatprep.subr.mxu0 0.0
  %4429 = vmatpush1.msra.mxu0 0.0
  %4430 = vmatprep.subr.mxu0 0.0
  %4431 = vmatpush1.msra.mxu0 0.0
  %4432 = vmatprep.subr.mxu0 0.0
  %4433 = vmatpush1.msra.mxu0 0.0
  %4434 = vmatprep.subr.mxu0 0.0
  %4435 = vmatpush1.msra.mxu0 0.0
  %4436 = vmatprep.subr.mxu0 0.0
  %4437 = vmatpush1.msra.mxu0 0.0
  %4438 = vmatprep.subr.mxu0 0.0
  %4439 = vmatpush1.msra.mxu0 0.0
  %4440 = vmatprep.subr.mxu0 0.0
  %4441 = vmatpush1.msra.mxu0 0.0
  %4442 = vmatprep.subr.mxu0 0.0
  %4443 = vmatpush1.msra.mxu0 0.0
  %4444 = vmatprep.subr.mxu0 0.0
  %4445 = vmatpush1.msra.mxu0 0.0
  %4446 = vmatprep.subr.mxu0 0.0
  %4447 = vmatpush1.msra.mxu0 0.0
  %4448 = vmatprep.subr.mxu0 0.0
  %4449 = vmatpush1.msra.mxu0 0.0
  %4450 = vmatprep.subr.mxu0 0.0
  %4451 = vmatpush1.msra.mxu0 0.0
  %4452 = vmatprep.subr.mxu0 0.0
  %4453 = vmatpush1.msra.mxu0 0.0
  %4454 = vmatprep.subr.mxu0 0.0
  %4455 = vmatpush1.msra.mxu0 0.0
  %4456 = vmatprep.subr.mxu0 0.0
  %4457 = vmatpush1.msra.mxu0 0.0
  %4458 = vmatprep.subr.mxu0 0.0
  %4459 = vmatpush1.msra.mxu0 0.0
  %4460 = vmatprep.subr.mxu0 0.0
  %4461 = vmatpush1.msra.mxu0 0.0
  %4462 = vmatprep.subr.mxu0 0.0
  %4463 = vmatpush1.msra.mxu0 0.0
  %4464 = vmatprep.subr.mxu0 0.0
  %4465 = vmatpush1.msra.mxu0 0.0
  %4466 = vmatprep.mubr.f32.mxu0 0.0
  %4467 = vmatmul.mubr.f32.gmra.mrb[0].mxu0 %v373
  %v4468 = vpop.f32.mrb[0].mxu0
  %v4469 = vadd.f32 %v364, %v4468
  %v4470 = vpop.f32.mrb[0].mxu0
  %4471 = vmatprep.mubr.f32.mxu0 0.0
  %4472 = vmatmul.mubr.f32.gmra.mrb[0].mxu0 %v376
  %v4473 = vpop.f32.mrb[0].mxu0
  %v4474 = vadd.f32 %v365, %v4473
  %v4475 = vpop.f32.mrb[0].mxu0
  %4476 = vmatprep.mubr.f32.mxu0 0.0
  %4477 = vmatmul.mubr.f32.gmra.mrb[0].mxu0 %v379
  %v4478 = vpop.f32.mrb[0].mxu0
  %v4479 = vadd.f32 %v366, %v4478
  %v4480 = vpop.f32.mrb[0].mxu0
  %4481 = vmatprep.mubr.f32.mxu0 0.0
  %4482 = vmatmul.mubr.f32.gmra.mrb[0].mxu0 %v382
  %v4483 = vpop.f32.mrb[0].mxu0
  %v4484 = vadd.f32 %v367, %v4483
  %v4485 = vpop.f32.mrb[0].mxu0
  %4486 = vmatprep.mubr.f32.mxu0 0.0
  %4487 = vmatmul.mubr.f32.gmra.mrb[0].mxu0 %v385
  %v4488 = vpop.f32.mrb[0].mxu0
  %v4489 = vadd.f32 %v368, %v4488
  %v4490 = vpop.f32.mrb[0].mxu0
  %4491 = vmatprep.mubr.f32.mxu0 0.0
  %4492 = vmatmul.mubr.f32.gmra.mrb[0].mxu0 %v388
  %v4493 = vpop.f32.mrb[0].mxu0
  %v4494 = vadd.f32 %v369, %v4493
  %v4495 = vpop.f32.mrb[0].mxu0
  %4496 = vmatprep.mubr.f32.mxu0 0.0
  %4497 = vmatmul.mubr.f32.gmra.mrb[0].mxu0 %v391
  %v4498 = vpop.f32.mrb[0].mxu0
  %v4499 = vadd.f32 %v370, %v4498
  %v4500 = vpop.f32.mrb[0].mxu0
  %4501 = vmatprep.mubr.f32.mxu0 0.0
  %4502 = vmatmul.mubr.f32.gmra.mrb[0].mxu0 %v394
  %v4503 = vpop.f32.mrb[0].mxu0
  %v4504 = vadd.f32 %v371, %v4503
  %v4505 = vpop.f32.mrb[0].mxu0
  %4506 = vdwg.mxu0
  %v4507 = vmax.f32 %v4394, %v4469
  %v4508 = vmax.f32 %v4395, %v4474
  %v4509 = vmax.f32 %v4396, %v4479
  %v4510 = vmax.f32 %v4397, %v4484
  %v4511 = vmax.f32 %v4398, %v4489
  %v4512 = vmax.f32 %v4399, %v4494
  %v4513 = vmax.f32 %v4400, %v4499
  %v4514 = vmax.f32 %v4401, %v4504
  %v4515 = vadd.f32 %v4168, %v4507
  %v4516 = vadd.f32 %v4169, %v4508
  %v4517 = vadd.f32 %v4170, %v4509
  %v4518 = vadd.f32 %v4171, %v4510
  %v4519 = vadd.f32 %v4172, %v4511
  %v4520 = vadd.f32 %v4173, %v4512
  %v4521 = vadd.f32 %v4174, %v4513
  %v4522 = vadd.f32 %v4175, %v4514
  %s4523 = scalar_lea.vmem %s4, 1024
  %v4524 = vld [vmem:[%s4523] sm:$0xff]
  %v4525 = vld [vmem:[%s4523 + $0x8] sm:$0xff]
  %v4526 = vld [vmem:[%s4523 + $0x10] sm:$0xff]
  %v4527 = vld [vmem:[%s4523 + $0x18] sm:$0xff]
  %v4528 = vld [vmem:[%s4523 + $0x20] sm:$0xff]
  %v4529 = vld [vmem:[%s4523 + $0x28] sm:$0xff]
  %v4530 = vld [vmem:[%s4523 + $0x30] sm:$0xff]
  %v4531 = vld [vmem:[%s4523 + $0x38] sm:$0xff]
  %v4532 = vld [vmem:[%s4523 + $0x40] sm:$0xff]
  %v4533 = vld [vmem:[%s4523 + $0x48] sm:$0xff]
  %v4534 = vld [vmem:[%s4523 + $0x50] sm:$0xff]
  %v4535 = vld [vmem:[%s4523 + $0x58] sm:$0xff]
  %v4536 = vld [vmem:[%s4523 + $0x60] sm:$0xff]
  %v4537 = vld [vmem:[%s4523 + $0x68] sm:$0xff]
  %v4538 = vld [vmem:[%s4523 + $0x70] sm:$0xff]
  %v4539 = vld [vmem:[%s4523 + $0x78] sm:$0xff]
  %s4540 = scalar_lea.vmem %s5, 8
  %v4541 = vld [vmem:[%s4540] sm:$0x1]
  %v4543 = vlaneseq
  %v4544 = vshrl.u32 %v4543, 7
  %v4545 = vsub.s32 0, %v4544
  %v4546 = vrot.slane %v4541, %v4545
  %4548 = vmatprep.subr.mxu0 0.0
  %4549 = vmatpush1.msra.mxu0 %v4524
  %4550 = vmatprep.subr.mxu0 0.0
  %4551 = vmatpush1.msra.mxu0 %v4525
  %4552 = vmatprep.subr.mxu0 0.0
  %4553 = vmatpush1.msra.mxu0 %v4526
  %4554 = vmatprep.subr.mxu0 0.0
  %4555 = vmatpush1.msra.mxu0 %v4527
  %4556 = vmatprep.subr.mxu0 0.0
  %4557 = vmatpush1.msra.mxu0 %v4528
  %4558 = vmatprep.subr.mxu0 0.0
  %4559 = vmatpush1.msra.mxu0 %v4529
  %4560 = vmatprep.subr.mxu0 0.0
  %4561 = vmatpush1.msra.mxu0 %v4530
  %4562 = vmatprep.subr.mxu0 0.0
  %4563 = vmatpush1.msra.mxu0 %v4531
  %4564 = vmatprep.subr.mxu0 0.0
  %4565 = vmatpush1.msra.mxu0 %v4532
  %4566 = vmatprep.subr.mxu0 0.0
  %4567 = vmatpush1.msra.mxu0 %v4533
  %4568 = vmatprep.subr.mxu0 0.0
  %4569 = vmatpush1.msra.mxu0 %v4534
  %4570 = vmatprep.subr.mxu0 0.0
  %4571 = vmatpush1.msra.mxu0 %v4535
  %4572 = vmatprep.subr.mxu0 0.0
  %4573 = vmatpush1.msra.mxu0 %v4536
  %4574 = vmatprep.subr.mxu0 0.0
  %4575 = vmatpush1.msra.mxu0 %v4537
  %4576 = vmatprep.subr.mxu0 0.0
  %4577 = vmatpush1.msra.mxu0 %v4538
  %4578 = vmatprep.subr.mxu0 0.0
  %4579 = vmatpush1.msra.mxu0 %v4539
  %4580 = vmatprep.subr.mxu0 0.0
  %4581 = vmatpush1.msra.mxu0 0.0
  %4582 = vmatprep.subr.mxu0 0.0
  %4583 = vmatpush1.msra.mxu0 0.0
  %4584 = vmatprep.subr.mxu0 0.0
  %4585 = vmatpush1.msra.mxu0 0.0
  %4586 = vmatprep.subr.mxu0 0.0
  %4587 = vmatpush1.msra.mxu0 0.0
  %4588 = vmatprep.subr.mxu0 0.0
  %4589 = vmatpush1.msra.mxu0 0.0
  %4590 = vmatprep.subr.mxu0 0.0
  %4591 = vmatpush1.msra.mxu0 0.0
  %4592 = vmatprep.subr.mxu0 0.0
  %4593 = vmatpush1.msra.mxu0 0.0
  %4594 = vmatprep.subr.mxu0 0.0
  %4595 = vmatpush1.msra.mxu0 0.0
  %4596 = vmatprep.subr.mxu0 0.0
  %4597 = vmatpush1.msra.mxu0 0.0
  %4598 = vmatprep.subr.mxu0 0.0
  %4599 = vmatpush1.msra.mxu0 0.0
  %4600 = vmatprep.subr.mxu0 0.0
  %4601 = vmatpush1.msra.mxu0 0.0
  %4602 = vmatprep.subr.mxu0 0.0
  %4603 = vmatpush1.msra.mxu0 0.0
  %4604 = vmatprep.subr.mxu0 0.0
  %4605 = vmatpush1.msra.mxu0 0.0
  %4606 = vmatprep.subr.mxu0 0.0
  %4607 = vmatpush1.msra.mxu0 0.0
  %4608 = vmatprep.subr.mxu0 0.0
  %4609 = vmatpush1.msra.mxu0 0.0
  %4610 = vmatprep.subr.mxu0 0.0
  %4611 = vmatpush1.msra.mxu0 0.0
  %4612 = vmatprep.mubr.f32.mxu0 0.0
  %4613 = vmatmul.mubr.f32.gmra.mrb[0].mxu0 %v4515
  %v4614 = vpop.f32.mrb[0].mxu0
  %v4615 = vadd.f32 %v4546, %v4614
  %v4616 = vpop.f32.mrb[0].mxu0
  %4617 = vmatprep.mubr.f32.mxu0 0.0
  %4618 = vmatmul.mubr.f32.gmra.mrb[0].mxu0 %v4516
  %v4619 = vpop.f32.mrb[0].mxu0
  %v4620 = vadd.f32 %v4546, %v4619
  %v4621 = vpop.f32.mrb[0].mxu0
  %4622 = vmatprep.mubr.f32.mxu0 0.0
  %4623 = vmatmul.mubr.f32.gmra.mrb[0].mxu0 %v4517
  %v4624 = vpop.f32.mrb[0].mxu0
  %v4625 = vadd.f32 %v4546, %v4624
  %v4626 = vpop.f32.mrb[0].mxu0
  %4627 = vmatprep.mubr.f32.mxu0 0.0
  %4628 = vmatmul.mubr.f32.gmra.mrb[0].mxu0 %v4518
  %v4629 = vpop.f32.mrb[0].mxu0
  %v4630 = vadd.f32 %v4546, %v4629
  %v4631 = vpop.f32.mrb[0].mxu0
  %4632 = vmatprep.mubr.f32.mxu0 0.0
  %4633 = vmatmul.mubr.f32.gmra.mrb[0].mxu0 %v4519
  %v4634 = vpop.f32.mrb[0].mxu0
  %v4635 = vadd.f32 %v4546, %v4634
  %v4636 = vpop.f32.mrb[0].mxu0
  %4637 = vmatprep.mubr.f32.mxu0 0.0
  %4638 = vmatmul.mubr.f32.gmra.mrb[0].mxu0 %v4520
  %v4639 = vpop.f32.mrb[0].mxu0
  %v4640 = vadd.f32 %v4546, %v4639
  %v4641 = vpop.f32.mrb[0].mxu0
  %4642 = vmatprep.mubr.f32.mxu0 0.0
  %4643 = vmatmul.mubr.f32.gmra.mrb[0].mxu0 %v4521
  %v4644 = vpop.f32.mrb[0].mxu0
  %v4645 = vadd.f32 %v4546, %v4644
  %v4646 = vpop.f32.mrb[0].mxu0
  %4647 = vmatprep.mubr.f32.mxu0 0.0
  %4648 = vmatmul.mubr.f32.gmra.mrb[0].mxu0 %v4522
  %v4649 = vpop.f32.mrb[0].mxu0
  %v4650 = vadd.f32 %v4546, %v4649
  %v4651 = vpop.f32.mrb[0].mxu0
  %4652 = vdwg.mxu0
  %vm4653 = vcmp.ge.f32.partialorder %v4615, 0.0
  %vm4654 = vcmp.ge.f32.partialorder %v4620, 0.0
  %vm4655 = vcmp.ge.f32.partialorder %v4625, 0.0
  %vm4656 = vcmp.ge.f32.partialorder %v4630, 0.0
  %vm4657 = vcmp.ge.f32.partialorder %v4635, 0.0
  %vm4658 = vcmp.ge.f32.partialorder %v4640, 0.0
  %vm4659 = vcmp.ge.f32.partialorder %v4645, 0.0
  %vm4660 = vcmp.ge.f32.partialorder %v4650, 0.0
  %v4661 = vmul.f32 %v4615, 0.01
  %v4662 = vmul.f32 %v4620, 0.01
  %v4663 = vmul.f32 %v4625, 0.01
  %v4664 = vmul.f32 %v4630, 0.01
  %v4665 = vmul.f32 %v4635, 0.01
  %v4666 = vmul.f32 %v4640, 0.01
  %v4667 = vmul.f32 %v4645, 0.01
  %v4668 = vmul.f32 %v4650, 0.01
  %v4669 = vsel %vm4653, %v4615, %v4661
  %v4670 = vsel %vm4654, %v4620, %v4662
  %v4671 = vsel %vm4655, %v4625, %v4663
  %v4672 = vsel %vm4656, %v4630, %v4664
  %v4673 = vsel %vm4657, %v4635, %v4665
  %v4674 = vsel %vm4658, %v4640, %v4666
  %v4675 = vsel %vm4659, %v4645, %v4667
  %v4676 = vsel %vm4660, %v4650, %v4668
  %4677 = vmatprep.subr.mxu0 0.0
  %4678 = vmatpush1.msra.mxu0 %v4669
  %4679 = vmatprep.subr.mxu0 0.0
  %4680 = vmatpush1.msra.mxu0 %v4670
  %4681 = vmatprep.subr.mxu0 0.0
  %4682 = vmatpush1.msra.mxu0 %v4671
  %4683 = vmatprep.subr.mxu0 0.0
  %4684 = vmatpush1.msra.mxu0 %v4672
  %4685 = vmatprep.subr.mxu0 0.0
  %4686 = vmatpush1.msra.mxu0 %v4673
  %4687 = vmatprep.subr.mxu0 0.0
  %4688 = vmatpush1.msra.mxu0 %v4674
  %4689 = vmatprep.subr.mxu0 0.0
  %4690 = vmatpush1.msra.mxu0 %v4675
  %4691 = vmatprep.subr.mxu0 0.0
  %4692 = vmatpush1.msra.mxu0 %v4676
  %4693 = vmatprep.subr.mxu0 0.0
  %4694 = vmatpush1.msra.mxu0 0.0
  %4695 = vmatprep.subr.mxu0 0.0
  %4696 = vmatpush1.msra.mxu0 0.0
  %4697 = vmatprep.subr.mxu0 0.0
  %4698 = vmatpush1.msra.mxu0 0.0
  %4699 = vmatprep.subr.mxu0 0.0
  %4700 = vmatpush1.msra.mxu0 0.0
  %4701 = vmatprep.subr.mxu0 0.0
  %4702 = vmatpush1.msra.mxu0 0.0
  %4703 = vmatprep.subr.mxu0 0.0
  %4704 = vmatpush1.msra.mxu0 0.0
  %4705 = vmatprep.subr.mxu0 0.0
  %4706 = vmatpush1.msra.mxu0 0.0
  %4707 = vmatprep.subr.mxu0 0.0
  %4708 = vmatpush1.msra.mxu0 0.0
  %4709 = vmatprep.subr.mxu0 0.0
  %4710 = vmatpush1.msra.mxu0 0.0
  %4711 = vmatprep.subr.mxu0 0.0
  %4712 = vmatpush1.msra.mxu0 0.0
  %4713 = vmatprep.subr.mxu0 0.0
  %4714 = vmatpush1.msra.mxu0 0.0
  %4715 = vmatprep.subr.mxu0 0.0
  %4716 = vmatpush1.msra.mxu0 0.0
  %4717 = vmatprep.subr.mxu0 0.0
  %4718 = vmatpush1.msra.mxu0 0.0
  %4719 = vmatprep.subr.mxu0 0.0
  %4720 = vmatpush1.msra.mxu0 0.0
  %4721 = vmatprep.subr.mxu0 0.0
  %4722 = vmatpush1.msra.mxu0 0.0
  %4723 = vmatprep.subr.mxu0 0.0
  %4724 = vmatpush1.msra.mxu0 0.0
  %4725 = vmatprep.subr.mxu0 0.0
  %4726 = vmatpush1.msra.mxu0 0.0
  %4727 = vmatprep.subr.mxu0 0.0
  %4728 = vmatpush1.msra.mxu0 0.0
  %4729 = vmatprep.subr.mxu0 0.0
  %4730 = vmatpush1.msra.mxu0 0.0
  %4731 = vmatprep.subr.mxu0 0.0
  %4732 = vmatpush1.msra.mxu0 0.0
  %4733 = vmatprep.subr.mxu0 0.0
  %4734 = vmatpush1.msra.mxu0 0.0
  %4735 = vmatprep.subr.mxu0 0.0
  %4736 = vmatpush1.msra.mxu0 0.0
  %4737 = vmatprep.subr.mxu0 0.0
  %4738 = vmatpush1.msra.mxu0 0.0
  %4739 = vmatprep.subr.mxu0 0.0
  %4740 = vmatpush1.msra.mxu0 0.0
  %4741 = vmatprep.mubr.f32.mxu0 0.0
  %4742 = vmatmul.mubr.f32.gmra.mrb[0].mxu0 %v63
  %v4743 = vpop.f32.mrb[0].mxu0
  %v4744 = vadd.f32 %v53, %v4743
  %v4745 = vpop.f32.mrb[0].mxu0
  %4746 = vmatprep.mubr.f32.mxu0 0.0
  %4747 = vmatmul.mubr.f32.gmra.mrb[0].mxu0 %v66
  %v4748 = vpop.f32.mrb[0].mxu0
  %v4749 = vadd.f32 %v54, %v4748
  %v4750 = vpop.f32.mrb[0].mxu0
  %4751 = vmatprep.mubr.f32.mxu0 0.0
  %4752 = vmatmul.mubr.f32.gmra.mrb[0].mxu0 %v69
  %v4753 = vpop.f32.mrb[0].mxu0
  %v4754 = vadd.f32 %v55, %v4753
  %v4755 = vpop.f32.mrb[0].mxu0
  %4756 = vmatprep.mubr.f32.mxu0 0.0
  %4757 = vmatmul.mubr.f32.gmra.mrb[0].mxu0 %v72
  %v4758 = vpop.f32.mrb[0].mxu0
  %v4759 = vadd.f32 %v56, %v4758
  %v4760 = vpop.f32.mrb[0].mxu0
  %4761 = vmatprep.mubr.f32.mxu0 0.0
  %4762 = vmatmul.mubr.f32.gmra.mrb[0].mxu0 %v75
  %v4763 = vpop.f32.mrb[0].mxu0
  %v4764 = vadd.f32 %v57, %v4763
  %v4765 = vpop.f32.mrb[0].mxu0
  %4766 = vmatprep.mubr.f32.mxu0 0.0
  %4767 = vmatmul.mubr.f32.gmra.mrb[0].mxu0 %v78
  %v4768 = vpop.f32.mrb[0].mxu0
  %v4769 = vadd.f32 %v58, %v4768
  %v4770 = vpop.f32.mrb[0].mxu0
  %4771 = vmatprep.mubr.f32.mxu0 0.0
  %4772 = vmatmul.mubr.f32.gmra.mrb[0].mxu0 %v81
  %v4773 = vpop.f32.mrb[0].mxu0
  %v4774 = vadd.f32 %v59, %v4773
  %v4775 = vpop.f32.mrb[0].mxu0
  %4776 = vmatprep.mubr.f32.mxu0 0.0
  %4777 = vmatmul.mubr.f32.gmra.mrb[0].mxu0 %v84
  %v4778 = vpop.f32.mrb[0].mxu0
  %v4779 = vadd.f32 %v60, %v4778
  %v4780 = vpop.f32.mrb[0].mxu0
  %4781 = vdwg.mxu0
  %v4782 = vmax.f32 %v29, %v4744
  %v4783 = vmax.f32 %v30, %v4749
  %v4784 = vmax.f32 %v31, %v4754
  %v4785 = vmax.f32 %v32, %v4759
  %v4786 = vmax.f32 %v33, %v4764
  %v4787 = vmax.f32 %v34, %v4769
  %v4788 = vmax.f32 %v35, %v4774
  %v4789 = vmax.f32 %v36, %v4779
  %4790 = vmatprep.subr.mxu0 0.0
  %4791 = vmatpush1.msra.mxu0 %v4669
  %4792 = vmatprep.subr.mxu0 0.0
  %4793 = vmatpush1.msra.mxu0 %v4670
  %4794 = vmatprep.subr.mxu0 0.0
  %4795 = vmatpush1.msra.mxu0 %v4671
  %4796 = vmatprep.subr.mxu0 0.0
  %4797 = vmatpush1.msra.mxu0 %v4672
  %4798 = vmatprep.subr.mxu0 0.0
  %4799 = vmatpush1.msra.mxu0 %v4673
  %4800 = vmatprep.subr.mxu0 0.0
  %4801 = vmatpush1.msra.mxu0 %v4674
  %4802 = vmatprep.subr.mxu0 0.0
  %4803 = vmatpush1.msra.mxu0 %v4675
  %4804 = vmatprep.subr.mxu0 0.0
  %4805 = vmatpush1.msra.mxu0 %v4676
  %4806 = vmatprep.subr.mxu0 0.0
  %4807 = vmatpush1.msra.mxu0 0.0
  %4808 = vmatprep.subr.mxu0 0.0
  %4809 = vmatpush1.msra.mxu0 0.0
  %4810 = vmatprep.subr.mxu0 0.0
  %4811 = vmatpush1.msra.mxu0 0.0
  %4812 = vmatprep.subr.mxu0 0.0
  %4813 = vmatpush1.msra.mxu0 0.0
  %4814 = vmatprep.subr.mxu0 0.0
  %4815 = vmatpush1.msra.mxu0 0.0
  %4816 = vmatprep.subr.mxu0 0.0
  %4817 = vmatpush1.msra.mxu0 0.0
  %4818 = vmatprep.subr.mxu0 0.0
  %4819 = vmatpush1.msra.mxu0 0.0
  %4820 = vmatprep.subr.mxu0 0.0
  %4821 = vmatpush1.msra.mxu0 0.0
  %4822 = vmatprep.subr.mxu0 0.0
  %4823 = vmatpush1.msra.mxu0 0.0
  %4824 = vmatprep.subr.mxu0 0.0
  %4825 = vmatpush1.msra.mxu0 0.0
  %4826 = vmatprep.subr.mxu0 0.0
  %4827 = vmatpush1.msra.mxu0 0.0
  %4828 = vmatprep.subr.mxu0 0.0
  %4829 = vmatpush1.msra.mxu0 0.0
  %4830 = vmatprep.subr.mxu0 0.0
  %4831 = vmatpush1.msra.mxu0 0.0
  %4832 = vmatprep.subr.mxu0 0.0
  %4833 = vmatpush1.msra.mxu0 0.0
  %4834 = vmatprep.subr.mxu0 0.0
  %4835 = vmatpush1.msra.mxu0 0.0
  %4836 = vmatprep.subr.mxu0 0.0
  %4837 = vmatpush1.msra.mxu0 0.0
  %4838 = vmatprep.subr.mxu0 0.0
  %4839 = vmatpush1.msra.mxu0 0.0
  %4840 = vmatprep.subr.mxu0 0.0
  %4841 = vmatpush1.msra.mxu0 0.0
  %4842 = vmatprep.subr.mxu0 0.0
  %4843 = vmatpush1.msra.mxu0 0.0
  %4844 = vmatprep.subr.mxu0 0.0
  %4845 = vmatpush1.msra.mxu0 0.0
  %4846 = vmatprep.subr.mxu0 0.0
  %4847 = vmatpush1.msra.mxu0 0.0
  %4848 = vmatprep.subr.mxu0 0.0
  %4849 = vmatpush1.msra.mxu0 0.0
  %4850 = vmatprep.subr.mxu0 0.0
  %4851 = vmatpush1.msra.mxu0 0.0
  %4852 = vmatprep.subr.mxu0 0.0
  %4853 = vmatpush1.msra.mxu0 0.0
  %4854 = vmatprep.mubr.f32.mxu0 0.0
  %4855 = vmatmul.mubr.f32.gmra.mrb[0].mxu0 %v218
  %v4856 = vpop.f32.mrb[0].mxu0
  %v4857 = vadd.f32 %v209, %v4856
  %v4858 = vpop.f32.mrb[0].mxu0
  %4859 = vmatprep.mubr.f32.mxu0 0.0
  %4860 = vmatmul.mubr.f32.gmra.mrb[0].mxu0 %v221
  %v4861 = vpop.f32.mrb[0].mxu0
  %v4862 = vadd.f32 %v210, %v4861
  %v4863 = vpop.f32.mrb[0].mxu0
  %4864 = vmatprep.mubr.f32.mxu0 0.0
  %4865 = vmatmul.mubr.f32.gmra.mrb[0].mxu0 %v224
  %v4866 = vpop.f32.mrb[0].mxu0
  %v4867 = vadd.f32 %v211, %v4866
  %v4868 = vpop.f32.mrb[0].mxu0
  %4869 = vmatprep.mubr.f32.mxu0 0.0
  %4870 = vmatmul.mubr.f32.gmra.mrb[0].mxu0 %v227
  %v4871 = vpop.f32.mrb[0].mxu0
  %v4872 = vadd.f32 %v212, %v4871
  %v4873 = vpop.f32.mrb[0].mxu0
  %4874 = vmatprep.mubr.f32.mxu0 0.0
  %4875 = vmatmul.mubr.f32.gmra.mrb[0].mxu0 %v230
  %v4876 = vpop.f32.mrb[0].mxu0
  %v4877 = vadd.f32 %v213, %v4876
  %v4878 = vpop.f32.mrb[0].mxu0
  %4879 = vmatprep.mubr.f32.mxu0 0.0
  %4880 = vmatmul.mubr.f32.gmra.mrb[0].mxu0 %v233
  %v4881 = vpop.f32.mrb[0].mxu0
  %v4882 = vadd.f32 %v214, %v4881
  %v4883 = vpop.f32.mrb[0].mxu0
  %4884 = vmatprep.mubr.f32.mxu0 0.0
  %4885 = vmatmul.mubr.f32.gmra.mrb[0].mxu0 %v236
  %v4886 = vpop.f32.mrb[0].mxu0
  %v4887 = vadd.f32 %v215, %v4886
  %v4888 = vpop.f32.mrb[0].mxu0
  %4889 = vmatprep.mubr.f32.mxu0 0.0
  %4890 = vmatmul.mubr.f32.gmra.mrb[0].mxu0 %v239
  %v4891 = vpop.f32.mrb[0].mxu0
  %v4892 = vadd.f32 %v216, %v4891
  %v4893 = vpop.f32.mrb[0].mxu0
  %4894 = vdwg.mxu0
  %v4895 = vmax.f32 %v4782, %v4857
  %v4896 = vmax.f32 %v4783, %v4862
  %v4897 = vmax.f32 %v4784, %v4867
  %v4898 = vmax.f32 %v4785, %v4872
  %v4899 = vmax.f32 %v4786, %v4877
  %v4900 = vmax.f32 %v4787, %v4882
  %v4901 = vmax.f32 %v4788, %v4887
  %v4902 = vmax.f32 %v4789, %v4892
  %4903 = vmatprep.subr.mxu0 0.0
  %4904 = vmatpush1.msra.mxu0 %v4669
  %4905 = vmatprep.subr.mxu0 0.0
  %4906 = vmatpush1.msra.mxu0 %v4670
  %4907 = vmatprep.subr.mxu0 0.0
  %4908 = vmatpush1.msra.mxu0 %v4671
  %4909 = vmatprep.subr.mxu0 0.0
  %4910 = vmatpush1.msra.mxu0 %v4672
  %4911 = vmatprep.subr.mxu0 0.0
  %4912 = vmatpush1.msra.mxu0 %v4673
  %4913 = vmatprep.subr.mxu0 0.0
  %4914 = vmatpush1.msra.mxu0 %v4674
  %4915 = vmatprep.subr.mxu0 0.0
  %4916 = vmatpush1.msra.mxu0 %v4675
  %4917 = vmatprep.subr.mxu0 0.0
  %4918 = vmatpush1.msra.mxu0 %v4676
  %4919 = vmatprep.subr.mxu0 0.0
  %4920 = vmatpush1.msra.mxu0 0.0
  %4921 = vmatprep.subr.mxu0 0.0
  %4922 = vmatpush1.msra.mxu0 0.0
  %4923 = vmatprep.subr.mxu0 0.0
  %4924 = vmatpush1.msra.mxu0 0.0
  %4925 = vmatprep.subr.mxu0 0.0
  %4926 = vmatpush1.msra.mxu0 0.0
  %4927 = vmatprep.subr.mxu0 0.0
  %4928 = vmatpush1.msra.mxu0 0.0
  %4929 = vmatprep.subr.mxu0 0.0
  %4930 = vmatpush1.msra.mxu0 0.0
  %4931 = vmatprep.subr.mxu0 0.0
  %4932 = vmatpush1.msra.mxu0 0.0
  %4933 = vmatprep.subr.mxu0 0.0
  %4934 = vmatpush1.msra.mxu0 0.0
  %4935 = vmatprep.subr.mxu0 0.0
  %4936 = vmatpush1.msra.mxu0 0.0
  %4937 = vmatprep.subr.mxu0 0.0
  %4938 = vmatpush1.msra.mxu0 0.0
  %4939 = vmatprep.subr.mxu0 0.0
  %4940 = vmatpush1.msra.mxu0 0.0
  %4941 = vmatprep.subr.mxu0 0.0
  %4942 = vmatpush1.msra.mxu0 0.0
  %4943 = vmatprep.subr.mxu0 0.0
  %4944 = vmatpush1.msra.mxu0 0.0
  %4945 = vmatprep.subr.mxu0 0.0
  %4946 = vmatpush1.msra.mxu0 0.0
  %4947 = vmatprep.subr.mxu0 0.0
  %4948 = vmatpush1.msra.mxu0 0.0
  %4949 = vmatprep.subr.mxu0 0.0
  %4950 = vmatpush1.msra.mxu0 0.0
  %4951 = vmatprep.subr.mxu0 0.0
  %4952 = vmatpush1.msra.mxu0 0.0
  %4953 = vmatprep.subr.mxu0 0.0
  %4954 = vmatpush1.msra.mxu0 0.0
  %4955 = vmatprep.subr.mxu0 0.0
  %4956 = vmatpush1.msra.mxu0 0.0
  %4957 = vmatprep.subr.mxu0 0.0
  %4958 = vmatpush1.msra.mxu0 0.0
  %4959 = vmatprep.subr.mxu0 0.0
  %4960 = vmatpush1.msra.mxu0 0.0
  %4961 = vmatprep.subr.mxu0 0.0
  %4962 = vmatpush1.msra.mxu0 0.0
  %4963 = vmatprep.subr.mxu0 0.0
  %4964 = vmatpush1.msra.mxu0 0.0
  %4965 = vmatprep.subr.mxu0 0.0
  %4966 = vmatpush1.msra.mxu0 0.0
  %4967 = vmatprep.mubr.f32.mxu0 0.0
  %4968 = vmatmul.mubr.f32.gmra.mrb[0].mxu0 %v373
  %v4969 = vpop.f32.mrb[0].mxu0
  %v4970 = vadd.f32 %v364, %v4969
  %v4971 = vpop.f32.mrb[0].mxu0
  %4972 = vmatprep.mubr.f32.mxu0 0.0
  %4973 = vmatmul.mubr.f32.gmra.mrb[0].mxu0 %v376
  %v4974 = vpop.f32.mrb[0].mxu0
  %v4975 = vadd.f32 %v365, %v4974
  %v4976 = vpop.f32.mrb[0].mxu0
  %4977 = vmatprep.mubr.f32.mxu0 0.0
  %4978 = vmatmul.mubr.f32.gmra.mrb[0].mxu0 %v379
  %v4979 = vpop.f32.mrb[0].mxu0
  %v4980 = vadd.f32 %v366, %v4979
  %v4981 = vpop.f32.mrb[0].mxu0
  %4982 = vmatprep.mubr.f32.mxu0 0.0
  %4983 = vmatmul.mubr.f32.gmra.mrb[0].mxu0 %v382
  %v4984 = vpop.f32.mrb[0].mxu0
  %v4985 = vadd.f32 %v367, %v4984
  %v4986 = vpop.f32.mrb[0].mxu0
  %4987 = vmatprep.mubr.f32.mxu0 0.0
  %4988 = vmatmul.mubr.f32.gmra.mrb[0].mxu0 %v385
  %v4989 = vpop.f32.mrb[0].mxu0
  %v4990 = vadd.f32 %v368, %v4989
  %v4991 = vpop.f32.mrb[0].mxu0
  %4992 = vmatprep.mubr.f32.mxu0 0.0
  %4993 = vmatmul.mubr.f32.gmra.mrb[0].mxu0 %v388
  %v4994 = vpop.f32.mrb[0].mxu0
  %v4995 = vadd.f32 %v369, %v4994
  %v4996 = vpop.f32.mrb[0].mxu0
  %4997 = vmatprep.mubr.f32.mxu0 0.0
  %4998 = vmatmul.mubr.f32.gmra.mrb[0].mxu0 %v391
  %v4999 = vpop.f32.mrb[0].mxu0
  %v5000 = vadd.f32 %v370, %v4999
  %v5001 = vpop.f32.mrb[0].mxu0
  %5002 = vmatprep.mubr.f32.mxu0 0.0
  %5003 = vmatmul.mubr.f32.gmra.mrb[0].mxu0 %v394
  %v5004 = vpop.f32.mrb[0].mxu0
  %v5005 = vadd.f32 %v371, %v5004
  %v5006 = vpop.f32.mrb[0].mxu0
  %5007 = vdwg.mxu0
  %v5008 = vmax.f32 %v4895, %v4970
  %v5009 = vmax.f32 %v4896, %v4975
  %v5010 = vmax.f32 %v4897, %v4980
  %v5011 = vmax.f32 %v4898, %v4985
  %v5012 = vmax.f32 %v4899, %v4990
  %v5013 = vmax.f32 %v4900, %v4995
  %v5014 = vmax.f32 %v4901, %v5000
  %v5015 = vmax.f32 %v4902, %v5005
  %v5016 = vadd.f32 %v4669, %v5008
  %v5017 = vadd.f32 %v4670, %v5009
  %v5018 = vadd.f32 %v4671, %v5010
  %v5019 = vadd.f32 %v4672, %v5011
  %v5020 = vadd.f32 %v4673, %v5012
  %v5021 = vadd.f32 %v4674, %v5013
  %v5022 = vadd.f32 %v4675, %v5014
  %v5023 = vadd.f32 %v4676, %v5015
  %s5024 = scalar_lea.vmem %s4, 1152
  %v5025 = vld [vmem:[%s5024] sm:$0xff]
  %v5026 = vld [vmem:[%s5024 + $0x8] sm:$0xff]
  %v5027 = vld [vmem:[%s5024 + $0x10] sm:$0xff]
  %v5028 = vld [vmem:[%s5024 + $0x18] sm:$0xff]
  %v5029 = vld [vmem:[%s5024 + $0x20] sm:$0xff]
  %v5030 = vld [vmem:[%s5024 + $0x28] sm:$0xff]
  %v5031 = vld [vmem:[%s5024 + $0x30] sm:$0xff]
  %v5032 = vld [vmem:[%s5024 + $0x38] sm:$0xff]
  %v5033 = vld [vmem:[%s5024 + $0x40] sm:$0xff]
  %v5034 = vld [vmem:[%s5024 + $0x48] sm:$0xff]
  %v5035 = vld [vmem:[%s5024 + $0x50] sm:$0xff]
  %v5036 = vld [vmem:[%s5024 + $0x58] sm:$0xff]
  %v5037 = vld [vmem:[%s5024 + $0x60] sm:$0xff]
  %v5038 = vld [vmem:[%s5024 + $0x68] sm:$0xff]
  %v5039 = vld [vmem:[%s5024 + $0x70] sm:$0xff]
  %v5040 = vld [vmem:[%s5024 + $0x78] sm:$0xff]
  %s5041 = scalar_lea.vmem %s5, 9
  %v5042 = vld [vmem:[%s5041] sm:$0x1]
  %v5044 = vlaneseq
  %v5045 = vshrl.u32 %v5044, 7
  %v5046 = vsub.s32 0, %v5045
  %v5047 = vrot.slane %v5042, %v5046
  %5049 = vmatprep.subr.mxu0 0.0
  %5050 = vmatpush1.msra.mxu0 %v5025
  %5051 = vmatprep.subr.mxu0 0.0
  %5052 = vmatpush1.msra.mxu0 %v5026
  %5053 = vmatprep.subr.mxu0 0.0
  %5054 = vmatpush1.msra.mxu0 %v5027
  %5055 = vmatprep.subr.mxu0 0.0
  %5056 = vmatpush1.msra.mxu0 %v5028
  %5057 = vmatprep.subr.mxu0 0.0
  %5058 = vmatpush1.msra.mxu0 %v5029
  %5059 = vmatprep.subr.mxu0 0.0
  %5060 = vmatpush1.msra.mxu0 %v5030
  %5061 = vmatprep.subr.mxu0 0.0
  %5062 = vmatpush1.msra.mxu0 %v5031
  %5063 = vmatprep.subr.mxu0 0.0
  %5064 = vmatpush1.msra.mxu0 %v5032
  %5065 = vmatprep.subr.mxu0 0.0
  %5066 = vmatpush1.msra.mxu0 %v5033
  %5067 = vmatprep.subr.mxu0 0.0
  %5068 = vmatpush1.msra.mxu0 %v5034
  %5069 = vmatprep.subr.mxu0 0.0
  %5070 = vmatpush1.msra.mxu0 %v5035
  %5071 = vmatprep.subr.mxu0 0.0
  %5072 = vmatpush1.msra.mxu0 %v5036
  %5073 = vmatprep.subr.mxu0 0.0
  %5074 = vmatpush1.msra.mxu0 %v5037
  %5075 = vmatprep.subr.mxu0 0.0
  %5076 = vmatpush1.msra.mxu0 %v5038
  %5077 = vmatprep.subr.mxu0 0.0
  %5078 = vmatpush1.msra.mxu0 %v5039
  %5079 = vmatprep.subr.mxu0 0.0
  %5080 = vmatpush1.msra.mxu0 %v5040
  %5081 = vmatprep.subr.mxu0 0.0
  %5082 = vmatpush1.msra.mxu0 0.0
  %5083 = vmatprep.subr.mxu0 0.0
  %5084 = vmatpush1.msra.mxu0 0.0
  %5085 = vmatprep.subr.mxu0 0.0
  %5086 = vmatpush1.msra.mxu0 0.0
  %5087 = vmatprep.subr.mxu0 0.0
  %5088 = vmatpush1.msra.mxu0 0.0
  %5089 = vmatprep.subr.mxu0 0.0
  %5090 = vmatpush1.msra.mxu0 0.0
  %5091 = vmatprep.subr.mxu0 0.0
  %5092 = vmatpush1.msra.mxu0 0.0
  %5093 = vmatprep.subr.mxu0 0.0
  %5094 = vmatpush1.msra.mxu0 0.0
  %5095 = vmatprep.subr.mxu0 0.0
  %5096 = vmatpush1.msra.mxu0 0.0
  %5097 = vmatprep.subr.mxu0 0.0
  %5098 = vmatpush1.msra.mxu0 0.0
  %5099 = vmatprep.subr.mxu0 0.0
  %5100 = vmatpush1.msra.mxu0 0.0
  %5101 = vmatprep.subr.mxu0 0.0
  %5102 = vmatpush1.msra.mxu0 0.0
  %5103 = vmatprep.subr.mxu0 0.0
  %5104 = vmatpush1.msra.mxu0 0.0
  %5105 = vmatprep.subr.mxu0 0.0
  %5106 = vmatpush1.msra.mxu0 0.0
  %5107 = vmatprep.subr.mxu0 0.0
  %5108 = vmatpush1.msra.mxu0 0.0
  %5109 = vmatprep.subr.mxu0 0.0
  %5110 = vmatpush1.msra.mxu0 0.0
  %5111 = vmatprep.subr.mxu0 0.0
  %5112 = vmatpush1.msra.mxu0 0.0
  %5113 = vmatprep.mubr.f32.mxu0 0.0
  %5114 = vmatmul.mubr.f32.gmra.mrb[0].mxu0 %v5016
  %v5115 = vpop.f32.mrb[0].mxu0
  %v5116 = vadd.f32 %v5047, %v5115
  %v5117 = vpop.f32.mrb[0].mxu0
  %5118 = vmatprep.mubr.f32.mxu0 0.0
  %5119 = vmatmul.mubr.f32.gmra.mrb[0].mxu0 %v5017
  %v5120 = vpop.f32.mrb[0].mxu0
  %v5121 = vadd.f32 %v5047, %v5120
  %v5122 = vpop.f32.mrb[0].mxu0
  %5123 = vmatprep.mubr.f32.mxu0 0.0
  %5124 = vmatmul.mubr.f32.gmra.mrb[0].mxu0 %v5018
  %v5125 = vpop.f32.mrb[0].mxu0
  %v5126 = vadd.f32 %v5047, %v5125
  %v5127 = vpop.f32.mrb[0].mxu0
  %5128 = vmatprep.mubr.f32.mxu0 0.0
  %5129 = vmatmul.mubr.f32.gmra.mrb[0].mxu0 %v5019
  %v5130 = vpop.f32.mrb[0].mxu0
  %v5131 = vadd.f32 %v5047, %v5130
  %v5132 = vpop.f32.mrb[0].mxu0
  %5133 = vmatprep.mubr.f32.mxu0 0.0
  %5134 = vmatmul.mubr.f32.gmra.mrb[0].mxu0 %v5020
  %v5135 = vpop.f32.mrb[0].mxu0
  %v5136 = vadd.f32 %v5047, %v5135
  %v5137 = vpop.f32.mrb[0].mxu0
  %5138 = vmatprep.mubr.f32.mxu0 0.0
  %5139 = vmatmul.mubr.f32.gmra.mrb[0].mxu0 %v5021
  %v5140 = vpop.f32.mrb[0].mxu0
  %v5141 = vadd.f32 %v5047, %v5140
  %v5142 = vpop.f32.mrb[0].mxu0
  %5143 = vmatprep.mubr.f32.mxu0 0.0
  %5144 = vmatmul.mubr.f32.gmra.mrb[0].mxu0 %v5022
  %v5145 = vpop.f32.mrb[0].mxu0
  %v5146 = vadd.f32 %v5047, %v5145
  %v5147 = vpop.f32.mrb[0].mxu0
  %5148 = vmatprep.mubr.f32.mxu0 0.0
  %5149 = vmatmul.mubr.f32.gmra.mrb[0].mxu0 %v5023
  %v5150 = vpop.f32.mrb[0].mxu0
  %v5151 = vadd.f32 %v5047, %v5150
  %v5152 = vpop.f32.mrb[0].mxu0
  %5153 = vdwg.mxu0
  %vm5154 = vcmp.ge.f32.partialorder %v5116, 0.0
  %vm5155 = vcmp.ge.f32.partialorder %v5121, 0.0
  %vm5156 = vcmp.ge.f32.partialorder %v5126, 0.0
  %vm5157 = vcmp.ge.f32.partialorder %v5131, 0.0
  %vm5158 = vcmp.ge.f32.partialorder %v5136, 0.0
  %vm5159 = vcmp.ge.f32.partialorder %v5141, 0.0
  %vm5160 = vcmp.ge.f32.partialorder %v5146, 0.0
  %vm5161 = vcmp.ge.f32.partialorder %v5151, 0.0
  %v5162 = vmul.f32 %v5116, 0.01
  %v5163 = vmul.f32 %v5121, 0.01
  %v5164 = vmul.f32 %v5126, 0.01
  %v5165 = vmul.f32 %v5131, 0.01
  %v5166 = vmul.f32 %v5136, 0.01
  %v5167 = vmul.f32 %v5141, 0.01
  %v5168 = vmul.f32 %v5146, 0.01
  %v5169 = vmul.f32 %v5151, 0.01
  %v5170 = vsel %vm5154, %v5116, %v5162
  %v5171 = vsel %vm5155, %v5121, %v5163
  %v5172 = vsel %vm5156, %v5126, %v5164
  %v5173 = vsel %vm5157, %v5131, %v5165
  %v5174 = vsel %vm5158, %v5136, %v5166
  %v5175 = vsel %vm5159, %v5141, %v5167
  %v5176 = vsel %vm5160, %v5146, %v5168
  %v5177 = vsel %vm5161, %v5151, %v5169
  %5178 = vmatprep.subr.mxu0 0.0
  %5179 = vmatpush1.msra.mxu0 %v5170
  %5180 = vmatprep.subr.mxu0 0.0
  %5181 = vmatpush1.msra.mxu0 %v5171
  %5182 = vmatprep.subr.mxu0 0.0
  %5183 = vmatpush1.msra.mxu0 %v5172
  %5184 = vmatprep.subr.mxu0 0.0
  %5185 = vmatpush1.msra.mxu0 %v5173
  %5186 = vmatprep.subr.mxu0 0.0
  %5187 = vmatpush1.msra.mxu0 %v5174
  %5188 = vmatprep.subr.mxu0 0.0
  %5189 = vmatpush1.msra.mxu0 %v5175
  %5190 = vmatprep.subr.mxu0 0.0
  %5191 = vmatpush1.msra.mxu0 %v5176
  %5192 = vmatprep.subr.mxu0 0.0
  %5193 = vmatpush1.msra.mxu0 %v5177
  %5194 = vmatprep.subr.mxu0 0.0
  %5195 = vmatpush1.msra.mxu0 0.0
  %5196 = vmatprep.subr.mxu0 0.0
  %5197 = vmatpush1.msra.mxu0 0.0
  %5198 = vmatprep.subr.mxu0 0.0
  %5199 = vmatpush1.msra.mxu0 0.0
  %5200 = vmatprep.subr.mxu0 0.0
  %5201 = vmatpush1.msra.mxu0 0.0
  %5202 = vmatprep.subr.mxu0 0.0
  %5203 = vmatpush1.msra.mxu0 0.0
  %5204 = vmatprep.subr.mxu0 0.0
  %5205 = vmatpush1.msra.mxu0 0.0
  %5206 = vmatprep.subr.mxu0 0.0
  %5207 = vmatpush1.msra.mxu0 0.0
  %5208 = vmatprep.subr.mxu0 0.0
  %5209 = vmatpush1.msra.mxu0 0.0
  %5210 = vmatprep.subr.mxu0 0.0
  %5211 = vmatpush1.msra.mxu0 0.0
  %5212 = vmatprep.subr.mxu0 0.0
  %5213 = vmatpush1.msra.mxu0 0.0
  %5214 = vmatprep.subr.mxu0 0.0
  %5215 = vmatpush1.msra.mxu0 0.0
  %5216 = vmatprep.subr.mxu0 0.0
  %5217 = vmatpush1.msra.mxu0 0.0
  %5218 = vmatprep.subr.mxu0 0.0
  %5219 = vmatpush1.msra.mxu0 0.0
  %5220 = vmatprep.subr.mxu0 0.0
  %5221 = vmatpush1.msra.mxu0 0.0
  %5222 = vmatprep.subr.mxu0 0.0
  %5223 = vmatpush1.msra.mxu0 0.0
  %5224 = vmatprep.subr.mxu0 0.0
  %5225 = vmatpush1.msra.mxu0 0.0
  %5226 = vmatprep.subr.mxu0 0.0
  %5227 = vmatpush1.msra.mxu0 0.0
  %5228 = vmatprep.subr.mxu0 0.0
  %5229 = vmatpush1.msra.mxu0 0.0
  %5230 = vmatprep.subr.mxu0 0.0
  %5231 = vmatpush1.msra.mxu0 0.0
  %5232 = vmatprep.subr.mxu0 0.0
  %5233 = vmatpush1.msra.mxu0 0.0
  %5234 = vmatprep.subr.mxu0 0.0
  %5235 = vmatpush1.msra.mxu0 0.0
  %5236 = vmatprep.subr.mxu0 0.0
  %5237 = vmatpush1.msra.mxu0 0.0
  %5238 = vmatprep.subr.mxu0 0.0
  %5239 = vmatpush1.msra.mxu0 0.0
  %5240 = vmatprep.subr.mxu0 0.0
  %5241 = vmatpush1.msra.mxu0 0.0
  %5242 = vmatprep.mubr.f32.mxu0 0.0
  %5243 = vmatmul.mubr.f32.gmra.mrb[0].mxu0 %v63
  %v5244 = vpop.f32.mrb[0].mxu0
  %v5245 = vadd.f32 %v53, %v5244
  %v5246 = vpop.f32.mrb[0].mxu0
  %5247 = vmatprep.mubr.f32.mxu0 0.0
  %5248 = vmatmul.mubr.f32.gmra.mrb[0].mxu0 %v66
  %v5249 = vpop.f32.mrb[0].mxu0
  %v5250 = vadd.f32 %v54, %v5249
  %v5251 = vpop.f32.mrb[0].mxu0
  %5252 = vmatprep.mubr.f32.mxu0 0.0
  %5253 = vmatmul.mubr.f32.gmra.mrb[0].mxu0 %v69
  %v5254 = vpop.f32.mrb[0].mxu0
  %v5255 = vadd.f32 %v55, %v5254
  %v5256 = vpop.f32.mrb[0].mxu0
  %5257 = vmatprep.mubr.f32.mxu0 0.0
  %5258 = vmatmul.mubr.f32.gmra.mrb[0].mxu0 %v72
  %v5259 = vpop.f32.mrb[0].mxu0
  %v5260 = vadd.f32 %v56, %v5259
  %v5261 = vpop.f32.mrb[0].mxu0
  %5262 = vmatprep.mubr.f32.mxu0 0.0
  %5263 = vmatmul.mubr.f32.gmra.mrb[0].mxu0 %v75
  %v5264 = vpop.f32.mrb[0].mxu0
  %v5265 = vadd.f32 %v57, %v5264
  %v5266 = vpop.f32.mrb[0].mxu0
  %5267 = vmatprep.mubr.f32.mxu0 0.0
  %5268 = vmatmul.mubr.f32.gmra.mrb[0].mxu0 %v78
  %v5269 = vpop.f32.mrb[0].mxu0
  %v5270 = vadd.f32 %v58, %v5269
  %v5271 = vpop.f32.mrb[0].mxu0
  %5272 = vmatprep.mubr.f32.mxu0 0.0
  %5273 = vmatmul.mubr.f32.gmra.mrb[0].mxu0 %v81
  %v5274 = vpop.f32.mrb[0].mxu0
  %v5275 = vadd.f32 %v59, %v5274
  %v5276 = vpop.f32.mrb[0].mxu0
  %5277 = vmatprep.mubr.f32.mxu0 0.0
  %5278 = vmatmul.mubr.f32.gmra.mrb[0].mxu0 %v84
  %v5279 = vpop.f32.mrb[0].mxu0
  %v5280 = vadd.f32 %v60, %v5279
  %v5281 = vpop.f32.mrb[0].mxu0
  %5282 = vdwg.mxu0
  %v5283 = vmax.f32 %v29, %v5245
  %v5284 = vmax.f32 %v30, %v5250
  %v5285 = vmax.f32 %v31, %v5255
  %v5286 = vmax.f32 %v32, %v5260
  %v5287 = vmax.f32 %v33, %v5265
  %v5288 = vmax.f32 %v34, %v5270
  %v5289 = vmax.f32 %v35, %v5275
  %v5290 = vmax.f32 %v36, %v5280
  %5291 = vmatprep.subr.mxu0 0.0
  %5292 = vmatpush1.msra.mxu0 %v5170
  %5293 = vmatprep.subr.mxu0 0.0
  %5294 = vmatpush1.msra.mxu0 %v5171
  %5295 = vmatprep.subr.mxu0 0.0
  %5296 = vmatpush1.msra.mxu0 %v5172
  %5297 = vmatprep.subr.mxu0 0.0
  %5298 = vmatpush1.msra.mxu0 %v5173
  %5299 = vmatprep.subr.mxu0 0.0
  %5300 = vmatpush1.msra.mxu0 %v5174
  %5301 = vmatprep.subr.mxu0 0.0
  %5302 = vmatpush1.msra.mxu0 %v5175
  %5303 = vmatprep.subr.mxu0 0.0
  %5304 = vmatpush1.msra.mxu0 %v5176
  %5305 = vmatprep.subr.mxu0 0.0
  %5306 = vmatpush1.msra.mxu0 %v5177
  %5307 = vmatprep.subr.mxu0 0.0
  %5308 = vmatpush1.msra.mxu0 0.0
  %5309 = vmatprep.subr.mxu0 0.0
  %5310 = vmatpush1.msra.mxu0 0.0
  %5311 = vmatprep.subr.mxu0 0.0
  %5312 = vmatpush1.msra.mxu0 0.0
  %5313 = vmatprep.subr.mxu0 0.0
  %5314 = vmatpush1.msra.mxu0 0.0
  %5315 = vmatprep.subr.mxu0 0.0
  %5316 = vmatpush1.msra.mxu0 0.0
  %5317 = vmatprep.subr.mxu0 0.0
  %5318 = vmatpush1.msra.mxu0 0.0
  %5319 = vmatprep.subr.mxu0 0.0
  %5320 = vmatpush1.msra.mxu0 0.0
  %5321 = vmatprep.subr.mxu0 0.0
  %5322 = vmatpush1.msra.mxu0 0.0
  %5323 = vmatprep.subr.mxu0 0.0
  %5324 = vmatpush1.msra.mxu0 0.0
  %5325 = vmatprep.subr.mxu0 0.0
  %5326 = vmatpush1.msra.mxu0 0.0
  %5327 = vmatprep.subr.mxu0 0.0
  %5328 = vmatpush1.msra.mxu0 0.0
  %5329 = vmatprep.subr.mxu0 0.0
  %5330 = vmatpush1.msra.mxu0 0.0
  %5331 = vmatprep.subr.mxu0 0.0
  %5332 = vmatpush1.msra.mxu0 0.0
  %5333 = vmatprep.subr.mxu0 0.0
  %5334 = vmatpush1.msra.mxu0 0.0
  %5335 = vmatprep.subr.mxu0 0.0
  %5336 = vmatpush1.msra.mxu0 0.0
  %5337 = vmatprep.subr.mxu0 0.0
  %5338 = vmatpush1.msra.mxu0 0.0
  %5339 = vmatprep.subr.mxu0 0.0
  %5340 = vmatpush1.msra.mxu0 0.0
  %5341 = vmatprep.subr.mxu0 0.0
  %5342 = vmatpush1.msra.mxu0 0.0
  %5343 = vmatprep.subr.mxu0 0.0
  %5344 = vmatpush1.msra.mxu0 0.0
  %5345 = vmatprep.subr.mxu0 0.0
  %5346 = vmatpush1.msra.mxu0 0.0
  %5347 = vmatprep.subr.mxu0 0.0
  %5348 = vmatpush1.msra.mxu0 0.0
  %5349 = vmatprep.subr.mxu0 0.0
  %5350 = vmatpush1.msra.mxu0 0.0
  %5351 = vmatprep.subr.mxu0 0.0
  %5352 = vmatpush1.msra.mxu0 0.0
  %5353 = vmatprep.subr.mxu0 0.0
  %5354 = vmatpush1.msra.mxu0 0.0
  %5355 = vmatprep.mubr.f32.mxu0 0.0
  %5356 = vmatmul.mubr.f32.gmra.mrb[0].mxu0 %v218
  %v5357 = vpop.f32.mrb[0].mxu0
  %v5358 = vadd.f32 %v209, %v5357
  %v5359 = vpop.f32.mrb[0].mxu0
  %5360 = vmatprep.mubr.f32.mxu0 0.0
  %5361 = vmatmul.mubr.f32.gmra.mrb[0].mxu0 %v221
  %v5362 = vpop.f32.mrb[0].mxu0
  %v5363 = vadd.f32 %v210, %v5362
  %v5364 = vpop.f32.mrb[0].mxu0
  %5365 = vmatprep.mubr.f32.mxu0 0.0
  %5366 = vmatmul.mubr.f32.gmra.mrb[0].mxu0 %v224
  %v5367 = vpop.f32.mrb[0].mxu0
  %v5368 = vadd.f32 %v211, %v5367
  %v5369 = vpop.f32.mrb[0].mxu0
  %5370 = vmatprep.mubr.f32.mxu0 0.0
  %5371 = vmatmul.mubr.f32.gmra.mrb[0].mxu0 %v227
  %v5372 = vpop.f32.mrb[0].mxu0
  %v5373 = vadd.f32 %v212, %v5372
  %v5374 = vpop.f32.mrb[0].mxu0
  %5375 = vmatprep.mubr.f32.mxu0 0.0
  %5376 = vmatmul.mubr.f32.gmra.mrb[0].mxu0 %v230
  %v5377 = vpop.f32.mrb[0].mxu0
  %v5378 = vadd.f32 %v213, %v5377
  %v5379 = vpop.f32.mrb[0].mxu0
  %5380 = vmatprep.mubr.f32.mxu0 0.0
  %5381 = vmatmul.mubr.f32.gmra.mrb[0].mxu0 %v233
  %v5382 = vpop.f32.mrb[0].mxu0
  %v5383 = vadd.f32 %v214, %v5382
  %v5384 = vpop.f32.mrb[0].mxu0
  %5385 = vmatprep.mubr.f32.mxu0 0.0
  %5386 = vmatmul.mubr.f32.gmra.mrb[0].mxu0 %v236
  %v5387 = vpop.f32.mrb[0].mxu0
  %v5388 = vadd.f32 %v215, %v5387
  %v5389 = vpop.f32.mrb[0].mxu0
  %5390 = vmatprep.mubr.f32.mxu0 0.0
  %5391 = vmatmul.mubr.f32.gmra.mrb[0].mxu0 %v239
  %v5392 = vpop.f32.mrb[0].mxu0
  %v5393 = vadd.f32 %v216, %v5392
  %v5394 = vpop.f32.mrb[0].mxu0
  %5395 = vdwg.mxu0
  %v5396 = vmax.f32 %v5283, %v5358
  %v5397 = vmax.f32 %v5284, %v5363
  %v5398 = vmax.f32 %v5285, %v5368
  %v5399 = vmax.f32 %v5286, %v5373
  %v5400 = vmax.f32 %v5287, %v5378
  %v5401 = vmax.f32 %v5288, %v5383
  %v5402 = vmax.f32 %v5289, %v5388
  %v5403 = vmax.f32 %v5290, %v5393
  %5404 = vmatprep.subr.mxu0 0.0
  %5405 = vmatpush1.msra.mxu0 %v5170
  %5406 = vmatprep.subr.mxu0 0.0
  %5407 = vmatpush1.msra.mxu0 %v5171
  %5408 = vmatprep.subr.mxu0 0.0
  %5409 = vmatpush1.msra.mxu0 %v5172
  %5410 = vmatprep.subr.mxu0 0.0
  %5411 = vmatpush1.msra.mxu0 %v5173
  %5412 = vmatprep.subr.mxu0 0.0
  %5413 = vmatpush1.msra.mxu0 %v5174
  %5414 = vmatprep.subr.mxu0 0.0
  %5415 = vmatpush1.msra.mxu0 %v5175
  %5416 = vmatprep.subr.mxu0 0.0
  %5417 = vmatpush1.msra.mxu0 %v5176
  %5418 = vmatprep.subr.mxu0 0.0
  %5419 = vmatpush1.msra.mxu0 %v5177
  %5420 = vmatprep.subr.mxu0 0.0
  %5421 = vmatpush1.msra.mxu0 0.0
  %5422 = vmatprep.subr.mxu0 0.0
  %5423 = vmatpush1.msra.mxu0 0.0
  %5424 = vmatprep.subr.mxu0 0.0
  %5425 = vmatpush1.msra.mxu0 0.0
  %5426 = vmatprep.subr.mxu0 0.0
  %5427 = vmatpush1.msra.mxu0 0.0
  %5428 = vmatprep.subr.mxu0 0.0
  %5429 = vmatpush1.msra.mxu0 0.0
  %5430 = vmatprep.subr.mxu0 0.0
  %5431 = vmatpush1.msra.mxu0 0.0
  %5432 = vmatprep.subr.mxu0 0.0
  %5433 = vmatpush1.msra.mxu0 0.0
  %5434 = vmatprep.subr.mxu0 0.0
  %5435 = vmatpush1.msra.mxu0 0.0
  %5436 = vmatprep.subr.mxu0 0.0
  %5437 = vmatpush1.msra.mxu0 0.0
  %5438 = vmatprep.subr.mxu0 0.0
  %5439 = vmatpush1.msra.mxu0 0.0
  %5440 = vmatprep.subr.mxu0 0.0
  %5441 = vmatpush1.msra.mxu0 0.0
  %5442 = vmatprep.subr.mxu0 0.0
  %5443 = vmatpush1.msra.mxu0 0.0
  %5444 = vmatprep.subr.mxu0 0.0
  %5445 = vmatpush1.msra.mxu0 0.0
  %5446 = vmatprep.subr.mxu0 0.0
  %5447 = vmatpush1.msra.mxu0 0.0
  %5448 = vmatprep.subr.mxu0 0.0
  %5449 = vmatpush1.msra.mxu0 0.0
  %5450 = vmatprep.subr.mxu0 0.0
  %5451 = vmatpush1.msra.mxu0 0.0
  %5452 = vmatprep.subr.mxu0 0.0
  %5453 = vmatpush1.msra.mxu0 0.0
  %5454 = vmatprep.subr.mxu0 0.0
  %5455 = vmatpush1.msra.mxu0 0.0
  %5456 = vmatprep.subr.mxu0 0.0
  %5457 = vmatpush1.msra.mxu0 0.0
  %5458 = vmatprep.subr.mxu0 0.0
  %5459 = vmatpush1.msra.mxu0 0.0
  %5460 = vmatprep.subr.mxu0 0.0
  %5461 = vmatpush1.msra.mxu0 0.0
  %5462 = vmatprep.subr.mxu0 0.0
  %5463 = vmatpush1.msra.mxu0 0.0
  %5464 = vmatprep.subr.mxu0 0.0
  %5465 = vmatpush1.msra.mxu0 0.0
  %5466 = vmatprep.subr.mxu0 0.0
  %5467 = vmatpush1.msra.mxu0 0.0
  %5468 = vmatprep.mubr.f32.mxu0 0.0
  %5469 = vmatmul.mubr.f32.gmra.mrb[0].mxu0 %v373
  %v5470 = vpop.f32.mrb[0].mxu0
  %v5471 = vadd.f32 %v364, %v5470
  %v5472 = vpop.f32.mrb[0].mxu0
  %5473 = vmatprep.mubr.f32.mxu0 0.0
  %5474 = vmatmul.mubr.f32.gmra.mrb[0].mxu0 %v376
  %v5475 = vpop.f32.mrb[0].mxu0
  %v5476 = vadd.f32 %v365, %v5475
  %v5477 = vpop.f32.mrb[0].mxu0
  %5478 = vmatprep.mubr.f32.mxu0 0.0
  %5479 = vmatmul.mubr.f32.gmra.mrb[0].mxu0 %v379
  %v5480 = vpop.f32.mrb[0].mxu0
  %v5481 = vadd.f32 %v366, %v5480
  %v5482 = vpop.f32.mrb[0].mxu0
  %5483 = vmatprep.mubr.f32.mxu0 0.0
  %5484 = vmatmul.mubr.f32.gmra.mrb[0].mxu0 %v382
  %v5485 = vpop.f32.mrb[0].mxu0
  %v5486 = vadd.f32 %v367, %v5485
  %v5487 = vpop.f32.mrb[0].mxu0
  %5488 = vmatprep.mubr.f32.mxu0 0.0
  %5489 = vmatmul.mubr.f32.gmra.mrb[0].mxu0 %v385
  %v5490 = vpop.f32.mrb[0].mxu0
  %v5491 = vadd.f32 %v368, %v5490
  %v5492 = vpop.f32.mrb[0].mxu0
  %5493 = vmatprep.mubr.f32.mxu0 0.0
  %5494 = vmatmul.mubr.f32.gmra.mrb[0].mxu0 %v388
  %v5495 = vpop.f32.mrb[0].mxu0
  %v5496 = vadd.f32 %v369, %v5495
  %v5497 = vpop.f32.mrb[0].mxu0
  %5498 = vmatprep.mubr.f32.mxu0 0.0
  %5499 = vmatmul.mubr.f32.gmra.mrb[0].mxu0 %v391
  %v5500 = vpop.f32.mrb[0].mxu0
  %v5501 = vadd.f32 %v370, %v5500
  %v5502 = vpop.f32.mrb[0].mxu0
  %5503 = vmatprep.mubr.f32.mxu0 0.0
  %5504 = vmatmul.mubr.f32.gmra.mrb[0].mxu0 %v394
  %v5505 = vpop.f32.mrb[0].mxu0
  %v5506 = vadd.f32 %v371, %v5505
  %v5507 = vpop.f32.mrb[0].mxu0
  %5508 = vdwg.mxu0
  %v5509 = vmax.f32 %v5396, %v5471
  %v5510 = vmax.f32 %v5397, %v5476
  %v5511 = vmax.f32 %v5398, %v5481
  %v5512 = vmax.f32 %v5399, %v5486
  %v5513 = vmax.f32 %v5400, %v5491
  %v5514 = vmax.f32 %v5401, %v5496
  %v5515 = vmax.f32 %v5402, %v5501
  %v5516 = vmax.f32 %v5403, %v5506
  %v5517 = vadd.f32 %v5170, %v5509
  %v5518 = vadd.f32 %v5171, %v5510
  %v5519 = vadd.f32 %v5172, %v5511
  %v5520 = vadd.f32 %v5173, %v5512
  %v5521 = vadd.f32 %v5174, %v5513
  %v5522 = vadd.f32 %v5175, %v5514
  %v5523 = vadd.f32 %v5176, %v5515
  %v5524 = vadd.f32 %v5177, %v5516
  %s5525 = scalar_lea.vmem %s4, 1280
  %v5526 = vld [vmem:[%s5525] sm:$0xff]
  %v5527 = vld [vmem:[%s5525 + $0x8] sm:$0xff]
  %v5528 = vld [vmem:[%s5525 + $0x10] sm:$0xff]
  %v5529 = vld [vmem:[%s5525 + $0x18] sm:$0xff]
  %v5530 = vld [vmem:[%s5525 + $0x20] sm:$0xff]
  %v5531 = vld [vmem:[%s5525 + $0x28] sm:$0xff]
  %v5532 = vld [vmem:[%s5525 + $0x30] sm:$0xff]
  %v5533 = vld [vmem:[%s5525 + $0x38] sm:$0xff]
  %v5534 = vld [vmem:[%s5525 + $0x40] sm:$0xff]
  %v5535 = vld [vmem:[%s5525 + $0x48] sm:$0xff]
  %v5536 = vld [vmem:[%s5525 + $0x50] sm:$0xff]
  %v5537 = vld [vmem:[%s5525 + $0x58] sm:$0xff]
  %v5538 = vld [vmem:[%s5525 + $0x60] sm:$0xff]
  %v5539 = vld [vmem:[%s5525 + $0x68] sm:$0xff]
  %v5540 = vld [vmem:[%s5525 + $0x70] sm:$0xff]
  %v5541 = vld [vmem:[%s5525 + $0x78] sm:$0xff]
  %s5542 = scalar_lea.vmem %s5, 10
  %v5543 = vld [vmem:[%s5542] sm:$0x1]
  %v5545 = vlaneseq
  %v5546 = vshrl.u32 %v5545, 7
  %v5547 = vsub.s32 0, %v5546
  %v5548 = vrot.slane %v5543, %v5547
  %5550 = vmatprep.subr.mxu0 0.0
  %5551 = vmatpush1.msra.mxu0 %v5526
  %5552 = vmatprep.subr.mxu0 0.0
  %5553 = vmatpush1.msra.mxu0 %v5527
  %5554 = vmatprep.subr.mxu0 0.0
  %5555 = vmatpush1.msra.mxu0 %v5528
  %5556 = vmatprep.subr.mxu0 0.0
  %5557 = vmatpush1.msra.mxu0 %v5529
  %5558 = vmatprep.subr.mxu0 0.0
  %5559 = vmatpush1.msra.mxu0 %v5530
  %5560 = vmatprep.subr.mxu0 0.0
  %5561 = vmatpush1.msra.mxu0 %v5531
  %5562 = vmatprep.subr.mxu0 0.0
  %5563 = vmatpush1.msra.mxu0 %v5532
  %5564 = vmatprep.subr.mxu0 0.0
  %5565 = vmatpush1.msra.mxu0 %v5533
  %5566 = vmatprep.subr.mxu0 0.0
  %5567 = vmatpush1.msra.mxu0 %v5534
  %5568 = vmatprep.subr.mxu0 0.0
  %5569 = vmatpush1.msra.mxu0 %v5535
  %5570 = vmatprep.subr.mxu0 0.0
  %5571 = vmatpush1.msra.mxu0 %v5536
  %5572 = vmatprep.subr.mxu0 0.0
  %5573 = vmatpush1.msra.mxu0 %v5537
  %5574 = vmatprep.subr.mxu0 0.0
  %5575 = vmatpush1.msra.mxu0 %v5538
  %5576 = vmatprep.subr.mxu0 0.0
  %5577 = vmatpush1.msra.mxu0 %v5539
  %5578 = vmatprep.subr.mxu0 0.0
  %5579 = vmatpush1.msra.mxu0 %v5540
  %5580 = vmatprep.subr.mxu0 0.0
  %5581 = vmatpush1.msra.mxu0 %v5541
  %5582 = vmatprep.subr.mxu0 0.0
  %5583 = vmatpush1.msra.mxu0 0.0
  %5584 = vmatprep.subr.mxu0 0.0
  %5585 = vmatpush1.msra.mxu0 0.0
  %5586 = vmatprep.subr.mxu0 0.0
  %5587 = vmatpush1.msra.mxu0 0.0
  %5588 = vmatprep.subr.mxu0 0.0
  %5589 = vmatpush1.msra.mxu0 0.0
  %5590 = vmatprep.subr.mxu0 0.0
  %5591 = vmatpush1.msra.mxu0 0.0
  %5592 = vmatprep.subr.mxu0 0.0
  %5593 = vmatpush1.msra.mxu0 0.0
  %5594 = vmatprep.subr.mxu0 0.0
  %5595 = vmatpush1.msra.mxu0 0.0
  %5596 = vmatprep.subr.mxu0 0.0
  %5597 = vmatpush1.msra.mxu0 0.0
  %5598 = vmatprep.subr.mxu0 0.0
  %5599 = vmatpush1.msra.mxu0 0.0
  %5600 = vmatprep.subr.mxu0 0.0
  %5601 = vmatpush1.msra.mxu0 0.0
  %5602 = vmatprep.subr.mxu0 0.0
  %5603 = vmatpush1.msra.mxu0 0.0
  %5604 = vmatprep.subr.mxu0 0.0
  %5605 = vmatpush1.msra.mxu0 0.0
  %5606 = vmatprep.subr.mxu0 0.0
  %5607 = vmatpush1.msra.mxu0 0.0
  %5608 = vmatprep.subr.mxu0 0.0
  %5609 = vmatpush1.msra.mxu0 0.0
  %5610 = vmatprep.subr.mxu0 0.0
  %5611 = vmatpush1.msra.mxu0 0.0
  %5612 = vmatprep.subr.mxu0 0.0
  %5613 = vmatpush1.msra.mxu0 0.0
  %5614 = vmatprep.mubr.f32.mxu0 0.0
  %5615 = vmatmul.mubr.f32.gmra.mrb[0].mxu0 %v5517
  %v5616 = vpop.f32.mrb[0].mxu0
  %v5617 = vadd.f32 %v5548, %v5616
  %v5618 = vpop.f32.mrb[0].mxu0
  %5619 = vmatprep.mubr.f32.mxu0 0.0
  %5620 = vmatmul.mubr.f32.gmra.mrb[0].mxu0 %v5518
  %v5621 = vpop.f32.mrb[0].mxu0
  %v5622 = vadd.f32 %v5548, %v5621
  %v5623 = vpop.f32.mrb[0].mxu0
  %5624 = vmatprep.mubr.f32.mxu0 0.0
  %5625 = vmatmul.mubr.f32.gmra.mrb[0].mxu0 %v5519
  %v5626 = vpop.f32.mrb[0].mxu0
  %v5627 = vadd.f32 %v5548, %v5626
  %v5628 = vpop.f32.mrb[0].mxu0
  %5629 = vmatprep.mubr.f32.mxu0 0.0
  %5630 = vmatmul.mubr.f32.gmra.mrb[0].mxu0 %v5520
  %v5631 = vpop.f32.mrb[0].mxu0
  %v5632 = vadd.f32 %v5548, %v5631
  %v5633 = vpop.f32.mrb[0].mxu0
  %5634 = vmatprep.mubr.f32.mxu0 0.0
  %5635 = vmatmul.mubr.f32.gmra.mrb[0].mxu0 %v5521
  %v5636 = vpop.f32.mrb[0].mxu0
  %v5637 = vadd.f32 %v5548, %v5636
  %v5638 = vpop.f32.mrb[0].mxu0
  %5639 = vmatprep.mubr.f32.mxu0 0.0
  %5640 = vmatmul.mubr.f32.gmra.mrb[0].mxu0 %v5522
  %v5641 = vpop.f32.mrb[0].mxu0
  %v5642 = vadd.f32 %v5548, %v5641
  %v5643 = vpop.f32.mrb[0].mxu0
  %5644 = vmatprep.mubr.f32.mxu0 0.0
  %5645 = vmatmul.mubr.f32.gmra.mrb[0].mxu0 %v5523
  %v5646 = vpop.f32.mrb[0].mxu0
  %v5647 = vadd.f32 %v5548, %v5646
  %v5648 = vpop.f32.mrb[0].mxu0
  %5649 = vmatprep.mubr.f32.mxu0 0.0
  %5650 = vmatmul.mubr.f32.gmra.mrb[0].mxu0 %v5524
  %v5651 = vpop.f32.mrb[0].mxu0
  %v5652 = vadd.f32 %v5548, %v5651
  %v5653 = vpop.f32.mrb[0].mxu0
  %5654 = vdwg.mxu0
  %vm5655 = vcmp.ge.f32.partialorder %v5617, 0.0
  %vm5656 = vcmp.ge.f32.partialorder %v5622, 0.0
  %vm5657 = vcmp.ge.f32.partialorder %v5627, 0.0
  %vm5658 = vcmp.ge.f32.partialorder %v5632, 0.0
  %vm5659 = vcmp.ge.f32.partialorder %v5637, 0.0
  %vm5660 = vcmp.ge.f32.partialorder %v5642, 0.0
  %vm5661 = vcmp.ge.f32.partialorder %v5647, 0.0
  %vm5662 = vcmp.ge.f32.partialorder %v5652, 0.0
  %v5663 = vmul.f32 %v5617, 0.01
  %v5664 = vmul.f32 %v5622, 0.01
  %v5665 = vmul.f32 %v5627, 0.01
  %v5666 = vmul.f32 %v5632, 0.01
  %v5667 = vmul.f32 %v5637, 0.01
  %v5668 = vmul.f32 %v5642, 0.01
  %v5669 = vmul.f32 %v5647, 0.01
  %v5670 = vmul.f32 %v5652, 0.01
  %v5671 = vsel %vm5655, %v5617, %v5663
  %v5672 = vsel %vm5656, %v5622, %v5664
  %v5673 = vsel %vm5657, %v5627, %v5665
  %v5674 = vsel %vm5658, %v5632, %v5666
  %v5675 = vsel %vm5659, %v5637, %v5667
  %v5676 = vsel %vm5660, %v5642, %v5668
  %v5677 = vsel %vm5661, %v5647, %v5669
  %v5678 = vsel %vm5662, %v5652, %v5670
  %5679 = vmatprep.subr.mxu0 0.0
  %5680 = vmatpush1.msra.mxu0 %v5671
  %5681 = vmatprep.subr.mxu0 0.0
  %5682 = vmatpush1.msra.mxu0 %v5672
  %5683 = vmatprep.subr.mxu0 0.0
  %5684 = vmatpush1.msra.mxu0 %v5673
  %5685 = vmatprep.subr.mxu0 0.0
  %5686 = vmatpush1.msra.mxu0 %v5674
  %5687 = vmatprep.subr.mxu0 0.0
  %5688 = vmatpush1.msra.mxu0 %v5675
  %5689 = vmatprep.subr.mxu0 0.0
  %5690 = vmatpush1.msra.mxu0 %v5676
  %5691 = vmatprep.subr.mxu0 0.0
  %5692 = vmatpush1.msra.mxu0 %v5677
  %5693 = vmatprep.subr.mxu0 0.0
  %5694 = vmatpush1.msra.mxu0 %v5678
  %5695 = vmatprep.subr.mxu0 0.0
  %5696 = vmatpush1.msra.mxu0 0.0
  %5697 = vmatprep.subr.mxu0 0.0
  %5698 = vmatpush1.msra.mxu0 0.0
  %5699 = vmatprep.subr.mxu0 0.0
  %5700 = vmatpush1.msra.mxu0 0.0
  %5701 = vmatprep.subr.mxu0 0.0
  %5702 = vmatpush1.msra.mxu0 0.0
  %5703 = vmatprep.subr.mxu0 0.0
  %5704 = vmatpush1.msra.mxu0 0.0
  %5705 = vmatprep.subr.mxu0 0.0
  %5706 = vmatpush1.msra.mxu0 0.0
  %5707 = vmatprep.subr.mxu0 0.0
  %5708 = vmatpush1.msra.mxu0 0.0
  %5709 = vmatprep.subr.mxu0 0.0
  %5710 = vmatpush1.msra.mxu0 0.0
  %5711 = vmatprep.subr.mxu0 0.0
  %5712 = vmatpush1.msra.mxu0 0.0
  %5713 = vmatprep.subr.mxu0 0.0
  %5714 = vmatpush1.msra.mxu0 0.0
  %5715 = vmatprep.subr.mxu0 0.0
  %5716 = vmatpush1.msra.mxu0 0.0
  %5717 = vmatprep.subr.mxu0 0.0
  %5718 = vmatpush1.msra.mxu0 0.0
  %5719 = vmatprep.subr.mxu0 0.0
  %5720 = vmatpush1.msra.mxu0 0.0
  %5721 = vmatprep.subr.mxu0 0.0
  %5722 = vmatpush1.msra.mxu0 0.0
  %5723 = vmatprep.subr.mxu0 0.0
  %5724 = vmatpush1.msra.mxu0 0.0
  %5725 = vmatprep.subr.mxu0 0.0
  %5726 = vmatpush1.msra.mxu0 0.0
  %5727 = vmatprep.subr.mxu0 0.0
  %5728 = vmatpush1.msra.mxu0 0.0
  %5729 = vmatprep.subr.mxu0 0.0
  %5730 = vmatpush1.msra.mxu0 0.0
  %5731 = vmatprep.subr.mxu0 0.0
  %5732 = vmatpush1.msra.mxu0 0.0
  %5733 = vmatprep.subr.mxu0 0.0
  %5734 = vmatpush1.msra.mxu0 0.0
  %5735 = vmatprep.subr.mxu0 0.0
  %5736 = vmatpush1.msra.mxu0 0.0
  %5737 = vmatprep.subr.mxu0 0.0
  %5738 = vmatpush1.msra.mxu0 0.0
  %5739 = vmatprep.subr.mxu0 0.0
  %5740 = vmatpush1.msra.mxu0 0.0
  %5741 = vmatprep.subr.mxu0 0.0
  %5742 = vmatpush1.msra.mxu0 0.0
  %5743 = vmatprep.mubr.f32.mxu0 0.0
  %5744 = vmatmul.mubr.f32.gmra.mrb[0].mxu0 %v63
  %v5745 = vpop.f32.mrb[0].mxu0
  %v5746 = vadd.f32 %v53, %v5745
  %v5747 = vpop.f32.mrb[0].mxu0
  %5748 = vmatprep.mubr.f32.mxu0 0.0
  %5749 = vmatmul.mubr.f32.gmra.mrb[0].mxu0 %v66
  %v5750 = vpop.f32.mrb[0].mxu0
  %v5751 = vadd.f32 %v54, %v5750
  %v5752 = vpop.f32.mrb[0].mxu0
  %5753 = vmatprep.mubr.f32.mxu0 0.0
  %5754 = vmatmul.mubr.f32.gmra.mrb[0].mxu0 %v69
  %v5755 = vpop.f32.mrb[0].mxu0
  %v5756 = vadd.f32 %v55, %v5755
  %v5757 = vpop.f32.mrb[0].mxu0
  %5758 = vmatprep.mubr.f32.mxu0 0.0
  %5759 = vmatmul.mubr.f32.gmra.mrb[0].mxu0 %v72
  %v5760 = vpop.f32.mrb[0].mxu0
  %v5761 = vadd.f32 %v56, %v5760
  %v5762 = vpop.f32.mrb[0].mxu0
  %5763 = vmatprep.mubr.f32.mxu0 0.0
  %5764 = vmatmul.mubr.f32.gmra.mrb[0].mxu0 %v75
  %v5765 = vpop.f32.mrb[0].mxu0
  %v5766 = vadd.f32 %v57, %v5765
  %v5767 = vpop.f32.mrb[0].mxu0
  %5768 = vmatprep.mubr.f32.mxu0 0.0
  %5769 = vmatmul.mubr.f32.gmra.mrb[0].mxu0 %v78
  %v5770 = vpop.f32.mrb[0].mxu0
  %v5771 = vadd.f32 %v58, %v5770
  %v5772 = vpop.f32.mrb[0].mxu0
  %5773 = vmatprep.mubr.f32.mxu0 0.0
  %5774 = vmatmul.mubr.f32.gmra.mrb[0].mxu0 %v81
  %v5775 = vpop.f32.mrb[0].mxu0
  %v5776 = vadd.f32 %v59, %v5775
  %v5777 = vpop.f32.mrb[0].mxu0
  %5778 = vmatprep.mubr.f32.mxu0 0.0
  %5779 = vmatmul.mubr.f32.gmra.mrb[0].mxu0 %v84
  %v5780 = vpop.f32.mrb[0].mxu0
  %v5781 = vadd.f32 %v60, %v5780
  %v5782 = vpop.f32.mrb[0].mxu0
  %5783 = vdwg.mxu0
  %v5784 = vmax.f32 %v29, %v5746
  %v5785 = vmax.f32 %v30, %v5751
  %v5786 = vmax.f32 %v31, %v5756
  %v5787 = vmax.f32 %v32, %v5761
  %v5788 = vmax.f32 %v33, %v5766
  %v5789 = vmax.f32 %v34, %v5771
  %v5790 = vmax.f32 %v35, %v5776
  %v5791 = vmax.f32 %v36, %v5781
  %5792 = vmatprep.subr.mxu0 0.0
  %5793 = vmatpush1.msra.mxu0 %v5671
  %5794 = vmatprep.subr.mxu0 0.0
  %5795 = vmatpush1.msra.mxu0 %v5672
  %5796 = vmatprep.subr.mxu0 0.0
  %5797 = vmatpush1.msra.mxu0 %v5673
  %5798 = vmatprep.subr.mxu0 0.0
  %5799 = vmatpush1.msra.mxu0 %v5674
  %5800 = vmatprep.subr.mxu0 0.0
  %5801 = vmatpush1.msra.mxu0 %v5675
  %5802 = vmatprep.subr.mxu0 0.0
  %5803 = vmatpush1.msra.mxu0 %v5676
  %5804 = vmatprep.subr.mxu0 0.0
  %5805 = vmatpush1.msra.mxu0 %v5677
  %5806 = vmatprep.subr.mxu0 0.0
  %5807 = vmatpush1.msra.mxu0 %v5678
  %5808 = vmatprep.subr.mxu0 0.0
  %5809 = vmatpush1.msra.mxu0 0.0
  %5810 = vmatprep.subr.mxu0 0.0
  %5811 = vmatpush1.msra.mxu0 0.0
  %5812 = vmatprep.subr.mxu0 0.0
  %5813 = vmatpush1.msra.mxu0 0.0
  %5814 = vmatprep.subr.mxu0 0.0
  %5815 = vmatpush1.msra.mxu0 0.0
  %5816 = vmatprep.subr.mxu0 0.0
  %5817 = vmatpush1.msra.mxu0 0.0
  %5818 = vmatprep.subr.mxu0 0.0
  %5819 = vmatpush1.msra.mxu0 0.0
  %5820 = vmatprep.subr.mxu0 0.0
  %5821 = vmatpush1.msra.mxu0 0.0
  %5822 = vmatprep.subr.mxu0 0.0
  %5823 = vmatpush1.msra.mxu0 0.0
  %5824 = vmatprep.subr.mxu0 0.0
  %5825 = vmatpush1.msra.mxu0 0.0
  %5826 = vmatprep.subr.mxu0 0.0
  %5827 = vmatpush1.msra.mxu0 0.0
  %5828 = vmatprep.subr.mxu0 0.0
  %5829 = vmatpush1.msra.mxu0 0.0
  %5830 = vmatprep.subr.mxu0 0.0
  %5831 = vmatpush1.msra.mxu0 0.0
  %5832 = vmatprep.subr.mxu0 0.0
  %5833 = vmatpush1.msra.mxu0 0.0
  %5834 = vmatprep.subr.mxu0 0.0
  %5835 = vmatpush1.msra.mxu0 0.0
  %5836 = vmatprep.subr.mxu0 0.0
  %5837 = vmatpush1.msra.mxu0 0.0
  %5838 = vmatprep.subr.mxu0 0.0
  %5839 = vmatpush1.msra.mxu0 0.0
  %5840 = vmatprep.subr.mxu0 0.0
  %5841 = vmatpush1.msra.mxu0 0.0
  %5842 = vmatprep.subr.mxu0 0.0
  %5843 = vmatpush1.msra.mxu0 0.0
  %5844 = vmatprep.subr.mxu0 0.0
  %5845 = vmatpush1.msra.mxu0 0.0
  %5846 = vmatprep.subr.mxu0 0.0
  %5847 = vmatpush1.msra.mxu0 0.0
  %5848 = vmatprep.subr.mxu0 0.0
  %5849 = vmatpush1.msra.mxu0 0.0
  %5850 = vmatprep.subr.mxu0 0.0
  %5851 = vmatpush1.msra.mxu0 0.0
  %5852 = vmatprep.subr.mxu0 0.0
  %5853 = vmatpush1.msra.mxu0 0.0
  %5854 = vmatprep.subr.mxu0 0.0
  %5855 = vmatpush1.msra.mxu0 0.0
  %5856 = vmatprep.mubr.f32.mxu0 0.0
  %5857 = vmatmul.mubr.f32.gmra.mrb[0].mxu0 %v218
  %v5858 = vpop.f32.mrb[0].mxu0
  %v5859 = vadd.f32 %v209, %v5858
  %v5860 = vpop.f32.mrb[0].mxu0
  %5861 = vmatprep.mubr.f32.mxu0 0.0
  %5862 = vmatmul.mubr.f32.gmra.mrb[0].mxu0 %v221
  %v5863 = vpop.f32.mrb[0].mxu0
  %v5864 = vadd.f32 %v210, %v5863
  %v5865 = vpop.f32.mrb[0].mxu0
  %5866 = vmatprep.mubr.f32.mxu0 0.0
  %5867 = vmatmul.mubr.f32.gmra.mrb[0].mxu0 %v224
  %v5868 = vpop.f32.mrb[0].mxu0
  %v5869 = vadd.f32 %v211, %v5868
  %v5870 = vpop.f32.mrb[0].mxu0
  %5871 = vmatprep.mubr.f32.mxu0 0.0
  %5872 = vmatmul.mubr.f32.gmra.mrb[0].mxu0 %v227
  %v5873 = vpop.f32.mrb[0].mxu0
  %v5874 = vadd.f32 %v212, %v5873
  %v5875 = vpop.f32.mrb[0].mxu0
  %5876 = vmatprep.mubr.f32.mxu0 0.0
  %5877 = vmatmul.mubr.f32.gmra.mrb[0].mxu0 %v230
  %v5878 = vpop.f32.mrb[0].mxu0
  %v5879 = vadd.f32 %v213, %v5878
  %v5880 = vpop.f32.mrb[0].mxu0
  %5881 = vmatprep.mubr.f32.mxu0 0.0
  %5882 = vmatmul.mubr.f32.gmra.mrb[0].mxu0 %v233
  %v5883 = vpop.f32.mrb[0].mxu0
  %v5884 = vadd.f32 %v214, %v5883
  %v5885 = vpop.f32.mrb[0].mxu0
  %5886 = vmatprep.mubr.f32.mxu0 0.0
  %5887 = vmatmul.mubr.f32.gmra.mrb[0].mxu0 %v236
  %v5888 = vpop.f32.mrb[0].mxu0
  %v5889 = vadd.f32 %v215, %v5888
  %v5890 = vpop.f32.mrb[0].mxu0
  %5891 = vmatprep.mubr.f32.mxu0 0.0
  %5892 = vmatmul.mubr.f32.gmra.mrb[0].mxu0 %v239
  %v5893 = vpop.f32.mrb[0].mxu0
  %v5894 = vadd.f32 %v216, %v5893
  %v5895 = vpop.f32.mrb[0].mxu0
  %5896 = vdwg.mxu0
  %v5897 = vmax.f32 %v5784, %v5859
  %v5898 = vmax.f32 %v5785, %v5864
  %v5899 = vmax.f32 %v5786, %v5869
  %v5900 = vmax.f32 %v5787, %v5874
  %v5901 = vmax.f32 %v5788, %v5879
  %v5902 = vmax.f32 %v5789, %v5884
  %v5903 = vmax.f32 %v5790, %v5889
  %v5904 = vmax.f32 %v5791, %v5894
  %5905 = vmatprep.subr.mxu0 0.0
  %5906 = vmatpush1.msra.mxu0 %v5671
  %5907 = vmatprep.subr.mxu0 0.0
  %5908 = vmatpush1.msra.mxu0 %v5672
  %5909 = vmatprep.subr.mxu0 0.0
  %5910 = vmatpush1.msra.mxu0 %v5673
  %5911 = vmatprep.subr.mxu0 0.0
  %5912 = vmatpush1.msra.mxu0 %v5674
  %5913 = vmatprep.subr.mxu0 0.0
  %5914 = vmatpush1.msra.mxu0 %v5675
  %5915 = vmatprep.subr.mxu0 0.0
  %5916 = vmatpush1.msra.mxu0 %v5676
  %5917 = vmatprep.subr.mxu0 0.0
  %5918 = vmatpush1.msra.mxu0 %v5677
  %5919 = vmatprep.subr.mxu0 0.0
  %5920 = vmatpush1.msra.mxu0 %v5678
  %5921 = vmatprep.subr.mxu0 0.0
  %5922 = vmatpush1.msra.mxu0 0.0
  %5923 = vmatprep.subr.mxu0 0.0
  %5924 = vmatpush1.msra.mxu0 0.0
  %5925 = vmatprep.subr.mxu0 0.0
  %5926 = vmatpush1.msra.mxu0 0.0
  %5927 = vmatprep.subr.mxu0 0.0
  %5928 = vmatpush1.msra.mxu0 0.0
  %5929 = vmatprep.subr.mxu0 0.0
  %5930 = vmatpush1.msra.mxu0 0.0
  %5931 = vmatprep.subr.mxu0 0.0
  %5932 = vmatpush1.msra.mxu0 0.0
  %5933 = vmatprep.subr.mxu0 0.0
  %5934 = vmatpush1.msra.mxu0 0.0
  %5935 = vmatprep.subr.mxu0 0.0
  %5936 = vmatpush1.msra.mxu0 0.0
  %5937 = vmatprep.subr.mxu0 0.0
  %5938 = vmatpush1.msra.mxu0 0.0
  %5939 = vmatprep.subr.mxu0 0.0
  %5940 = vmatpush1.msra.mxu0 0.0
  %5941 = vmatprep.subr.mxu0 0.0
  %5942 = vmatpush1.msra.mxu0 0.0
  %5943 = vmatprep.subr.mxu0 0.0
  %5944 = vmatpush1.msra.mxu0 0.0
  %5945 = vmatprep.subr.mxu0 0.0
  %5946 = vmatpush1.msra.mxu0 0.0
  %5947 = vmatprep.subr.mxu0 0.0
  %5948 = vmatpush1.msra.mxu0 0.0
  %5949 = vmatprep.subr.mxu0 0.0
  %5950 = vmatpush1.msra.mxu0 0.0
  %5951 = vmatprep.subr.mxu0 0.0
  %5952 = vmatpush1.msra.mxu0 0.0
  %5953 = vmatprep.subr.mxu0 0.0
  %5954 = vmatpush1.msra.mxu0 0.0
  %5955 = vmatprep.subr.mxu0 0.0
  %5956 = vmatpush1.msra.mxu0 0.0
  %5957 = vmatprep.subr.mxu0 0.0
  %5958 = vmatpush1.msra.mxu0 0.0
  %5959 = vmatprep.subr.mxu0 0.0
  %5960 = vmatpush1.msra.mxu0 0.0
  %5961 = vmatprep.subr.mxu0 0.0
  %5962 = vmatpush1.msra.mxu0 0.0
  %5963 = vmatprep.subr.mxu0 0.0
  %5964 = vmatpush1.msra.mxu0 0.0
  %5965 = vmatprep.subr.mxu0 0.0
  %5966 = vmatpush1.msra.mxu0 0.0
  %5967 = vmatprep.subr.mxu0 0.0
  %5968 = vmatpush1.msra.mxu0 0.0
  %5969 = vmatprep.mubr.f32.mxu0 0.0
  %5970 = vmatmul.mubr.f32.gmra.mrb[0].mxu0 %v373
  %v5971 = vpop.f32.mrb[0].mxu0
  %v5972 = vadd.f32 %v364, %v5971
  %v5973 = vpop.f32.mrb[0].mxu0
  %5974 = vmatprep.mubr.f32.mxu0 0.0
  %5975 = vmatmul.mubr.f32.gmra.mrb[0].mxu0 %v376
  %v5976 = vpop.f32.mrb[0].mxu0
  %v5977 = vadd.f32 %v365, %v5976
  %v5978 = vpop.f32.mrb[0].mxu0
  %5979 = vmatprep.mubr.f32.mxu0 0.0
  %5980 = vmatmul.mubr.f32.gmra.mrb[0].mxu0 %v379
  %v5981 = vpop.f32.mrb[0].mxu0
  %v5982 = vadd.f32 %v366, %v5981
  %v5983 = vpop.f32.mrb[0].mxu0
  %5984 = vmatprep.mubr.f32.mxu0 0.0
  %5985 = vmatmul.mubr.f32.gmra.mrb[0].mxu0 %v382
  %v5986 = vpop.f32.mrb[0].mxu0
  %v5987 = vadd.f32 %v367, %v5986
  %v5988 = vpop.f32.mrb[0].mxu0
  %5989 = vmatprep.mubr.f32.mxu0 0.0
  %5990 = vmatmul.mubr.f32.gmra.mrb[0].mxu0 %v385
  %v5991 = vpop.f32.mrb[0].mxu0
  %v5992 = vadd.f32 %v368, %v5991
  %v5993 = vpop.f32.mrb[0].mxu0
  %5994 = vmatprep.mubr.f32.mxu0 0.0
  %5995 = vmatmul.mubr.f32.gmra.mrb[0].mxu0 %v388
  %v5996 = vpop.f32.mrb[0].mxu0
  %v5997 = vadd.f32 %v369, %v5996
  %v5998 = vpop.f32.mrb[0].mxu0
  %5999 = vmatprep.mubr.f32.mxu0 0.0
  %6000 = vmatmul.mubr.f32.gmra.mrb[0].mxu0 %v391
  %v6001 = vpop.f32.mrb[0].mxu0
  %v6002 = vadd.f32 %v370, %v6001
  %v6003 = vpop.f32.mrb[0].mxu0
  %6004 = vmatprep.mubr.f32.mxu0 0.0
  %6005 = vmatmul.mubr.f32.gmra.mrb[0].mxu0 %v394
  %v6006 = vpop.f32.mrb[0].mxu0
  %v6007 = vadd.f32 %v371, %v6006
  %v6008 = vpop.f32.mrb[0].mxu0
  %6009 = vdwg.mxu0
  %v6010 = vmax.f32 %v5897, %v5972
  %v6011 = vmax.f32 %v5898, %v5977
  %v6012 = vmax.f32 %v5899, %v5982
  %v6013 = vmax.f32 %v5900, %v5987
  %v6014 = vmax.f32 %v5901, %v5992
  %v6015 = vmax.f32 %v5902, %v5997
  %v6016 = vmax.f32 %v5903, %v6002
  %v6017 = vmax.f32 %v5904, %v6007
  %v6018 = vadd.f32 %v5671, %v6010
  %v6019 = vadd.f32 %v5672, %v6011
  %v6020 = vadd.f32 %v5673, %v6012
  %v6021 = vadd.f32 %v5674, %v6013
  %v6022 = vadd.f32 %v5675, %v6014
  %v6023 = vadd.f32 %v5676, %v6015
  %v6024 = vadd.f32 %v5677, %v6016
  %v6025 = vadd.f32 %v5678, %v6017
  %s6026 = scalar_lea.vmem %s4, 1408
  %v6027 = vld [vmem:[%s6026] sm:$0xff]
  %v6028 = vld [vmem:[%s6026 + $0x8] sm:$0xff]
  %v6029 = vld [vmem:[%s6026 + $0x10] sm:$0xff]
  %v6030 = vld [vmem:[%s6026 + $0x18] sm:$0xff]
  %v6031 = vld [vmem:[%s6026 + $0x20] sm:$0xff]
  %v6032 = vld [vmem:[%s6026 + $0x28] sm:$0xff]
  %v6033 = vld [vmem:[%s6026 + $0x30] sm:$0xff]
  %v6034 = vld [vmem:[%s6026 + $0x38] sm:$0xff]
  %v6035 = vld [vmem:[%s6026 + $0x40] sm:$0xff]
  %v6036 = vld [vmem:[%s6026 + $0x48] sm:$0xff]
  %v6037 = vld [vmem:[%s6026 + $0x50] sm:$0xff]
  %v6038 = vld [vmem:[%s6026 + $0x58] sm:$0xff]
  %v6039 = vld [vmem:[%s6026 + $0x60] sm:$0xff]
  %v6040 = vld [vmem:[%s6026 + $0x68] sm:$0xff]
  %v6041 = vld [vmem:[%s6026 + $0x70] sm:$0xff]
  %v6042 = vld [vmem:[%s6026 + $0x78] sm:$0xff]
  %s6043 = scalar_lea.vmem %s5, 11
  %v6044 = vld [vmem:[%s6043] sm:$0x1]
  %v6046 = vlaneseq
  %v6047 = vshrl.u32 %v6046, 7
  %v6048 = vsub.s32 0, %v6047
  %v6049 = vrot.slane %v6044, %v6048
  %6051 = vmatprep.subr.mxu0 0.0
  %6052 = vmatpush1.msra.mxu0 %v6027
  %6053 = vmatprep.subr.mxu0 0.0
  %6054 = vmatpush1.msra.mxu0 %v6028
  %6055 = vmatprep.subr.mxu0 0.0
  %6056 = vmatpush1.msra.mxu0 %v6029
  %6057 = vmatprep.subr.mxu0 0.0
  %6058 = vmatpush1.msra.mxu0 %v6030
  %6059 = vmatprep.subr.mxu0 0.0
  %6060 = vmatpush1.msra.mxu0 %v6031
  %6061 = vmatprep.subr.mxu0 0.0
  %6062 = vmatpush1.msra.mxu0 %v6032
  %6063 = vmatprep.subr.mxu0 0.0
  %6064 = vmatpush1.msra.mxu0 %v6033
  %6065 = vmatprep.subr.mxu0 0.0
  %6066 = vmatpush1.msra.mxu0 %v6034
  %6067 = vmatprep.subr.mxu0 0.0
  %6068 = vmatpush1.msra.mxu0 %v6035
  %6069 = vmatprep.subr.mxu0 0.0
  %6070 = vmatpush1.msra.mxu0 %v6036
  %6071 = vmatprep.subr.mxu0 0.0
  %6072 = vmatpush1.msra.mxu0 %v6037
  %6073 = vmatprep.subr.mxu0 0.0
  %6074 = vmatpush1.msra.mxu0 %v6038
  %6075 = vmatprep.subr.mxu0 0.0
  %6076 = vmatpush1.msra.mxu0 %v6039
  %6077 = vmatprep.subr.mxu0 0.0
  %6078 = vmatpush1.msra.mxu0 %v6040
  %6079 = vmatprep.subr.mxu0 0.0
  %6080 = vmatpush1.msra.mxu0 %v6041
  %6081 = vmatprep.subr.mxu0 0.0
  %6082 = vmatpush1.msra.mxu0 %v6042
  %6083 = vmatprep.subr.mxu0 0.0
  %6084 = vmatpush1.msra.mxu0 0.0
  %6085 = vmatprep.subr.mxu0 0.0
  %6086 = vmatpush1.msra.mxu0 0.0
  %6087 = vmatprep.subr.mxu0 0.0
  %6088 = vmatpush1.msra.mxu0 0.0
  %6089 = vmatprep.subr.mxu0 0.0
  %6090 = vmatpush1.msra.mxu0 0.0
  %6091 = vmatprep.subr.mxu0 0.0
  %6092 = vmatpush1.msra.mxu0 0.0
  %6093 = vmatprep.subr.mxu0 0.0
  %6094 = vmatpush1.msra.mxu0 0.0
  %6095 = vmatprep.subr.mxu0 0.0
  %6096 = vmatpush1.msra.mxu0 0.0
  %6097 = vmatprep.subr.mxu0 0.0
  %6098 = vmatpush1.msra.mxu0 0.0
  %6099 = vmatprep.subr.mxu0 0.0
  %6100 = vmatpush1.msra.mxu0 0.0
  %6101 = vmatprep.subr.mxu0 0.0
  %6102 = vmatpush1.msra.mxu0 0.0
  %6103 = vmatprep.subr.mxu0 0.0
  %6104 = vmatpush1.msra.mxu0 0.0
  %6105 = vmatprep.subr.mxu0 0.0
  %6106 = vmatpush1.msra.mxu0 0.0
  %6107 = vmatprep.subr.mxu0 0.0
  %6108 = vmatpush1.msra.mxu0 0.0
  %6109 = vmatprep.subr.mxu0 0.0
  %6110 = vmatpush1.msra.mxu0 0.0
  %6111 = vmatprep.subr.mxu0 0.0
  %6112 = vmatpush1.msra.mxu0 0.0
  %6113 = vmatprep.subr.mxu0 0.0
  %6114 = vmatpush1.msra.mxu0 0.0
  %6115 = vmatprep.mubr.f32.mxu0 0.0
  %6116 = vmatmul.mubr.f32.gmra.mrb[0].mxu0 %v6018
  %v6117 = vpop.f32.mrb[0].mxu0
  %v6118 = vadd.f32 %v6049, %v6117
  %v6119 = vpop.f32.mrb[0].mxu0
  %6120 = vmatprep.mubr.f32.mxu0 0.0
  %6121 = vmatmul.mubr.f32.gmra.mrb[0].mxu0 %v6019
  %v6122 = vpop.f32.mrb[0].mxu0
  %v6123 = vadd.f32 %v6049, %v6122
  %v6124 = vpop.f32.mrb[0].mxu0
  %6125 = vmatprep.mubr.f32.mxu0 0.0
  %6126 = vmatmul.mubr.f32.gmra.mrb[0].mxu0 %v6020
  %v6127 = vpop.f32.mrb[0].mxu0
  %v6128 = vadd.f32 %v6049, %v6127
  %v6129 = vpop.f32.mrb[0].mxu0
  %6130 = vmatprep.mubr.f32.mxu0 0.0
  %6131 = vmatmul.mubr.f32.gmra.mrb[0].mxu0 %v6021
  %v6132 = vpop.f32.mrb[0].mxu0
  %v6133 = vadd.f32 %v6049, %v6132
  %v6134 = vpop.f32.mrb[0].mxu0
  %6135 = vmatprep.mubr.f32.mxu0 0.0
  %6136 = vmatmul.mubr.f32.gmra.mrb[0].mxu0 %v6022
  %v6137 = vpop.f32.mrb[0].mxu0
  %v6138 = vadd.f32 %v6049, %v6137
  %v6139 = vpop.f32.mrb[0].mxu0
  %6140 = vmatprep.mubr.f32.mxu0 0.0
  %6141 = vmatmul.mubr.f32.gmra.mrb[0].mxu0 %v6023
  %v6142 = vpop.f32.mrb[0].mxu0
  %v6143 = vadd.f32 %v6049, %v6142
  %v6144 = vpop.f32.mrb[0].mxu0
  %6145 = vmatprep.mubr.f32.mxu0 0.0
  %6146 = vmatmul.mubr.f32.gmra.mrb[0].mxu0 %v6024
  %v6147 = vpop.f32.mrb[0].mxu0
  %v6148 = vadd.f32 %v6049, %v6147
  %v6149 = vpop.f32.mrb[0].mxu0
  %6150 = vmatprep.mubr.f32.mxu0 0.0
  %6151 = vmatmul.mubr.f32.gmra.mrb[0].mxu0 %v6025
  %v6152 = vpop.f32.mrb[0].mxu0
  %v6153 = vadd.f32 %v6049, %v6152
  %v6154 = vpop.f32.mrb[0].mxu0
  %6155 = vdwg.mxu0
  %vm6156 = vcmp.ge.f32.partialorder %v6118, 0.0
  %vm6157 = vcmp.ge.f32.partialorder %v6123, 0.0
  %vm6158 = vcmp.ge.f32.partialorder %v6128, 0.0
  %vm6159 = vcmp.ge.f32.partialorder %v6133, 0.0
  %vm6160 = vcmp.ge.f32.partialorder %v6138, 0.0
  %vm6161 = vcmp.ge.f32.partialorder %v6143, 0.0
  %vm6162 = vcmp.ge.f32.partialorder %v6148, 0.0
  %vm6163 = vcmp.ge.f32.partialorder %v6153, 0.0
  %v6164 = vmul.f32 %v6118, 0.01
  %v6165 = vmul.f32 %v6123, 0.01
  %v6166 = vmul.f32 %v6128, 0.01
  %v6167 = vmul.f32 %v6133, 0.01
  %v6168 = vmul.f32 %v6138, 0.01
  %v6169 = vmul.f32 %v6143, 0.01
  %v6170 = vmul.f32 %v6148, 0.01
  %v6171 = vmul.f32 %v6153, 0.01
  %v6172 = vsel %vm6156, %v6118, %v6164
  %v6173 = vsel %vm6157, %v6123, %v6165
  %v6174 = vsel %vm6158, %v6128, %v6166
  %v6175 = vsel %vm6159, %v6133, %v6167
  %v6176 = vsel %vm6160, %v6138, %v6168
  %v6177 = vsel %vm6161, %v6143, %v6169
  %v6178 = vsel %vm6162, %v6148, %v6170
  %v6179 = vsel %vm6163, %v6153, %v6171
  %6180 = vmatprep.subr.mxu0 0.0
  %6181 = vmatpush1.msra.mxu0 %v6172
  %6182 = vmatprep.subr.mxu0 0.0
  %6183 = vmatpush1.msra.mxu0 %v6173
  %6184 = vmatprep.subr.mxu0 0.0
  %6185 = vmatpush1.msra.mxu0 %v6174
  %6186 = vmatprep.subr.mxu0 0.0
  %6187 = vmatpush1.msra.mxu0 %v6175
  %6188 = vmatprep.subr.mxu0 0.0
  %6189 = vmatpush1.msra.mxu0 %v6176
  %6190 = vmatprep.subr.mxu0 0.0
  %6191 = vmatpush1.msra.mxu0 %v6177
  %6192 = vmatprep.subr.mxu0 0.0
  %6193 = vmatpush1.msra.mxu0 %v6178
  %6194 = vmatprep.subr.mxu0 0.0
  %6195 = vmatpush1.msra.mxu0 %v6179
  %6196 = vmatprep.subr.mxu0 0.0
  %6197 = vmatpush1.msra.mxu0 0.0
  %6198 = vmatprep.subr.mxu0 0.0
  %6199 = vmatpush1.msra.mxu0 0.0
  %6200 = vmatprep.subr.mxu0 0.0
  %6201 = vmatpush1.msra.mxu0 0.0
  %6202 = vmatprep.subr.mxu0 0.0
  %6203 = vmatpush1.msra.mxu0 0.0
  %6204 = vmatprep.subr.mxu0 0.0
  %6205 = vmatpush1.msra.mxu0 0.0
  %6206 = vmatprep.subr.mxu0 0.0
  %6207 = vmatpush1.msra.mxu0 0.0
  %6208 = vmatprep.subr.mxu0 0.0
  %6209 = vmatpush1.msra.mxu0 0.0
  %6210 = vmatprep.subr.mxu0 0.0
  %6211 = vmatpush1.msra.mxu0 0.0
  %6212 = vmatprep.subr.mxu0 0.0
  %6213 = vmatpush1.msra.mxu0 0.0
  %6214 = vmatprep.subr.mxu0 0.0
  %6215 = vmatpush1.msra.mxu0 0.0
  %6216 = vmatprep.subr.mxu0 0.0
  %6217 = vmatpush1.msra.mxu0 0.0
  %6218 = vmatprep.subr.mxu0 0.0
  %6219 = vmatpush1.msra.mxu0 0.0
  %6220 = vmatprep.subr.mxu0 0.0
  %6221 = vmatpush1.msra.mxu0 0.0
  %6222 = vmatprep.subr.mxu0 0.0
  %6223 = vmatpush1.msra.mxu0 0.0
  %6224 = vmatprep.subr.mxu0 0.0
  %6225 = vmatpush1.msra.mxu0 0.0
  %6226 = vmatprep.subr.mxu0 0.0
  %6227 = vmatpush1.msra.mxu0 0.0
  %6228 = vmatprep.subr.mxu0 0.0
  %6229 = vmatpush1.msra.mxu0 0.0
  %6230 = vmatprep.subr.mxu0 0.0
  %6231 = vmatpush1.msra.mxu0 0.0
  %6232 = vmatprep.subr.mxu0 0.0
  %6233 = vmatpush1.msra.mxu0 0.0
  %6234 = vmatprep.subr.mxu0 0.0
  %6235 = vmatpush1.msra.mxu0 0.0
  %6236 = vmatprep.subr.mxu0 0.0
  %6237 = vmatpush1.msra.mxu0 0.0
  %6238 = vmatprep.subr.mxu0 0.0
  %6239 = vmatpush1.msra.mxu0 0.0
  %6240 = vmatprep.subr.mxu0 0.0
  %6241 = vmatpush1.msra.mxu0 0.0
  %6242 = vmatprep.subr.mxu0 0.0
  %6243 = vmatpush1.msra.mxu0 0.0
  %6244 = vmatprep.mubr.f32.mxu0 0.0
  %6245 = vmatmul.mubr.f32.gmra.mrb[0].mxu0 %v63
  %v6246 = vpop.f32.mrb[0].mxu0
  %v6247 = vadd.f32 %v53, %v6246
  %v6248 = vpop.f32.mrb[0].mxu0
  %6249 = vmatprep.mubr.f32.mxu0 0.0
  %6250 = vmatmul.mubr.f32.gmra.mrb[0].mxu0 %v66
  %v6251 = vpop.f32.mrb[0].mxu0
  %v6252 = vadd.f32 %v54, %v6251
  %v6253 = vpop.f32.mrb[0].mxu0
  %6254 = vmatprep.mubr.f32.mxu0 0.0
  %6255 = vmatmul.mubr.f32.gmra.mrb[0].mxu0 %v69
  %v6256 = vpop.f32.mrb[0].mxu0
  %v6257 = vadd.f32 %v55, %v6256
  %v6258 = vpop.f32.mrb[0].mxu0
  %6259 = vmatprep.mubr.f32.mxu0 0.0
  %6260 = vmatmul.mubr.f32.gmra.mrb[0].mxu0 %v72
  %v6261 = vpop.f32.mrb[0].mxu0
  %v6262 = vadd.f32 %v56, %v6261
  %v6263 = vpop.f32.mrb[0].mxu0
  %6264 = vmatprep.mubr.f32.mxu0 0.0
  %6265 = vmatmul.mubr.f32.gmra.mrb[0].mxu0 %v75
  %v6266 = vpop.f32.mrb[0].mxu0
  %v6267 = vadd.f32 %v57, %v6266
  %v6268 = vpop.f32.mrb[0].mxu0
  %6269 = vmatprep.mubr.f32.mxu0 0.0
  %6270 = vmatmul.mubr.f32.gmra.mrb[0].mxu0 %v78
  %v6271 = vpop.f32.mrb[0].mxu0
  %v6272 = vadd.f32 %v58, %v6271
  %v6273 = vpop.f32.mrb[0].mxu0
  %6274 = vmatprep.mubr.f32.mxu0 0.0
  %6275 = vmatmul.mubr.f32.gmra.mrb[0].mxu0 %v81
  %v6276 = vpop.f32.mrb[0].mxu0
  %v6277 = vadd.f32 %v59, %v6276
  %v6278 = vpop.f32.mrb[0].mxu0
  %6279 = vmatprep.mubr.f32.mxu0 0.0
  %6280 = vmatmul.mubr.f32.gmra.mrb[0].mxu0 %v84
  %v6281 = vpop.f32.mrb[0].mxu0
  %v6282 = vadd.f32 %v60, %v6281
  %v6283 = vpop.f32.mrb[0].mxu0
  %6284 = vdwg.mxu0
  %v6285 = vmax.f32 %v29, %v6247
  %v6286 = vmax.f32 %v30, %v6252
  %v6287 = vmax.f32 %v31, %v6257
  %v6288 = vmax.f32 %v32, %v6262
  %v6289 = vmax.f32 %v33, %v6267
  %v6290 = vmax.f32 %v34, %v6272
  %v6291 = vmax.f32 %v35, %v6277
  %v6292 = vmax.f32 %v36, %v6282
  %6293 = vmatprep.subr.mxu0 0.0
  %6294 = vmatpush1.msra.mxu0 %v6172
  %6295 = vmatprep.subr.mxu0 0.0
  %6296 = vmatpush1.msra.mxu0 %v6173
  %6297 = vmatprep.subr.mxu0 0.0
  %6298 = vmatpush1.msra.mxu0 %v6174
  %6299 = vmatprep.subr.mxu0 0.0
  %6300 = vmatpush1.msra.mxu0 %v6175
  %6301 = vmatprep.subr.mxu0 0.0
  %6302 = vmatpush1.msra.mxu0 %v6176
  %6303 = vmatprep.subr.mxu0 0.0
  %6304 = vmatpush1.msra.mxu0 %v6177
  %6305 = vmatprep.subr.mxu0 0.0
  %6306 = vmatpush1.msra.mxu0 %v6178
  %6307 = vmatprep.subr.mxu0 0.0
  %6308 = vmatpush1.msra.mxu0 %v6179
  %6309 = vmatprep.subr.mxu0 0.0
  %6310 = vmatpush1.msra.mxu0 0.0
  %6311 = vmatprep.subr.mxu0 0.0
  %6312 = vmatpush1.msra.mxu0 0.0
  %6313 = vmatprep.subr.mxu0 0.0
  %6314 = vmatpush1.msra.mxu0 0.0
  %6315 = vmatprep.subr.mxu0 0.0
  %6316 = vmatpush1.msra.mxu0 0.0
  %6317 = vmatprep.subr.mxu0 0.0
  %6318 = vmatpush1.msra.mxu0 0.0
  %6319 = vmatprep.subr.mxu0 0.0
  %6320 = vmatpush1.msra.mxu0 0.0
  %6321 = vmatprep.subr.mxu0 0.0
  %6322 = vmatpush1.msra.mxu0 0.0
  %6323 = vmatprep.subr.mxu0 0.0
  %6324 = vmatpush1.msra.mxu0 0.0
  %6325 = vmatprep.subr.mxu0 0.0
  %6326 = vmatpush1.msra.mxu0 0.0
  %6327 = vmatprep.subr.mxu0 0.0
  %6328 = vmatpush1.msra.mxu0 0.0
  %6329 = vmatprep.subr.mxu0 0.0
  %6330 = vmatpush1.msra.mxu0 0.0
  %6331 = vmatprep.subr.mxu0 0.0
  %6332 = vmatpush1.msra.mxu0 0.0
  %6333 = vmatprep.subr.mxu0 0.0
  %6334 = vmatpush1.msra.mxu0 0.0
  %6335 = vmatprep.subr.mxu0 0.0
  %6336 = vmatpush1.msra.mxu0 0.0
  %6337 = vmatprep.subr.mxu0 0.0
  %6338 = vmatpush1.msra.mxu0 0.0
  %6339 = vmatprep.subr.mxu0 0.0
  %6340 = vmatpush1.msra.mxu0 0.0
  %6341 = vmatprep.subr.mxu0 0.0
  %6342 = vmatpush1.msra.mxu0 0.0
  %6343 = vmatprep.subr.mxu0 0.0
  %6344 = vmatpush1.msra.mxu0 0.0
  %6345 = vmatprep.subr.mxu0 0.0
  %6346 = vmatpush1.msra.mxu0 0.0
  %6347 = vmatprep.subr.mxu0 0.0
  %6348 = vmatpush1.msra.mxu0 0.0
  %6349 = vmatprep.subr.mxu0 0.0
  %6350 = vmatpush1.msra.mxu0 0.0
  %6351 = vmatprep.subr.mxu0 0.0
  %6352 = vmatpush1.msra.mxu0 0.0
  %6353 = vmatprep.subr.mxu0 0.0
  %6354 = vmatpush1.msra.mxu0 0.0
  %6355 = vmatprep.subr.mxu0 0.0
  %6356 = vmatpush1.msra.mxu0 0.0
  %6357 = vmatprep.mubr.f32.mxu0 0.0
  %6358 = vmatmul.mubr.f32.gmra.mrb[0].mxu0 %v218
  %v6359 = vpop.f32.mrb[0].mxu0
  %v6360 = vadd.f32 %v209, %v6359
  %v6361 = vpop.f32.mrb[0].mxu0
  %6362 = vmatprep.mubr.f32.mxu0 0.0
  %6363 = vmatmul.mubr.f32.gmra.mrb[0].mxu0 %v221
  %v6364 = vpop.f32.mrb[0].mxu0
  %v6365 = vadd.f32 %v210, %v6364
  %v6366 = vpop.f32.mrb[0].mxu0
  %6367 = vmatprep.mubr.f32.mxu0 0.0
  %6368 = vmatmul.mubr.f32.gmra.mrb[0].mxu0 %v224
  %v6369 = vpop.f32.mrb[0].mxu0
  %v6370 = vadd.f32 %v211, %v6369
  %v6371 = vpop.f32.mrb[0].mxu0
  %6372 = vmatprep.mubr.f32.mxu0 0.0
  %6373 = vmatmul.mubr.f32.gmra.mrb[0].mxu0 %v227
  %v6374 = vpop.f32.mrb[0].mxu0
  %v6375 = vadd.f32 %v212, %v6374
  %v6376 = vpop.f32.mrb[0].mxu0
  %6377 = vmatprep.mubr.f32.mxu0 0.0
  %6378 = vmatmul.mubr.f32.gmra.mrb[0].mxu0 %v230
  %v6379 = vpop.f32.mrb[0].mxu0
  %v6380 = vadd.f32 %v213, %v6379
  %v6381 = vpop.f32.mrb[0].mxu0
  %6382 = vmatprep.mubr.f32.mxu0 0.0
  %6383 = vmatmul.mubr.f32.gmra.mrb[0].mxu0 %v233
  %v6384 = vpop.f32.mrb[0].mxu0
  %v6385 = vadd.f32 %v214, %v6384
  %v6386 = vpop.f32.mrb[0].mxu0
  %6387 = vmatprep.mubr.f32.mxu0 0.0
  %6388 = vmatmul.mubr.f32.gmra.mrb[0].mxu0 %v236
  %v6389 = vpop.f32.mrb[0].mxu0
  %v6390 = vadd.f32 %v215, %v6389
  %v6391 = vpop.f32.mrb[0].mxu0
  %6392 = vmatprep.mubr.f32.mxu0 0.0
  %6393 = vmatmul.mubr.f32.gmra.mrb[0].mxu0 %v239
  %v6394 = vpop.f32.mrb[0].mxu0
  %v6395 = vadd.f32 %v216, %v6394
  %v6396 = vpop.f32.mrb[0].mxu0
  %6397 = vdwg.mxu0
  %v6398 = vmax.f32 %v6285, %v6360
  %v6399 = vmax.f32 %v6286, %v6365
  %v6400 = vmax.f32 %v6287, %v6370
  %v6401 = vmax.f32 %v6288, %v6375
  %v6402 = vmax.f32 %v6289, %v6380
  %v6403 = vmax.f32 %v6290, %v6385
  %v6404 = vmax.f32 %v6291, %v6390
  %v6405 = vmax.f32 %v6292, %v6395
  %6406 = vmatprep.subr.mxu0 0.0
  %6407 = vmatpush1.msra.mxu0 %v6172
  %6408 = vmatprep.subr.mxu0 0.0
  %6409 = vmatpush1.msra.mxu0 %v6173
  %6410 = vmatprep.subr.mxu0 0.0
  %6411 = vmatpush1.msra.mxu0 %v6174
  %6412 = vmatprep.subr.mxu0 0.0
  %6413 = vmatpush1.msra.mxu0 %v6175
  %6414 = vmatprep.subr.mxu0 0.0
  %6415 = vmatpush1.msra.mxu0 %v6176
  %6416 = vmatprep.subr.mxu0 0.0
  %6417 = vmatpush1.msra.mxu0 %v6177
  %6418 = vmatprep.subr.mxu0 0.0
  %6419 = vmatpush1.msra.mxu0 %v6178
  %6420 = vmatprep.subr.mxu0 0.0
  %6421 = vmatpush1.msra.mxu0 %v6179
  %6422 = vmatprep.subr.mxu0 0.0
  %6423 = vmatpush1.msra.mxu0 0.0
  %6424 = vmatprep.subr.mxu0 0.0
  %6425 = vmatpush1.msra.mxu0 0.0
  %6426 = vmatprep.subr.mxu0 0.0
  %6427 = vmatpush1.msra.mxu0 0.0
  %6428 = vmatprep.subr.mxu0 0.0
  %6429 = vmatpush1.msra.mxu0 0.0
  %6430 = vmatprep.subr.mxu0 0.0
  %6431 = vmatpush1.msra.mxu0 0.0
  %6432 = vmatprep.subr.mxu0 0.0
  %6433 = vmatpush1.msra.mxu0 0.0
  %6434 = vmatprep.subr.mxu0 0.0
  %6435 = vmatpush1.msra.mxu0 0.0
  %6436 = vmatprep.subr.mxu0 0.0
  %6437 = vmatpush1.msra.mxu0 0.0
  %6438 = vmatprep.subr.mxu0 0.0
  %6439 = vmatpush1.msra.mxu0 0.0
  %6440 = vmatprep.subr.mxu0 0.0
  %6441 = vmatpush1.msra.mxu0 0.0
  %6442 = vmatprep.subr.mxu0 0.0
  %6443 = vmatpush1.msra.mxu0 0.0
  %6444 = vmatprep.subr.mxu0 0.0
  %6445 = vmatpush1.msra.mxu0 0.0
  %6446 = vmatprep.subr.mxu0 0.0
  %6447 = vmatpush1.msra.mxu0 0.0
  %6448 = vmatprep.subr.mxu0 0.0
  %6449 = vmatpush1.msra.mxu0 0.0
  %6450 = vmatprep.subr.mxu0 0.0
  %6451 = vmatpush1.msra.mxu0 0.0
  %6452 = vmatprep.subr.mxu0 0.0
  %6453 = vmatpush1.msra.mxu0 0.0
  %6454 = vmatprep.subr.mxu0 0.0
  %6455 = vmatpush1.msra.mxu0 0.0
  %6456 = vmatprep.subr.mxu0 0.0
  %6457 = vmatpush1.msra.mxu0 0.0
  %6458 = vmatprep.subr.mxu0 0.0
  %6459 = vmatpush1.msra.mxu0 0.0
  %6460 = vmatprep.subr.mxu0 0.0
  %6461 = vmatpush1.msra.mxu0 0.0
  %6462 = vmatprep.subr.mxu0 0.0
  %6463 = vmatpush1.msra.mxu0 0.0
  %6464 = vmatprep.subr.mxu0 0.0
  %6465 = vmatpush1.msra.mxu0 0.0
  %6466 = vmatprep.subr.mxu0 0.0
  %6467 = vmatpush1.msra.mxu0 0.0
  %6468 = vmatprep.subr.mxu0 0.0
  %6469 = vmatpush1.msra.mxu0 0.0
  %6470 = vmatprep.mubr.f32.mxu0 0.0
  %6471 = vmatmul.mubr.f32.gmra.mrb[0].mxu0 %v373
  %v6472 = vpop.f32.mrb[0].mxu0
  %v6473 = vadd.f32 %v364, %v6472
  %v6474 = vpop.f32.mrb[0].mxu0
  %6475 = vmatprep.mubr.f32.mxu0 0.0
  %6476 = vmatmul.mubr.f32.gmra.mrb[0].mxu0 %v376
  %v6477 = vpop.f32.mrb[0].mxu0
  %v6478 = vadd.f32 %v365, %v6477
  %v6479 = vpop.f32.mrb[0].mxu0
  %6480 = vmatprep.mubr.f32.mxu0 0.0
  %6481 = vmatmul.mubr.f32.gmra.mrb[0].mxu0 %v379
  %v6482 = vpop.f32.mrb[0].mxu0
  %v6483 = vadd.f32 %v366, %v6482
  %v6484 = vpop.f32.mrb[0].mxu0
  %6485 = vmatprep.mubr.f32.mxu0 0.0
  %6486 = vmatmul.mubr.f32.gmra.mrb[0].mxu0 %v382
  %v6487 = vpop.f32.mrb[0].mxu0
  %v6488 = vadd.f32 %v367, %v6487
  %v6489 = vpop.f32.mrb[0].mxu0
  %6490 = vmatprep.mubr.f32.mxu0 0.0
  %6491 = vmatmul.mubr.f32.gmra.mrb[0].mxu0 %v385
  %v6492 = vpop.f32.mrb[0].mxu0
  %v6493 = vadd.f32 %v368, %v6492
  %v6494 = vpop.f32.mrb[0].mxu0
  %6495 = vmatprep.mubr.f32.mxu0 0.0
  %6496 = vmatmul.mubr.f32.gmra.mrb[0].mxu0 %v388
  %v6497 = vpop.f32.mrb[0].mxu0
  %v6498 = vadd.f32 %v369, %v6497
  %v6499 = vpop.f32.mrb[0].mxu0
  %6500 = vmatprep.mubr.f32.mxu0 0.0
  %6501 = vmatmul.mubr.f32.gmra.mrb[0].mxu0 %v391
  %v6502 = vpop.f32.mrb[0].mxu0
  %v6503 = vadd.f32 %v370, %v6502
  %v6504 = vpop.f32.mrb[0].mxu0
  %6505 = vmatprep.mubr.f32.mxu0 0.0
  %6506 = vmatmul.mubr.f32.gmra.mrb[0].mxu0 %v394
  %v6507 = vpop.f32.mrb[0].mxu0
  %v6508 = vadd.f32 %v371, %v6507
  %v6509 = vpop.f32.mrb[0].mxu0
  %6510 = vdwg.mxu0
  %v6511 = vmax.f32 %v6398, %v6473
  %v6512 = vmax.f32 %v6399, %v6478
  %v6513 = vmax.f32 %v6400, %v6483
  %v6514 = vmax.f32 %v6401, %v6488
  %v6515 = vmax.f32 %v6402, %v6493
  %v6516 = vmax.f32 %v6403, %v6498
  %v6517 = vmax.f32 %v6404, %v6503
  %v6518 = vmax.f32 %v6405, %v6508
  %v6519 = vadd.f32 %v6172, %v6511
  %v6520 = vadd.f32 %v6173, %v6512
  %v6521 = vadd.f32 %v6174, %v6513
  %v6522 = vadd.f32 %v6175, %v6514
  %v6523 = vadd.f32 %v6176, %v6515
  %v6524 = vadd.f32 %v6177, %v6516
  %v6525 = vadd.f32 %v6178, %v6517
  %v6526 = vadd.f32 %v6179, %v6518
  %s6527 = scalar_lea.vmem %s4, 1536
  %v6528 = vld [vmem:[%s6527] sm:$0xff]
  %v6529 = vld [vmem:[%s6527 + $0x8] sm:$0xff]
  %v6530 = vld [vmem:[%s6527 + $0x10] sm:$0xff]
  %v6531 = vld [vmem:[%s6527 + $0x18] sm:$0xff]
  %v6532 = vld [vmem:[%s6527 + $0x20] sm:$0xff]
  %v6533 = vld [vmem:[%s6527 + $0x28] sm:$0xff]
  %v6534 = vld [vmem:[%s6527 + $0x30] sm:$0xff]
  %v6535 = vld [vmem:[%s6527 + $0x38] sm:$0xff]
  %v6536 = vld [vmem:[%s6527 + $0x40] sm:$0xff]
  %v6537 = vld [vmem:[%s6527 + $0x48] sm:$0xff]
  %v6538 = vld [vmem:[%s6527 + $0x50] sm:$0xff]
  %v6539 = vld [vmem:[%s6527 + $0x58] sm:$0xff]
  %v6540 = vld [vmem:[%s6527 + $0x60] sm:$0xff]
  %v6541 = vld [vmem:[%s6527 + $0x68] sm:$0xff]
  %v6542 = vld [vmem:[%s6527 + $0x70] sm:$0xff]
  %v6543 = vld [vmem:[%s6527 + $0x78] sm:$0xff]
  %s6544 = scalar_lea.vmem %s5, 12
  %v6545 = vld [vmem:[%s6544] sm:$0x1]
  %v6547 = vlaneseq
  %v6548 = vshrl.u32 %v6547, 7
  %v6549 = vsub.s32 0, %v6548
  %v6550 = vrot.slane %v6545, %v6549
  %6552 = vmatprep.subr.mxu0 0.0
  %6553 = vmatpush1.msra.mxu0 %v6528
  %6554 = vmatprep.subr.mxu0 0.0
  %6555 = vmatpush1.msra.mxu0 %v6529
  %6556 = vmatprep.subr.mxu0 0.0
  %6557 = vmatpush1.msra.mxu0 %v6530
  %6558 = vmatprep.subr.mxu0 0.0
  %6559 = vmatpush1.msra.mxu0 %v6531
  %6560 = vmatprep.subr.mxu0 0.0
  %6561 = vmatpush1.msra.mxu0 %v6532
  %6562 = vmatprep.subr.mxu0 0.0
  %6563 = vmatpush1.msra.mxu0 %v6533
  %6564 = vmatprep.subr.mxu0 0.0
  %6565 = vmatpush1.msra.mxu0 %v6534
  %6566 = vmatprep.subr.mxu0 0.0
  %6567 = vmatpush1.msra.mxu0 %v6535
  %6568 = vmatprep.subr.mxu0 0.0
  %6569 = vmatpush1.msra.mxu0 %v6536
  %6570 = vmatprep.subr.mxu0 0.0
  %6571 = vmatpush1.msra.mxu0 %v6537
  %6572 = vmatprep.subr.mxu0 0.0
  %6573 = vmatpush1.msra.mxu0 %v6538
  %6574 = vmatprep.subr.mxu0 0.0
  %6575 = vmatpush1.msra.mxu0 %v6539
  %6576 = vmatprep.subr.mxu0 0.0
  %6577 = vmatpush1.msra.mxu0 %v6540
  %6578 = vmatprep.subr.mxu0 0.0
  %6579 = vmatpush1.msra.mxu0 %v6541
  %6580 = vmatprep.subr.mxu0 0.0
  %6581 = vmatpush1.msra.mxu0 %v6542
  %6582 = vmatprep.subr.mxu0 0.0
  %6583 = vmatpush1.msra.mxu0 %v6543
  %6584 = vmatprep.subr.mxu0 0.0
  %6585 = vmatpush1.msra.mxu0 0.0
  %6586 = vmatprep.subr.mxu0 0.0
  %6587 = vmatpush1.msra.mxu0 0.0
  %6588 = vmatprep.subr.mxu0 0.0
  %6589 = vmatpush1.msra.mxu0 0.0
  %6590 = vmatprep.subr.mxu0 0.0
  %6591 = vmatpush1.msra.mxu0 0.0
  %6592 = vmatprep.subr.mxu0 0.0
  %6593 = vmatpush1.msra.mxu0 0.0
  %6594 = vmatprep.subr.mxu0 0.0
  %6595 = vmatpush1.msra.mxu0 0.0
  %6596 = vmatprep.subr.mxu0 0.0
  %6597 = vmatpush1.msra.mxu0 0.0
  %6598 = vmatprep.subr.mxu0 0.0
  %6599 = vmatpush1.msra.mxu0 0.0
  %6600 = vmatprep.subr.mxu0 0.0
  %6601 = vmatpush1.msra.mxu0 0.0
  %6602 = vmatprep.subr.mxu0 0.0
  %6603 = vmatpush1.msra.mxu0 0.0
  %6604 = vmatprep.subr.mxu0 0.0
  %6605 = vmatpush1.msra.mxu0 0.0
  %6606 = vmatprep.subr.mxu0 0.0
  %6607 = vmatpush1.msra.mxu0 0.0
  %6608 = vmatprep.subr.mxu0 0.0
  %6609 = vmatpush1.msra.mxu0 0.0
  %6610 = vmatprep.subr.mxu0 0.0
  %6611 = vmatpush1.msra.mxu0 0.0
  %6612 = vmatprep.subr.mxu0 0.0
  %6613 = vmatpush1.msra.mxu0 0.0
  %6614 = vmatprep.subr.mxu0 0.0
  %6615 = vmatpush1.msra.mxu0 0.0
  %6616 = vmatprep.mubr.f32.mxu0 0.0
  %6617 = vmatmul.mubr.f32.gmra.mrb[0].mxu0 %v6519
  %v6618 = vpop.f32.mrb[0].mxu0
  %v6619 = vadd.f32 %v6550, %v6618
  %v6620 = vpop.f32.mrb[0].mxu0
  %6621 = vmatprep.mubr.f32.mxu0 0.0
  %6622 = vmatmul.mubr.f32.gmra.mrb[0].mxu0 %v6520
  %v6623 = vpop.f32.mrb[0].mxu0
  %v6624 = vadd.f32 %v6550, %v6623
  %v6625 = vpop.f32.mrb[0].mxu0
  %6626 = vmatprep.mubr.f32.mxu0 0.0
  %6627 = vmatmul.mubr.f32.gmra.mrb[0].mxu0 %v6521
  %v6628 = vpop.f32.mrb[0].mxu0
  %v6629 = vadd.f32 %v6550, %v6628
  %v6630 = vpop.f32.mrb[0].mxu0
  %6631 = vmatprep.mubr.f32.mxu0 0.0
  %6632 = vmatmul.mubr.f32.gmra.mrb[0].mxu0 %v6522
  %v6633 = vpop.f32.mrb[0].mxu0
  %v6634 = vadd.f32 %v6550, %v6633
  %v6635 = vpop.f32.mrb[0].mxu0
  %6636 = vmatprep.mubr.f32.mxu0 0.0
  %6637 = vmatmul.mubr.f32.gmra.mrb[0].mxu0 %v6523
  %v6638 = vpop.f32.mrb[0].mxu0
  %v6639 = vadd.f32 %v6550, %v6638
  %v6640 = vpop.f32.mrb[0].mxu0
  %6641 = vmatprep.mubr.f32.mxu0 0.0
  %6642 = vmatmul.mubr.f32.gmra.mrb[0].mxu0 %v6524
  %v6643 = vpop.f32.mrb[0].mxu0
  %v6644 = vadd.f32 %v6550, %v6643
  %v6645 = vpop.f32.mrb[0].mxu0
  %6646 = vmatprep.mubr.f32.mxu0 0.0
  %6647 = vmatmul.mubr.f32.gmra.mrb[0].mxu0 %v6525
  %v6648 = vpop.f32.mrb[0].mxu0
  %v6649 = vadd.f32 %v6550, %v6648
  %v6650 = vpop.f32.mrb[0].mxu0
  %6651 = vmatprep.mubr.f32.mxu0 0.0
  %6652 = vmatmul.mubr.f32.gmra.mrb[0].mxu0 %v6526
  %v6653 = vpop.f32.mrb[0].mxu0
  %v6654 = vadd.f32 %v6550, %v6653
  %v6655 = vpop.f32.mrb[0].mxu0
  %6656 = vdwg.mxu0
  %vm6657 = vcmp.ge.f32.partialorder %v6619, 0.0
  %vm6658 = vcmp.ge.f32.partialorder %v6624, 0.0
  %vm6659 = vcmp.ge.f32.partialorder %v6629, 0.0
  %vm6660 = vcmp.ge.f32.partialorder %v6634, 0.0
  %vm6661 = vcmp.ge.f32.partialorder %v6639, 0.0
  %vm6662 = vcmp.ge.f32.partialorder %v6644, 0.0
  %vm6663 = vcmp.ge.f32.partialorder %v6649, 0.0
  %vm6664 = vcmp.ge.f32.partialorder %v6654, 0.0
  %v6665 = vmul.f32 %v6619, 0.01
  %v6666 = vmul.f32 %v6624, 0.01
  %v6667 = vmul.f32 %v6629, 0.01
  %v6668 = vmul.f32 %v6634, 0.01
  %v6669 = vmul.f32 %v6639, 0.01
  %v6670 = vmul.f32 %v6644, 0.01
  %v6671 = vmul.f32 %v6649, 0.01
  %v6672 = vmul.f32 %v6654, 0.01
  %v6673 = vsel %vm6657, %v6619, %v6665
  %v6674 = vsel %vm6658, %v6624, %v6666
  %v6675 = vsel %vm6659, %v6629, %v6667
  %v6676 = vsel %vm6660, %v6634, %v6668
  %v6677 = vsel %vm6661, %v6639, %v6669
  %v6678 = vsel %vm6662, %v6644, %v6670
  %v6679 = vsel %vm6663, %v6649, %v6671
  %v6680 = vsel %vm6664, %v6654, %v6672
  %6681 = vmatprep.subr.mxu0 0.0
  %6682 = vmatpush1.msra.mxu0 %v6673
  %6683 = vmatprep.subr.mxu0 0.0
  %6684 = vmatpush1.msra.mxu0 %v6674
  %6685 = vmatprep.subr.mxu0 0.0
  %6686 = vmatpush1.msra.mxu0 %v6675
  %6687 = vmatprep.subr.mxu0 0.0
  %6688 = vmatpush1.msra.mxu0 %v6676
  %6689 = vmatprep.subr.mxu0 0.0
  %6690 = vmatpush1.msra.mxu0 %v6677
  %6691 = vmatprep.subr.mxu0 0.0
  %6692 = vmatpush1.msra.mxu0 %v6678
  %6693 = vmatprep.subr.mxu0 0.0
  %6694 = vmatpush1.msra.mxu0 %v6679
  %6695 = vmatprep.subr.mxu0 0.0
  %6696 = vmatpush1.msra.mxu0 %v6680
  %6697 = vmatprep.subr.mxu0 0.0
  %6698 = vmatpush1.msra.mxu0 0.0
  %6699 = vmatprep.subr.mxu0 0.0
  %6700 = vmatpush1.msra.mxu0 0.0
  %6701 = vmatprep.subr.mxu0 0.0
  %6702 = vmatpush1.msra.mxu0 0.0
  %6703 = vmatprep.subr.mxu0 0.0
  %6704 = vmatpush1.msra.mxu0 0.0
  %6705 = vmatprep.subr.mxu0 0.0
  %6706 = vmatpush1.msra.mxu0 0.0
  %6707 = vmatprep.subr.mxu0 0.0
  %6708 = vmatpush1.msra.mxu0 0.0
  %6709 = vmatprep.subr.mxu0 0.0
  %6710 = vmatpush1.msra.mxu0 0.0
  %6711 = vmatprep.subr.mxu0 0.0
  %6712 = vmatpush1.msra.mxu0 0.0
  %6713 = vmatprep.subr.mxu0 0.0
  %6714 = vmatpush1.msra.mxu0 0.0
  %6715 = vmatprep.subr.mxu0 0.0
  %6716 = vmatpush1.msra.mxu0 0.0
  %6717 = vmatprep.subr.mxu0 0.0
  %6718 = vmatpush1.msra.mxu0 0.0
  %6719 = vmatprep.subr.mxu0 0.0
  %6720 = vmatpush1.msra.mxu0 0.0
  %6721 = vmatprep.subr.mxu0 0.0
  %6722 = vmatpush1.msra.mxu0 0.0
  %6723 = vmatprep.subr.mxu0 0.0
  %6724 = vmatpush1.msra.mxu0 0.0
  %6725 = vmatprep.subr.mxu0 0.0
  %6726 = vmatpush1.msra.mxu0 0.0
  %6727 = vmatprep.subr.mxu0 0.0
  %6728 = vmatpush1.msra.mxu0 0.0
  %6729 = vmatprep.subr.mxu0 0.0
  %6730 = vmatpush1.msra.mxu0 0.0
  %6731 = vmatprep.subr.mxu0 0.0
  %6732 = vmatpush1.msra.mxu0 0.0
  %6733 = vmatprep.subr.mxu0 0.0
  %6734 = vmatpush1.msra.mxu0 0.0
  %6735 = vmatprep.subr.mxu0 0.0
  %6736 = vmatpush1.msra.mxu0 0.0
  %6737 = vmatprep.subr.mxu0 0.0
  %6738 = vmatpush1.msra.mxu0 0.0
  %6739 = vmatprep.subr.mxu0 0.0
  %6740 = vmatpush1.msra.mxu0 0.0
  %6741 = vmatprep.subr.mxu0 0.0
  %6742 = vmatpush1.msra.mxu0 0.0
  %6743 = vmatprep.subr.mxu0 0.0
  %6744 = vmatpush1.msra.mxu0 0.0
  %6745 = vmatprep.mubr.f32.mxu0 0.0
  %6746 = vmatmul.mubr.f32.gmra.mrb[0].mxu0 %v63
  %v6747 = vpop.f32.mrb[0].mxu0
  %v6748 = vadd.f32 %v53, %v6747
  %v6749 = vpop.f32.mrb[0].mxu0
  %6750 = vmatprep.mubr.f32.mxu0 0.0
  %6751 = vmatmul.mubr.f32.gmra.mrb[0].mxu0 %v66
  %v6752 = vpop.f32.mrb[0].mxu0
  %v6753 = vadd.f32 %v54, %v6752
  %v6754 = vpop.f32.mrb[0].mxu0
  %6755 = vmatprep.mubr.f32.mxu0 0.0
  %6756 = vmatmul.mubr.f32.gmra.mrb[0].mxu0 %v69
  %v6757 = vpop.f32.mrb[0].mxu0
  %v6758 = vadd.f32 %v55, %v6757
  %v6759 = vpop.f32.mrb[0].mxu0
  %6760 = vmatprep.mubr.f32.mxu0 0.0
  %6761 = vmatmul.mubr.f32.gmra.mrb[0].mxu0 %v72
  %v6762 = vpop.f32.mrb[0].mxu0
  %v6763 = vadd.f32 %v56, %v6762
  %v6764 = vpop.f32.mrb[0].mxu0
  %6765 = vmatprep.mubr.f32.mxu0 0.0
  %6766 = vmatmul.mubr.f32.gmra.mrb[0].mxu0 %v75
  %v6767 = vpop.f32.mrb[0].mxu0
  %v6768 = vadd.f32 %v57, %v6767
  %v6769 = vpop.f32.mrb[0].mxu0
  %6770 = vmatprep.mubr.f32.mxu0 0.0
  %6771 = vmatmul.mubr.f32.gmra.mrb[0].mxu0 %v78
  %v6772 = vpop.f32.mrb[0].mxu0
  %v6773 = vadd.f32 %v58, %v6772
  %v6774 = vpop.f32.mrb[0].mxu0
  %6775 = vmatprep.mubr.f32.mxu0 0.0
  %6776 = vmatmul.mubr.f32.gmra.mrb[0].mxu0 %v81
  %v6777 = vpop.f32.mrb[0].mxu0
  %v6778 = vadd.f32 %v59, %v6777
  %v6779 = vpop.f32.mrb[0].mxu0
  %6780 = vmatprep.mubr.f32.mxu0 0.0
  %6781 = vmatmul.mubr.f32.gmra.mrb[0].mxu0 %v84
  %v6782 = vpop.f32.mrb[0].mxu0
  %v6783 = vadd.f32 %v60, %v6782
  %v6784 = vpop.f32.mrb[0].mxu0
  %6785 = vdwg.mxu0
  %v6786 = vmax.f32 %v29, %v6748
  %v6787 = vmax.f32 %v30, %v6753
  %v6788 = vmax.f32 %v31, %v6758
  %v6789 = vmax.f32 %v32, %v6763
  %v6790 = vmax.f32 %v33, %v6768
  %v6791 = vmax.f32 %v34, %v6773
  %v6792 = vmax.f32 %v35, %v6778
  %v6793 = vmax.f32 %v36, %v6783
  %6794 = vmatprep.subr.mxu0 0.0
  %6795 = vmatpush1.msra.mxu0 %v6673
  %6796 = vmatprep.subr.mxu0 0.0
  %6797 = vmatpush1.msra.mxu0 %v6674
  %6798 = vmatprep.subr.mxu0 0.0
  %6799 = vmatpush1.msra.mxu0 %v6675
  %6800 = vmatprep.subr.mxu0 0.0
  %6801 = vmatpush1.msra.mxu0 %v6676
  %6802 = vmatprep.subr.mxu0 0.0
  %6803 = vmatpush1.msra.mxu0 %v6677
  %6804 = vmatprep.subr.mxu0 0.0
  %6805 = vmatpush1.msra.mxu0 %v6678
  %6806 = vmatprep.subr.mxu0 0.0
  %6807 = vmatpush1.msra.mxu0 %v6679
  %6808 = vmatprep.subr.mxu0 0.0
  %6809 = vmatpush1.msra.mxu0 %v6680
  %6810 = vmatprep.subr.mxu0 0.0
  %6811 = vmatpush1.msra.mxu0 0.0
  %6812 = vmatprep.subr.mxu0 0.0
  %6813 = vmatpush1.msra.mxu0 0.0
  %6814 = vmatprep.subr.mxu0 0.0
  %6815 = vmatpush1.msra.mxu0 0.0
  %6816 = vmatprep.subr.mxu0 0.0
  %6817 = vmatpush1.msra.mxu0 0.0
  %6818 = vmatprep.subr.mxu0 0.0
  %6819 = vmatpush1.msra.mxu0 0.0
  %6820 = vmatprep.subr.mxu0 0.0
  %6821 = vmatpush1.msra.mxu0 0.0
  %6822 = vmatprep.subr.mxu0 0.0
  %6823 = vmatpush1.msra.mxu0 0.0
  %6824 = vmatprep.subr.mxu0 0.0
  %6825 = vmatpush1.msra.mxu0 0.0
  %6826 = vmatprep.subr.mxu0 0.0
  %6827 = vmatpush1.msra.mxu0 0.0
  %6828 = vmatprep.subr.mxu0 0.0
  %6829 = vmatpush1.msra.mxu0 0.0
  %6830 = vmatprep.subr.mxu0 0.0
  %6831 = vmatpush1.msra.mxu0 0.0
  %6832 = vmatprep.subr.mxu0 0.0
  %6833 = vmatpush1.msra.mxu0 0.0
  %6834 = vmatprep.subr.mxu0 0.0
  %6835 = vmatpush1.msra.mxu0 0.0
  %6836 = vmatprep.subr.mxu0 0.0
  %6837 = vmatpush1.msra.mxu0 0.0
  %6838 = vmatprep.subr.mxu0 0.0
  %6839 = vmatpush1.msra.mxu0 0.0
  %6840 = vmatprep.subr.mxu0 0.0
  %6841 = vmatpush1.msra.mxu0 0.0
  %6842 = vmatprep.subr.mxu0 0.0
  %6843 = vmatpush1.msra.mxu0 0.0
  %6844 = vmatprep.subr.mxu0 0.0
  %6845 = vmatpush1.msra.mxu0 0.0
  %6846 = vmatprep.subr.mxu0 0.0
  %6847 = vmatpush1.msra.mxu0 0.0
  %6848 = vmatprep.subr.mxu0 0.0
  %6849 = vmatpush1.msra.mxu0 0.0
  %6850 = vmatprep.subr.mxu0 0.0
  %6851 = vmatpush1.msra.mxu0 0.0
  %6852 = vmatprep.subr.mxu0 0.0
  %6853 = vmatpush1.msra.mxu0 0.0
  %6854 = vmatprep.subr.mxu0 0.0
  %6855 = vmatpush1.msra.mxu0 0.0
  %6856 = vmatprep.subr.mxu0 0.0
  %6857 = vmatpush1.msra.mxu0 0.0
  %6858 = vmatprep.mubr.f32.mxu0 0.0
  %6859 = vmatmul.mubr.f32.gmra.mrb[0].mxu0 %v218
  %v6860 = vpop.f32.mrb[0].mxu0
  %v6861 = vadd.f32 %v209, %v6860
  %v6862 = vpop.f32.mrb[0].mxu0
  %6863 = vmatprep.mubr.f32.mxu0 0.0
  %6864 = vmatmul.mubr.f32.gmra.mrb[0].mxu0 %v221
  %v6865 = vpop.f32.mrb[0].mxu0
  %v6866 = vadd.f32 %v210, %v6865
  %v6867 = vpop.f32.mrb[0].mxu0
  %6868 = vmatprep.mubr.f32.mxu0 0.0
  %6869 = vmatmul.mubr.f32.gmra.mrb[0].mxu0 %v224
  %v6870 = vpop.f32.mrb[0].mxu0
  %v6871 = vadd.f32 %v211, %v6870
  %v6872 = vpop.f32.mrb[0].mxu0
  %6873 = vmatprep.mubr.f32.mxu0 0.0
  %6874 = vmatmul.mubr.f32.gmra.mrb[0].mxu0 %v227
  %v6875 = vpop.f32.mrb[0].mxu0
  %v6876 = vadd.f32 %v212, %v6875
  %v6877 = vpop.f32.mrb[0].mxu0
  %6878 = vmatprep.mubr.f32.mxu0 0.0
  %6879 = vmatmul.mubr.f32.gmra.mrb[0].mxu0 %v230
  %v6880 = vpop.f32.mrb[0].mxu0
  %v6881 = vadd.f32 %v213, %v6880
  %v6882 = vpop.f32.mrb[0].mxu0
  %6883 = vmatprep.mubr.f32.mxu0 0.0
  %6884 = vmatmul.mubr.f32.gmra.mrb[0].mxu0 %v233
  %v6885 = vpop.f32.mrb[0].mxu0
  %v6886 = vadd.f32 %v214, %v6885
  %v6887 = vpop.f32.mrb[0].mxu0
  %6888 = vmatprep.mubr.f32.mxu0 0.0
  %6889 = vmatmul.mubr.f32.gmra.mrb[0].mxu0 %v236
  %v6890 = vpop.f32.mrb[0].mxu0
  %v6891 = vadd.f32 %v215, %v6890
  %v6892 = vpop.f32.mrb[0].mxu0
  %6893 = vmatprep.mubr.f32.mxu0 0.0
  %6894 = vmatmul.mubr.f32.gmra.mrb[0].mxu0 %v239
  %v6895 = vpop.f32.mrb[0].mxu0
  %v6896 = vadd.f32 %v216, %v6895
  %v6897 = vpop.f32.mrb[0].mxu0
  %6898 = vdwg.mxu0
  %v6899 = vmax.f32 %v6786, %v6861
  %v6900 = vmax.f32 %v6787, %v6866
  %v6901 = vmax.f32 %v6788, %v6871
  %v6902 = vmax.f32 %v6789, %v6876
  %v6903 = vmax.f32 %v6790, %v6881
  %v6904 = vmax.f32 %v6791, %v6886
  %v6905 = vmax.f32 %v6792, %v6891
  %v6906 = vmax.f32 %v6793, %v6896
  %6907 = vmatprep.subr.mxu0 0.0
  %6908 = vmatpush1.msra.mxu0 %v6673
  %6909 = vmatprep.subr.mxu0 0.0
  %6910 = vmatpush1.msra.mxu0 %v6674
  %6911 = vmatprep.subr.mxu0 0.0
  %6912 = vmatpush1.msra.mxu0 %v6675
  %6913 = vmatprep.subr.mxu0 0.0
  %6914 = vmatpush1.msra.mxu0 %v6676
  %6915 = vmatprep.subr.mxu0 0.0
  %6916 = vmatpush1.msra.mxu0 %v6677
  %6917 = vmatprep.subr.mxu0 0.0
  %6918 = vmatpush1.msra.mxu0 %v6678
  %6919 = vmatprep.subr.mxu0 0.0
  %6920 = vmatpush1.msra.mxu0 %v6679
  %6921 = vmatprep.subr.mxu0 0.0
  %6922 = vmatpush1.msra.mxu0 %v6680
  %6923 = vmatprep.subr.mxu0 0.0
  %6924 = vmatpush1.msra.mxu0 0.0
  %6925 = vmatprep.subr.mxu0 0.0
  %6926 = vmatpush1.msra.mxu0 0.0
  %6927 = vmatprep.subr.mxu0 0.0
  %6928 = vmatpush1.msra.mxu0 0.0
  %6929 = vmatprep.subr.mxu0 0.0
  %6930 = vmatpush1.msra.mxu0 0.0
  %6931 = vmatprep.subr.mxu0 0.0
  %6932 = vmatpush1.msra.mxu0 0.0
  %6933 = vmatprep.subr.mxu0 0.0
  %6934 = vmatpush1.msra.mxu0 0.0
  %6935 = vmatprep.subr.mxu0 0.0
  %6936 = vmatpush1.msra.mxu0 0.0
  %6937 = vmatprep.subr.mxu0 0.0
  %6938 = vmatpush1.msra.mxu0 0.0
  %6939 = vmatprep.subr.mxu0 0.0
  %6940 = vmatpush1.msra.mxu0 0.0
  %6941 = vmatprep.subr.mxu0 0.0
  %6942 = vmatpush1.msra.mxu0 0.0
  %6943 = vmatprep.subr.mxu0 0.0
  %6944 = vmatpush1.msra.mxu0 0.0
  %6945 = vmatprep.subr.mxu0 0.0
  %6946 = vmatpush1.msra.mxu0 0.0
  %6947 = vmatprep.subr.mxu0 0.0
  %6948 = vmatpush1.msra.mxu0 0.0
  %6949 = vmatprep.subr.mxu0 0.0
  %6950 = vmatpush1.msra.mxu0 0.0
  %6951 = vmatprep.subr.mxu0 0.0
  %6952 = vmatpush1.msra.mxu0 0.0
  %6953 = vmatprep.subr.mxu0 0.0
  %6954 = vmatpush1.msra.mxu0 0.0
  %6955 = vmatprep.subr.mxu0 0.0
  %6956 = vmatpush1.msra.mxu0 0.0
  %6957 = vmatprep.subr.mxu0 0.0
  %6958 = vmatpush1.msra.mxu0 0.0
  %6959 = vmatprep.subr.mxu0 0.0
  %6960 = vmatpush1.msra.mxu0 0.0
  %6961 = vmatprep.subr.mxu0 0.0
  %6962 = vmatpush1.msra.mxu0 0.0
  %6963 = vmatprep.subr.mxu0 0.0
  %6964 = vmatpush1.msra.mxu0 0.0
  %6965 = vmatprep.subr.mxu0 0.0
  %6966 = vmatpush1.msra.mxu0 0.0
  %6967 = vmatprep.subr.mxu0 0.0
  %6968 = vmatpush1.msra.mxu0 0.0
  %6969 = vmatprep.subr.mxu0 0.0
  %6970 = vmatpush1.msra.mxu0 0.0
  %6971 = vmatprep.mubr.f32.mxu0 0.0
  %6972 = vmatmul.mubr.f32.gmra.mrb[0].mxu0 %v373
  %v6973 = vpop.f32.mrb[0].mxu0
  %v6974 = vadd.f32 %v364, %v6973
  %v6975 = vpop.f32.mrb[0].mxu0
  %6976 = vmatprep.mubr.f32.mxu0 0.0
  %6977 = vmatmul.mubr.f32.gmra.mrb[0].mxu0 %v376
  %v6978 = vpop.f32.mrb[0].mxu0
  %v6979 = vadd.f32 %v365, %v6978
  %v6980 = vpop.f32.mrb[0].mxu0
  %6981 = vmatprep.mubr.f32.mxu0 0.0
  %6982 = vmatmul.mubr.f32.gmra.mrb[0].mxu0 %v379
  %v6983 = vpop.f32.mrb[0].mxu0
  %v6984 = vadd.f32 %v366, %v6983
  %v6985 = vpop.f32.mrb[0].mxu0
  %6986 = vmatprep.mubr.f32.mxu0 0.0
  %6987 = vmatmul.mubr.f32.gmra.mrb[0].mxu0 %v382
  %v6988 = vpop.f32.mrb[0].mxu0
  %v6989 = vadd.f32 %v367, %v6988
  %v6990 = vpop.f32.mrb[0].mxu0
  %6991 = vmatprep.mubr.f32.mxu0 0.0
  %6992 = vmatmul.mubr.f32.gmra.mrb[0].mxu0 %v385
  %v6993 = vpop.f32.mrb[0].mxu0
  %v6994 = vadd.f32 %v368, %v6993
  %v6995 = vpop.f32.mrb[0].mxu0
  %6996 = vmatprep.mubr.f32.mxu0 0.0
  %6997 = vmatmul.mubr.f32.gmra.mrb[0].mxu0 %v388
  %v6998 = vpop.f32.mrb[0].mxu0
  %v6999 = vadd.f32 %v369, %v6998
  %v7000 = vpop.f32.mrb[0].mxu0
  %7001 = vmatprep.mubr.f32.mxu0 0.0
  %7002 = vmatmul.mubr.f32.gmra.mrb[0].mxu0 %v391
  %v7003 = vpop.f32.mrb[0].mxu0
  %v7004 = vadd.f32 %v370, %v7003
  %v7005 = vpop.f32.mrb[0].mxu0
  %7006 = vmatprep.mubr.f32.mxu0 0.0
  %7007 = vmatmul.mubr.f32.gmra.mrb[0].mxu0 %v394
  %v7008 = vpop.f32.mrb[0].mxu0
  %v7009 = vadd.f32 %v371, %v7008
  %v7010 = vpop.f32.mrb[0].mxu0
  %7011 = vdwg.mxu0
  %v7012 = vmax.f32 %v6899, %v6974
  %v7013 = vmax.f32 %v6900, %v6979
  %v7014 = vmax.f32 %v6901, %v6984
  %v7015 = vmax.f32 %v6902, %v6989
  %v7016 = vmax.f32 %v6903, %v6994
  %v7017 = vmax.f32 %v6904, %v6999
  %v7018 = vmax.f32 %v6905, %v7004
  %v7019 = vmax.f32 %v6906, %v7009
  %v7020 = vadd.f32 %v6673, %v7012
  %v7021 = vadd.f32 %v6674, %v7013
  %v7022 = vadd.f32 %v6675, %v7014
  %v7023 = vadd.f32 %v6676, %v7015
  %v7024 = vadd.f32 %v6677, %v7016
  %v7025 = vadd.f32 %v6678, %v7017
  %v7026 = vadd.f32 %v6679, %v7018
  %v7027 = vadd.f32 %v6680, %v7019
  %s7028 = scalar_lea.vmem %s4, 1664
  %v7029 = vld [vmem:[%s7028] sm:$0xff]
  %v7030 = vld [vmem:[%s7028 + $0x8] sm:$0xff]
  %v7031 = vld [vmem:[%s7028 + $0x10] sm:$0xff]
  %v7032 = vld [vmem:[%s7028 + $0x18] sm:$0xff]
  %v7033 = vld [vmem:[%s7028 + $0x20] sm:$0xff]
  %v7034 = vld [vmem:[%s7028 + $0x28] sm:$0xff]
  %v7035 = vld [vmem:[%s7028 + $0x30] sm:$0xff]
  %v7036 = vld [vmem:[%s7028 + $0x38] sm:$0xff]
  %v7037 = vld [vmem:[%s7028 + $0x40] sm:$0xff]
  %v7038 = vld [vmem:[%s7028 + $0x48] sm:$0xff]
  %v7039 = vld [vmem:[%s7028 + $0x50] sm:$0xff]
  %v7040 = vld [vmem:[%s7028 + $0x58] sm:$0xff]
  %v7041 = vld [vmem:[%s7028 + $0x60] sm:$0xff]
  %v7042 = vld [vmem:[%s7028 + $0x68] sm:$0xff]
  %v7043 = vld [vmem:[%s7028 + $0x70] sm:$0xff]
  %v7044 = vld [vmem:[%s7028 + $0x78] sm:$0xff]
  %s7045 = scalar_lea.vmem %s5, 13
  %v7046 = vld [vmem:[%s7045] sm:$0x1]
  %v7048 = vlaneseq
  %v7049 = vshrl.u32 %v7048, 7
  %v7050 = vsub.s32 0, %v7049
  %v7051 = vrot.slane %v7046, %v7050
  %7053 = vmatprep.subr.mxu0 0.0
  %7054 = vmatpush1.msra.mxu0 %v7029
  %7055 = vmatprep.subr.mxu0 0.0
  %7056 = vmatpush1.msra.mxu0 %v7030
  %7057 = vmatprep.subr.mxu0 0.0
  %7058 = vmatpush1.msra.mxu0 %v7031
  %7059 = vmatprep.subr.mxu0 0.0
  %7060 = vmatpush1.msra.mxu0 %v7032
  %7061 = vmatprep.subr.mxu0 0.0
  %7062 = vmatpush1.msra.mxu0 %v7033
  %7063 = vmatprep.subr.mxu0 0.0
  %7064 = vmatpush1.msra.mxu0 %v7034
  %7065 = vmatprep.subr.mxu0 0.0
  %7066 = vmatpush1.msra.mxu0 %v7035
  %7067 = vmatprep.subr.mxu0 0.0
  %7068 = vmatpush1.msra.mxu0 %v7036
  %7069 = vmatprep.subr.mxu0 0.0
  %7070 = vmatpush1.msra.mxu0 %v7037
  %7071 = vmatprep.subr.mxu0 0.0
  %7072 = vmatpush1.msra.mxu0 %v7038
  %7073 = vmatprep.subr.mxu0 0.0
  %7074 = vmatpush1.msra.mxu0 %v7039
  %7075 = vmatprep.subr.mxu0 0.0
  %7076 = vmatpush1.msra.mxu0 %v7040
  %7077 = vmatprep.subr.mxu0 0.0
  %7078 = vmatpush1.msra.mxu0 %v7041
  %7079 = vmatprep.subr.mxu0 0.0
  %7080 = vmatpush1.msra.mxu0 %v7042
  %7081 = vmatprep.subr.mxu0 0.0
  %7082 = vmatpush1.msra.mxu0 %v7043
  %7083 = vmatprep.subr.mxu0 0.0
  %7084 = vmatpush1.msra.mxu0 %v7044
  %7085 = vmatprep.subr.mxu0 0.0
  %7086 = vmatpush1.msra.mxu0 0.0
  %7087 = vmatprep.subr.mxu0 0.0
  %7088 = vmatpush1.msra.mxu0 0.0
  %7089 = vmatprep.subr.mxu0 0.0
  %7090 = vmatpush1.msra.mxu0 0.0
  %7091 = vmatprep.subr.mxu0 0.0
  %7092 = vmatpush1.msra.mxu0 0.0
  %7093 = vmatprep.subr.mxu0 0.0
  %7094 = vmatpush1.msra.mxu0 0.0
  %7095 = vmatprep.subr.mxu0 0.0
  %7096 = vmatpush1.msra.mxu0 0.0
  %7097 = vmatprep.subr.mxu0 0.0
  %7098 = vmatpush1.msra.mxu0 0.0
  %7099 = vmatprep.subr.mxu0 0.0
  %7100 = vmatpush1.msra.mxu0 0.0
  %7101 = vmatprep.subr.mxu0 0.0
  %7102 = vmatpush1.msra.mxu0 0.0
  %7103 = vmatprep.subr.mxu0 0.0
  %7104 = vmatpush1.msra.mxu0 0.0
  %7105 = vmatprep.subr.mxu0 0.0
  %7106 = vmatpush1.msra.mxu0 0.0
  %7107 = vmatprep.subr.mxu0 0.0
  %7108 = vmatpush1.msra.mxu0 0.0
  %7109 = vmatprep.subr.mxu0 0.0
  %7110 = vmatpush1.msra.mxu0 0.0
  %7111 = vmatprep.subr.mxu0 0.0
  %7112 = vmatpush1.msra.mxu0 0.0
  %7113 = vmatprep.subr.mxu0 0.0
  %7114 = vmatpush1.msra.mxu0 0.0
  %7115 = vmatprep.subr.mxu0 0.0
  %7116 = vmatpush1.msra.mxu0 0.0
  %7117 = vmatprep.mubr.f32.mxu0 0.0
  %7118 = vmatmul.mubr.f32.gmra.mrb[0].mxu0 %v7020
  %v7119 = vpop.f32.mrb[0].mxu0
  %v7120 = vadd.f32 %v7051, %v7119
  %v7121 = vpop.f32.mrb[0].mxu0
  %7122 = vmatprep.mubr.f32.mxu0 0.0
  %7123 = vmatmul.mubr.f32.gmra.mrb[0].mxu0 %v7021
  %v7124 = vpop.f32.mrb[0].mxu0
  %v7125 = vadd.f32 %v7051, %v7124
  %v7126 = vpop.f32.mrb[0].mxu0
  %7127 = vmatprep.mubr.f32.mxu0 0.0
  %7128 = vmatmul.mubr.f32.gmra.mrb[0].mxu0 %v7022
  %v7129 = vpop.f32.mrb[0].mxu0
  %v7130 = vadd.f32 %v7051, %v7129
  %v7131 = vpop.f32.mrb[0].mxu0
  %7132 = vmatprep.mubr.f32.mxu0 0.0
  %7133 = vmatmul.mubr.f32.gmra.mrb[0].mxu0 %v7023
  %v7134 = vpop.f32.mrb[0].mxu0
  %v7135 = vadd.f32 %v7051, %v7134
  %v7136 = vpop.f32.mrb[0].mxu0
  %7137 = vmatprep.mubr.f32.mxu0 0.0
  %7138 = vmatmul.mubr.f32.gmra.mrb[0].mxu0 %v7024
  %v7139 = vpop.f32.mrb[0].mxu0
  %v7140 = vadd.f32 %v7051, %v7139
  %v7141 = vpop.f32.mrb[0].mxu0
  %7142 = vmatprep.mubr.f32.mxu0 0.0
  %7143 = vmatmul.mubr.f32.gmra.mrb[0].mxu0 %v7025
  %v7144 = vpop.f32.mrb[0].mxu0
  %v7145 = vadd.f32 %v7051, %v7144
  %v7146 = vpop.f32.mrb[0].mxu0
  %7147 = vmatprep.mubr.f32.mxu0 0.0
  %7148 = vmatmul.mubr.f32.gmra.mrb[0].mxu0 %v7026
  %v7149 = vpop.f32.mrb[0].mxu0
  %v7150 = vadd.f32 %v7051, %v7149
  %v7151 = vpop.f32.mrb[0].mxu0
  %7152 = vmatprep.mubr.f32.mxu0 0.0
  %7153 = vmatmul.mubr.f32.gmra.mrb[0].mxu0 %v7027
  %v7154 = vpop.f32.mrb[0].mxu0
  %v7155 = vadd.f32 %v7051, %v7154
  %v7156 = vpop.f32.mrb[0].mxu0
  %7157 = vdwg.mxu0
  %vm7158 = vcmp.ge.f32.partialorder %v7120, 0.0
  %vm7159 = vcmp.ge.f32.partialorder %v7125, 0.0
  %vm7160 = vcmp.ge.f32.partialorder %v7130, 0.0
  %vm7161 = vcmp.ge.f32.partialorder %v7135, 0.0
  %vm7162 = vcmp.ge.f32.partialorder %v7140, 0.0
  %vm7163 = vcmp.ge.f32.partialorder %v7145, 0.0
  %vm7164 = vcmp.ge.f32.partialorder %v7150, 0.0
  %vm7165 = vcmp.ge.f32.partialorder %v7155, 0.0
  %v7166 = vmul.f32 %v7120, 0.01
  %v7167 = vmul.f32 %v7125, 0.01
  %v7168 = vmul.f32 %v7130, 0.01
  %v7169 = vmul.f32 %v7135, 0.01
  %v7170 = vmul.f32 %v7140, 0.01
  %v7171 = vmul.f32 %v7145, 0.01
  %v7172 = vmul.f32 %v7150, 0.01
  %v7173 = vmul.f32 %v7155, 0.01
  %v7174 = vsel %vm7158, %v7120, %v7166
  %v7175 = vsel %vm7159, %v7125, %v7167
  %v7176 = vsel %vm7160, %v7130, %v7168
  %v7177 = vsel %vm7161, %v7135, %v7169
  %v7178 = vsel %vm7162, %v7140, %v7170
  %v7179 = vsel %vm7163, %v7145, %v7171
  %v7180 = vsel %vm7164, %v7150, %v7172
  %v7181 = vsel %vm7165, %v7155, %v7173
  %7182 = vmatprep.subr.mxu0 0.0
  %7183 = vmatpush1.msra.mxu0 %v7174
  %7184 = vmatprep.subr.mxu0 0.0
  %7185 = vmatpush1.msra.mxu0 %v7175
  %7186 = vmatprep.subr.mxu0 0.0
  %7187 = vmatpush1.msra.mxu0 %v7176
  %7188 = vmatprep.subr.mxu0 0.0
  %7189 = vmatpush1.msra.mxu0 %v7177
  %7190 = vmatprep.subr.mxu0 0.0
  %7191 = vmatpush1.msra.mxu0 %v7178
  %7192 = vmatprep.subr.mxu0 0.0
  %7193 = vmatpush1.msra.mxu0 %v7179
  %7194 = vmatprep.subr.mxu0 0.0
  %7195 = vmatpush1.msra.mxu0 %v7180
  %7196 = vmatprep.subr.mxu0 0.0
  %7197 = vmatpush1.msra.mxu0 %v7181
  %7198 = vmatprep.subr.mxu0 0.0
  %7199 = vmatpush1.msra.mxu0 0.0
  %7200 = vmatprep.subr.mxu0 0.0
  %7201 = vmatpush1.msra.mxu0 0.0
  %7202 = vmatprep.subr.mxu0 0.0
  %7203 = vmatpush1.msra.mxu0 0.0
  %7204 = vmatprep.subr.mxu0 0.0
  %7205 = vmatpush1.msra.mxu0 0.0
  %7206 = vmatprep.subr.mxu0 0.0
  %7207 = vmatpush1.msra.mxu0 0.0
  %7208 = vmatprep.subr.mxu0 0.0
  %7209 = vmatpush1.msra.mxu0 0.0
  %7210 = vmatprep.subr.mxu0 0.0
  %7211 = vmatpush1.msra.mxu0 0.0
  %7212 = vmatprep.subr.mxu0 0.0
  %7213 = vmatpush1.msra.mxu0 0.0
  %7214 = vmatprep.subr.mxu0 0.0
  %7215 = vmatpush1.msra.mxu0 0.0
  %7216 = vmatprep.subr.mxu0 0.0
  %7217 = vmatpush1.msra.mxu0 0.0
  %7218 = vmatprep.subr.mxu0 0.0
  %7219 = vmatpush1.msra.mxu0 0.0
  %7220 = vmatprep.subr.mxu0 0.0
  %7221 = vmatpush1.msra.mxu0 0.0
  %7222 = vmatprep.subr.mxu0 0.0
  %7223 = vmatpush1.msra.mxu0 0.0
  %7224 = vmatprep.subr.mxu0 0.0
  %7225 = vmatpush1.msra.mxu0 0.0
  %7226 = vmatprep.subr.mxu0 0.0
  %7227 = vmatpush1.msra.mxu0 0.0
  %7228 = vmatprep.subr.mxu0 0.0
  %7229 = vmatpush1.msra.mxu0 0.0
  %7230 = vmatprep.subr.mxu0 0.0
  %7231 = vmatpush1.msra.mxu0 0.0
  %7232 = vmatprep.subr.mxu0 0.0
  %7233 = vmatpush1.msra.mxu0 0.0
  %7234 = vmatprep.subr.mxu0 0.0
  %7235 = vmatpush1.msra.mxu0 0.0
  %7236 = vmatprep.subr.mxu0 0.0
  %7237 = vmatpush1.msra.mxu0 0.0
  %7238 = vmatprep.subr.mxu0 0.0
  %7239 = vmatpush1.msra.mxu0 0.0
  %7240 = vmatprep.subr.mxu0 0.0
  %7241 = vmatpush1.msra.mxu0 0.0
  %7242 = vmatprep.subr.mxu0 0.0
  %7243 = vmatpush1.msra.mxu0 0.0
  %7244 = vmatprep.subr.mxu0 0.0
  %7245 = vmatpush1.msra.mxu0 0.0
  %7246 = vmatprep.mubr.f32.mxu0 0.0
  %7247 = vmatmul.mubr.f32.gmra.mrb[0].mxu0 %v63
  %v7248 = vpop.f32.mrb[0].mxu0
  %v7249 = vadd.f32 %v53, %v7248
  %v7250 = vpop.f32.mrb[0].mxu0
  %7251 = vmatprep.mubr.f32.mxu0 0.0
  %7252 = vmatmul.mubr.f32.gmra.mrb[0].mxu0 %v66
  %v7253 = vpop.f32.mrb[0].mxu0
  %v7254 = vadd.f32 %v54, %v7253
  %v7255 = vpop.f32.mrb[0].mxu0
  %7256 = vmatprep.mubr.f32.mxu0 0.0
  %7257 = vmatmul.mubr.f32.gmra.mrb[0].mxu0 %v69
  %v7258 = vpop.f32.mrb[0].mxu0
  %v7259 = vadd.f32 %v55, %v7258
  %v7260 = vpop.f32.mrb[0].mxu0
  %7261 = vmatprep.mubr.f32.mxu0 0.0
  %7262 = vmatmul.mubr.f32.gmra.mrb[0].mxu0 %v72
  %v7263 = vpop.f32.mrb[0].mxu0
  %v7264 = vadd.f32 %v56, %v7263
  %v7265 = vpop.f32.mrb[0].mxu0
  %7266 = vmatprep.mubr.f32.mxu0 0.0
  %7267 = vmatmul.mubr.f32.gmra.mrb[0].mxu0 %v75
  %v7268 = vpop.f32.mrb[0].mxu0
  %v7269 = vadd.f32 %v57, %v7268
  %v7270 = vpop.f32.mrb[0].mxu0
  %7271 = vmatprep.mubr.f32.mxu0 0.0
  %7272 = vmatmul.mubr.f32.gmra.mrb[0].mxu0 %v78
  %v7273 = vpop.f32.mrb[0].mxu0
  %v7274 = vadd.f32 %v58, %v7273
  %v7275 = vpop.f32.mrb[0].mxu0
  %7276 = vmatprep.mubr.f32.mxu0 0.0
  %7277 = vmatmul.mubr.f32.gmra.mrb[0].mxu0 %v81
  %v7278 = vpop.f32.mrb[0].mxu0
  %v7279 = vadd.f32 %v59, %v7278
  %v7280 = vpop.f32.mrb[0].mxu0
  %7281 = vmatprep.mubr.f32.mxu0 0.0
  %7282 = vmatmul.mubr.f32.gmra.mrb[0].mxu0 %v84
  %v7283 = vpop.f32.mrb[0].mxu0
  %v7284 = vadd.f32 %v60, %v7283
  %v7285 = vpop.f32.mrb[0].mxu0
  %7286 = vdwg.mxu0
  %v7287 = vmax.f32 %v29, %v7249
  %v7288 = vmax.f32 %v30, %v7254
  %v7289 = vmax.f32 %v31, %v7259
  %v7290 = vmax.f32 %v32, %v7264
  %v7291 = vmax.f32 %v33, %v7269
  %v7292 = vmax.f32 %v34, %v7274
  %v7293 = vmax.f32 %v35, %v7279
  %v7294 = vmax.f32 %v36, %v7284
  %7295 = vmatprep.subr.mxu0 0.0
  %7296 = vmatpush1.msra.mxu0 %v7174
  %7297 = vmatprep.subr.mxu0 0.0
  %7298 = vmatpush1.msra.mxu0 %v7175
  %7299 = vmatprep.subr.mxu0 0.0
  %7300 = vmatpush1.msra.mxu0 %v7176
  %7301 = vmatprep.subr.mxu0 0.0
  %7302 = vmatpush1.msra.mxu0 %v7177
  %7303 = vmatprep.subr.mxu0 0.0
  %7304 = vmatpush1.msra.mxu0 %v7178
  %7305 = vmatprep.subr.mxu0 0.0
  %7306 = vmatpush1.msra.mxu0 %v7179
  %7307 = vmatprep.subr.mxu0 0.0
  %7308 = vmatpush1.msra.mxu0 %v7180
  %7309 = vmatprep.subr.mxu0 0.0
  %7310 = vmatpush1.msra.mxu0 %v7181
  %7311 = vmatprep.subr.mxu0 0.0
  %7312 = vmatpush1.msra.mxu0 0.0
  %7313 = vmatprep.subr.mxu0 0.0
  %7314 = vmatpush1.msra.mxu0 0.0
  %7315 = vmatprep.subr.mxu0 0.0
  %7316 = vmatpush1.msra.mxu0 0.0
  %7317 = vmatprep.subr.mxu0 0.0
  %7318 = vmatpush1.msra.mxu0 0.0
  %7319 = vmatprep.subr.mxu0 0.0
  %7320 = vmatpush1.msra.mxu0 0.0
  %7321 = vmatprep.subr.mxu0 0.0
  %7322 = vmatpush1.msra.mxu0 0.0
  %7323 = vmatprep.subr.mxu0 0.0
  %7324 = vmatpush1.msra.mxu0 0.0
  %7325 = vmatprep.subr.mxu0 0.0
  %7326 = vmatpush1.msra.mxu0 0.0
  %7327 = vmatprep.subr.mxu0 0.0
  %7328 = vmatpush1.msra.mxu0 0.0
  %7329 = vmatprep.subr.mxu0 0.0
  %7330 = vmatpush1.msra.mxu0 0.0
  %7331 = vmatprep.subr.mxu0 0.0
  %7332 = vmatpush1.msra.mxu0 0.0
  %7333 = vmatprep.subr.mxu0 0.0
  %7334 = vmatpush1.msra.mxu0 0.0
  %7335 = vmatprep.subr.mxu0 0.0
  %7336 = vmatpush1.msra.mxu0 0.0
  %7337 = vmatprep.subr.mxu0 0.0
  %7338 = vmatpush1.msra.mxu0 0.0
  %7339 = vmatprep.subr.mxu0 0.0
  %7340 = vmatpush1.msra.mxu0 0.0
  %7341 = vmatprep.subr.mxu0 0.0
  %7342 = vmatpush1.msra.mxu0 0.0
  %7343 = vmatprep.subr.mxu0 0.0
  %7344 = vmatpush1.msra.mxu0 0.0
  %7345 = vmatprep.subr.mxu0 0.0
  %7346 = vmatpush1.msra.mxu0 0.0
  %7347 = vmatprep.subr.mxu0 0.0
  %7348 = vmatpush1.msra.mxu0 0.0
  %7349 = vmatprep.subr.mxu0 0.0
  %7350 = vmatpush1.msra.mxu0 0.0
  %7351 = vmatprep.subr.mxu0 0.0
  %7352 = vmatpush1.msra.mxu0 0.0
  %7353 = vmatprep.subr.mxu0 0.0
  %7354 = vmatpush1.msra.mxu0 0.0
  %7355 = vmatprep.subr.mxu0 0.0
  %7356 = vmatpush1.msra.mxu0 0.0
  %7357 = vmatprep.subr.mxu0 0.0
  %7358 = vmatpush1.msra.mxu0 0.0
  %7359 = vmatprep.mubr.f32.mxu0 0.0
  %7360 = vmatmul.mubr.f32.gmra.mrb[0].mxu0 %v218
  %v7361 = vpop.f32.mrb[0].mxu0
  %v7362 = vadd.f32 %v209, %v7361
  %v7363 = vpop.f32.mrb[0].mxu0
  %7364 = vmatprep.mubr.f32.mxu0 0.0
  %7365 = vmatmul.mubr.f32.gmra.mrb[0].mxu0 %v221
  %v7366 = vpop.f32.mrb[0].mxu0
  %v7367 = vadd.f32 %v210, %v7366
  %v7368 = vpop.f32.mrb[0].mxu0
  %7369 = vmatprep.mubr.f32.mxu0 0.0
  %7370 = vmatmul.mubr.f32.gmra.mrb[0].mxu0 %v224
  %v7371 = vpop.f32.mrb[0].mxu0
  %v7372 = vadd.f32 %v211, %v7371
  %v7373 = vpop.f32.mrb[0].mxu0
  %7374 = vmatprep.mubr.f32.mxu0 0.0
  %7375 = vmatmul.mubr.f32.gmra.mrb[0].mxu0 %v227
  %v7376 = vpop.f32.mrb[0].mxu0
  %v7377 = vadd.f32 %v212, %v7376
  %v7378 = vpop.f32.mrb[0].mxu0
  %7379 = vmatprep.mubr.f32.mxu0 0.0
  %7380 = vmatmul.mubr.f32.gmra.mrb[0].mxu0 %v230
  %v7381 = vpop.f32.mrb[0].mxu0
  %v7382 = vadd.f32 %v213, %v7381
  %v7383 = vpop.f32.mrb[0].mxu0
  %7384 = vmatprep.mubr.f32.mxu0 0.0
  %7385 = vmatmul.mubr.f32.gmra.mrb[0].mxu0 %v233
  %v7386 = vpop.f32.mrb[0].mxu0
  %v7387 = vadd.f32 %v214, %v7386
  %v7388 = vpop.f32.mrb[0].mxu0
  %7389 = vmatprep.mubr.f32.mxu0 0.0
  %7390 = vmatmul.mubr.f32.gmra.mrb[0].mxu0 %v236
  %v7391 = vpop.f32.mrb[0].mxu0
  %v7392 = vadd.f32 %v215, %v7391
  %v7393 = vpop.f32.mrb[0].mxu0
  %7394 = vmatprep.mubr.f32.mxu0 0.0
  %7395 = vmatmul.mubr.f32.gmra.mrb[0].mxu0 %v239
  %v7396 = vpop.f32.mrb[0].mxu0
  %v7397 = vadd.f32 %v216, %v7396
  %v7398 = vpop.f32.mrb[0].mxu0
  %7399 = vdwg.mxu0
  %v7400 = vmax.f32 %v7287, %v7362
  %v7401 = vmax.f32 %v7288, %v7367
  %v7402 = vmax.f32 %v7289, %v7372
  %v7403 = vmax.f32 %v7290, %v7377
  %v7404 = vmax.f32 %v7291, %v7382
  %v7405 = vmax.f32 %v7292, %v7387
  %v7406 = vmax.f32 %v7293, %v7392
  %v7407 = vmax.f32 %v7294, %v7397
  %7408 = vmatprep.subr.mxu0 0.0
  %7409 = vmatpush1.msra.mxu0 %v7174
  %7410 = vmatprep.subr.mxu0 0.0
  %7411 = vmatpush1.msra.mxu0 %v7175
  %7412 = vmatprep.subr.mxu0 0.0
  %7413 = vmatpush1.msra.mxu0 %v7176
  %7414 = vmatprep.subr.mxu0 0.0
  %7415 = vmatpush1.msra.mxu0 %v7177
  %7416 = vmatprep.subr.mxu0 0.0
  %7417 = vmatpush1.msra.mxu0 %v7178
  %7418 = vmatprep.subr.mxu0 0.0
  %7419 = vmatpush1.msra.mxu0 %v7179
  %7420 = vmatprep.subr.mxu0 0.0
  %7421 = vmatpush1.msra.mxu0 %v7180
  %7422 = vmatprep.subr.mxu0 0.0
  %7423 = vmatpush1.msra.mxu0 %v7181
  %7424 = vmatprep.subr.mxu0 0.0
  %7425 = vmatpush1.msra.mxu0 0.0
  %7426 = vmatprep.subr.mxu0 0.0
  %7427 = vmatpush1.msra.mxu0 0.0
  %7428 = vmatprep.subr.mxu0 0.0
  %7429 = vmatpush1.msra.mxu0 0.0
  %7430 = vmatprep.subr.mxu0 0.0
  %7431 = vmatpush1.msra.mxu0 0.0
  %7432 = vmatprep.subr.mxu0 0.0
  %7433 = vmatpush1.msra.mxu0 0.0
  %7434 = vmatprep.subr.mxu0 0.0
  %7435 = vmatpush1.msra.mxu0 0.0
  %7436 = vmatprep.subr.mxu0 0.0
  %7437 = vmatpush1.msra.mxu0 0.0
  %7438 = vmatprep.subr.mxu0 0.0
  %7439 = vmatpush1.msra.mxu0 0.0
  %7440 = vmatprep.subr.mxu0 0.0
  %7441 = vmatpush1.msra.mxu0 0.0
  %7442 = vmatprep.subr.mxu0 0.0
  %7443 = vmatpush1.msra.mxu0 0.0
  %7444 = vmatprep.subr.mxu0 0.0
  %7445 = vmatpush1.msra.mxu0 0.0
  %7446 = vmatprep.subr.mxu0 0.0
  %7447 = vmatpush1.msra.mxu0 0.0
  %7448 = vmatprep.subr.mxu0 0.0
  %7449 = vmatpush1.msra.mxu0 0.0
  %7450 = vmatprep.subr.mxu0 0.0
  %7451 = vmatpush1.msra.mxu0 0.0
  %7452 = vmatprep.subr.mxu0 0.0
  %7453 = vmatpush1.msra.mxu0 0.0
  %7454 = vmatprep.subr.mxu0 0.0
  %7455 = vmatpush1.msra.mxu0 0.0
  %7456 = vmatprep.subr.mxu0 0.0
  %7457 = vmatpush1.msra.mxu0 0.0
  %7458 = vmatprep.subr.mxu0 0.0
  %7459 = vmatpush1.msra.mxu0 0.0
  %7460 = vmatprep.subr.mxu0 0.0
  %7461 = vmatpush1.msra.mxu0 0.0
  %7462 = vmatprep.subr.mxu0 0.0
  %7463 = vmatpush1.msra.mxu0 0.0
  %7464 = vmatprep.subr.mxu0 0.0
  %7465 = vmatpush1.msra.mxu0 0.0
  %7466 = vmatprep.subr.mxu0 0.0
  %7467 = vmatpush1.msra.mxu0 0.0
  %7468 = vmatprep.subr.mxu0 0.0
  %7469 = vmatpush1.msra.mxu0 0.0
  %7470 = vmatprep.subr.mxu0 0.0
  %7471 = vmatpush1.msra.mxu0 0.0
  %7472 = vmatprep.mubr.f32.mxu0 0.0
  %7473 = vmatmul.mubr.f32.gmra.mrb[0].mxu0 %v373
  %v7474 = vpop.f32.mrb[0].mxu0
  %v7475 = vadd.f32 %v364, %v7474
  %v7476 = vpop.f32.mrb[0].mxu0
  %7477 = vmatprep.mubr.f32.mxu0 0.0
  %7478 = vmatmul.mubr.f32.gmra.mrb[0].mxu0 %v376
  %v7479 = vpop.f32.mrb[0].mxu0
  %v7480 = vadd.f32 %v365, %v7479
  %v7481 = vpop.f32.mrb[0].mxu0
  %7482 = vmatprep.mubr.f32.mxu0 0.0
  %7483 = vmatmul.mubr.f32.gmra.mrb[0].mxu0 %v379
  %v7484 = vpop.f32.mrb[0].mxu0
  %v7485 = vadd.f32 %v366, %v7484
  %v7486 = vpop.f32.mrb[0].mxu0
  %7487 = vmatprep.mubr.f32.mxu0 0.0
  %7488 = vmatmul.mubr.f32.gmra.mrb[0].mxu0 %v382
  %v7489 = vpop.f32.mrb[0].mxu0
  %v7490 = vadd.f32 %v367, %v7489
  %v7491 = vpop.f32.mrb[0].mxu0
  %7492 = vmatprep.mubr.f32.mxu0 0.0
  %7493 = vmatmul.mubr.f32.gmra.mrb[0].mxu0 %v385
  %v7494 = vpop.f32.mrb[0].mxu0
  %v7495 = vadd.f32 %v368, %v7494
  %v7496 = vpop.f32.mrb[0].mxu0
  %7497 = vmatprep.mubr.f32.mxu0 0.0
  %7498 = vmatmul.mubr.f32.gmra.mrb[0].mxu0 %v388
  %v7499 = vpop.f32.mrb[0].mxu0
  %v7500 = vadd.f32 %v369, %v7499
  %v7501 = vpop.f32.mrb[0].mxu0
  %7502 = vmatprep.mubr.f32.mxu0 0.0
  %7503 = vmatmul.mubr.f32.gmra.mrb[0].mxu0 %v391
  %v7504 = vpop.f32.mrb[0].mxu0
  %v7505 = vadd.f32 %v370, %v7504
  %v7506 = vpop.f32.mrb[0].mxu0
  %7507 = vmatprep.mubr.f32.mxu0 0.0
  %7508 = vmatmul.mubr.f32.gmra.mrb[0].mxu0 %v394
  %v7509 = vpop.f32.mrb[0].mxu0
  %v7510 = vadd.f32 %v371, %v7509
  %v7511 = vpop.f32.mrb[0].mxu0
  %7512 = vdwg.mxu0
  %v7513 = vmax.f32 %v7400, %v7475
  %v7514 = vmax.f32 %v7401, %v7480
  %v7515 = vmax.f32 %v7402, %v7485
  %v7516 = vmax.f32 %v7403, %v7490
  %v7517 = vmax.f32 %v7404, %v7495
  %v7518 = vmax.f32 %v7405, %v7500
  %v7519 = vmax.f32 %v7406, %v7505
  %v7520 = vmax.f32 %v7407, %v7510
  %v7521 = vadd.f32 %v7174, %v7513
  %v7522 = vadd.f32 %v7175, %v7514
  %v7523 = vadd.f32 %v7176, %v7515
  %v7524 = vadd.f32 %v7177, %v7516
  %v7525 = vadd.f32 %v7178, %v7517
  %v7526 = vadd.f32 %v7179, %v7518
  %v7527 = vadd.f32 %v7180, %v7519
  %v7528 = vadd.f32 %v7181, %v7520
  %s7529 = scalar_lea.vmem %s4, 1792
  %v7530 = vld [vmem:[%s7529] sm:$0xff]
  %v7531 = vld [vmem:[%s7529 + $0x8] sm:$0xff]
  %v7532 = vld [vmem:[%s7529 + $0x10] sm:$0xff]
  %v7533 = vld [vmem:[%s7529 + $0x18] sm:$0xff]
  %v7534 = vld [vmem:[%s7529 + $0x20] sm:$0xff]
  %v7535 = vld [vmem:[%s7529 + $0x28] sm:$0xff]
  %v7536 = vld [vmem:[%s7529 + $0x30] sm:$0xff]
  %v7537 = vld [vmem:[%s7529 + $0x38] sm:$0xff]
  %v7538 = vld [vmem:[%s7529 + $0x40] sm:$0xff]
  %v7539 = vld [vmem:[%s7529 + $0x48] sm:$0xff]
  %v7540 = vld [vmem:[%s7529 + $0x50] sm:$0xff]
  %v7541 = vld [vmem:[%s7529 + $0x58] sm:$0xff]
  %v7542 = vld [vmem:[%s7529 + $0x60] sm:$0xff]
  %v7543 = vld [vmem:[%s7529 + $0x68] sm:$0xff]
  %v7544 = vld [vmem:[%s7529 + $0x70] sm:$0xff]
  %v7545 = vld [vmem:[%s7529 + $0x78] sm:$0xff]
  %s7546 = scalar_lea.vmem %s5, 14
  %v7547 = vld [vmem:[%s7546] sm:$0x1]
  %v7549 = vlaneseq
  %v7550 = vshrl.u32 %v7549, 7
  %v7551 = vsub.s32 0, %v7550
  %v7552 = vrot.slane %v7547, %v7551
  %7554 = vmatprep.subr.mxu0 0.0
  %7555 = vmatpush1.msra.mxu0 %v7530
  %7556 = vmatprep.subr.mxu0 0.0
  %7557 = vmatpush1.msra.mxu0 %v7531
  %7558 = vmatprep.subr.mxu0 0.0
  %7559 = vmatpush1.msra.mxu0 %v7532
  %7560 = vmatprep.subr.mxu0 0.0
  %7561 = vmatpush1.msra.mxu0 %v7533
  %7562 = vmatprep.subr.mxu0 0.0
  %7563 = vmatpush1.msra.mxu0 %v7534
  %7564 = vmatprep.subr.mxu0 0.0
  %7565 = vmatpush1.msra.mxu0 %v7535
  %7566 = vmatprep.subr.mxu0 0.0
  %7567 = vmatpush1.msra.mxu0 %v7536
  %7568 = vmatprep.subr.mxu0 0.0
  %7569 = vmatpush1.msra.mxu0 %v7537
  %7570 = vmatprep.subr.mxu0 0.0
  %7571 = vmatpush1.msra.mxu0 %v7538
  %7572 = vmatprep.subr.mxu0 0.0
  %7573 = vmatpush1.msra.mxu0 %v7539
  %7574 = vmatprep.subr.mxu0 0.0
  %7575 = vmatpush1.msra.mxu0 %v7540
  %7576 = vmatprep.subr.mxu0 0.0
  %7577 = vmatpush1.msra.mxu0 %v7541
  %7578 = vmatprep.subr.mxu0 0.0
  %7579 = vmatpush1.msra.mxu0 %v7542
  %7580 = vmatprep.subr.mxu0 0.0
  %7581 = vmatpush1.msra.mxu0 %v7543
  %7582 = vmatprep.subr.mxu0 0.0
  %7583 = vmatpush1.msra.mxu0 %v7544
  %7584 = vmatprep.subr.mxu0 0.0
  %7585 = vmatpush1.msra.mxu0 %v7545
  %7586 = vmatprep.subr.mxu0 0.0
  %7587 = vmatpush1.msra.mxu0 0.0
  %7588 = vmatprep.subr.mxu0 0.0
  %7589 = vmatpush1.msra.mxu0 0.0
  %7590 = vmatprep.subr.mxu0 0.0
  %7591 = vmatpush1.msra.mxu0 0.0
  %7592 = vmatprep.subr.mxu0 0.0
  %7593 = vmatpush1.msra.mxu0 0.0
  %7594 = vmatprep.subr.mxu0 0.0
  %7595 = vmatpush1.msra.mxu0 0.0
  %7596 = vmatprep.subr.mxu0 0.0
  %7597 = vmatpush1.msra.mxu0 0.0
  %7598 = vmatprep.subr.mxu0 0.0
  %7599 = vmatpush1.msra.mxu0 0.0
  %7600 = vmatprep.subr.mxu0 0.0
  %7601 = vmatpush1.msra.mxu0 0.0
  %7602 = vmatprep.subr.mxu0 0.0
  %7603 = vmatpush1.msra.mxu0 0.0
  %7604 = vmatprep.subr.mxu0 0.0
  %7605 = vmatpush1.msra.mxu0 0.0
  %7606 = vmatprep.subr.mxu0 0.0
  %7607 = vmatpush1.msra.mxu0 0.0
  %7608 = vmatprep.subr.mxu0 0.0
  %7609 = vmatpush1.msra.mxu0 0.0
  %7610 = vmatprep.subr.mxu0 0.0
  %7611 = vmatpush1.msra.mxu0 0.0
  %7612 = vmatprep.subr.mxu0 0.0
  %7613 = vmatpush1.msra.mxu0 0.0
  %7614 = vmatprep.subr.mxu0 0.0
  %7615 = vmatpush1.msra.mxu0 0.0
  %7616 = vmatprep.subr.mxu0 0.0
  %7617 = vmatpush1.msra.mxu0 0.0
  %7618 = vmatprep.mubr.f32.mxu0 0.0
  %7619 = vmatmul.mubr.f32.gmra.mrb[0].mxu0 %v7521
  %v7620 = vpop.f32.mrb[0].mxu0
  %v7621 = vadd.f32 %v7552, %v7620
  %v7622 = vpop.f32.mrb[0].mxu0
  %7623 = vmatprep.mubr.f32.mxu0 0.0
  %7624 = vmatmul.mubr.f32.gmra.mrb[0].mxu0 %v7522
  %v7625 = vpop.f32.mrb[0].mxu0
  %v7626 = vadd.f32 %v7552, %v7625
  %v7627 = vpop.f32.mrb[0].mxu0
  %7628 = vmatprep.mubr.f32.mxu0 0.0
  %7629 = vmatmul.mubr.f32.gmra.mrb[0].mxu0 %v7523
  %v7630 = vpop.f32.mrb[0].mxu0
  %v7631 = vadd.f32 %v7552, %v7630
  %v7632 = vpop.f32.mrb[0].mxu0
  %7633 = vmatprep.mubr.f32.mxu0 0.0
  %7634 = vmatmul.mubr.f32.gmra.mrb[0].mxu0 %v7524
  %v7635 = vpop.f32.mrb[0].mxu0
  %v7636 = vadd.f32 %v7552, %v7635
  %v7637 = vpop.f32.mrb[0].mxu0
  %7638 = vmatprep.mubr.f32.mxu0 0.0
  %7639 = vmatmul.mubr.f32.gmra.mrb[0].mxu0 %v7525
  %v7640 = vpop.f32.mrb[0].mxu0
  %v7641 = vadd.f32 %v7552, %v7640
  %v7642 = vpop.f32.mrb[0].mxu0
  %7643 = vmatprep.mubr.f32.mxu0 0.0
  %7644 = vmatmul.mubr.f32.gmra.mrb[0].mxu0 %v7526
  %v7645 = vpop.f32.mrb[0].mxu0
  %v7646 = vadd.f32 %v7552, %v7645
  %v7647 = vpop.f32.mrb[0].mxu0
  %7648 = vmatprep.mubr.f32.mxu0 0.0
  %7649 = vmatmul.mubr.f32.gmra.mrb[0].mxu0 %v7527
  %v7650 = vpop.f32.mrb[0].mxu0
  %v7651 = vadd.f32 %v7552, %v7650
  %v7652 = vpop.f32.mrb[0].mxu0
  %7653 = vmatprep.mubr.f32.mxu0 0.0
  %7654 = vmatmul.mubr.f32.gmra.mrb[0].mxu0 %v7528
  %v7655 = vpop.f32.mrb[0].mxu0
  %v7656 = vadd.f32 %v7552, %v7655
  %v7657 = vpop.f32.mrb[0].mxu0
  %7658 = vdwg.mxu0
  %vm7659 = vcmp.ge.f32.partialorder %v7621, 0.0
  %vm7660 = vcmp.ge.f32.partialorder %v7626, 0.0
  %vm7661 = vcmp.ge.f32.partialorder %v7631, 0.0
  %vm7662 = vcmp.ge.f32.partialorder %v7636, 0.0
  %vm7663 = vcmp.ge.f32.partialorder %v7641, 0.0
  %vm7664 = vcmp.ge.f32.partialorder %v7646, 0.0
  %vm7665 = vcmp.ge.f32.partialorder %v7651, 0.0
  %vm7666 = vcmp.ge.f32.partialorder %v7656, 0.0
  %v7667 = vmul.f32 %v7621, 0.01
  %v7668 = vmul.f32 %v7626, 0.01
  %v7669 = vmul.f32 %v7631, 0.01
  %v7670 = vmul.f32 %v7636, 0.01
  %v7671 = vmul.f32 %v7641, 0.01
  %v7672 = vmul.f32 %v7646, 0.01
  %v7673 = vmul.f32 %v7651, 0.01
  %v7674 = vmul.f32 %v7656, 0.01
  %v7675 = vsel %vm7659, %v7621, %v7667
  %v7676 = vsel %vm7660, %v7626, %v7668
  %v7677 = vsel %vm7661, %v7631, %v7669
  %v7678 = vsel %vm7662, %v7636, %v7670
  %v7679 = vsel %vm7663, %v7641, %v7671
  %v7680 = vsel %vm7664, %v7646, %v7672
  %v7681 = vsel %vm7665, %v7651, %v7673
  %v7682 = vsel %vm7666, %v7656, %v7674
  %7683 = vmatprep.subr.mxu0 0.0
  %7684 = vmatpush1.msra.mxu0 %v7675
  %7685 = vmatprep.subr.mxu0 0.0
  %7686 = vmatpush1.msra.mxu0 %v7676
  %7687 = vmatprep.subr.mxu0 0.0
  %7688 = vmatpush1.msra.mxu0 %v7677
  %7689 = vmatprep.subr.mxu0 0.0
  %7690 = vmatpush1.msra.mxu0 %v7678
  %7691 = vmatprep.subr.mxu0 0.0
  %7692 = vmatpush1.msra.mxu0 %v7679
  %7693 = vmatprep.subr.mxu0 0.0
  %7694 = vmatpush1.msra.mxu0 %v7680
  %7695 = vmatprep.subr.mxu0 0.0
  %7696 = vmatpush1.msra.mxu0 %v7681
  %7697 = vmatprep.subr.mxu0 0.0
  %7698 = vmatpush1.msra.mxu0 %v7682
  %7699 = vmatprep.subr.mxu0 0.0
  %7700 = vmatpush1.msra.mxu0 0.0
  %7701 = vmatprep.subr.mxu0 0.0
  %7702 = vmatpush1.msra.mxu0 0.0
  %7703 = vmatprep.subr.mxu0 0.0
  %7704 = vmatpush1.msra.mxu0 0.0
  %7705 = vmatprep.subr.mxu0 0.0
  %7706 = vmatpush1.msra.mxu0 0.0
  %7707 = vmatprep.subr.mxu0 0.0
  %7708 = vmatpush1.msra.mxu0 0.0
  %7709 = vmatprep.subr.mxu0 0.0
  %7710 = vmatpush1.msra.mxu0 0.0
  %7711 = vmatprep.subr.mxu0 0.0
  %7712 = vmatpush1.msra.mxu0 0.0
  %7713 = vmatprep.subr.mxu0 0.0
  %7714 = vmatpush1.msra.mxu0 0.0
  %7715 = vmatprep.subr.mxu0 0.0
  %7716 = vmatpush1.msra.mxu0 0.0
  %7717 = vmatprep.subr.mxu0 0.0
  %7718 = vmatpush1.msra.mxu0 0.0
  %7719 = vmatprep.subr.mxu0 0.0
  %7720 = vmatpush1.msra.mxu0 0.0
  %7721 = vmatprep.subr.mxu0 0.0
  %7722 = vmatpush1.msra.mxu0 0.0
  %7723 = vmatprep.subr.mxu0 0.0
  %7724 = vmatpush1.msra.mxu0 0.0
  %7725 = vmatprep.subr.mxu0 0.0
  %7726 = vmatpush1.msra.mxu0 0.0
  %7727 = vmatprep.subr.mxu0 0.0
  %7728 = vmatpush1.msra.mxu0 0.0
  %7729 = vmatprep.subr.mxu0 0.0
  %7730 = vmatpush1.msra.mxu0 0.0
  %7731 = vmatprep.subr.mxu0 0.0
  %7732 = vmatpush1.msra.mxu0 0.0
  %7733 = vmatprep.subr.mxu0 0.0
  %7734 = vmatpush1.msra.mxu0 0.0
  %7735 = vmatprep.subr.mxu0 0.0
  %7736 = vmatpush1.msra.mxu0 0.0
  %7737 = vmatprep.subr.mxu0 0.0
  %7738 = vmatpush1.msra.mxu0 0.0
  %7739 = vmatprep.subr.mxu0 0.0
  %7740 = vmatpush1.msra.mxu0 0.0
  %7741 = vmatprep.subr.mxu0 0.0
  %7742 = vmatpush1.msra.mxu0 0.0
  %7743 = vmatprep.subr.mxu0 0.0
  %7744 = vmatpush1.msra.mxu0 0.0
  %7745 = vmatprep.subr.mxu0 0.0
  %7746 = vmatpush1.msra.mxu0 0.0
  %7747 = vmatprep.mubr.f32.mxu0 0.0
  %7748 = vmatmul.mubr.f32.gmra.mrb[0].mxu0 %v63
  %v7749 = vpop.f32.mrb[0].mxu0
  %v7750 = vadd.f32 %v53, %v7749
  %v7751 = vpop.f32.mrb[0].mxu0
  %7752 = vmatprep.mubr.f32.mxu0 0.0
  %7753 = vmatmul.mubr.f32.gmra.mrb[0].mxu0 %v66
  %v7754 = vpop.f32.mrb[0].mxu0
  %v7755 = vadd.f32 %v54, %v7754
  %v7756 = vpop.f32.mrb[0].mxu0
  %7757 = vmatprep.mubr.f32.mxu0 0.0
  %7758 = vmatmul.mubr.f32.gmra.mrb[0].mxu0 %v69
  %v7759 = vpop.f32.mrb[0].mxu0
  %v7760 = vadd.f32 %v55, %v7759
  %v7761 = vpop.f32.mrb[0].mxu0
  %7762 = vmatprep.mubr.f32.mxu0 0.0
  %7763 = vmatmul.mubr.f32.gmra.mrb[0].mxu0 %v72
  %v7764 = vpop.f32.mrb[0].mxu0
  %v7765 = vadd.f32 %v56, %v7764
  %v7766 = vpop.f32.mrb[0].mxu0
  %7767 = vmatprep.mubr.f32.mxu0 0.0
  %7768 = vmatmul.mubr.f32.gmra.mrb[0].mxu0 %v75
  %v7769 = vpop.f32.mrb[0].mxu0
  %v7770 = vadd.f32 %v57, %v7769
  %v7771 = vpop.f32.mrb[0].mxu0
  %7772 = vmatprep.mubr.f32.mxu0 0.0
  %7773 = vmatmul.mubr.f32.gmra.mrb[0].mxu0 %v78
  %v7774 = vpop.f32.mrb[0].mxu0
  %v7775 = vadd.f32 %v58, %v7774
  %v7776 = vpop.f32.mrb[0].mxu0
  %7777 = vmatprep.mubr.f32.mxu0 0.0
  %7778 = vmatmul.mubr.f32.gmra.mrb[0].mxu0 %v81
  %v7779 = vpop.f32.mrb[0].mxu0
  %v7780 = vadd.f32 %v59, %v7779
  %v7781 = vpop.f32.mrb[0].mxu0
  %7782 = vmatprep.mubr.f32.mxu0 0.0
  %7783 = vmatmul.mubr.f32.gmra.mrb[0].mxu0 %v84
  %v7784 = vpop.f32.mrb[0].mxu0
  %v7785 = vadd.f32 %v60, %v7784
  %v7786 = vpop.f32.mrb[0].mxu0
  %7787 = vdwg.mxu0
  %v7788 = vmax.f32 %v29, %v7750
  %v7789 = vmax.f32 %v30, %v7755
  %v7790 = vmax.f32 %v31, %v7760
  %v7791 = vmax.f32 %v32, %v7765
  %v7792 = vmax.f32 %v33, %v7770
  %v7793 = vmax.f32 %v34, %v7775
  %v7794 = vmax.f32 %v35, %v7780
  %v7795 = vmax.f32 %v36, %v7785
  %7796 = vmatprep.subr.mxu0 0.0
  %7797 = vmatpush1.msra.mxu0 %v7675
  %7798 = vmatprep.subr.mxu0 0.0
  %7799 = vmatpush1.msra.mxu0 %v7676
  %7800 = vmatprep.subr.mxu0 0.0
  %7801 = vmatpush1.msra.mxu0 %v7677
  %7802 = vmatprep.subr.mxu0 0.0
  %7803 = vmatpush1.msra.mxu0 %v7678
  %7804 = vmatprep.subr.mxu0 0.0
  %7805 = vmatpush1.msra.mxu0 %v7679
  %7806 = vmatprep.subr.mxu0 0.0
  %7807 = vmatpush1.msra.mxu0 %v7680
  %7808 = vmatprep.subr.mxu0 0.0
  %7809 = vmatpush1.msra.mxu0 %v7681
  %7810 = vmatprep.subr.mxu0 0.0
  %7811 = vmatpush1.msra.mxu0 %v7682
  %7812 = vmatprep.subr.mxu0 0.0
  %7813 = vmatpush1.msra.mxu0 0.0
  %7814 = vmatprep.subr.mxu0 0.0
  %7815 = vmatpush1.msra.mxu0 0.0
  %7816 = vmatprep.subr.mxu0 0.0
  %7817 = vmatpush1.msra.mxu0 0.0
  %7818 = vmatprep.subr.mxu0 0.0
  %7819 = vmatpush1.msra.mxu0 0.0
  %7820 = vmatprep.subr.mxu0 0.0
  %7821 = vmatpush1.msra.mxu0 0.0
  %7822 = vmatprep.subr.mxu0 0.0
  %7823 = vmatpush1.msra.mxu0 0.0
  %7824 = vmatprep.subr.mxu0 0.0
  %7825 = vmatpush1.msra.mxu0 0.0
  %7826 = vmatprep.subr.mxu0 0.0
  %7827 = vmatpush1.msra.mxu0 0.0
  %7828 = vmatprep.subr.mxu0 0.0
  %7829 = vmatpush1.msra.mxu0 0.0
  %7830 = vmatprep.subr.mxu0 0.0
  %7831 = vmatpush1.msra.mxu0 0.0
  %7832 = vmatprep.subr.mxu0 0.0
  %7833 = vmatpush1.msra.mxu0 0.0
  %7834 = vmatprep.subr.mxu0 0.0
  %7835 = vmatpush1.msra.mxu0 0.0
  %7836 = vmatprep.subr.mxu0 0.0
  %7837 = vmatpush1.msra.mxu0 0.0
  %7838 = vmatprep.subr.mxu0 0.0
  %7839 = vmatpush1.msra.mxu0 0.0
  %7840 = vmatprep.subr.mxu0 0.0
  %7841 = vmatpush1.msra.mxu0 0.0
  %7842 = vmatprep.subr.mxu0 0.0
  %7843 = vmatpush1.msra.mxu0 0.0
  %7844 = vmatprep.subr.mxu0 0.0
  %7845 = vmatpush1.msra.mxu0 0.0
  %7846 = vmatprep.subr.mxu0 0.0
  %7847 = vmatpush1.msra.mxu0 0.0
  %7848 = vmatprep.subr.mxu0 0.0
  %7849 = vmatpush1.msra.mxu0 0.0
  %7850 = vmatprep.subr.mxu0 0.0
  %7851 = vmatpush1.msra.mxu0 0.0
  %7852 = vmatprep.subr.mxu0 0.0
  %7853 = vmatpush1.msra.mxu0 0.0
  %7854 = vmatprep.subr.mxu0 0.0
  %7855 = vmatpush1.msra.mxu0 0.0
  %7856 = vmatprep.subr.mxu0 0.0
  %7857 = vmatpush1.msra.mxu0 0.0
  %7858 = vmatprep.subr.mxu0 0.0
  %7859 = vmatpush1.msra.mxu0 0.0
  %7860 = vmatprep.mubr.f32.mxu0 0.0
  %7861 = vmatmul.mubr.f32.gmra.mrb[0].mxu0 %v218
  %v7862 = vpop.f32.mrb[0].mxu0
  %v7863 = vadd.f32 %v209, %v7862
  %v7864 = vpop.f32.mrb[0].mxu0
  %7865 = vmatprep.mubr.f32.mxu0 0.0
  %7866 = vmatmul.mubr.f32.gmra.mrb[0].mxu0 %v221
  %v7867 = vpop.f32.mrb[0].mxu0
  %v7868 = vadd.f32 %v210, %v7867
  %v7869 = vpop.f32.mrb[0].mxu0
  %7870 = vmatprep.mubr.f32.mxu0 0.0
  %7871 = vmatmul.mubr.f32.gmra.mrb[0].mxu0 %v224
  %v7872 = vpop.f32.mrb[0].mxu0
  %v7873 = vadd.f32 %v211, %v7872
  %v7874 = vpop.f32.mrb[0].mxu0
  %7875 = vmatprep.mubr.f32.mxu0 0.0
  %7876 = vmatmul.mubr.f32.gmra.mrb[0].mxu0 %v227
  %v7877 = vpop.f32.mrb[0].mxu0
  %v7878 = vadd.f32 %v212, %v7877
  %v7879 = vpop.f32.mrb[0].mxu0
  %7880 = vmatprep.mubr.f32.mxu0 0.0
  %7881 = vmatmul.mubr.f32.gmra.mrb[0].mxu0 %v230
  %v7882 = vpop.f32.mrb[0].mxu0
  %v7883 = vadd.f32 %v213, %v7882
  %v7884 = vpop.f32.mrb[0].mxu0
  %7885 = vmatprep.mubr.f32.mxu0 0.0
  %7886 = vmatmul.mubr.f32.gmra.mrb[0].mxu0 %v233
  %v7887 = vpop.f32.mrb[0].mxu0
  %v7888 = vadd.f32 %v214, %v7887
  %v7889 = vpop.f32.mrb[0].mxu0
  %7890 = vmatprep.mubr.f32.mxu0 0.0
  %7891 = vmatmul.mubr.f32.gmra.mrb[0].mxu0 %v236
  %v7892 = vpop.f32.mrb[0].mxu0
  %v7893 = vadd.f32 %v215, %v7892
  %v7894 = vpop.f32.mrb[0].mxu0
  %7895 = vmatprep.mubr.f32.mxu0 0.0
  %7896 = vmatmul.mubr.f32.gmra.mrb[0].mxu0 %v239
  %v7897 = vpop.f32.mrb[0].mxu0
  %v7898 = vadd.f32 %v216, %v7897
  %v7899 = vpop.f32.mrb[0].mxu0
  %7900 = vdwg.mxu0
  %v7901 = vmax.f32 %v7788, %v7863
  %v7902 = vmax.f32 %v7789, %v7868
  %v7903 = vmax.f32 %v7790, %v7873
  %v7904 = vmax.f32 %v7791, %v7878
  %v7905 = vmax.f32 %v7792, %v7883
  %v7906 = vmax.f32 %v7793, %v7888
  %v7907 = vmax.f32 %v7794, %v7893
  %v7908 = vmax.f32 %v7795, %v7898
  %7909 = vmatprep.subr.mxu0 0.0
  %7910 = vmatpush1.msra.mxu0 %v7675
  %7911 = vmatprep.subr.mxu0 0.0
  %7912 = vmatpush1.msra.mxu0 %v7676
  %7913 = vmatprep.subr.mxu0 0.0
  %7914 = vmatpush1.msra.mxu0 %v7677
  %7915 = vmatprep.subr.mxu0 0.0
  %7916 = vmatpush1.msra.mxu0 %v7678
  %7917 = vmatprep.subr.mxu0 0.0
  %7918 = vmatpush1.msra.mxu0 %v7679
  %7919 = vmatprep.subr.mxu0 0.0
  %7920 = vmatpush1.msra.mxu0 %v7680
  %7921 = vmatprep.subr.mxu0 0.0
  %7922 = vmatpush1.msra.mxu0 %v7681
  %7923 = vmatprep.subr.mxu0 0.0
  %7924 = vmatpush1.msra.mxu0 %v7682
  %7925 = vmatprep.subr.mxu0 0.0
  %7926 = vmatpush1.msra.mxu0 0.0
  %7927 = vmatprep.subr.mxu0 0.0
  %7928 = vmatpush1.msra.mxu0 0.0
  %7929 = vmatprep.subr.mxu0 0.0
  %7930 = vmatpush1.msra.mxu0 0.0
  %7931 = vmatprep.subr.mxu0 0.0
  %7932 = vmatpush1.msra.mxu0 0.0
  %7933 = vmatprep.subr.mxu0 0.0
  %7934 = vmatpush1.msra.mxu0 0.0
  %7935 = vmatprep.subr.mxu0 0.0
  %7936 = vmatpush1.msra.mxu0 0.0
  %7937 = vmatprep.subr.mxu0 0.0
  %7938 = vmatpush1.msra.mxu0 0.0
  %7939 = vmatprep.subr.mxu0 0.0
  %7940 = vmatpush1.msra.mxu0 0.0
  %7941 = vmatprep.subr.mxu0 0.0
  %7942 = vmatpush1.msra.mxu0 0.0
  %7943 = vmatprep.subr.mxu0 0.0
  %7944 = vmatpush1.msra.mxu0 0.0
  %7945 = vmatprep.subr.mxu0 0.0
  %7946 = vmatpush1.msra.mxu0 0.0
  %7947 = vmatprep.subr.mxu0 0.0
  %7948 = vmatpush1.msra.mxu0 0.0
  %7949 = vmatprep.subr.mxu0 0.0
  %7950 = vmatpush1.msra.mxu0 0.0
  %7951 = vmatprep.subr.mxu0 0.0
  %7952 = vmatpush1.msra.mxu0 0.0
  %7953 = vmatprep.subr.mxu0 0.0
  %7954 = vmatpush1.msra.mxu0 0.0
  %7955 = vmatprep.subr.mxu0 0.0
  %7956 = vmatpush1.msra.mxu0 0.0
  %7957 = vmatprep.subr.mxu0 0.0
  %7958 = vmatpush1.msra.mxu0 0.0
  %7959 = vmatprep.subr.mxu0 0.0
  %7960 = vmatpush1.msra.mxu0 0.0
  %7961 = vmatprep.subr.mxu0 0.0
  %7962 = vmatpush1.msra.mxu0 0.0
  %7963 = vmatprep.subr.mxu0 0.0
  %7964 = vmatpush1.msra.mxu0 0.0
  %7965 = vmatprep.subr.mxu0 0.0
  %7966 = vmatpush1.msra.mxu0 0.0
  %7967 = vmatprep.subr.mxu0 0.0
  %7968 = vmatpush1.msra.mxu0 0.0
  %7969 = vmatprep.subr.mxu0 0.0
  %7970 = vmatpush1.msra.mxu0 0.0
  %7971 = vmatprep.subr.mxu0 0.0
  %7972 = vmatpush1.msra.mxu0 0.0
  %7973 = vmatprep.mubr.f32.mxu0 0.0
  %7974 = vmatmul.mubr.f32.gmra.mrb[0].mxu0 %v373
  %v7975 = vpop.f32.mrb[0].mxu0
  %v7976 = vadd.f32 %v364, %v7975
  %v7977 = vpop.f32.mrb[0].mxu0
  %7978 = vmatprep.mubr.f32.mxu0 0.0
  %7979 = vmatmul.mubr.f32.gmra.mrb[0].mxu0 %v376
  %v7980 = vpop.f32.mrb[0].mxu0
  %v7981 = vadd.f32 %v365, %v7980
  %v7982 = vpop.f32.mrb[0].mxu0
  %7983 = vmatprep.mubr.f32.mxu0 0.0
  %7984 = vmatmul.mubr.f32.gmra.mrb[0].mxu0 %v379
  %v7985 = vpop.f32.mrb[0].mxu0
  %v7986 = vadd.f32 %v366, %v7985
  %v7987 = vpop.f32.mrb[0].mxu0
  %7988 = vmatprep.mubr.f32.mxu0 0.0
  %7989 = vmatmul.mubr.f32.gmra.mrb[0].mxu0 %v382
  %v7990 = vpop.f32.mrb[0].mxu0
  %v7991 = vadd.f32 %v367, %v7990
  %v7992 = vpop.f32.mrb[0].mxu0
  %7993 = vmatprep.mubr.f32.mxu0 0.0
  %7994 = vmatmul.mubr.f32.gmra.mrb[0].mxu0 %v385
  %v7995 = vpop.f32.mrb[0].mxu0
  %v7996 = vadd.f32 %v368, %v7995
  %v7997 = vpop.f32.mrb[0].mxu0
  %7998 = vmatprep.mubr.f32.mxu0 0.0
  %7999 = vmatmul.mubr.f32.gmra.mrb[0].mxu0 %v388
  %v8000 = vpop.f32.mrb[0].mxu0
  %v8001 = vadd.f32 %v369, %v8000
  %v8002 = vpop.f32.mrb[0].mxu0
  %8003 = vmatprep.mubr.f32.mxu0 0.0
  %8004 = vmatmul.mubr.f32.gmra.mrb[0].mxu0 %v391
  %v8005 = vpop.f32.mrb[0].mxu0
  %v8006 = vadd.f32 %v370, %v8005
  %v8007 = vpop.f32.mrb[0].mxu0
  %8008 = vmatprep.mubr.f32.mxu0 0.0
  %8009 = vmatmul.mubr.f32.gmra.mrb[0].mxu0 %v394
  %v8010 = vpop.f32.mrb[0].mxu0
  %v8011 = vadd.f32 %v371, %v8010
  %v8012 = vpop.f32.mrb[0].mxu0
  %8013 = vdwg.mxu0
  %v8014 = vmax.f32 %v7901, %v7976
  %v8015 = vmax.f32 %v7902, %v7981
  %v8016 = vmax.f32 %v7903, %v7986
  %v8017 = vmax.f32 %v7904, %v7991
  %v8018 = vmax.f32 %v7905, %v7996
  %v8019 = vmax.f32 %v7906, %v8001
  %v8020 = vmax.f32 %v7907, %v8006
  %v8021 = vmax.f32 %v7908, %v8011
  %v8022 = vadd.f32 %v7675, %v8014
  %v8023 = vadd.f32 %v7676, %v8015
  %v8024 = vadd.f32 %v7677, %v8016
  %v8025 = vadd.f32 %v7678, %v8017
  %v8026 = vadd.f32 %v7679, %v8018
  %v8027 = vadd.f32 %v7680, %v8019
  %v8028 = vadd.f32 %v7681, %v8020
  %v8029 = vadd.f32 %v7682, %v8021
  %s8030 = scalar_lea.vmem %s4, 1920
  %v8031 = vld [vmem:[%s8030] sm:$0xff]
  %v8032 = vld [vmem:[%s8030 + $0x8] sm:$0xff]
  %v8033 = vld [vmem:[%s8030 + $0x10] sm:$0xff]
  %v8034 = vld [vmem:[%s8030 + $0x18] sm:$0xff]
  %v8035 = vld [vmem:[%s8030 + $0x20] sm:$0xff]
  %v8036 = vld [vmem:[%s8030 + $0x28] sm:$0xff]
  %v8037 = vld [vmem:[%s8030 + $0x30] sm:$0xff]
  %v8038 = vld [vmem:[%s8030 + $0x38] sm:$0xff]
  %v8039 = vld [vmem:[%s8030 + $0x40] sm:$0xff]
  %v8040 = vld [vmem:[%s8030 + $0x48] sm:$0xff]
  %v8041 = vld [vmem:[%s8030 + $0x50] sm:$0xff]
  %v8042 = vld [vmem:[%s8030 + $0x58] sm:$0xff]
  %v8043 = vld [vmem:[%s8030 + $0x60] sm:$0xff]
  %v8044 = vld [vmem:[%s8030 + $0x68] sm:$0xff]
  %v8045 = vld [vmem:[%s8030 + $0x70] sm:$0xff]
  %v8046 = vld [vmem:[%s8030 + $0x78] sm:$0xff]
  %s8047 = scalar_lea.vmem %s5, 15
  %v8048 = vld [vmem:[%s8047] sm:$0x1]
  %v8050 = vlaneseq
  %v8051 = vshrl.u32 %v8050, 7
  %v8052 = vsub.s32 0, %v8051
  %v8053 = vrot.slane %v8048, %v8052
  %8055 = vmatprep.subr.mxu0 0.0
  %8056 = vmatpush1.msra.mxu0 %v8031
  %8057 = vmatprep.subr.mxu0 0.0
  %8058 = vmatpush1.msra.mxu0 %v8032
  %8059 = vmatprep.subr.mxu0 0.0
  %8060 = vmatpush1.msra.mxu0 %v8033
  %8061 = vmatprep.subr.mxu0 0.0
  %8062 = vmatpush1.msra.mxu0 %v8034
  %8063 = vmatprep.subr.mxu0 0.0
  %8064 = vmatpush1.msra.mxu0 %v8035
  %8065 = vmatprep.subr.mxu0 0.0
  %8066 = vmatpush1.msra.mxu0 %v8036
  %8067 = vmatprep.subr.mxu0 0.0
  %8068 = vmatpush1.msra.mxu0 %v8037
  %8069 = vmatprep.subr.mxu0 0.0
  %8070 = vmatpush1.msra.mxu0 %v8038
  %8071 = vmatprep.subr.mxu0 0.0
  %8072 = vmatpush1.msra.mxu0 %v8039
  %8073 = vmatprep.subr.mxu0 0.0
  %8074 = vmatpush1.msra.mxu0 %v8040
  %8075 = vmatprep.subr.mxu0 0.0
  %8076 = vmatpush1.msra.mxu0 %v8041
  %8077 = vmatprep.subr.mxu0 0.0
  %8078 = vmatpush1.msra.mxu0 %v8042
  %8079 = vmatprep.subr.mxu0 0.0
  %8080 = vmatpush1.msra.mxu0 %v8043
  %8081 = vmatprep.subr.mxu0 0.0
  %8082 = vmatpush1.msra.mxu0 %v8044
  %8083 = vmatprep.subr.mxu0 0.0
  %8084 = vmatpush1.msra.mxu0 %v8045
  %8085 = vmatprep.subr.mxu0 0.0
  %8086 = vmatpush1.msra.mxu0 %v8046
  %8087 = vmatprep.subr.mxu0 0.0
  %8088 = vmatpush1.msra.mxu0 0.0
  %8089 = vmatprep.subr.mxu0 0.0
  %8090 = vmatpush1.msra.mxu0 0.0
  %8091 = vmatprep.subr.mxu0 0.0
  %8092 = vmatpush1.msra.mxu0 0.0
  %8093 = vmatprep.subr.mxu0 0.0
  %8094 = vmatpush1.msra.mxu0 0.0
  %8095 = vmatprep.subr.mxu0 0.0
  %8096 = vmatpush1.msra.mxu0 0.0
  %8097 = vmatprep.subr.mxu0 0.0
  %8098 = vmatpush1.msra.mxu0 0.0
  %8099 = vmatprep.subr.mxu0 0.0
  %8100 = vmatpush1.msra.mxu0 0.0
  %8101 = vmatprep.subr.mxu0 0.0
  %8102 = vmatpush1.msra.mxu0 0.0
  %8103 = vmatprep.subr.mxu0 0.0
  %8104 = vmatpush1.msra.mxu0 0.0
  %8105 = vmatprep.subr.mxu0 0.0
  %8106 = vmatpush1.msra.mxu0 0.0
  %8107 = vmatprep.subr.mxu0 0.0
  %8108 = vmatpush1.msra.mxu0 0.0
  %8109 = vmatprep.subr.mxu0 0.0
  %8110 = vmatpush1.msra.mxu0 0.0
  %8111 = vmatprep.subr.mxu0 0.0
  %8112 = vmatpush1.msra.mxu0 0.0
  %8113 = vmatprep.subr.mxu0 0.0
  %8114 = vmatpush1.msra.mxu0 0.0
  %8115 = vmatprep.subr.mxu0 0.0
  %8116 = vmatpush1.msra.mxu0 0.0
  %8117 = vmatprep.subr.mxu0 0.0
  %8118 = vmatpush1.msra.mxu0 0.0
  %8119 = vmatprep.mubr.f32.mxu0 0.0
  %8120 = vmatmul.mubr.f32.gmra.mrb[0].mxu0 %v8022
  %v8121 = vpop.f32.mrb[0].mxu0
  %v8122 = vadd.f32 %v8053, %v8121
  %v8123 = vpop.f32.mrb[0].mxu0
  %8124 = vmatprep.mubr.f32.mxu0 0.0
  %8125 = vmatmul.mubr.f32.gmra.mrb[0].mxu0 %v8023
  %v8126 = vpop.f32.mrb[0].mxu0
  %v8127 = vadd.f32 %v8053, %v8126
  %v8128 = vpop.f32.mrb[0].mxu0
  %8129 = vmatprep.mubr.f32.mxu0 0.0
  %8130 = vmatmul.mubr.f32.gmra.mrb[0].mxu0 %v8024
  %v8131 = vpop.f32.mrb[0].mxu0
  %v8132 = vadd.f32 %v8053, %v8131
  %v8133 = vpop.f32.mrb[0].mxu0
  %8134 = vmatprep.mubr.f32.mxu0 0.0
  %8135 = vmatmul.mubr.f32.gmra.mrb[0].mxu0 %v8025
  %v8136 = vpop.f32.mrb[0].mxu0
  %v8137 = vadd.f32 %v8053, %v8136
  %v8138 = vpop.f32.mrb[0].mxu0
  %8139 = vmatprep.mubr.f32.mxu0 0.0
  %8140 = vmatmul.mubr.f32.gmra.mrb[0].mxu0 %v8026
  %v8141 = vpop.f32.mrb[0].mxu0
  %v8142 = vadd.f32 %v8053, %v8141
  %v8143 = vpop.f32.mrb[0].mxu0
  %8144 = vmatprep.mubr.f32.mxu0 0.0
  %8145 = vmatmul.mubr.f32.gmra.mrb[0].mxu0 %v8027
  %v8146 = vpop.f32.mrb[0].mxu0
  %v8147 = vadd.f32 %v8053, %v8146
  %v8148 = vpop.f32.mrb[0].mxu0
  %8149 = vmatprep.mubr.f32.mxu0 0.0
  %8150 = vmatmul.mubr.f32.gmra.mrb[0].mxu0 %v8028
  %v8151 = vpop.f32.mrb[0].mxu0
  %v8152 = vadd.f32 %v8053, %v8151
  %v8153 = vpop.f32.mrb[0].mxu0
  %8154 = vmatprep.mubr.f32.mxu0 0.0
  %8155 = vmatmul.mubr.f32.gmra.mrb[0].mxu0 %v8029
  %v8156 = vpop.f32.mrb[0].mxu0
  %v8157 = vadd.f32 %v8053, %v8156
  %v8158 = vpop.f32.mrb[0].mxu0
  %8159 = vdwg.mxu0
  %vm8160 = vcmp.ge.f32.partialorder %v8122, 0.0
  %vm8161 = vcmp.ge.f32.partialorder %v8127, 0.0
  %vm8162 = vcmp.ge.f32.partialorder %v8132, 0.0
  %vm8163 = vcmp.ge.f32.partialorder %v8137, 0.0
  %vm8164 = vcmp.ge.f32.partialorder %v8142, 0.0
  %vm8165 = vcmp.ge.f32.partialorder %v8147, 0.0
  %vm8166 = vcmp.ge.f32.partialorder %v8152, 0.0
  %vm8167 = vcmp.ge.f32.partialorder %v8157, 0.0
  %v8168 = vmul.f32 %v8122, 0.01
  %v8169 = vmul.f32 %v8127, 0.01
  %v8170 = vmul.f32 %v8132, 0.01
  %v8171 = vmul.f32 %v8137, 0.01
  %v8172 = vmul.f32 %v8142, 0.01
  %v8173 = vmul.f32 %v8147, 0.01
  %v8174 = vmul.f32 %v8152, 0.01
  %v8175 = vmul.f32 %v8157, 0.01
  %v8176 = vsel %vm8160, %v8122, %v8168
  %v8177 = vsel %vm8161, %v8127, %v8169
  %v8178 = vsel %vm8162, %v8132, %v8170
  %v8179 = vsel %vm8163, %v8137, %v8171
  %v8180 = vsel %vm8164, %v8142, %v8172
  %v8181 = vsel %vm8165, %v8147, %v8173
  %v8182 = vsel %vm8166, %v8152, %v8174
  %v8183 = vsel %vm8167, %v8157, %v8175
  %8184 = vmatprep.subr.mxu0 0.0
  %8185 = vmatpush1.msra.mxu0 %v8176
  %8186 = vmatprep.subr.mxu0 0.0
  %8187 = vmatpush1.msra.mxu0 %v8177
  %8188 = vmatprep.subr.mxu0 0.0
  %8189 = vmatpush1.msra.mxu0 %v8178
  %8190 = vmatprep.subr.mxu0 0.0
  %8191 = vmatpush1.msra.mxu0 %v8179
  %8192 = vmatprep.subr.mxu0 0.0
  %8193 = vmatpush1.msra.mxu0 %v8180
  %8194 = vmatprep.subr.mxu0 0.0
  %8195 = vmatpush1.msra.mxu0 %v8181
  %8196 = vmatprep.subr.mxu0 0.0
  %8197 = vmatpush1.msra.mxu0 %v8182
  %8198 = vmatprep.subr.mxu0 0.0
  %8199 = vmatpush1.msra.mxu0 %v8183
  %8200 = vmatprep.subr.mxu0 0.0
  %8201 = vmatpush1.msra.mxu0 0.0
  %8202 = vmatprep.subr.mxu0 0.0
  %8203 = vmatpush1.msra.mxu0 0.0
  %8204 = vmatprep.subr.mxu0 0.0
  %8205 = vmatpush1.msra.mxu0 0.0
  %8206 = vmatprep.subr.mxu0 0.0
  %8207 = vmatpush1.msra.mxu0 0.0
  %8208 = vmatprep.subr.mxu0 0.0
  %8209 = vmatpush1.msra.mxu0 0.0
  %8210 = vmatprep.subr.mxu0 0.0
  %8211 = vmatpush1.msra.mxu0 0.0
  %8212 = vmatprep.subr.mxu0 0.0
  %8213 = vmatpush1.msra.mxu0 0.0
  %8214 = vmatprep.subr.mxu0 0.0
  %8215 = vmatpush1.msra.mxu0 0.0
  %8216 = vmatprep.subr.mxu0 0.0
  %8217 = vmatpush1.msra.mxu0 0.0
  %8218 = vmatprep.subr.mxu0 0.0
  %8219 = vmatpush1.msra.mxu0 0.0
  %8220 = vmatprep.subr.mxu0 0.0
  %8221 = vmatpush1.msra.mxu0 0.0
  %8222 = vmatprep.subr.mxu0 0.0
  %8223 = vmatpush1.msra.mxu0 0.0
  %8224 = vmatprep.subr.mxu0 0.0
  %8225 = vmatpush1.msra.mxu0 0.0
  %8226 = vmatprep.subr.mxu0 0.0
  %8227 = vmatpush1.msra.mxu0 0.0
  %8228 = vmatprep.subr.mxu0 0.0
  %8229 = vmatpush1.msra.mxu0 0.0
  %8230 = vmatprep.subr.mxu0 0.0
  %8231 = vmatpush1.msra.mxu0 0.0
  %8232 = vmatprep.subr.mxu0 0.0
  %8233 = vmatpush1.msra.mxu0 0.0
  %8234 = vmatprep.subr.mxu0 0.0
  %8235 = vmatpush1.msra.mxu0 0.0
  %8236 = vmatprep.subr.mxu0 0.0
  %8237 = vmatpush1.msra.mxu0 0.0
  %8238 = vmatprep.subr.mxu0 0.0
  %8239 = vmatpush1.msra.mxu0 0.0
  %8240 = vmatprep.subr.mxu0 0.0
  %8241 = vmatpush1.msra.mxu0 0.0
  %8242 = vmatprep.subr.mxu0 0.0
  %8243 = vmatpush1.msra.mxu0 0.0
  %8244 = vmatprep.subr.mxu0 0.0
  %8245 = vmatpush1.msra.mxu0 0.0
  %8246 = vmatprep.subr.mxu0 0.0
  %8247 = vmatpush1.msra.mxu0 0.0
  %8248 = vmatprep.mubr.f32.mxu0 0.0
  %8249 = vmatmul.mubr.f32.gmra.mrb[0].mxu0 %v63
  %v8250 = vpop.f32.mrb[0].mxu0
  %v8251 = vadd.f32 %v53, %v8250
  %v8252 = vpop.f32.mrb[0].mxu0
  %8253 = vmatprep.mubr.f32.mxu0 0.0
  %8254 = vmatmul.mubr.f32.gmra.mrb[0].mxu0 %v66
  %v8255 = vpop.f32.mrb[0].mxu0
  %v8256 = vadd.f32 %v54, %v8255
  %v8257 = vpop.f32.mrb[0].mxu0
  %8258 = vmatprep.mubr.f32.mxu0 0.0
  %8259 = vmatmul.mubr.f32.gmra.mrb[0].mxu0 %v69
  %v8260 = vpop.f32.mrb[0].mxu0
  %v8261 = vadd.f32 %v55, %v8260
  %v8262 = vpop.f32.mrb[0].mxu0
  %8263 = vmatprep.mubr.f32.mxu0 0.0
  %8264 = vmatmul.mubr.f32.gmra.mrb[0].mxu0 %v72
  %v8265 = vpop.f32.mrb[0].mxu0
  %v8266 = vadd.f32 %v56, %v8265
  %v8267 = vpop.f32.mrb[0].mxu0
  %8268 = vmatprep.mubr.f32.mxu0 0.0
  %8269 = vmatmul.mubr.f32.gmra.mrb[0].mxu0 %v75
  %v8270 = vpop.f32.mrb[0].mxu0
  %v8271 = vadd.f32 %v57, %v8270
  %v8272 = vpop.f32.mrb[0].mxu0
  %8273 = vmatprep.mubr.f32.mxu0 0.0
  %8274 = vmatmul.mubr.f32.gmra.mrb[0].mxu0 %v78
  %v8275 = vpop.f32.mrb[0].mxu0
  %v8276 = vadd.f32 %v58, %v8275
  %v8277 = vpop.f32.mrb[0].mxu0
  %8278 = vmatprep.mubr.f32.mxu0 0.0
  %8279 = vmatmul.mubr.f32.gmra.mrb[0].mxu0 %v81
  %v8280 = vpop.f32.mrb[0].mxu0
  %v8281 = vadd.f32 %v59, %v8280
  %v8282 = vpop.f32.mrb[0].mxu0
  %8283 = vmatprep.mubr.f32.mxu0 0.0
  %8284 = vmatmul.mubr.f32.gmra.mrb[0].mxu0 %v84
  %v8285 = vpop.f32.mrb[0].mxu0
  %v8286 = vadd.f32 %v60, %v8285
  %v8287 = vpop.f32.mrb[0].mxu0
  %8288 = vdwg.mxu0
  %v8289 = vmax.f32 %v29, %v8251
  %v8290 = vmax.f32 %v30, %v8256
  %v8291 = vmax.f32 %v31, %v8261
  %v8292 = vmax.f32 %v32, %v8266
  %v8293 = vmax.f32 %v33, %v8271
  %v8294 = vmax.f32 %v34, %v8276
  %v8295 = vmax.f32 %v35, %v8281
  %v8296 = vmax.f32 %v36, %v8286
  %8297 = vmatprep.subr.mxu0 0.0
  %8298 = vmatpush1.msra.mxu0 %v8176
  %8299 = vmatprep.subr.mxu0 0.0
  %8300 = vmatpush1.msra.mxu0 %v8177
  %8301 = vmatprep.subr.mxu0 0.0
  %8302 = vmatpush1.msra.mxu0 %v8178
  %8303 = vmatprep.subr.mxu0 0.0
  %8304 = vmatpush1.msra.mxu0 %v8179
  %8305 = vmatprep.subr.mxu0 0.0
  %8306 = vmatpush1.msra.mxu0 %v8180
  %8307 = vmatprep.subr.mxu0 0.0
  %8308 = vmatpush1.msra.mxu0 %v8181
  %8309 = vmatprep.subr.mxu0 0.0
  %8310 = vmatpush1.msra.mxu0 %v8182
  %8311 = vmatprep.subr.mxu0 0.0
  %8312 = vmatpush1.msra.mxu0 %v8183
  %8313 = vmatprep.subr.mxu0 0.0
  %8314 = vmatpush1.msra.mxu0 0.0
  %8315 = vmatprep.subr.mxu0 0.0
  %8316 = vmatpush1.msra.mxu0 0.0
  %8317 = vmatprep.subr.mxu0 0.0
  %8318 = vmatpush1.msra.mxu0 0.0
  %8319 = vmatprep.subr.mxu0 0.0
  %8320 = vmatpush1.msra.mxu0 0.0
  %8321 = vmatprep.subr.mxu0 0.0
  %8322 = vmatpush1.msra.mxu0 0.0
  %8323 = vmatprep.subr.mxu0 0.0
  %8324 = vmatpush1.msra.mxu0 0.0
  %8325 = vmatprep.subr.mxu0 0.0
  %8326 = vmatpush1.msra.mxu0 0.0
  %8327 = vmatprep.subr.mxu0 0.0
  %8328 = vmatpush1.msra.mxu0 0.0
  %8329 = vmatprep.subr.mxu0 0.0
  %8330 = vmatpush1.msra.mxu0 0.0
  %8331 = vmatprep.subr.mxu0 0.0
  %8332 = vmatpush1.msra.mxu0 0.0
  %8333 = vmatprep.subr.mxu0 0.0
  %8334 = vmatpush1.msra.mxu0 0.0
  %8335 = vmatprep.subr.mxu0 0.0
  %8336 = vmatpush1.msra.mxu0 0.0
  %8337 = vmatprep.subr.mxu0 0.0
  %8338 = vmatpush1.msra.mxu0 0.0
  %8339 = vmatprep.subr.mxu0 0.0
  %8340 = vmatpush1.msra.mxu0 0.0
  %8341 = vmatprep.subr.mxu0 0.0
  %8342 = vmatpush1.msra.mxu0 0.0
  %8343 = vmatprep.subr.mxu0 0.0
  %8344 = vmatpush1.msra.mxu0 0.0
  %8345 = vmatprep.subr.mxu0 0.0
  %8346 = vmatpush1.msra.mxu0 0.0
  %8347 = vmatprep.subr.mxu0 0.0
  %8348 = vmatpush1.msra.mxu0 0.0
  %8349 = vmatprep.subr.mxu0 0.0
  %8350 = vmatpush1.msra.mxu0 0.0
  %8351 = vmatprep.subr.mxu0 0.0
  %8352 = vmatpush1.msra.mxu0 0.0
  %8353 = vmatprep.subr.mxu0 0.0
  %8354 = vmatpush1.msra.mxu0 0.0
  %8355 = vmatprep.subr.mxu0 0.0
  %8356 = vmatpush1.msra.mxu0 0.0
  %8357 = vmatprep.subr.mxu0 0.0
  %8358 = vmatpush1.msra.mxu0 0.0
  %8359 = vmatprep.subr.mxu0 0.0
  %8360 = vmatpush1.msra.mxu0 0.0
  %8361 = vmatprep.mubr.f32.mxu0 0.0
  %8362 = vmatmul.mubr.f32.gmra.mrb[0].mxu0 %v218
  %v8363 = vpop.f32.mrb[0].mxu0
  %v8364 = vadd.f32 %v209, %v8363
  %v8365 = vpop.f32.mrb[0].mxu0
  %8366 = vmatprep.mubr.f32.mxu0 0.0
  %8367 = vmatmul.mubr.f32.gmra.mrb[0].mxu0 %v221
  %v8368 = vpop.f32.mrb[0].mxu0
  %v8369 = vadd.f32 %v210, %v8368
  %v8370 = vpop.f32.mrb[0].mxu0
  %8371 = vmatprep.mubr.f32.mxu0 0.0
  %8372 = vmatmul.mubr.f32.gmra.mrb[0].mxu0 %v224
  %v8373 = vpop.f32.mrb[0].mxu0
  %v8374 = vadd.f32 %v211, %v8373
  %v8375 = vpop.f32.mrb[0].mxu0
  %8376 = vmatprep.mubr.f32.mxu0 0.0
  %8377 = vmatmul.mubr.f32.gmra.mrb[0].mxu0 %v227
  %v8378 = vpop.f32.mrb[0].mxu0
  %v8379 = vadd.f32 %v212, %v8378
  %v8380 = vpop.f32.mrb[0].mxu0
  %8381 = vmatprep.mubr.f32.mxu0 0.0
  %8382 = vmatmul.mubr.f32.gmra.mrb[0].mxu0 %v230
  %v8383 = vpop.f32.mrb[0].mxu0
  %v8384 = vadd.f32 %v213, %v8383
  %v8385 = vpop.f32.mrb[0].mxu0
  %8386 = vmatprep.mubr.f32.mxu0 0.0
  %8387 = vmatmul.mubr.f32.gmra.mrb[0].mxu0 %v233
  %v8388 = vpop.f32.mrb[0].mxu0
  %v8389 = vadd.f32 %v214, %v8388
  %v8390 = vpop.f32.mrb[0].mxu0
  %8391 = vmatprep.mubr.f32.mxu0 0.0
  %8392 = vmatmul.mubr.f32.gmra.mrb[0].mxu0 %v236
  %v8393 = vpop.f32.mrb[0].mxu0
  %v8394 = vadd.f32 %v215, %v8393
  %v8395 = vpop.f32.mrb[0].mxu0
  %8396 = vmatprep.mubr.f32.mxu0 0.0
  %8397 = vmatmul.mubr.f32.gmra.mrb[0].mxu0 %v239
  %v8398 = vpop.f32.mrb[0].mxu0
  %v8399 = vadd.f32 %v216, %v8398
  %v8400 = vpop.f32.mrb[0].mxu0
  %8401 = vdwg.mxu0
  %v8402 = vmax.f32 %v8289, %v8364
  %v8403 = vmax.f32 %v8290, %v8369
  %v8404 = vmax.f32 %v8291, %v8374
  %v8405 = vmax.f32 %v8292, %v8379
  %v8406 = vmax.f32 %v8293, %v8384
  %v8407 = vmax.f32 %v8294, %v8389
  %v8408 = vmax.f32 %v8295, %v8394
  %v8409 = vmax.f32 %v8296, %v8399
  %8410 = vmatprep.subr.mxu0 0.0
  %8411 = vmatpush1.msra.mxu0 %v8176
  %8412 = vmatprep.subr.mxu0 0.0
  %8413 = vmatpush1.msra.mxu0 %v8177
  %8414 = vmatprep.subr.mxu0 0.0
  %8415 = vmatpush1.msra.mxu0 %v8178
  %8416 = vmatprep.subr.mxu0 0.0
  %8417 = vmatpush1.msra.mxu0 %v8179
  %8418 = vmatprep.subr.mxu0 0.0
  %8419 = vmatpush1.msra.mxu0 %v8180
  %8420 = vmatprep.subr.mxu0 0.0
  %8421 = vmatpush1.msra.mxu0 %v8181
  %8422 = vmatprep.subr.mxu0 0.0
  %8423 = vmatpush1.msra.mxu0 %v8182
  %8424 = vmatprep.subr.mxu0 0.0
  %8425 = vmatpush1.msra.mxu0 %v8183
  %8426 = vmatprep.subr.mxu0 0.0
  %8427 = vmatpush1.msra.mxu0 0.0
  %8428 = vmatprep.subr.mxu0 0.0
  %8429 = vmatpush1.msra.mxu0 0.0
  %8430 = vmatprep.subr.mxu0 0.0
  %8431 = vmatpush1.msra.mxu0 0.0
  %8432 = vmatprep.subr.mxu0 0.0
  %8433 = vmatpush1.msra.mxu0 0.0
  %8434 = vmatprep.subr.mxu0 0.0
  %8435 = vmatpush1.msra.mxu0 0.0
  %8436 = vmatprep.subr.mxu0 0.0
  %8437 = vmatpush1.msra.mxu0 0.0
  %8438 = vmatprep.subr.mxu0 0.0
  %8439 = vmatpush1.msra.mxu0 0.0
  %8440 = vmatprep.subr.mxu0 0.0
  %8441 = vmatpush1.msra.mxu0 0.0
  %8442 = vmatprep.subr.mxu0 0.0
  %8443 = vmatpush1.msra.mxu0 0.0
  %8444 = vmatprep.subr.mxu0 0.0
  %8445 = vmatpush1.msra.mxu0 0.0
  %8446 = vmatprep.subr.mxu0 0.0
  %8447 = vmatpush1.msra.mxu0 0.0
  %8448 = vmatprep.subr.mxu0 0.0
  %8449 = vmatpush1.msra.mxu0 0.0
  %8450 = vmatprep.subr.mxu0 0.0
  %8451 = vmatpush1.msra.mxu0 0.0
  %8452 = vmatprep.subr.mxu0 0.0
  %8453 = vmatpush1.msra.mxu0 0.0
  %8454 = vmatprep.subr.mxu0 0.0
  %8455 = vmatpush1.msra.mxu0 0.0
  %8456 = vmatprep.subr.mxu0 0.0
  %8457 = vmatpush1.msra.mxu0 0.0
  %8458 = vmatprep.subr.mxu0 0.0
  %8459 = vmatpush1.msra.mxu0 0.0
  %8460 = vmatprep.subr.mxu0 0.0
  %8461 = vmatpush1.msra.mxu0 0.0
  %8462 = vmatprep.subr.mxu0 0.0
  %8463 = vmatpush1.msra.mxu0 0.0
  %8464 = vmatprep.subr.mxu0 0.0
  %8465 = vmatpush1.msra.mxu0 0.0
  %8466 = vmatprep.subr.mxu0 0.0
  %8467 = vmatpush1.msra.mxu0 0.0
  %8468 = vmatprep.subr.mxu0 0.0
  %8469 = vmatpush1.msra.mxu0 0.0
  %8470 = vmatprep.subr.mxu0 0.0
  %8471 = vmatpush1.msra.mxu0 0.0
  %8472 = vmatprep.subr.mxu0 0.0
  %8473 = vmatpush1.msra.mxu0 0.0
  %8474 = vmatprep.mubr.f32.mxu0 0.0
  %8475 = vmatmul.mubr.f32.gmra.mrb[0].mxu0 %v373
  %v8476 = vpop.f32.mrb[0].mxu0
  %v8477 = vadd.f32 %v364, %v8476
  %v8478 = vpop.f32.mrb[0].mxu0
  %8479 = vmatprep.mubr.f32.mxu0 0.0
  %8480 = vmatmul.mubr.f32.gmra.mrb[0].mxu0 %v376
  %v8481 = vpop.f32.mrb[0].mxu0
  %v8482 = vadd.f32 %v365, %v8481
  %v8483 = vpop.f32.mrb[0].mxu0
  %8484 = vmatprep.mubr.f32.mxu0 0.0
  %8485 = vmatmul.mubr.f32.gmra.mrb[0].mxu0 %v379
  %v8486 = vpop.f32.mrb[0].mxu0
  %v8487 = vadd.f32 %v366, %v8486
  %v8488 = vpop.f32.mrb[0].mxu0
  %8489 = vmatprep.mubr.f32.mxu0 0.0
  %8490 = vmatmul.mubr.f32.gmra.mrb[0].mxu0 %v382
  %v8491 = vpop.f32.mrb[0].mxu0
  %v8492 = vadd.f32 %v367, %v8491
  %v8493 = vpop.f32.mrb[0].mxu0
  %8494 = vmatprep.mubr.f32.mxu0 0.0
  %8495 = vmatmul.mubr.f32.gmra.mrb[0].mxu0 %v385
  %v8496 = vpop.f32.mrb[0].mxu0
  %v8497 = vadd.f32 %v368, %v8496
  %v8498 = vpop.f32.mrb[0].mxu0
  %8499 = vmatprep.mubr.f32.mxu0 0.0
  %8500 = vmatmul.mubr.f32.gmra.mrb[0].mxu0 %v388
  %v8501 = vpop.f32.mrb[0].mxu0
  %v8502 = vadd.f32 %v369, %v8501
  %v8503 = vpop.f32.mrb[0].mxu0
  %8504 = vmatprep.mubr.f32.mxu0 0.0
  %8505 = vmatmul.mubr.f32.gmra.mrb[0].mxu0 %v391
  %v8506 = vpop.f32.mrb[0].mxu0
  %v8507 = vadd.f32 %v370, %v8506
  %v8508 = vpop.f32.mrb[0].mxu0
  %8509 = vmatprep.mubr.f32.mxu0 0.0
  %8510 = vmatmul.mubr.f32.gmra.mrb[0].mxu0 %v394
  %v8511 = vpop.f32.mrb[0].mxu0
  %v8512 = vadd.f32 %v371, %v8511
  %v8513 = vpop.f32.mrb[0].mxu0
  %8514 = vdwg.mxu0
  %v8515 = vmax.f32 %v8402, %v8477
  %v8516 = vmax.f32 %v8403, %v8482
  %v8517 = vmax.f32 %v8404, %v8487
  %v8518 = vmax.f32 %v8405, %v8492
  %v8519 = vmax.f32 %v8406, %v8497
  %v8520 = vmax.f32 %v8407, %v8502
  %v8521 = vmax.f32 %v8408, %v8507
  %v8522 = vmax.f32 %v8409, %v8512
  %v8523 = vadd.f32 %v8176, %v8515
  %v8524 = vadd.f32 %v8177, %v8516
  %v8525 = vadd.f32 %v8178, %v8517
  %v8526 = vadd.f32 %v8179, %v8518
  %v8527 = vadd.f32 %v8180, %v8519
  %v8528 = vadd.f32 %v8181, %v8520
  %v8529 = vadd.f32 %v8182, %v8521
  %v8530 = vadd.f32 %v8183, %v8522
  %s8531 = scalar_lea.vmem %s4, 2048
  %v8532 = vld [vmem:[%s8531] sm:$0xff]
  %v8533 = vld [vmem:[%s8531 + $0x8] sm:$0xff]
  %v8534 = vld [vmem:[%s8531 + $0x10] sm:$0xff]
  %v8535 = vld [vmem:[%s8531 + $0x18] sm:$0xff]
  %v8536 = vld [vmem:[%s8531 + $0x20] sm:$0xff]
  %v8537 = vld [vmem:[%s8531 + $0x28] sm:$0xff]
  %v8538 = vld [vmem:[%s8531 + $0x30] sm:$0xff]
  %v8539 = vld [vmem:[%s8531 + $0x38] sm:$0xff]
  %v8540 = vld [vmem:[%s8531 + $0x40] sm:$0xff]
  %v8541 = vld [vmem:[%s8531 + $0x48] sm:$0xff]
  %v8542 = vld [vmem:[%s8531 + $0x50] sm:$0xff]
  %v8543 = vld [vmem:[%s8531 + $0x58] sm:$0xff]
  %v8544 = vld [vmem:[%s8531 + $0x60] sm:$0xff]
  %v8545 = vld [vmem:[%s8531 + $0x68] sm:$0xff]
  %v8546 = vld [vmem:[%s8531 + $0x70] sm:$0xff]
  %v8547 = vld [vmem:[%s8531 + $0x78] sm:$0xff]
  %s8548 = scalar_lea.vmem %s5, 16
  %v8549 = vld [vmem:[%s8548] sm:$0x1]
  %v8551 = vlaneseq
  %v8552 = vshrl.u32 %v8551, 7
  %v8553 = vsub.s32 0, %v8552
  %v8554 = vrot.slane %v8549, %v8553
  %8556 = vmatprep.subr.mxu0 0.0
  %8557 = vmatpush1.msra.mxu0 %v8532
  %8558 = vmatprep.subr.mxu0 0.0
  %8559 = vmatpush1.msra.mxu0 %v8533
  %8560 = vmatprep.subr.mxu0 0.0
  %8561 = vmatpush1.msra.mxu0 %v8534
  %8562 = vmatprep.subr.mxu0 0.0
  %8563 = vmatpush1.msra.mxu0 %v8535
  %8564 = vmatprep.subr.mxu0 0.0
  %8565 = vmatpush1.msra.mxu0 %v8536
  %8566 = vmatprep.subr.mxu0 0.0
  %8567 = vmatpush1.msra.mxu0 %v8537
  %8568 = vmatprep.subr.mxu0 0.0
  %8569 = vmatpush1.msra.mxu0 %v8538
  %8570 = vmatprep.subr.mxu0 0.0
  %8571 = vmatpush1.msra.mxu0 %v8539
  %8572 = vmatprep.subr.mxu0 0.0
  %8573 = vmatpush1.msra.mxu0 %v8540
  %8574 = vmatprep.subr.mxu0 0.0
  %8575 = vmatpush1.msra.mxu0 %v8541
  %8576 = vmatprep.subr.mxu0 0.0
  %8577 = vmatpush1.msra.mxu0 %v8542
  %8578 = vmatprep.subr.mxu0 0.0
  %8579 = vmatpush1.msra.mxu0 %v8543
  %8580 = vmatprep.subr.mxu0 0.0
  %8581 = vmatpush1.msra.mxu0 %v8544
  %8582 = vmatprep.subr.mxu0 0.0
  %8583 = vmatpush1.msra.mxu0 %v8545
  %8584 = vmatprep.subr.mxu0 0.0
  %8585 = vmatpush1.msra.mxu0 %v8546
  %8586 = vmatprep.subr.mxu0 0.0
  %8587 = vmatpush1.msra.mxu0 %v8547
  %8588 = vmatprep.subr.mxu0 0.0
  %8589 = vmatpush1.msra.mxu0 0.0
  %8590 = vmatprep.subr.mxu0 0.0
  %8591 = vmatpush1.msra.mxu0 0.0
  %8592 = vmatprep.subr.mxu0 0.0
  %8593 = vmatpush1.msra.mxu0 0.0
  %8594 = vmatprep.subr.mxu0 0.0
  %8595 = vmatpush1.msra.mxu0 0.0
  %8596 = vmatprep.subr.mxu0 0.0
  %8597 = vmatpush1.msra.mxu0 0.0
  %8598 = vmatprep.subr.mxu0 0.0
  %8599 = vmatpush1.msra.mxu0 0.0
  %8600 = vmatprep.subr.mxu0 0.0
  %8601 = vmatpush1.msra.mxu0 0.0
  %8602 = vmatprep.subr.mxu0 0.0
  %8603 = vmatpush1.msra.mxu0 0.0
  %8604 = vmatprep.subr.mxu0 0.0
  %8605 = vmatpush1.msra.mxu0 0.0
  %8606 = vmatprep.subr.mxu0 0.0
  %8607 = vmatpush1.msra.mxu0 0.0
  %8608 = vmatprep.subr.mxu0 0.0
  %8609 = vmatpush1.msra.mxu0 0.0
  %8610 = vmatprep.subr.mxu0 0.0
  %8611 = vmatpush1.msra.mxu0 0.0
  %8612 = vmatprep.subr.mxu0 0.0
  %8613 = vmatpush1.msra.mxu0 0.0
  %8614 = vmatprep.subr.mxu0 0.0
  %8615 = vmatpush1.msra.mxu0 0.0
  %8616 = vmatprep.subr.mxu0 0.0
  %8617 = vmatpush1.msra.mxu0 0.0
  %8618 = vmatprep.subr.mxu0 0.0
  %8619 = vmatpush1.msra.mxu0 0.0
  %8620 = vmatprep.mubr.f32.mxu0 0.0
  %8621 = vmatmul.mubr.f32.gmra.mrb[0].mxu0 %v8523
  %v8622 = vpop.f32.mrb[0].mxu0
  %v8623 = vadd.f32 %v8554, %v8622
  %v8624 = vpop.f32.mrb[0].mxu0
  %8625 = vmatprep.mubr.f32.mxu0 0.0
  %8626 = vmatmul.mubr.f32.gmra.mrb[0].mxu0 %v8524
  %v8627 = vpop.f32.mrb[0].mxu0
  %v8628 = vadd.f32 %v8554, %v8627
  %v8629 = vpop.f32.mrb[0].mxu0
  %8630 = vmatprep.mubr.f32.mxu0 0.0
  %8631 = vmatmul.mubr.f32.gmra.mrb[0].mxu0 %v8525
  %v8632 = vpop.f32.mrb[0].mxu0
  %v8633 = vadd.f32 %v8554, %v8632
  %v8634 = vpop.f32.mrb[0].mxu0
  %8635 = vmatprep.mubr.f32.mxu0 0.0
  %8636 = vmatmul.mubr.f32.gmra.mrb[0].mxu0 %v8526
  %v8637 = vpop.f32.mrb[0].mxu0
  %v8638 = vadd.f32 %v8554, %v8637
  %v8639 = vpop.f32.mrb[0].mxu0
  %8640 = vmatprep.mubr.f32.mxu0 0.0
  %8641 = vmatmul.mubr.f32.gmra.mrb[0].mxu0 %v8527
  %v8642 = vpop.f32.mrb[0].mxu0
  %v8643 = vadd.f32 %v8554, %v8642
  %v8644 = vpop.f32.mrb[0].mxu0
  %8645 = vmatprep.mubr.f32.mxu0 0.0
  %8646 = vmatmul.mubr.f32.gmra.mrb[0].mxu0 %v8528
  %v8647 = vpop.f32.mrb[0].mxu0
  %v8648 = vadd.f32 %v8554, %v8647
  %v8649 = vpop.f32.mrb[0].mxu0
  %8650 = vmatprep.mubr.f32.mxu0 0.0
  %8651 = vmatmul.mubr.f32.gmra.mrb[0].mxu0 %v8529
  %v8652 = vpop.f32.mrb[0].mxu0
  %v8653 = vadd.f32 %v8554, %v8652
  %v8654 = vpop.f32.mrb[0].mxu0
  %8655 = vmatprep.mubr.f32.mxu0 0.0
  %8656 = vmatmul.mubr.f32.gmra.mrb[0].mxu0 %v8530
  %v8657 = vpop.f32.mrb[0].mxu0
  %v8658 = vadd.f32 %v8554, %v8657
  %v8659 = vpop.f32.mrb[0].mxu0
  %8660 = vdwg.mxu0
  %vm8661 = vcmp.ge.f32.partialorder %v8623, 0.0
  %vm8662 = vcmp.ge.f32.partialorder %v8628, 0.0
  %vm8663 = vcmp.ge.f32.partialorder %v8633, 0.0
  %vm8664 = vcmp.ge.f32.partialorder %v8638, 0.0
  %vm8665 = vcmp.ge.f32.partialorder %v8643, 0.0
  %vm8666 = vcmp.ge.f32.partialorder %v8648, 0.0
  %vm8667 = vcmp.ge.f32.partialorder %v8653, 0.0
  %vm8668 = vcmp.ge.f32.partialorder %v8658, 0.0
  %v8669 = vmul.f32 %v8623, 0.01
  %v8670 = vmul.f32 %v8628, 0.01
  %v8671 = vmul.f32 %v8633, 0.01
  %v8672 = vmul.f32 %v8638, 0.01
  %v8673 = vmul.f32 %v8643, 0.01
  %v8674 = vmul.f32 %v8648, 0.01
  %v8675 = vmul.f32 %v8653, 0.01
  %v8676 = vmul.f32 %v8658, 0.01
  %v8677 = vsel %vm8661, %v8623, %v8669
  %v8678 = vsel %vm8662, %v8628, %v8670
  %v8679 = vsel %vm8663, %v8633, %v8671
  %v8680 = vsel %vm8664, %v8638, %v8672
  %v8681 = vsel %vm8665, %v8643, %v8673
  %v8682 = vsel %vm8666, %v8648, %v8674
  %v8683 = vsel %vm8667, %v8653, %v8675
  %v8684 = vsel %vm8668, %v8658, %v8676
  %8685 = vmatprep.subr.mxu0 0.0
  %8686 = vmatpush1.msra.mxu0 %v8677
  %8687 = vmatprep.subr.mxu0 0.0
  %8688 = vmatpush1.msra.mxu0 %v8678
  %8689 = vmatprep.subr.mxu0 0.0
  %8690 = vmatpush1.msra.mxu0 %v8679
  %8691 = vmatprep.subr.mxu0 0.0
  %8692 = vmatpush1.msra.mxu0 %v8680
  %8693 = vmatprep.subr.mxu0 0.0
  %8694 = vmatpush1.msra.mxu0 %v8681
  %8695 = vmatprep.subr.mxu0 0.0
  %8696 = vmatpush1.msra.mxu0 %v8682
  %8697 = vmatprep.subr.mxu0 0.0
  %8698 = vmatpush1.msra.mxu0 %v8683
  %8699 = vmatprep.subr.mxu0 0.0
  %8700 = vmatpush1.msra.mxu0 %v8684
  %8701 = vmatprep.subr.mxu0 0.0
  %8702 = vmatpush1.msra.mxu0 0.0
  %8703 = vmatprep.subr.mxu0 0.0
  %8704 = vmatpush1.msra.mxu0 0.0
  %8705 = vmatprep.subr.mxu0 0.0
  %8706 = vmatpush1.msra.mxu0 0.0
  %8707 = vmatprep.subr.mxu0 0.0
  %8708 = vmatpush1.msra.mxu0 0.0
  %8709 = vmatprep.subr.mxu0 0.0
  %8710 = vmatpush1.msra.mxu0 0.0
  %8711 = vmatprep.subr.mxu0 0.0
  %8712 = vmatpush1.msra.mxu0 0.0
  %8713 = vmatprep.subr.mxu0 0.0
  %8714 = vmatpush1.msra.mxu0 0.0
  %8715 = vmatprep.subr.mxu0 0.0
  %8716 = vmatpush1.msra.mxu0 0.0
  %8717 = vmatprep.subr.mxu0 0.0
  %8718 = vmatpush1.msra.mxu0 0.0
  %8719 = vmatprep.subr.mxu0 0.0
  %8720 = vmatpush1.msra.mxu0 0.0
  %8721 = vmatprep.subr.mxu0 0.0
  %8722 = vmatpush1.msra.mxu0 0.0
  %8723 = vmatprep.subr.mxu0 0.0
  %8724 = vmatpush1.msra.mxu0 0.0
  %8725 = vmatprep.subr.mxu0 0.0
  %8726 = vmatpush1.msra.mxu0 0.0
  %8727 = vmatprep.subr.mxu0 0.0
  %8728 = vmatpush1.msra.mxu0 0.0
  %8729 = vmatprep.subr.mxu0 0.0
  %8730 = vmatpush1.msra.mxu0 0.0
  %8731 = vmatprep.subr.mxu0 0.0
  %8732 = vmatpush1.msra.mxu0 0.0
  %8733 = vmatprep.subr.mxu0 0.0
  %8734 = vmatpush1.msra.mxu0 0.0
  %8735 = vmatprep.subr.mxu0 0.0
  %8736 = vmatpush1.msra.mxu0 0.0
  %8737 = vmatprep.subr.mxu0 0.0
  %8738 = vmatpush1.msra.mxu0 0.0
  %8739 = vmatprep.subr.mxu0 0.0
  %8740 = vmatpush1.msra.mxu0 0.0
  %8741 = vmatprep.subr.mxu0 0.0
  %8742 = vmatpush1.msra.mxu0 0.0
  %8743 = vmatprep.subr.mxu0 0.0
  %8744 = vmatpush1.msra.mxu0 0.0
  %8745 = vmatprep.subr.mxu0 0.0
  %8746 = vmatpush1.msra.mxu0 0.0
  %8747 = vmatprep.subr.mxu0 0.0
  %8748 = vmatpush1.msra.mxu0 0.0
  %8749 = vmatprep.mubr.f32.mxu0 0.0
  %8750 = vmatmul.mubr.f32.gmra.mrb[0].mxu0 %v63
  %v8751 = vpop.f32.mrb[0].mxu0
  %v8752 = vadd.f32 %v53, %v8751
  %v8753 = vpop.f32.mrb[0].mxu0
  %8754 = vmatprep.mubr.f32.mxu0 0.0
  %8755 = vmatmul.mubr.f32.gmra.mrb[0].mxu0 %v66
  %v8756 = vpop.f32.mrb[0].mxu0
  %v8757 = vadd.f32 %v54, %v8756
  %v8758 = vpop.f32.mrb[0].mxu0
  %8759 = vmatprep.mubr.f32.mxu0 0.0
  %8760 = vmatmul.mubr.f32.gmra.mrb[0].mxu0 %v69
  %v8761 = vpop.f32.mrb[0].mxu0
  %v8762 = vadd.f32 %v55, %v8761
  %v8763 = vpop.f32.mrb[0].mxu0
  %8764 = vmatprep.mubr.f32.mxu0 0.0
  %8765 = vmatmul.mubr.f32.gmra.mrb[0].mxu0 %v72
  %v8766 = vpop.f32.mrb[0].mxu0
  %v8767 = vadd.f32 %v56, %v8766
  %v8768 = vpop.f32.mrb[0].mxu0
  %8769 = vmatprep.mubr.f32.mxu0 0.0
  %8770 = vmatmul.mubr.f32.gmra.mrb[0].mxu0 %v75
  %v8771 = vpop.f32.mrb[0].mxu0
  %v8772 = vadd.f32 %v57, %v8771
  %v8773 = vpop.f32.mrb[0].mxu0
  %8774 = vmatprep.mubr.f32.mxu0 0.0
  %8775 = vmatmul.mubr.f32.gmra.mrb[0].mxu0 %v78
  %v8776 = vpop.f32.mrb[0].mxu0
  %v8777 = vadd.f32 %v58, %v8776
  %v8778 = vpop.f32.mrb[0].mxu0
  %8779 = vmatprep.mubr.f32.mxu0 0.0
  %8780 = vmatmul.mubr.f32.gmra.mrb[0].mxu0 %v81
  %v8781 = vpop.f32.mrb[0].mxu0
  %v8782 = vadd.f32 %v59, %v8781
  %v8783 = vpop.f32.mrb[0].mxu0
  %8784 = vmatprep.mubr.f32.mxu0 0.0
  %8785 = vmatmul.mubr.f32.gmra.mrb[0].mxu0 %v84
  %v8786 = vpop.f32.mrb[0].mxu0
  %v8787 = vadd.f32 %v60, %v8786
  %v8788 = vpop.f32.mrb[0].mxu0
  %8789 = vdwg.mxu0
  %v8790 = vmax.f32 %v29, %v8752
  %v8791 = vmax.f32 %v30, %v8757
  %v8792 = vmax.f32 %v31, %v8762
  %v8793 = vmax.f32 %v32, %v8767
  %v8794 = vmax.f32 %v33, %v8772
  %v8795 = vmax.f32 %v34, %v8777
  %v8796 = vmax.f32 %v35, %v8782
  %v8797 = vmax.f32 %v36, %v8787
  %8798 = vmatprep.subr.mxu0 0.0
  %8799 = vmatpush1.msra.mxu0 %v8677
  %8800 = vmatprep.subr.mxu0 0.0
  %8801 = vmatpush1.msra.mxu0 %v8678
  %8802 = vmatprep.subr.mxu0 0.0
  %8803 = vmatpush1.msra.mxu0 %v8679
  %8804 = vmatprep.subr.mxu0 0.0
  %8805 = vmatpush1.msra.mxu0 %v8680
  %8806 = vmatprep.subr.mxu0 0.0
  %8807 = vmatpush1.msra.mxu0 %v8681
  %8808 = vmatprep.subr.mxu0 0.0
  %8809 = vmatpush1.msra.mxu0 %v8682
  %8810 = vmatprep.subr.mxu0 0.0
  %8811 = vmatpush1.msra.mxu0 %v8683
  %8812 = vmatprep.subr.mxu0 0.0
  %8813 = vmatpush1.msra.mxu0 %v8684
  %8814 = vmatprep.subr.mxu0 0.0
  %8815 = vmatpush1.msra.mxu0 0.0
  %8816 = vmatprep.subr.mxu0 0.0
  %8817 = vmatpush1.msra.mxu0 0.0
  %8818 = vmatprep.subr.mxu0 0.0
  %8819 = vmatpush1.msra.mxu0 0.0
  %8820 = vmatprep.subr.mxu0 0.0
  %8821 = vmatpush1.msra.mxu0 0.0
  %8822 = vmatprep.subr.mxu0 0.0
  %8823 = vmatpush1.msra.mxu0 0.0
  %8824 = vmatprep.subr.mxu0 0.0
  %8825 = vmatpush1.msra.mxu0 0.0
  %8826 = vmatprep.subr.mxu0 0.0
  %8827 = vmatpush1.msra.mxu0 0.0
  %8828 = vmatprep.subr.mxu0 0.0
  %8829 = vmatpush1.msra.mxu0 0.0
  %8830 = vmatprep.subr.mxu0 0.0
  %8831 = vmatpush1.msra.mxu0 0.0
  %8832 = vmatprep.subr.mxu0 0.0
  %8833 = vmatpush1.msra.mxu0 0.0
  %8834 = vmatprep.subr.mxu0 0.0
  %8835 = vmatpush1.msra.mxu0 0.0
  %8836 = vmatprep.subr.mxu0 0.0
  %8837 = vmatpush1.msra.mxu0 0.0
  %8838 = vmatprep.subr.mxu0 0.0
  %8839 = vmatpush1.msra.mxu0 0.0
  %8840 = vmatprep.subr.mxu0 0.0
  %8841 = vmatpush1.msra.mxu0 0.0
  %8842 = vmatprep.subr.mxu0 0.0
  %8843 = vmatpush1.msra.mxu0 0.0
  %8844 = vmatprep.subr.mxu0 0.0
  %8845 = vmatpush1.msra.mxu0 0.0
  %8846 = vmatprep.subr.mxu0 0.0
  %8847 = vmatpush1.msra.mxu0 0.0
  %8848 = vmatprep.subr.mxu0 0.0
  %8849 = vmatpush1.msra.mxu0 0.0
  %8850 = vmatprep.subr.mxu0 0.0
  %8851 = vmatpush1.msra.mxu0 0.0
  %8852 = vmatprep.subr.mxu0 0.0
  %8853 = vmatpush1.msra.mxu0 0.0
  %8854 = vmatprep.subr.mxu0 0.0
  %8855 = vmatpush1.msra.mxu0 0.0
  %8856 = vmatprep.subr.mxu0 0.0
  %8857 = vmatpush1.msra.mxu0 0.0
  %8858 = vmatprep.subr.mxu0 0.0
  %8859 = vmatpush1.msra.mxu0 0.0
  %8860 = vmatprep.subr.mxu0 0.0
  %8861 = vmatpush1.msra.mxu0 0.0
  %8862 = vmatprep.mubr.f32.mxu0 0.0
  %8863 = vmatmul.mubr.f32.gmra.mrb[0].mxu0 %v218
  %v8864 = vpop.f32.mrb[0].mxu0
  %v8865 = vadd.f32 %v209, %v8864
  %v8866 = vpop.f32.mrb[0].mxu0
  %8867 = vmatprep.mubr.f32.mxu0 0.0
  %8868 = vmatmul.mubr.f32.gmra.mrb[0].mxu0 %v221
  %v8869 = vpop.f32.mrb[0].mxu0
  %v8870 = vadd.f32 %v210, %v8869
  %v8871 = vpop.f32.mrb[0].mxu0
  %8872 = vmatprep.mubr.f32.mxu0 0.0
  %8873 = vmatmul.mubr.f32.gmra.mrb[0].mxu0 %v224
  %v8874 = vpop.f32.mrb[0].mxu0
  %v8875 = vadd.f32 %v211, %v8874
  %v8876 = vpop.f32.mrb[0].mxu0
  %8877 = vmatprep.mubr.f32.mxu0 0.0
  %8878 = vmatmul.mubr.f32.gmra.mrb[0].mxu0 %v227
  %v8879 = vpop.f32.mrb[0].mxu0
  %v8880 = vadd.f32 %v212, %v8879
  %v8881 = vpop.f32.mrb[0].mxu0
  %8882 = vmatprep.mubr.f32.mxu0 0.0
  %8883 = vmatmul.mubr.f32.gmra.mrb[0].mxu0 %v230
  %v8884 = vpop.f32.mrb[0].mxu0
  %v8885 = vadd.f32 %v213, %v8884
  %v8886 = vpop.f32.mrb[0].mxu0
  %8887 = vmatprep.mubr.f32.mxu0 0.0
  %8888 = vmatmul.mubr.f32.gmra.mrb[0].mxu0 %v233
  %v8889 = vpop.f32.mrb[0].mxu0
  %v8890 = vadd.f32 %v214, %v8889
  %v8891 = vpop.f32.mrb[0].mxu0
  %8892 = vmatprep.mubr.f32.mxu0 0.0
  %8893 = vmatmul.mubr.f32.gmra.mrb[0].mxu0 %v236
  %v8894 = vpop.f32.mrb[0].mxu0
  %v8895 = vadd.f32 %v215, %v8894
  %v8896 = vpop.f32.mrb[0].mxu0
  %8897 = vmatprep.mubr.f32.mxu0 0.0
  %8898 = vmatmul.mubr.f32.gmra.mrb[0].mxu0 %v239
  %v8899 = vpop.f32.mrb[0].mxu0
  %v8900 = vadd.f32 %v216, %v8899
  %v8901 = vpop.f32.mrb[0].mxu0
  %8902 = vdwg.mxu0
  %v8903 = vmax.f32 %v8790, %v8865
  %v8904 = vmax.f32 %v8791, %v8870
  %v8905 = vmax.f32 %v8792, %v8875
  %v8906 = vmax.f32 %v8793, %v8880
  %v8907 = vmax.f32 %v8794, %v8885
  %v8908 = vmax.f32 %v8795, %v8890
  %v8909 = vmax.f32 %v8796, %v8895
  %v8910 = vmax.f32 %v8797, %v8900
  %8911 = vmatprep.subr.mxu0 0.0
  %8912 = vmatpush1.msra.mxu0 %v8677
  %8913 = vmatprep.subr.mxu0 0.0
  %8914 = vmatpush1.msra.mxu0 %v8678
  %8915 = vmatprep.subr.mxu0 0.0
  %8916 = vmatpush1.msra.mxu0 %v8679
  %8917 = vmatprep.subr.mxu0 0.0
  %8918 = vmatpush1.msra.mxu0 %v8680
  %8919 = vmatprep.subr.mxu0 0.0
  %8920 = vmatpush1.msra.mxu0 %v8681
  %8921 = vmatprep.subr.mxu0 0.0
  %8922 = vmatpush1.msra.mxu0 %v8682
  %8923 = vmatprep.subr.mxu0 0.0
  %8924 = vmatpush1.msra.mxu0 %v8683
  %8925 = vmatprep.subr.mxu0 0.0
  %8926 = vmatpush1.msra.mxu0 %v8684
  %8927 = vmatprep.subr.mxu0 0.0
  %8928 = vmatpush1.msra.mxu0 0.0
  %8929 = vmatprep.subr.mxu0 0.0
  %8930 = vmatpush1.msra.mxu0 0.0
  %8931 = vmatprep.subr.mxu0 0.0
  %8932 = vmatpush1.msra.mxu0 0.0
  %8933 = vmatprep.subr.mxu0 0.0
  %8934 = vmatpush1.msra.mxu0 0.0
  %8935 = vmatprep.subr.mxu0 0.0
  %8936 = vmatpush1.msra.mxu0 0.0
  %8937 = vmatprep.subr.mxu0 0.0
  %8938 = vmatpush1.msra.mxu0 0.0
  %8939 = vmatprep.subr.mxu0 0.0
  %8940 = vmatpush1.msra.mxu0 0.0
  %8941 = vmatprep.subr.mxu0 0.0
  %8942 = vmatpush1.msra.mxu0 0.0
  %8943 = vmatprep.subr.mxu0 0.0
  %8944 = vmatpush1.msra.mxu0 0.0
  %8945 = vmatprep.subr.mxu0 0.0
  %8946 = vmatpush1.msra.mxu0 0.0
  %8947 = vmatprep.subr.mxu0 0.0
  %8948 = vmatpush1.msra.mxu0 0.0
  %8949 = vmatprep.subr.mxu0 0.0
  %8950 = vmatpush1.msra.mxu0 0.0
  %8951 = vmatprep.subr.mxu0 0.0
  %8952 = vmatpush1.msra.mxu0 0.0
  %8953 = vmatprep.subr.mxu0 0.0
  %8954 = vmatpush1.msra.mxu0 0.0
  %8955 = vmatprep.subr.mxu0 0.0
  %8956 = vmatpush1.msra.mxu0 0.0
  %8957 = vmatprep.subr.mxu0 0.0
  %8958 = vmatpush1.msra.mxu0 0.0
  %8959 = vmatprep.subr.mxu0 0.0
  %8960 = vmatpush1.msra.mxu0 0.0
  %8961 = vmatprep.subr.mxu0 0.0
  %8962 = vmatpush1.msra.mxu0 0.0
  %8963 = vmatprep.subr.mxu0 0.0
  %8964 = vmatpush1.msra.mxu0 0.0
  %8965 = vmatprep.subr.mxu0 0.0
  %8966 = vmatpush1.msra.mxu0 0.0
  %8967 = vmatprep.subr.mxu0 0.0
  %8968 = vmatpush1.msra.mxu0 0.0
  %8969 = vmatprep.subr.mxu0 0.0
  %8970 = vmatpush1.msra.mxu0 0.0
  %8971 = vmatprep.subr.mxu0 0.0
  %8972 = vmatpush1.msra.mxu0 0.0
  %8973 = vmatprep.subr.mxu0 0.0
  %8974 = vmatpush1.msra.mxu0 0.0
  %8975 = vmatprep.mubr.f32.mxu0 0.0
  %8976 = vmatmul.mubr.f32.gmra.mrb[0].mxu0 %v373
  %v8977 = vpop.f32.mrb[0].mxu0
  %v8978 = vadd.f32 %v364, %v8977
  %v8979 = vpop.f32.mrb[0].mxu0
  %8980 = vmatprep.mubr.f32.mxu0 0.0
  %8981 = vmatmul.mubr.f32.gmra.mrb[0].mxu0 %v376
  %v8982 = vpop.f32.mrb[0].mxu0
  %v8983 = vadd.f32 %v365, %v8982
  %v8984 = vpop.f32.mrb[0].mxu0
  %8985 = vmatprep.mubr.f32.mxu0 0.0
  %8986 = vmatmul.mubr.f32.gmra.mrb[0].mxu0 %v379
  %v8987 = vpop.f32.mrb[0].mxu0
  %v8988 = vadd.f32 %v366, %v8987
  %v8989 = vpop.f32.mrb[0].mxu0
  %8990 = vmatprep.mubr.f32.mxu0 0.0
  %8991 = vmatmul.mubr.f32.gmra.mrb[0].mxu0 %v382
  %v8992 = vpop.f32.mrb[0].mxu0
  %v8993 = vadd.f32 %v367, %v8992
  %v8994 = vpop.f32.mrb[0].mxu0
  %8995 = vmatprep.mubr.f32.mxu0 0.0
  %8996 = vmatmul.mubr.f32.gmra.mrb[0].mxu0 %v385
  %v8997 = vpop.f32.mrb[0].mxu0
  %v8998 = vadd.f32 %v368, %v8997
  %v8999 = vpop.f32.mrb[0].mxu0
  %9000 = vmatprep.mubr.f32.mxu0 0.0
  %9001 = vmatmul.mubr.f32.gmra.mrb[0].mxu0 %v388
  %v9002 = vpop.f32.mrb[0].mxu0
  %v9003 = vadd.f32 %v369, %v9002
  %v9004 = vpop.f32.mrb[0].mxu0
  %9005 = vmatprep.mubr.f32.mxu0 0.0
  %9006 = vmatmul.mubr.f32.gmra.mrb[0].mxu0 %v391
  %v9007 = vpop.f32.mrb[0].mxu0
  %v9008 = vadd.f32 %v370, %v9007
  %v9009 = vpop.f32.mrb[0].mxu0
  %9010 = vmatprep.mubr.f32.mxu0 0.0
  %9011 = vmatmul.mubr.f32.gmra.mrb[0].mxu0 %v394
  %v9012 = vpop.f32.mrb[0].mxu0
  %v9013 = vadd.f32 %v371, %v9012
  %v9014 = vpop.f32.mrb[0].mxu0
  %9015 = vdwg.mxu0
  %v9016 = vmax.f32 %v8903, %v8978
  %v9017 = vmax.f32 %v8904, %v8983
  %v9018 = vmax.f32 %v8905, %v8988
  %v9019 = vmax.f32 %v8906, %v8993
  %v9020 = vmax.f32 %v8907, %v8998
  %v9021 = vmax.f32 %v8908, %v9003
  %v9022 = vmax.f32 %v8909, %v9008
  %v9023 = vmax.f32 %v8910, %v9013
  %v9024 = vadd.f32 %v8677, %v9016
  %v9025 = vadd.f32 %v8678, %v9017
  %v9026 = vadd.f32 %v8679, %v9018
  %v9027 = vadd.f32 %v8680, %v9019
  %v9028 = vadd.f32 %v8681, %v9020
  %v9029 = vadd.f32 %v8682, %v9021
  %v9030 = vadd.f32 %v8683, %v9022
  %v9031 = vadd.f32 %v8684, %v9023
  %s9032 = scalar_lea.vmem %s4, 2176
  %v9033 = vld [vmem:[%s9032] sm:$0xff]
  %v9034 = vld [vmem:[%s9032 + $0x8] sm:$0xff]
  %v9035 = vld [vmem:[%s9032 + $0x10] sm:$0xff]
  %v9036 = vld [vmem:[%s9032 + $0x18] sm:$0xff]
  %v9037 = vld [vmem:[%s9032 + $0x20] sm:$0xff]
  %v9038 = vld [vmem:[%s9032 + $0x28] sm:$0xff]
  %v9039 = vld [vmem:[%s9032 + $0x30] sm:$0xff]
  %v9040 = vld [vmem:[%s9032 + $0x38] sm:$0xff]
  %v9041 = vld [vmem:[%s9032 + $0x40] sm:$0xff]
  %v9042 = vld [vmem:[%s9032 + $0x48] sm:$0xff]
  %v9043 = vld [vmem:[%s9032 + $0x50] sm:$0xff]
  %v9044 = vld [vmem:[%s9032 + $0x58] sm:$0xff]
  %v9045 = vld [vmem:[%s9032 + $0x60] sm:$0xff]
  %v9046 = vld [vmem:[%s9032 + $0x68] sm:$0xff]
  %v9047 = vld [vmem:[%s9032 + $0x70] sm:$0xff]
  %v9048 = vld [vmem:[%s9032 + $0x78] sm:$0xff]
  %s9049 = scalar_lea.vmem %s5, 17
  %v9050 = vld [vmem:[%s9049] sm:$0x1]
  %v9052 = vlaneseq
  %v9053 = vshrl.u32 %v9052, 7
  %v9054 = vsub.s32 0, %v9053
  %v9055 = vrot.slane %v9050, %v9054
  %9057 = vmatprep.subr.mxu0 0.0
  %9058 = vmatpush1.msra.mxu0 %v9033
  %9059 = vmatprep.subr.mxu0 0.0
  %9060 = vmatpush1.msra.mxu0 %v9034
  %9061 = vmatprep.subr.mxu0 0.0
  %9062 = vmatpush1.msra.mxu0 %v9035
  %9063 = vmatprep.subr.mxu0 0.0
  %9064 = vmatpush1.msra.mxu0 %v9036
  %9065 = vmatprep.subr.mxu0 0.0
  %9066 = vmatpush1.msra.mxu0 %v9037
  %9067 = vmatprep.subr.mxu0 0.0
  %9068 = vmatpush1.msra.mxu0 %v9038
  %9069 = vmatprep.subr.mxu0 0.0
  %9070 = vmatpush1.msra.mxu0 %v9039
  %9071 = vmatprep.subr.mxu0 0.0
  %9072 = vmatpush1.msra.mxu0 %v9040
  %9073 = vmatprep.subr.mxu0 0.0
  %9074 = vmatpush1.msra.mxu0 %v9041
  %9075 = vmatprep.subr.mxu0 0.0
  %9076 = vmatpush1.msra.mxu0 %v9042
  %9077 = vmatprep.subr.mxu0 0.0
  %9078 = vmatpush1.msra.mxu0 %v9043
  %9079 = vmatprep.subr.mxu0 0.0
  %9080 = vmatpush1.msra.mxu0 %v9044
  %9081 = vmatprep.subr.mxu0 0.0
  %9082 = vmatpush1.msra.mxu0 %v9045
  %9083 = vmatprep.subr.mxu0 0.0
  %9084 = vmatpush1.msra.mxu0 %v9046
  %9085 = vmatprep.subr.mxu0 0.0
  %9086 = vmatpush1.msra.mxu0 %v9047
  %9087 = vmatprep.subr.mxu0 0.0
  %9088 = vmatpush1.msra.mxu0 %v9048
  %9089 = vmatprep.subr.mxu0 0.0
  %9090 = vmatpush1.msra.mxu0 0.0
  %9091 = vmatprep.subr.mxu0 0.0
  %9092 = vmatpush1.msra.mxu0 0.0
  %9093 = vmatprep.subr.mxu0 0.0
  %9094 = vmatpush1.msra.mxu0 0.0
  %9095 = vmatprep.subr.mxu0 0.0
  %9096 = vmatpush1.msra.mxu0 0.0
  %9097 = vmatprep.subr.mxu0 0.0
  %9098 = vmatpush1.msra.mxu0 0.0
  %9099 = vmatprep.subr.mxu0 0.0
  %9100 = vmatpush1.msra.mxu0 0.0
  %9101 = vmatprep.subr.mxu0 0.0
  %9102 = vmatpush1.msra.mxu0 0.0
  %9103 = vmatprep.subr.mxu0 0.0
  %9104 = vmatpush1.msra.mxu0 0.0
  %9105 = vmatprep.subr.mxu0 0.0
  %9106 = vmatpush1.msra.mxu0 0.0
  %9107 = vmatprep.subr.mxu0 0.0
  %9108 = vmatpush1.msra.mxu0 0.0
  %9109 = vmatprep.subr.mxu0 0.0
  %9110 = vmatpush1.msra.mxu0 0.0
  %9111 = vmatprep.subr.mxu0 0.0
  %9112 = vmatpush1.msra.mxu0 0.0
  %9113 = vmatprep.subr.mxu0 0.0
  %9114 = vmatpush1.msra.mxu0 0.0
  %9115 = vmatprep.subr.mxu0 0.0
  %9116 = vmatpush1.msra.mxu0 0.0
  %9117 = vmatprep.subr.mxu0 0.0
  %9118 = vmatpush1.msra.mxu0 0.0
  %9119 = vmatprep.subr.mxu0 0.0
  %9120 = vmatpush1.msra.mxu0 0.0
  %9121 = vmatprep.mubr.f32.mxu0 0.0
  %9122 = vmatmul.mubr.f32.gmra.mrb[0].mxu0 %v9024
  %v9123 = vpop.f32.mrb[0].mxu0
  %v9124 = vadd.f32 %v9055, %v9123
  %v9125 = vpop.f32.mrb[0].mxu0
  %9126 = vmatprep.mubr.f32.mxu0 0.0
  %9127 = vmatmul.mubr.f32.gmra.mrb[0].mxu0 %v9025
  %v9128 = vpop.f32.mrb[0].mxu0
  %v9129 = vadd.f32 %v9055, %v9128
  %v9130 = vpop.f32.mrb[0].mxu0
  %9131 = vmatprep.mubr.f32.mxu0 0.0
  %9132 = vmatmul.mubr.f32.gmra.mrb[0].mxu0 %v9026
  %v9133 = vpop.f32.mrb[0].mxu0
  %v9134 = vadd.f32 %v9055, %v9133
  %v9135 = vpop.f32.mrb[0].mxu0
  %9136 = vmatprep.mubr.f32.mxu0 0.0
  %9137 = vmatmul.mubr.f32.gmra.mrb[0].mxu0 %v9027
  %v9138 = vpop.f32.mrb[0].mxu0
  %v9139 = vadd.f32 %v9055, %v9138
  %v9140 = vpop.f32.mrb[0].mxu0
  %9141 = vmatprep.mubr.f32.mxu0 0.0
  %9142 = vmatmul.mubr.f32.gmra.mrb[0].mxu0 %v9028
  %v9143 = vpop.f32.mrb[0].mxu0
  %v9144 = vadd.f32 %v9055, %v9143
  %v9145 = vpop.f32.mrb[0].mxu0
  %9146 = vmatprep.mubr.f32.mxu0 0.0
  %9147 = vmatmul.mubr.f32.gmra.mrb[0].mxu0 %v9029
  %v9148 = vpop.f32.mrb[0].mxu0
  %v9149 = vadd.f32 %v9055, %v9148
  %v9150 = vpop.f32.mrb[0].mxu0
  %9151 = vmatprep.mubr.f32.mxu0 0.0
  %9152 = vmatmul.mubr.f32.gmra.mrb[0].mxu0 %v9030
  %v9153 = vpop.f32.mrb[0].mxu0
  %v9154 = vadd.f32 %v9055, %v9153
  %v9155 = vpop.f32.mrb[0].mxu0
  %9156 = vmatprep.mubr.f32.mxu0 0.0
  %9157 = vmatmul.mubr.f32.gmra.mrb[0].mxu0 %v9031
  %v9158 = vpop.f32.mrb[0].mxu0
  %v9159 = vadd.f32 %v9055, %v9158
  %v9160 = vpop.f32.mrb[0].mxu0
  %9161 = vdwg.mxu0
  %vm9162 = vcmp.ge.f32.partialorder %v9124, 0.0
  %vm9163 = vcmp.ge.f32.partialorder %v9129, 0.0
  %vm9164 = vcmp.ge.f32.partialorder %v9134, 0.0
  %vm9165 = vcmp.ge.f32.partialorder %v9139, 0.0
  %vm9166 = vcmp.ge.f32.partialorder %v9144, 0.0
  %vm9167 = vcmp.ge.f32.partialorder %v9149, 0.0
  %vm9168 = vcmp.ge.f32.partialorder %v9154, 0.0
  %vm9169 = vcmp.ge.f32.partialorder %v9159, 0.0
  %v9170 = vmul.f32 %v9124, 0.01
  %v9171 = vmul.f32 %v9129, 0.01
  %v9172 = vmul.f32 %v9134, 0.01
  %v9173 = vmul.f32 %v9139, 0.01
  %v9174 = vmul.f32 %v9144, 0.01
  %v9175 = vmul.f32 %v9149, 0.01
  %v9176 = vmul.f32 %v9154, 0.01
  %v9177 = vmul.f32 %v9159, 0.01
  %v9178 = vsel %vm9162, %v9124, %v9170
  %v9179 = vsel %vm9163, %v9129, %v9171
  %v9180 = vsel %vm9164, %v9134, %v9172
  %v9181 = vsel %vm9165, %v9139, %v9173
  %v9182 = vsel %vm9166, %v9144, %v9174
  %v9183 = vsel %vm9167, %v9149, %v9175
  %v9184 = vsel %vm9168, %v9154, %v9176
  %v9185 = vsel %vm9169, %v9159, %v9177
  %9186 = vmatprep.subr.mxu0 0.0
  %9187 = vmatpush1.msra.mxu0 %v9178
  %9188 = vmatprep.subr.mxu0 0.0
  %9189 = vmatpush1.msra.mxu0 %v9179
  %9190 = vmatprep.subr.mxu0 0.0
  %9191 = vmatpush1.msra.mxu0 %v9180
  %9192 = vmatprep.subr.mxu0 0.0
  %9193 = vmatpush1.msra.mxu0 %v9181
  %9194 = vmatprep.subr.mxu0 0.0
  %9195 = vmatpush1.msra.mxu0 %v9182
  %9196 = vmatprep.subr.mxu0 0.0
  %9197 = vmatpush1.msra.mxu0 %v9183
  %9198 = vmatprep.subr.mxu0 0.0
  %9199 = vmatpush1.msra.mxu0 %v9184
  %9200 = vmatprep.subr.mxu0 0.0
  %9201 = vmatpush1.msra.mxu0 %v9185
  %9202 = vmatprep.subr.mxu0 0.0
  %9203 = vmatpush1.msra.mxu0 0.0
  %9204 = vmatprep.subr.mxu0 0.0
  %9205 = vmatpush1.msra.mxu0 0.0
  %9206 = vmatprep.subr.mxu0 0.0
  %9207 = vmatpush1.msra.mxu0 0.0
  %9208 = vmatprep.subr.mxu0 0.0
  %9209 = vmatpush1.msra.mxu0 0.0
  %9210 = vmatprep.subr.mxu0 0.0
  %9211 = vmatpush1.msra.mxu0 0.0
  %9212 = vmatprep.subr.mxu0 0.0
  %9213 = vmatpush1.msra.mxu0 0.0
  %9214 = vmatprep.subr.mxu0 0.0
  %9215 = vmatpush1.msra.mxu0 0.0
  %9216 = vmatprep.subr.mxu0 0.0
  %9217 = vmatpush1.msra.mxu0 0.0
  %9218 = vmatprep.subr.mxu0 0.0
  %9219 = vmatpush1.msra.mxu0 0.0
  %9220 = vmatprep.subr.mxu0 0.0
  %9221 = vmatpush1.msra.mxu0 0.0
  %9222 = vmatprep.subr.mxu0 0.0
  %9223 = vmatpush1.msra.mxu0 0.0
  %9224 = vmatprep.subr.mxu0 0.0
  %9225 = vmatpush1.msra.mxu0 0.0
  %9226 = vmatprep.subr.mxu0 0.0
  %9227 = vmatpush1.msra.mxu0 0.0
  %9228 = vmatprep.subr.mxu0 0.0
  %9229 = vmatpush1.msra.mxu0 0.0
  %9230 = vmatprep.subr.mxu0 0.0
  %9231 = vmatpush1.msra.mxu0 0.0
  %9232 = vmatprep.subr.mxu0 0.0
  %9233 = vmatpush1.msra.mxu0 0.0
  %9234 = vmatprep.subr.mxu0 0.0
  %9235 = vmatpush1.msra.mxu0 0.0
  %9236 = vmatprep.subr.mxu0 0.0
  %9237 = vmatpush1.msra.mxu0 0.0
  %9238 = vmatprep.subr.mxu0 0.0
  %9239 = vmatpush1.msra.mxu0 0.0
  %9240 = vmatprep.subr.mxu0 0.0
  %9241 = vmatpush1.msra.mxu0 0.0
  %9242 = vmatprep.subr.mxu0 0.0
  %9243 = vmatpush1.msra.mxu0 0.0
  %9244 = vmatprep.subr.mxu0 0.0
  %9245 = vmatpush1.msra.mxu0 0.0
  %9246 = vmatprep.subr.mxu0 0.0
  %9247 = vmatpush1.msra.mxu0 0.0
  %9248 = vmatprep.subr.mxu0 0.0
  %9249 = vmatpush1.msra.mxu0 0.0
  %9250 = vmatprep.mubr.f32.mxu0 0.0
  %9251 = vmatmul.mubr.f32.gmra.mrb[0].mxu0 %v63
  %v9252 = vpop.f32.mrb[0].mxu0
  %v9253 = vadd.f32 %v53, %v9252
  %v9254 = vpop.f32.mrb[0].mxu0
  %9255 = vmatprep.mubr.f32.mxu0 0.0
  %9256 = vmatmul.mubr.f32.gmra.mrb[0].mxu0 %v66
  %v9257 = vpop.f32.mrb[0].mxu0
  %v9258 = vadd.f32 %v54, %v9257
  %v9259 = vpop.f32.mrb[0].mxu0
  %9260 = vmatprep.mubr.f32.mxu0 0.0
  %9261 = vmatmul.mubr.f32.gmra.mrb[0].mxu0 %v69
  %v9262 = vpop.f32.mrb[0].mxu0
  %v9263 = vadd.f32 %v55, %v9262
  %v9264 = vpop.f32.mrb[0].mxu0
  %9265 = vmatprep.mubr.f32.mxu0 0.0
  %9266 = vmatmul.mubr.f32.gmra.mrb[0].mxu0 %v72
  %v9267 = vpop.f32.mrb[0].mxu0
  %v9268 = vadd.f32 %v56, %v9267
  %v9269 = vpop.f32.mrb[0].mxu0
  %9270 = vmatprep.mubr.f32.mxu0 0.0
  %9271 = vmatmul.mubr.f32.gmra.mrb[0].mxu0 %v75
  %v9272 = vpop.f32.mrb[0].mxu0
  %v9273 = vadd.f32 %v57, %v9272
  %v9274 = vpop.f32.mrb[0].mxu0
  %9275 = vmatprep.mubr.f32.mxu0 0.0
  %9276 = vmatmul.mubr.f32.gmra.mrb[0].mxu0 %v78
  %v9277 = vpop.f32.mrb[0].mxu0
  %v9278 = vadd.f32 %v58, %v9277
  %v9279 = vpop.f32.mrb[0].mxu0
  %9280 = vmatprep.mubr.f32.mxu0 0.0
  %9281 = vmatmul.mubr.f32.gmra.mrb[0].mxu0 %v81
  %v9282 = vpop.f32.mrb[0].mxu0
  %v9283 = vadd.f32 %v59, %v9282
  %v9284 = vpop.f32.mrb[0].mxu0
  %9285 = vmatprep.mubr.f32.mxu0 0.0
  %9286 = vmatmul.mubr.f32.gmra.mrb[0].mxu0 %v84
  %v9287 = vpop.f32.mrb[0].mxu0
  %v9288 = vadd.f32 %v60, %v9287
  %v9289 = vpop.f32.mrb[0].mxu0
  %9290 = vdwg.mxu0
  %v9291 = vmax.f32 %v29, %v9253
  %v9292 = vmax.f32 %v30, %v9258
  %v9293 = vmax.f32 %v31, %v9263
  %v9294 = vmax.f32 %v32, %v9268
  %v9295 = vmax.f32 %v33, %v9273
  %v9296 = vmax.f32 %v34, %v9278
  %v9297 = vmax.f32 %v35, %v9283
  %v9298 = vmax.f32 %v36, %v9288
  %9299 = vmatprep.subr.mxu0 0.0
  %9300 = vmatpush1.msra.mxu0 %v9178
  %9301 = vmatprep.subr.mxu0 0.0
  %9302 = vmatpush1.msra.mxu0 %v9179
  %9303 = vmatprep.subr.mxu0 0.0
  %9304 = vmatpush1.msra.mxu0 %v9180
  %9305 = vmatprep.subr.mxu0 0.0
  %9306 = vmatpush1.msra.mxu0 %v9181
  %9307 = vmatprep.subr.mxu0 0.0
  %9308 = vmatpush1.msra.mxu0 %v9182
  %9309 = vmatprep.subr.mxu0 0.0
  %9310 = vmatpush1.msra.mxu0 %v9183
  %9311 = vmatprep.subr.mxu0 0.0
  %9312 = vmatpush1.msra.mxu0 %v9184
  %9313 = vmatprep.subr.mxu0 0.0
  %9314 = vmatpush1.msra.mxu0 %v9185
  %9315 = vmatprep.subr.mxu0 0.0
  %9316 = vmatpush1.msra.mxu0 0.0
  %9317 = vmatprep.subr.mxu0 0.0
  %9318 = vmatpush1.msra.mxu0 0.0
  %9319 = vmatprep.subr.mxu0 0.0
  %9320 = vmatpush1.msra.mxu0 0.0
  %9321 = vmatprep.subr.mxu0 0.0
  %9322 = vmatpush1.msra.mxu0 0.0
  %9323 = vmatprep.subr.mxu0 0.0
  %9324 = vmatpush1.msra.mxu0 0.0
  %9325 = vmatprep.subr.mxu0 0.0
  %9326 = vmatpush1.msra.mxu0 0.0
  %9327 = vmatprep.subr.mxu0 0.0
  %9328 = vmatpush1.msra.mxu0 0.0
  %9329 = vmatprep.subr.mxu0 0.0
  %9330 = vmatpush1.msra.mxu0 0.0
  %9331 = vmatprep.subr.mxu0 0.0
  %9332 = vmatpush1.msra.mxu0 0.0
  %9333 = vmatprep.subr.mxu0 0.0
  %9334 = vmatpush1.msra.mxu0 0.0
  %9335 = vmatprep.subr.mxu0 0.0
  %9336 = vmatpush1.msra.mxu0 0.0
  %9337 = vmatprep.subr.mxu0 0.0
  %9338 = vmatpush1.msra.mxu0 0.0
  %9339 = vmatprep.subr.mxu0 0.0
  %9340 = vmatpush1.msra.mxu0 0.0
  %9341 = vmatprep.subr.mxu0 0.0
  %9342 = vmatpush1.msra.mxu0 0.0
  %9343 = vmatprep.subr.mxu0 0.0
  %9344 = vmatpush1.msra.mxu0 0.0
  %9345 = vmatprep.subr.mxu0 0.0
  %9346 = vmatpush1.msra.mxu0 0.0
  %9347 = vmatprep.subr.mxu0 0.0
  %9348 = vmatpush1.msra.mxu0 0.0
  %9349 = vmatprep.subr.mxu0 0.0
  %9350 = vmatpush1.msra.mxu0 0.0
  %9351 = vmatprep.subr.mxu0 0.0
  %9352 = vmatpush1.msra.mxu0 0.0
  %9353 = vmatprep.subr.mxu0 0.0
  %9354 = vmatpush1.msra.mxu0 0.0
  %9355 = vmatprep.subr.mxu0 0.0
  %9356 = vmatpush1.msra.mxu0 0.0
  %9357 = vmatprep.subr.mxu0 0.0
  %9358 = vmatpush1.msra.mxu0 0.0
  %9359 = vmatprep.subr.mxu0 0.0
  %9360 = vmatpush1.msra.mxu0 0.0
  %9361 = vmatprep.subr.mxu0 0.0
  %9362 = vmatpush1.msra.mxu0 0.0
  %9363 = vmatprep.mubr.f32.mxu0 0.0
  %9364 = vmatmul.mubr.f32.gmra.mrb[0].mxu0 %v218
  %v9365 = vpop.f32.mrb[0].mxu0
  %v9366 = vadd.f32 %v209, %v9365
  %v9367 = vpop.f32.mrb[0].mxu0
  %9368 = vmatprep.mubr.f32.mxu0 0.0
  %9369 = vmatmul.mubr.f32.gmra.mrb[0].mxu0 %v221
  %v9370 = vpop.f32.mrb[0].mxu0
  %v9371 = vadd.f32 %v210, %v9370
  %v9372 = vpop.f32.mrb[0].mxu0
  %9373 = vmatprep.mubr.f32.mxu0 0.0
  %9374 = vmatmul.mubr.f32.gmra.mrb[0].mxu0 %v224
  %v9375 = vpop.f32.mrb[0].mxu0
  %v9376 = vadd.f32 %v211, %v9375
  %v9377 = vpop.f32.mrb[0].mxu0
  %9378 = vmatprep.mubr.f32.mxu0 0.0
  %9379 = vmatmul.mubr.f32.gmra.mrb[0].mxu0 %v227
  %v9380 = vpop.f32.mrb[0].mxu0
  %v9381 = vadd.f32 %v212, %v9380
  %v9382 = vpop.f32.mrb[0].mxu0
  %9383 = vmatprep.mubr.f32.mxu0 0.0
  %9384 = vmatmul.mubr.f32.gmra.mrb[0].mxu0 %v230
  %v9385 = vpop.f32.mrb[0].mxu0
  %v9386 = vadd.f32 %v213, %v9385
  %v9387 = vpop.f32.mrb[0].mxu0
  %9388 = vmatprep.mubr.f32.mxu0 0.0
  %9389 = vmatmul.mubr.f32.gmra.mrb[0].mxu0 %v233
  %v9390 = vpop.f32.mrb[0].mxu0
  %v9391 = vadd.f32 %v214, %v9390
  %v9392 = vpop.f32.mrb[0].mxu0
  %9393 = vmatprep.mubr.f32.mxu0 0.0
  %9394 = vmatmul.mubr.f32.gmra.mrb[0].mxu0 %v236
  %v9395 = vpop.f32.mrb[0].mxu0
  %v9396 = vadd.f32 %v215, %v9395
  %v9397 = vpop.f32.mrb[0].mxu0
  %9398 = vmatprep.mubr.f32.mxu0 0.0
  %9399 = vmatmul.mubr.f32.gmra.mrb[0].mxu0 %v239
  %v9400 = vpop.f32.mrb[0].mxu0
  %v9401 = vadd.f32 %v216, %v9400
  %v9402 = vpop.f32.mrb[0].mxu0
  %9403 = vdwg.mxu0
  %v9404 = vmax.f32 %v9291, %v9366
  %v9405 = vmax.f32 %v9292, %v9371
  %v9406 = vmax.f32 %v9293, %v9376
  %v9407 = vmax.f32 %v9294, %v9381
  %v9408 = vmax.f32 %v9295, %v9386
  %v9409 = vmax.f32 %v9296, %v9391
  %v9410 = vmax.f32 %v9297, %v9396
  %v9411 = vmax.f32 %v9298, %v9401
  %9412 = vmatprep.subr.mxu0 0.0
  %9413 = vmatpush1.msra.mxu0 %v9178
  %9414 = vmatprep.subr.mxu0 0.0
  %9415 = vmatpush1.msra.mxu0 %v9179
  %9416 = vmatprep.subr.mxu0 0.0
  %9417 = vmatpush1.msra.mxu0 %v9180
  %9418 = vmatprep.subr.mxu0 0.0
  %9419 = vmatpush1.msra.mxu0 %v9181
  %9420 = vmatprep.subr.mxu0 0.0
  %9421 = vmatpush1.msra.mxu0 %v9182
  %9422 = vmatprep.subr.mxu0 0.0
  %9423 = vmatpush1.msra.mxu0 %v9183
  %9424 = vmatprep.subr.mxu0 0.0
  %9425 = vmatpush1.msra.mxu0 %v9184
  %9426 = vmatprep.subr.mxu0 0.0
  %9427 = vmatpush1.msra.mxu0 %v9185
  %9428 = vmatprep.subr.mxu0 0.0
  %9429 = vmatpush1.msra.mxu0 0.0
  %9430 = vmatprep.subr.mxu0 0.0
  %9431 = vmatpush1.msra.mxu0 0.0
  %9432 = vmatprep.subr.mxu0 0.0
  %9433 = vmatpush1.msra.mxu0 0.0
  %9434 = vmatprep.subr.mxu0 0.0
  %9435 = vmatpush1.msra.mxu0 0.0
  %9436 = vmatprep.subr.mxu0 0.0
  %9437 = vmatpush1.msra.mxu0 0.0
  %9438 = vmatprep.subr.mxu0 0.0
  %9439 = vmatpush1.msra.mxu0 0.0
  %9440 = vmatprep.subr.mxu0 0.0
  %9441 = vmatpush1.msra.mxu0 0.0
  %9442 = vmatprep.subr.mxu0 0.0
  %9443 = vmatpush1.msra.mxu0 0.0
  %9444 = vmatprep.subr.mxu0 0.0
  %9445 = vmatpush1.msra.mxu0 0.0
  %9446 = vmatprep.subr.mxu0 0.0
  %9447 = vmatpush1.msra.mxu0 0.0
  %9448 = vmatprep.subr.mxu0 0.0
  %9449 = vmatpush1.msra.mxu0 0.0
  %9450 = vmatprep.subr.mxu0 0.0
  %9451 = vmatpush1.msra.mxu0 0.0
  %9452 = vmatprep.subr.mxu0 0.0
  %9453 = vmatpush1.msra.mxu0 0.0
  %9454 = vmatprep.subr.mxu0 0.0
  %9455 = vmatpush1.msra.mxu0 0.0
  %9456 = vmatprep.subr.mxu0 0.0
  %9457 = vmatpush1.msra.mxu0 0.0
  %9458 = vmatprep.subr.mxu0 0.0
  %9459 = vmatpush1.msra.mxu0 0.0
  %9460 = vmatprep.subr.mxu0 0.0
  %9461 = vmatpush1.msra.mxu0 0.0
  %9462 = vmatprep.subr.mxu0 0.0
  %9463 = vmatpush1.msra.mxu0 0.0
  %9464 = vmatprep.subr.mxu0 0.0
  %9465 = vmatpush1.msra.mxu0 0.0
  %9466 = vmatprep.subr.mxu0 0.0
  %9467 = vmatpush1.msra.mxu0 0.0
  %9468 = vmatprep.subr.mxu0 0.0
  %9469 = vmatpush1.msra.mxu0 0.0
  %9470 = vmatprep.subr.mxu0 0.0
  %9471 = vmatpush1.msra.mxu0 0.0
  %9472 = vmatprep.subr.mxu0 0.0
  %9473 = vmatpush1.msra.mxu0 0.0
  %9474 = vmatprep.subr.mxu0 0.0
  %9475 = vmatpush1.msra.mxu0 0.0
  %9476 = vmatprep.mubr.f32.mxu0 0.0
  %9477 = vmatmul.mubr.f32.gmra.mrb[0].mxu0 %v373
  %v9478 = vpop.f32.mrb[0].mxu0
  %v9479 = vadd.f32 %v364, %v9478
  %v9480 = vpop.f32.mrb[0].mxu0
  %9481 = vmatprep.mubr.f32.mxu0 0.0
  %9482 = vmatmul.mubr.f32.gmra.mrb[0].mxu0 %v376
  %v9483 = vpop.f32.mrb[0].mxu0
  %v9484 = vadd.f32 %v365, %v9483
  %v9485 = vpop.f32.mrb[0].mxu0
  %9486 = vmatprep.mubr.f32.mxu0 0.0
  %9487 = vmatmul.mubr.f32.gmra.mrb[0].mxu0 %v379
  %v9488 = vpop.f32.mrb[0].mxu0
  %v9489 = vadd.f32 %v366, %v9488
  %v9490 = vpop.f32.mrb[0].mxu0
  %9491 = vmatprep.mubr.f32.mxu0 0.0
  %9492 = vmatmul.mubr.f32.gmra.mrb[0].mxu0 %v382
  %v9493 = vpop.f32.mrb[0].mxu0
  %v9494 = vadd.f32 %v367, %v9493
  %v9495 = vpop.f32.mrb[0].mxu0
  %9496 = vmatprep.mubr.f32.mxu0 0.0
  %9497 = vmatmul.mubr.f32.gmra.mrb[0].mxu0 %v385
  %v9498 = vpop.f32.mrb[0].mxu0
  %v9499 = vadd.f32 %v368, %v9498
  %v9500 = vpop.f32.mrb[0].mxu0
  %9501 = vmatprep.mubr.f32.mxu0 0.0
  %9502 = vmatmul.mubr.f32.gmra.mrb[0].mxu0 %v388
  %v9503 = vpop.f32.mrb[0].mxu0
  %v9504 = vadd.f32 %v369, %v9503
  %v9505 = vpop.f32.mrb[0].mxu0
  %9506 = vmatprep.mubr.f32.mxu0 0.0
  %9507 = vmatmul.mubr.f32.gmra.mrb[0].mxu0 %v391
  %v9508 = vpop.f32.mrb[0].mxu0
  %v9509 = vadd.f32 %v370, %v9508
  %v9510 = vpop.f32.mrb[0].mxu0
  %9511 = vmatprep.mubr.f32.mxu0 0.0
  %9512 = vmatmul.mubr.f32.gmra.mrb[0].mxu0 %v394
  %v9513 = vpop.f32.mrb[0].mxu0
  %v9514 = vadd.f32 %v371, %v9513
  %v9515 = vpop.f32.mrb[0].mxu0
  %9516 = vdwg.mxu0
  %v9517 = vmax.f32 %v9404, %v9479
  %v9518 = vmax.f32 %v9405, %v9484
  %v9519 = vmax.f32 %v9406, %v9489
  %v9520 = vmax.f32 %v9407, %v9494
  %v9521 = vmax.f32 %v9408, %v9499
  %v9522 = vmax.f32 %v9409, %v9504
  %v9523 = vmax.f32 %v9410, %v9509
  %v9524 = vmax.f32 %v9411, %v9514
  %v9525 = vadd.f32 %v9178, %v9517
  %v9526 = vadd.f32 %v9179, %v9518
  %v9527 = vadd.f32 %v9180, %v9519
  %v9528 = vadd.f32 %v9181, %v9520
  %v9529 = vadd.f32 %v9182, %v9521
  %v9530 = vadd.f32 %v9183, %v9522
  %v9531 = vadd.f32 %v9184, %v9523
  %v9532 = vadd.f32 %v9185, %v9524
  %s9533 = scalar_lea.vmem %s4, 2304
  %v9534 = vld [vmem:[%s9533] sm:$0xff]
  %v9535 = vld [vmem:[%s9533 + $0x8] sm:$0xff]
  %v9536 = vld [vmem:[%s9533 + $0x10] sm:$0xff]
  %v9537 = vld [vmem:[%s9533 + $0x18] sm:$0xff]
  %v9538 = vld [vmem:[%s9533 + $0x20] sm:$0xff]
  %v9539 = vld [vmem:[%s9533 + $0x28] sm:$0xff]
  %v9540 = vld [vmem:[%s9533 + $0x30] sm:$0xff]
  %v9541 = vld [vmem:[%s9533 + $0x38] sm:$0xff]
  %v9542 = vld [vmem:[%s9533 + $0x40] sm:$0xff]
  %v9543 = vld [vmem:[%s9533 + $0x48] sm:$0xff]
  %v9544 = vld [vmem:[%s9533 + $0x50] sm:$0xff]
  %v9545 = vld [vmem:[%s9533 + $0x58] sm:$0xff]
  %v9546 = vld [vmem:[%s9533 + $0x60] sm:$0xff]
  %v9547 = vld [vmem:[%s9533 + $0x68] sm:$0xff]
  %v9548 = vld [vmem:[%s9533 + $0x70] sm:$0xff]
  %v9549 = vld [vmem:[%s9533 + $0x78] sm:$0xff]
  %s9550 = scalar_lea.vmem %s5, 18
  %v9551 = vld [vmem:[%s9550] sm:$0x1]
  %v9553 = vlaneseq
  %v9554 = vshrl.u32 %v9553, 7
  %v9555 = vsub.s32 0, %v9554
  %v9556 = vrot.slane %v9551, %v9555
  %9558 = vmatprep.subr.mxu0 0.0
  %9559 = vmatpush1.msra.mxu0 %v9534
  %9560 = vmatprep.subr.mxu0 0.0
  %9561 = vmatpush1.msra.mxu0 %v9535
  %9562 = vmatprep.subr.mxu0 0.0
  %9563 = vmatpush1.msra.mxu0 %v9536
  %9564 = vmatprep.subr.mxu0 0.0
  %9565 = vmatpush1.msra.mxu0 %v9537
  %9566 = vmatprep.subr.mxu0 0.0
  %9567 = vmatpush1.msra.mxu0 %v9538
  %9568 = vmatprep.subr.mxu0 0.0
  %9569 = vmatpush1.msra.mxu0 %v9539
  %9570 = vmatprep.subr.mxu0 0.0
  %9571 = vmatpush1.msra.mxu0 %v9540
  %9572 = vmatprep.subr.mxu0 0.0
  %9573 = vmatpush1.msra.mxu0 %v9541
  %9574 = vmatprep.subr.mxu0 0.0
  %9575 = vmatpush1.msra.mxu0 %v9542
  %9576 = vmatprep.subr.mxu0 0.0
  %9577 = vmatpush1.msra.mxu0 %v9543
  %9578 = vmatprep.subr.mxu0 0.0
  %9579 = vmatpush1.msra.mxu0 %v9544
  %9580 = vmatprep.subr.mxu0 0.0
  %9581 = vmatpush1.msra.mxu0 %v9545
  %9582 = vmatprep.subr.mxu0 0.0
  %9583 = vmatpush1.msra.mxu0 %v9546
  %9584 = vmatprep.subr.mxu0 0.0
  %9585 = vmatpush1.msra.mxu0 %v9547
  %9586 = vmatprep.subr.mxu0 0.0
  %9587 = vmatpush1.msra.mxu0 %v9548
  %9588 = vmatprep.subr.mxu0 0.0
  %9589 = vmatpush1.msra.mxu0 %v9549
  %9590 = vmatprep.subr.mxu0 0.0
  %9591 = vmatpush1.msra.mxu0 0.0
  %9592 = vmatprep.subr.mxu0 0.0
  %9593 = vmatpush1.msra.mxu0 0.0
  %9594 = vmatprep.subr.mxu0 0.0
  %9595 = vmatpush1.msra.mxu0 0.0
  %9596 = vmatprep.subr.mxu0 0.0
  %9597 = vmatpush1.msra.mxu0 0.0
  %9598 = vmatprep.subr.mxu0 0.0
  %9599 = vmatpush1.msra.mxu0 0.0
  %9600 = vmatprep.subr.mxu0 0.0
  %9601 = vmatpush1.msra.mxu0 0.0
  %9602 = vmatprep.subr.mxu0 0.0
  %9603 = vmatpush1.msra.mxu0 0.0
  %9604 = vmatprep.subr.mxu0 0.0
  %9605 = vmatpush1.msra.mxu0 0.0
  %9606 = vmatprep.subr.mxu0 0.0
  %9607 = vmatpush1.msra.mxu0 0.0
  %9608 = vmatprep.subr.mxu0 0.0
  %9609 = vmatpush1.msra.mxu0 0.0
  %9610 = vmatprep.subr.mxu0 0.0
  %9611 = vmatpush1.msra.mxu0 0.0
  %9612 = vmatprep.subr.mxu0 0.0
  %9613 = vmatpush1.msra.mxu0 0.0
  %9614 = vmatprep.subr.mxu0 0.0
  %9615 = vmatpush1.msra.mxu0 0.0
  %9616 = vmatprep.subr.mxu0 0.0
  %9617 = vmatpush1.msra.mxu0 0.0
  %9618 = vmatprep.subr.mxu0 0.0
  %9619 = vmatpush1.msra.mxu0 0.0
  %9620 = vmatprep.subr.mxu0 0.0
  %9621 = vmatpush1.msra.mxu0 0.0
  %9622 = vmatprep.mubr.f32.mxu0 0.0
  %9623 = vmatmul.mubr.f32.gmra.mrb[0].mxu0 %v9525
  %v9624 = vpop.f32.mrb[0].mxu0
  %v9625 = vadd.f32 %v9556, %v9624
  %v9626 = vpop.f32.mrb[0].mxu0
  %9627 = vmatprep.mubr.f32.mxu0 0.0
  %9628 = vmatmul.mubr.f32.gmra.mrb[0].mxu0 %v9526
  %v9629 = vpop.f32.mrb[0].mxu0
  %v9630 = vadd.f32 %v9556, %v9629
  %v9631 = vpop.f32.mrb[0].mxu0
  %9632 = vmatprep.mubr.f32.mxu0 0.0
  %9633 = vmatmul.mubr.f32.gmra.mrb[0].mxu0 %v9527
  %v9634 = vpop.f32.mrb[0].mxu0
  %v9635 = vadd.f32 %v9556, %v9634
  %v9636 = vpop.f32.mrb[0].mxu0
  %9637 = vmatprep.mubr.f32.mxu0 0.0
  %9638 = vmatmul.mubr.f32.gmra.mrb[0].mxu0 %v9528
  %v9639 = vpop.f32.mrb[0].mxu0
  %v9640 = vadd.f32 %v9556, %v9639
  %v9641 = vpop.f32.mrb[0].mxu0
  %9642 = vmatprep.mubr.f32.mxu0 0.0
  %9643 = vmatmul.mubr.f32.gmra.mrb[0].mxu0 %v9529
  %v9644 = vpop.f32.mrb[0].mxu0
  %v9645 = vadd.f32 %v9556, %v9644
  %v9646 = vpop.f32.mrb[0].mxu0
  %9647 = vmatprep.mubr.f32.mxu0 0.0
  %9648 = vmatmul.mubr.f32.gmra.mrb[0].mxu0 %v9530
  %v9649 = vpop.f32.mrb[0].mxu0
  %v9650 = vadd.f32 %v9556, %v9649
  %v9651 = vpop.f32.mrb[0].mxu0
  %9652 = vmatprep.mubr.f32.mxu0 0.0
  %9653 = vmatmul.mubr.f32.gmra.mrb[0].mxu0 %v9531
  %v9654 = vpop.f32.mrb[0].mxu0
  %v9655 = vadd.f32 %v9556, %v9654
  %v9656 = vpop.f32.mrb[0].mxu0
  %9657 = vmatprep.mubr.f32.mxu0 0.0
  %9658 = vmatmul.mubr.f32.gmra.mrb[0].mxu0 %v9532
  %v9659 = vpop.f32.mrb[0].mxu0
  %v9660 = vadd.f32 %v9556, %v9659
  %v9661 = vpop.f32.mrb[0].mxu0
  %9662 = vdwg.mxu0
  %vm9663 = vcmp.ge.f32.partialorder %v9625, 0.0
  %vm9664 = vcmp.ge.f32.partialorder %v9630, 0.0
  %vm9665 = vcmp.ge.f32.partialorder %v9635, 0.0
  %vm9666 = vcmp.ge.f32.partialorder %v9640, 0.0
  %vm9667 = vcmp.ge.f32.partialorder %v9645, 0.0
  %vm9668 = vcmp.ge.f32.partialorder %v9650, 0.0
  %vm9669 = vcmp.ge.f32.partialorder %v9655, 0.0
  %vm9670 = vcmp.ge.f32.partialorder %v9660, 0.0
  %v9671 = vmul.f32 %v9625, 0.01
  %v9672 = vmul.f32 %v9630, 0.01
  %v9673 = vmul.f32 %v9635, 0.01
  %v9674 = vmul.f32 %v9640, 0.01
  %v9675 = vmul.f32 %v9645, 0.01
  %v9676 = vmul.f32 %v9650, 0.01
  %v9677 = vmul.f32 %v9655, 0.01
  %v9678 = vmul.f32 %v9660, 0.01
  %v9679 = vsel %vm9663, %v9625, %v9671
  %v9680 = vsel %vm9664, %v9630, %v9672
  %v9681 = vsel %vm9665, %v9635, %v9673
  %v9682 = vsel %vm9666, %v9640, %v9674
  %v9683 = vsel %vm9667, %v9645, %v9675
  %v9684 = vsel %vm9668, %v9650, %v9676
  %v9685 = vsel %vm9669, %v9655, %v9677
  %v9686 = vsel %vm9670, %v9660, %v9678
  %9687 = vmatprep.subr.mxu0 0.0
  %9688 = vmatpush1.msra.mxu0 %v9679
  %9689 = vmatprep.subr.mxu0 0.0
  %9690 = vmatpush1.msra.mxu0 %v9680
  %9691 = vmatprep.subr.mxu0 0.0
  %9692 = vmatpush1.msra.mxu0 %v9681
  %9693 = vmatprep.subr.mxu0 0.0
  %9694 = vmatpush1.msra.mxu0 %v9682
  %9695 = vmatprep.subr.mxu0 0.0
  %9696 = vmatpush1.msra.mxu0 %v9683
  %9697 = vmatprep.subr.mxu0 0.0
  %9698 = vmatpush1.msra.mxu0 %v9684
  %9699 = vmatprep.subr.mxu0 0.0
  %9700 = vmatpush1.msra.mxu0 %v9685
  %9701 = vmatprep.subr.mxu0 0.0
  %9702 = vmatpush1.msra.mxu0 %v9686
  %9703 = vmatprep.subr.mxu0 0.0
  %9704 = vmatpush1.msra.mxu0 0.0
  %9705 = vmatprep.subr.mxu0 0.0
  %9706 = vmatpush1.msra.mxu0 0.0
  %9707 = vmatprep.subr.mxu0 0.0
  %9708 = vmatpush1.msra.mxu0 0.0
  %9709 = vmatprep.subr.mxu0 0.0
  %9710 = vmatpush1.msra.mxu0 0.0
  %9711 = vmatprep.subr.mxu0 0.0
  %9712 = vmatpush1.msra.mxu0 0.0
  %9713 = vmatprep.subr.mxu0 0.0
  %9714 = vmatpush1.msra.mxu0 0.0
  %9715 = vmatprep.subr.mxu0 0.0
  %9716 = vmatpush1.msra.mxu0 0.0
  %9717 = vmatprep.subr.mxu0 0.0
  %9718 = vmatpush1.msra.mxu0 0.0
  %9719 = vmatprep.subr.mxu0 0.0
  %9720 = vmatpush1.msra.mxu0 0.0
  %9721 = vmatprep.subr.mxu0 0.0
  %9722 = vmatpush1.msra.mxu0 0.0
  %9723 = vmatprep.subr.mxu0 0.0
  %9724 = vmatpush1.msra.mxu0 0.0
  %9725 = vmatprep.subr.mxu0 0.0
  %9726 = vmatpush1.msra.mxu0 0.0
  %9727 = vmatprep.subr.mxu0 0.0
  %9728 = vmatpush1.msra.mxu0 0.0
  %9729 = vmatprep.subr.mxu0 0.0
  %9730 = vmatpush1.msra.mxu0 0.0
  %9731 = vmatprep.subr.mxu0 0.0
  %9732 = vmatpush1.msra.mxu0 0.0
  %9733 = vmatprep.subr.mxu0 0.0
  %9734 = vmatpush1.msra.mxu0 0.0
  %9735 = vmatprep.subr.mxu0 0.0
  %9736 = vmatpush1.msra.mxu0 0.0
  %9737 = vmatprep.subr.mxu0 0.0
  %9738 = vmatpush1.msra.mxu0 0.0
  %9739 = vmatprep.subr.mxu0 0.0
  %9740 = vmatpush1.msra.mxu0 0.0
  %9741 = vmatprep.subr.mxu0 0.0
  %9742 = vmatpush1.msra.mxu0 0.0
  %9743 = vmatprep.subr.mxu0 0.0
  %9744 = vmatpush1.msra.mxu0 0.0
  %9745 = vmatprep.subr.mxu0 0.0
  %9746 = vmatpush1.msra.mxu0 0.0
  %9747 = vmatprep.subr.mxu0 0.0
  %9748 = vmatpush1.msra.mxu0 0.0
  %9749 = vmatprep.subr.mxu0 0.0
  %9750 = vmatpush1.msra.mxu0 0.0
  %9751 = vmatprep.mubr.f32.mxu0 0.0
  %9752 = vmatmul.mubr.f32.gmra.mrb[0].mxu0 %v63
  %v9753 = vpop.f32.mrb[0].mxu0
  %v9754 = vadd.f32 %v53, %v9753
  %v9755 = vpop.f32.mrb[0].mxu0
  %9756 = vmatprep.mubr.f32.mxu0 0.0
  %9757 = vmatmul.mubr.f32.gmra.mrb[0].mxu0 %v66
  %v9758 = vpop.f32.mrb[0].mxu0
  %v9759 = vadd.f32 %v54, %v9758
  %v9760 = vpop.f32.mrb[0].mxu0
  %9761 = vmatprep.mubr.f32.mxu0 0.0
  %9762 = vmatmul.mubr.f32.gmra.mrb[0].mxu0 %v69
  %v9763 = vpop.f32.mrb[0].mxu0
  %v9764 = vadd.f32 %v55, %v9763
  %v9765 = vpop.f32.mrb[0].mxu0
  %9766 = vmatprep.mubr.f32.mxu0 0.0
  %9767 = vmatmul.mubr.f32.gmra.mrb[0].mxu0 %v72
  %v9768 = vpop.f32.mrb[0].mxu0
  %v9769 = vadd.f32 %v56, %v9768
  %v9770 = vpop.f32.mrb[0].mxu0
  %9771 = vmatprep.mubr.f32.mxu0 0.0
  %9772 = vmatmul.mubr.f32.gmra.mrb[0].mxu0 %v75
  %v9773 = vpop.f32.mrb[0].mxu0
  %v9774 = vadd.f32 %v57, %v9773
  %v9775 = vpop.f32.mrb[0].mxu0
  %9776 = vmatprep.mubr.f32.mxu0 0.0
  %9777 = vmatmul.mubr.f32.gmra.mrb[0].mxu0 %v78
  %v9778 = vpop.f32.mrb[0].mxu0
  %v9779 = vadd.f32 %v58, %v9778
  %v9780 = vpop.f32.mrb[0].mxu0
  %9781 = vmatprep.mubr.f32.mxu0 0.0
  %9782 = vmatmul.mubr.f32.gmra.mrb[0].mxu0 %v81
  %v9783 = vpop.f32.mrb[0].mxu0
  %v9784 = vadd.f32 %v59, %v9783
  %v9785 = vpop.f32.mrb[0].mxu0
  %9786 = vmatprep.mubr.f32.mxu0 0.0
  %9787 = vmatmul.mubr.f32.gmra.mrb[0].mxu0 %v84
  %v9788 = vpop.f32.mrb[0].mxu0
  %v9789 = vadd.f32 %v60, %v9788
  %v9790 = vpop.f32.mrb[0].mxu0
  %9791 = vdwg.mxu0
  %v9792 = vmax.f32 %v29, %v9754
  %v9793 = vmax.f32 %v30, %v9759
  %v9794 = vmax.f32 %v31, %v9764
  %v9795 = vmax.f32 %v32, %v9769
  %v9796 = vmax.f32 %v33, %v9774
  %v9797 = vmax.f32 %v34, %v9779
  %v9798 = vmax.f32 %v35, %v9784
  %v9799 = vmax.f32 %v36, %v9789
  %9800 = vmatprep.subr.mxu0 0.0
  %9801 = vmatpush1.msra.mxu0 %v9679
  %9802 = vmatprep.subr.mxu0 0.0
  %9803 = vmatpush1.msra.mxu0 %v9680
  %9804 = vmatprep.subr.mxu0 0.0
  %9805 = vmatpush1.msra.mxu0 %v9681
  %9806 = vmatprep.subr.mxu0 0.0
  %9807 = vmatpush1.msra.mxu0 %v9682
  %9808 = vmatprep.subr.mxu0 0.0
  %9809 = vmatpush1.msra.mxu0 %v9683
  %9810 = vmatprep.subr.mxu0 0.0
  %9811 = vmatpush1.msra.mxu0 %v9684
  %9812 = vmatprep.subr.mxu0 0.0
  %9813 = vmatpush1.msra.mxu0 %v9685
  %9814 = vmatprep.subr.mxu0 0.0
  %9815 = vmatpush1.msra.mxu0 %v9686
  %9816 = vmatprep.subr.mxu0 0.0
  %9817 = vmatpush1.msra.mxu0 0.0
  %9818 = vmatprep.subr.mxu0 0.0
  %9819 = vmatpush1.msra.mxu0 0.0
  %9820 = vmatprep.subr.mxu0 0.0
  %9821 = vmatpush1.msra.mxu0 0.0
  %9822 = vmatprep.subr.mxu0 0.0
  %9823 = vmatpush1.msra.mxu0 0.0
  %9824 = vmatprep.subr.mxu0 0.0
  %9825 = vmatpush1.msra.mxu0 0.0
  %9826 = vmatprep.subr.mxu0 0.0
  %9827 = vmatpush1.msra.mxu0 0.0
  %9828 = vmatprep.subr.mxu0 0.0
  %9829 = vmatpush1.msra.mxu0 0.0
  %9830 = vmatprep.subr.mxu0 0.0
  %9831 = vmatpush1.msra.mxu0 0.0
  %9832 = vmatprep.subr.mxu0 0.0
  %9833 = vmatpush1.msra.mxu0 0.0
  %9834 = vmatprep.subr.mxu0 0.0
  %9835 = vmatpush1.msra.mxu0 0.0
  %9836 = vmatprep.subr.mxu0 0.0
  %9837 = vmatpush1.msra.mxu0 0.0
  %9838 = vmatprep.subr.mxu0 0.0
  %9839 = vmatpush1.msra.mxu0 0.0
  %9840 = vmatprep.subr.mxu0 0.0
  %9841 = vmatpush1.msra.mxu0 0.0
  %9842 = vmatprep.subr.mxu0 0.0
  %9843 = vmatpush1.msra.mxu0 0.0
  %9844 = vmatprep.subr.mxu0 0.0
  %9845 = vmatpush1.msra.mxu0 0.0
  %9846 = vmatprep.subr.mxu0 0.0
  %9847 = vmatpush1.msra.mxu0 0.0
  %9848 = vmatprep.subr.mxu0 0.0
  %9849 = vmatpush1.msra.mxu0 0.0
  %9850 = vmatprep.subr.mxu0 0.0
  %9851 = vmatpush1.msra.mxu0 0.0
  %9852 = vmatprep.subr.mxu0 0.0
  %9853 = vmatpush1.msra.mxu0 0.0
  %9854 = vmatprep.subr.mxu0 0.0
  %9855 = vmatpush1.msra.mxu0 0.0
  %9856 = vmatprep.subr.mxu0 0.0
  %9857 = vmatpush1.msra.mxu0 0.0
  %9858 = vmatprep.subr.mxu0 0.0
  %9859 = vmatpush1.msra.mxu0 0.0
  %9860 = vmatprep.subr.mxu0 0.0
  %9861 = vmatpush1.msra.mxu0 0.0
  %9862 = vmatprep.subr.mxu0 0.0
  %9863 = vmatpush1.msra.mxu0 0.0
  %9864 = vmatprep.mubr.f32.mxu0 0.0
  %9865 = vmatmul.mubr.f32.gmra.mrb[0].mxu0 %v218
  %v9866 = vpop.f32.mrb[0].mxu0
  %v9867 = vadd.f32 %v209, %v9866
  %v9868 = vpop.f32.mrb[0].mxu0
  %9869 = vmatprep.mubr.f32.mxu0 0.0
  %9870 = vmatmul.mubr.f32.gmra.mrb[0].mxu0 %v221
  %v9871 = vpop.f32.mrb[0].mxu0
  %v9872 = vadd.f32 %v210, %v9871
  %v9873 = vpop.f32.mrb[0].mxu0
  %9874 = vmatprep.mubr.f32.mxu0 0.0
  %9875 = vmatmul.mubr.f32.gmra.mrb[0].mxu0 %v224
  %v9876 = vpop.f32.mrb[0].mxu0
  %v9877 = vadd.f32 %v211, %v9876
  %v9878 = vpop.f32.mrb[0].mxu0
  %9879 = vmatprep.mubr.f32.mxu0 0.0
  %9880 = vmatmul.mubr.f32.gmra.mrb[0].mxu0 %v227
  %v9881 = vpop.f32.mrb[0].mxu0
  %v9882 = vadd.f32 %v212, %v9881
  %v9883 = vpop.f32.mrb[0].mxu0
  %9884 = vmatprep.mubr.f32.mxu0 0.0
  %9885 = vmatmul.mubr.f32.gmra.mrb[0].mxu0 %v230
  %v9886 = vpop.f32.mrb[0].mxu0
  %v9887 = vadd.f32 %v213, %v9886
  %v9888 = vpop.f32.mrb[0].mxu0
  %9889 = vmatprep.mubr.f32.mxu0 0.0
  %9890 = vmatmul.mubr.f32.gmra.mrb[0].mxu0 %v233
  %v9891 = vpop.f32.mrb[0].mxu0
  %v9892 = vadd.f32 %v214, %v9891
  %v9893 = vpop.f32.mrb[0].mxu0
  %9894 = vmatprep.mubr.f32.mxu0 0.0
  %9895 = vmatmul.mubr.f32.gmra.mrb[0].mxu0 %v236
  %v9896 = vpop.f32.mrb[0].mxu0
  %v9897 = vadd.f32 %v215, %v9896
  %v9898 = vpop.f32.mrb[0].mxu0
  %9899 = vmatprep.mubr.f32.mxu0 0.0
  %9900 = vmatmul.mubr.f32.gmra.mrb[0].mxu0 %v239
  %v9901 = vpop.f32.mrb[0].mxu0
  %v9902 = vadd.f32 %v216, %v9901
  %v9903 = vpop.f32.mrb[0].mxu0
  %9904 = vdwg.mxu0
  %v9905 = vmax.f32 %v9792, %v9867
  %v9906 = vmax.f32 %v9793, %v9872
  %v9907 = vmax.f32 %v9794, %v9877
  %v9908 = vmax.f32 %v9795, %v9882
  %v9909 = vmax.f32 %v9796, %v9887
  %v9910 = vmax.f32 %v9797, %v9892
  %v9911 = vmax.f32 %v9798, %v9897
  %v9912 = vmax.f32 %v9799, %v9902
  %9913 = vmatprep.subr.mxu0 0.0
  %9914 = vmatpush1.msra.mxu0 %v9679
  %9915 = vmatprep.subr.mxu0 0.0
  %9916 = vmatpush1.msra.mxu0 %v9680
  %9917 = vmatprep.subr.mxu0 0.0
  %9918 = vmatpush1.msra.mxu0 %v9681
  %9919 = vmatprep.subr.mxu0 0.0
  %9920 = vmatpush1.msra.mxu0 %v9682
  %9921 = vmatprep.subr.mxu0 0.0
  %9922 = vmatpush1.msra.mxu0 %v9683
  %9923 = vmatprep.subr.mxu0 0.0
  %9924 = vmatpush1.msra.mxu0 %v9684
  %9925 = vmatprep.subr.mxu0 0.0
  %9926 = vmatpush1.msra.mxu0 %v9685
  %9927 = vmatprep.subr.mxu0 0.0
  %9928 = vmatpush1.msra.mxu0 %v9686
  %9929 = vmatprep.subr.mxu0 0.0
  %9930 = vmatpush1.msra.mxu0 0.0
  %9931 = vmatprep.subr.mxu0 0.0
  %9932 = vmatpush1.msra.mxu0 0.0
  %9933 = vmatprep.subr.mxu0 0.0
  %9934 = vmatpush1.msra.mxu0 0.0
  %9935 = vmatprep.subr.mxu0 0.0
  %9936 = vmatpush1.msra.mxu0 0.0
  %9937 = vmatprep.subr.mxu0 0.0
  %9938 = vmatpush1.msra.mxu0 0.0
  %9939 = vmatprep.subr.mxu0 0.0
  %9940 = vmatpush1.msra.mxu0 0.0
  %9941 = vmatprep.subr.mxu0 0.0
  %9942 = vmatpush1.msra.mxu0 0.0
  %9943 = vmatprep.subr.mxu0 0.0
  %9944 = vmatpush1.msra.mxu0 0.0
  %9945 = vmatprep.subr.mxu0 0.0
  %9946 = vmatpush1.msra.mxu0 0.0
  %9947 = vmatprep.subr.mxu0 0.0
  %9948 = vmatpush1.msra.mxu0 0.0
  %9949 = vmatprep.subr.mxu0 0.0
  %9950 = vmatpush1.msra.mxu0 0.0
  %9951 = vmatprep.subr.mxu0 0.0
  %9952 = vmatpush1.msra.mxu0 0.0
  %9953 = vmatprep.subr.mxu0 0.0
  %9954 = vmatpush1.msra.mxu0 0.0
  %9955 = vmatprep.subr.mxu0 0.0
  %9956 = vmatpush1.msra.mxu0 0.0
  %9957 = vmatprep.subr.mxu0 0.0
  %9958 = vmatpush1.msra.mxu0 0.0
  %9959 = vmatprep.subr.mxu0 0.0
  %9960 = vmatpush1.msra.mxu0 0.0
  %9961 = vmatprep.subr.mxu0 0.0
  %9962 = vmatpush1.msra.mxu0 0.0
  %9963 = vmatprep.subr.mxu0 0.0
  %9964 = vmatpush1.msra.mxu0 0.0
  %9965 = vmatprep.subr.mxu0 0.0
  %9966 = vmatpush1.msra.mxu0 0.0
  %9967 = vmatprep.subr.mxu0 0.0
  %9968 = vmatpush1.msra.mxu0 0.0
  %9969 = vmatprep.subr.mxu0 0.0
  %9970 = vmatpush1.msra.mxu0 0.0
  %9971 = vmatprep.subr.mxu0 0.0
  %9972 = vmatpush1.msra.mxu0 0.0
  %9973 = vmatprep.subr.mxu0 0.0
  %9974 = vmatpush1.msra.mxu0 0.0
  %9975 = vmatprep.subr.mxu0 0.0
  %9976 = vmatpush1.msra.mxu0 0.0
  %9977 = vmatprep.mubr.f32.mxu0 0.0
  %9978 = vmatmul.mubr.f32.gmra.mrb[0].mxu0 %v373
  %v9979 = vpop.f32.mrb[0].mxu0
  %v9980 = vadd.f32 %v364, %v9979
  %v9981 = vpop.f32.mrb[0].mxu0
  %9982 = vmatprep.mubr.f32.mxu0 0.0
  %9983 = vmatmul.mubr.f32.gmra.mrb[0].mxu0 %v376
  %v9984 = vpop.f32.mrb[0].mxu0
  %v9985 = vadd.f32 %v365, %v9984
  %v9986 = vpop.f32.mrb[0].mxu0
  %9987 = vmatprep.mubr.f32.mxu0 0.0
  %9988 = vmatmul.mubr.f32.gmra.mrb[0].mxu0 %v379
  %v9989 = vpop.f32.mrb[0].mxu0
  %v9990 = vadd.f32 %v366, %v9989
  %v9991 = vpop.f32.mrb[0].mxu0
  %9992 = vmatprep.mubr.f32.mxu0 0.0
  %9993 = vmatmul.mubr.f32.gmra.mrb[0].mxu0 %v382
  %v9994 = vpop.f32.mrb[0].mxu0
  %v9995 = vadd.f32 %v367, %v9994
  %v9996 = vpop.f32.mrb[0].mxu0
  %9997 = vmatprep.mubr.f32.mxu0 0.0
  %9998 = vmatmul.mubr.f32.gmra.mrb[0].mxu0 %v385
  %v9999 = vpop.f32.mrb[0].mxu0
  %v10000 = vadd.f32 %v368, %v9999
  %v10001 = vpop.f32.mrb[0].mxu0
  %10002 = vmatprep.mubr.f32.mxu0 0.0
  %10003 = vmatmul.mubr.f32.gmra.mrb[0].mxu0 %v388
  %v10004 = vpop.f32.mrb[0].mxu0
  %v10005 = vadd.f32 %v369, %v10004
  %v10006 = vpop.f32.mrb[0].mxu0
  %10007 = vmatprep.mubr.f32.mxu0 0.0
  %10008 = vmatmul.mubr.f32.gmra.mrb[0].mxu0 %v391
  %v10009 = vpop.f32.mrb[0].mxu0
  %v10010 = vadd.f32 %v370, %v10009
  %v10011 = vpop.f32.mrb[0].mxu0
  %10012 = vmatprep.mubr.f32.mxu0 0.0
  %10013 = vmatmul.mubr.f32.gmra.mrb[0].mxu0 %v394
  %v10014 = vpop.f32.mrb[0].mxu0
  %v10015 = vadd.f32 %v371, %v10014
  %v10016 = vpop.f32.mrb[0].mxu0
  %10017 = vdwg.mxu0
  %v10018 = vmax.f32 %v9905, %v9980
  %v10019 = vmax.f32 %v9906, %v9985
  %v10020 = vmax.f32 %v9907, %v9990
  %v10021 = vmax.f32 %v9908, %v9995
  %v10022 = vmax.f32 %v9909, %v10000
  %v10023 = vmax.f32 %v9910, %v10005
  %v10024 = vmax.f32 %v9911, %v10010
  %v10025 = vmax.f32 %v9912, %v10015
  %v10026 = vadd.f32 %v9679, %v10018
  %v10027 = vadd.f32 %v9680, %v10019
  %v10028 = vadd.f32 %v9681, %v10020
  %v10029 = vadd.f32 %v9682, %v10021
  %v10030 = vadd.f32 %v9683, %v10022
  %v10031 = vadd.f32 %v9684, %v10023
  %v10032 = vadd.f32 %v9685, %v10024
  %v10033 = vadd.f32 %v9686, %v10025
  %s10034 = scalar_lea.vmem %s4, 2432
  %v10035 = vld [vmem:[%s10034] sm:$0xff]
  %v10036 = vld [vmem:[%s10034 + $0x8] sm:$0xff]
  %v10037 = vld [vmem:[%s10034 + $0x10] sm:$0xff]
  %v10038 = vld [vmem:[%s10034 + $0x18] sm:$0xff]
  %v10039 = vld [vmem:[%s10034 + $0x20] sm:$0xff]
  %v10040 = vld [vmem:[%s10034 + $0x28] sm:$0xff]
  %v10041 = vld [vmem:[%s10034 + $0x30] sm:$0xff]
  %v10042 = vld [vmem:[%s10034 + $0x38] sm:$0xff]
  %v10043 = vld [vmem:[%s10034 + $0x40] sm:$0xff]
  %v10044 = vld [vmem:[%s10034 + $0x48] sm:$0xff]
  %v10045 = vld [vmem:[%s10034 + $0x50] sm:$0xff]
  %v10046 = vld [vmem:[%s10034 + $0x58] sm:$0xff]
  %v10047 = vld [vmem:[%s10034 + $0x60] sm:$0xff]
  %v10048 = vld [vmem:[%s10034 + $0x68] sm:$0xff]
  %v10049 = vld [vmem:[%s10034 + $0x70] sm:$0xff]
  %v10050 = vld [vmem:[%s10034 + $0x78] sm:$0xff]
  %s10051 = scalar_lea.vmem %s5, 19
  %v10052 = vld [vmem:[%s10051] sm:$0x1]
  %v10054 = vlaneseq
  %v10055 = vshrl.u32 %v10054, 7
  %v10056 = vsub.s32 0, %v10055
  %v10057 = vrot.slane %v10052, %v10056
  %10059 = vmatprep.subr.mxu0 0.0
  %10060 = vmatpush1.msra.mxu0 %v10035
  %10061 = vmatprep.subr.mxu0 0.0
  %10062 = vmatpush1.msra.mxu0 %v10036
  %10063 = vmatprep.subr.mxu0 0.0
  %10064 = vmatpush1.msra.mxu0 %v10037
  %10065 = vmatprep.subr.mxu0 0.0
  %10066 = vmatpush1.msra.mxu0 %v10038
  %10067 = vmatprep.subr.mxu0 0.0
  %10068 = vmatpush1.msra.mxu0 %v10039
  %10069 = vmatprep.subr.mxu0 0.0
  %10070 = vmatpush1.msra.mxu0 %v10040
  %10071 = vmatprep.subr.mxu0 0.0
  %10072 = vmatpush1.msra.mxu0 %v10041
  %10073 = vmatprep.subr.mxu0 0.0
  %10074 = vmatpush1.msra.mxu0 %v10042
  %10075 = vmatprep.subr.mxu0 0.0
  %10076 = vmatpush1.msra.mxu0 %v10043
  %10077 = vmatprep.subr.mxu0 0.0
  %10078 = vmatpush1.msra.mxu0 %v10044
  %10079 = vmatprep.subr.mxu0 0.0
  %10080 = vmatpush1.msra.mxu0 %v10045
  %10081 = vmatprep.subr.mxu0 0.0
  %10082 = vmatpush1.msra.mxu0 %v10046
  %10083 = vmatprep.subr.mxu0 0.0
  %10084 = vmatpush1.msra.mxu0 %v10047
  %10085 = vmatprep.subr.mxu0 0.0
  %10086 = vmatpush1.msra.mxu0 %v10048
  %10087 = vmatprep.subr.mxu0 0.0
  %10088 = vmatpush1.msra.mxu0 %v10049
  %10089 = vmatprep.subr.mxu0 0.0
  %10090 = vmatpush1.msra.mxu0 %v10050
  %10091 = vmatprep.subr.mxu0 0.0
  %10092 = vmatpush1.msra.mxu0 0.0
  %10093 = vmatprep.subr.mxu0 0.0
  %10094 = vmatpush1.msra.mxu0 0.0
  %10095 = vmatprep.subr.mxu0 0.0
  %10096 = vmatpush1.msra.mxu0 0.0
  %10097 = vmatprep.subr.mxu0 0.0
  %10098 = vmatpush1.msra.mxu0 0.0
  %10099 = vmatprep.subr.mxu0 0.0
  %10100 = vmatpush1.msra.mxu0 0.0
  %10101 = vmatprep.subr.mxu0 0.0
  %10102 = vmatpush1.msra.mxu0 0.0
  %10103 = vmatprep.subr.mxu0 0.0
  %10104 = vmatpush1.msra.mxu0 0.0
  %10105 = vmatprep.subr.mxu0 0.0
  %10106 = vmatpush1.msra.mxu0 0.0
  %10107 = vmatprep.subr.mxu0 0.0
  %10108 = vmatpush1.msra.mxu0 0.0
  %10109 = vmatprep.subr.mxu0 0.0
  %10110 = vmatpush1.msra.mxu0 0.0
  %10111 = vmatprep.subr.mxu0 0.0
  %10112 = vmatpush1.msra.mxu0 0.0
  %10113 = vmatprep.subr.mxu0 0.0
  %10114 = vmatpush1.msra.mxu0 0.0
  %10115 = vmatprep.subr.mxu0 0.0
  %10116 = vmatpush1.msra.mxu0 0.0
  %10117 = vmatprep.subr.mxu0 0.0
  %10118 = vmatpush1.msra.mxu0 0.0
  %10119 = vmatprep.subr.mxu0 0.0
  %10120 = vmatpush1.msra.mxu0 0.0
  %10121 = vmatprep.subr.mxu0 0.0
  %10122 = vmatpush1.msra.mxu0 0.0
  %10123 = vmatprep.mubr.f32.mxu0 0.0
  %10124 = vmatmul.mubr.f32.gmra.mrb[0].mxu0 %v10026
  %v10125 = vpop.f32.mrb[0].mxu0
  %v10126 = vadd.f32 %v10057, %v10125
  %v10127 = vpop.f32.mrb[0].mxu0
  %10128 = vmatprep.mubr.f32.mxu0 0.0
  %10129 = vmatmul.mubr.f32.gmra.mrb[0].mxu0 %v10027
  %v10130 = vpop.f32.mrb[0].mxu0
  %v10131 = vadd.f32 %v10057, %v10130
  %v10132 = vpop.f32.mrb[0].mxu0
  %10133 = vmatprep.mubr.f32.mxu0 0.0
  %10134 = vmatmul.mubr.f32.gmra.mrb[0].mxu0 %v10028
  %v10135 = vpop.f32.mrb[0].mxu0
  %v10136 = vadd.f32 %v10057, %v10135
  %v10137 = vpop.f32.mrb[0].mxu0
  %10138 = vmatprep.mubr.f32.mxu0 0.0
  %10139 = vmatmul.mubr.f32.gmra.mrb[0].mxu0 %v10029
  %v10140 = vpop.f32.mrb[0].mxu0
  %v10141 = vadd.f32 %v10057, %v10140
  %v10142 = vpop.f32.mrb[0].mxu0
  %10143 = vmatprep.mubr.f32.mxu0 0.0
  %10144 = vmatmul.mubr.f32.gmra.mrb[0].mxu0 %v10030
  %v10145 = vpop.f32.mrb[0].mxu0
  %v10146 = vadd.f32 %v10057, %v10145
  %v10147 = vpop.f32.mrb[0].mxu0
  %10148 = vmatprep.mubr.f32.mxu0 0.0
  %10149 = vmatmul.mubr.f32.gmra.mrb[0].mxu0 %v10031
  %v10150 = vpop.f32.mrb[0].mxu0
  %v10151 = vadd.f32 %v10057, %v10150
  %v10152 = vpop.f32.mrb[0].mxu0
  %10153 = vmatprep.mubr.f32.mxu0 0.0
  %10154 = vmatmul.mubr.f32.gmra.mrb[0].mxu0 %v10032
  %v10155 = vpop.f32.mrb[0].mxu0
  %v10156 = vadd.f32 %v10057, %v10155
  %v10157 = vpop.f32.mrb[0].mxu0
  %10158 = vmatprep.mubr.f32.mxu0 0.0
  %10159 = vmatmul.mubr.f32.gmra.mrb[0].mxu0 %v10033
  %v10160 = vpop.f32.mrb[0].mxu0
  %v10161 = vadd.f32 %v10057, %v10160
  %v10162 = vpop.f32.mrb[0].mxu0
  %10163 = vdwg.mxu0
  %vm10164 = vcmp.ge.f32.partialorder %v10126, 0.0
  %vm10165 = vcmp.ge.f32.partialorder %v10131, 0.0
  %vm10166 = vcmp.ge.f32.partialorder %v10136, 0.0
  %vm10167 = vcmp.ge.f32.partialorder %v10141, 0.0
  %vm10168 = vcmp.ge.f32.partialorder %v10146, 0.0
  %vm10169 = vcmp.ge.f32.partialorder %v10151, 0.0
  %vm10170 = vcmp.ge.f32.partialorder %v10156, 0.0
  %vm10171 = vcmp.ge.f32.partialorder %v10161, 0.0
  %v10172 = vmul.f32 %v10126, 0.01
  %v10173 = vmul.f32 %v10131, 0.01
  %v10174 = vmul.f32 %v10136, 0.01
  %v10175 = vmul.f32 %v10141, 0.01
  %v10176 = vmul.f32 %v10146, 0.01
  %v10177 = vmul.f32 %v10151, 0.01
  %v10178 = vmul.f32 %v10156, 0.01
  %v10179 = vmul.f32 %v10161, 0.01
  %v10180 = vsel %vm10164, %v10126, %v10172
  %v10181 = vsel %vm10165, %v10131, %v10173
  %v10182 = vsel %vm10166, %v10136, %v10174
  %v10183 = vsel %vm10167, %v10141, %v10175
  %v10184 = vsel %vm10168, %v10146, %v10176
  %v10185 = vsel %vm10169, %v10151, %v10177
  %v10186 = vsel %vm10170, %v10156, %v10178
  %v10187 = vsel %vm10171, %v10161, %v10179
  %v10188 = vld [vmem:[%s6] sm:$0xff]
  %v10189 = vld [vmem:[%s6 + $0x8] sm:$0xff]
  %v10190 = vld [vmem:[%s6 + $0x10] sm:$0xff]
  %v10191 = vld [vmem:[%s6 + $0x18] sm:$0xff]
  %v10192 = vld [vmem:[%s6 + $0x20] sm:$0xff]
  %v10193 = vld [vmem:[%s6 + $0x28] sm:$0xff]
  %v10194 = vld [vmem:[%s6 + $0x30] sm:$0xff]
  %v10195 = vld [vmem:[%s6 + $0x38] sm:$0xff]
  %v10196 = vld [vmem:[%s6 + $0x40] sm:$0xff]
  %v10197 = vld [vmem:[%s6 + $0x48] sm:$0xff]
  %v10198 = vld [vmem:[%s6 + $0x50] sm:$0xff]
  %v10199 = vld [vmem:[%s6 + $0x58] sm:$0xff]
  %v10200 = vld [vmem:[%s6 + $0x60] sm:$0xff]
  %v10201 = vld [vmem:[%s6 + $0x68] sm:$0xff]
  %v10202 = vld [vmem:[%s6 + $0x70] sm:$0xff]
  %v10203 = vld [vmem:[%s6 + $0x78] sm:$0xff]
  %v10204 = vld [vmem:[%s7] sm:$0x1]
  %v10206 = vlaneseq
  %v10207 = vshrl.u32 %v10206, 7
  %v10208 = vsub.s32 0, %v10207
  %v10209 = vrot.slane %v10204, %v10208
  %10211 = vmatprep.subr.mxu0 0.0
  %10212 = vmatpush1.msra.mxu0 %v10188
  %10213 = vmatprep.subr.mxu0 0.0
  %10214 = vmatpush1.msra.mxu0 %v10189
  %10215 = vmatprep.subr.mxu0 0.0
  %10216 = vmatpush1.msra.mxu0 %v10190
  %10217 = vmatprep.subr.mxu0 0.0
  %10218 = vmatpush1.msra.mxu0 %v10191
  %10219 = vmatprep.subr.mxu0 0.0
  %10220 = vmatpush1.msra.mxu0 %v10192
  %10221 = vmatprep.subr.mxu0 0.0
  %10222 = vmatpush1.msra.mxu0 %v10193
  %10223 = vmatprep.subr.mxu0 0.0
  %10224 = vmatpush1.msra.mxu0 %v10194
  %10225 = vmatprep.subr.mxu0 0.0
  %10226 = vmatpush1.msra.mxu0 %v10195
  %10227 = vmatprep.subr.mxu0 0.0
  %10228 = vmatpush1.msra.mxu0 %v10196
  %10229 = vmatprep.subr.mxu0 0.0
  %10230 = vmatpush1.msra.mxu0 %v10197
  %10231 = vmatprep.subr.mxu0 0.0
  %10232 = vmatpush1.msra.mxu0 %v10198
  %10233 = vmatprep.subr.mxu0 0.0
  %10234 = vmatpush1.msra.mxu0 %v10199
  %10235 = vmatprep.subr.mxu0 0.0
  %10236 = vmatpush1.msra.mxu0 %v10200
  %10237 = vmatprep.subr.mxu0 0.0
  %10238 = vmatpush1.msra.mxu0 %v10201
  %10239 = vmatprep.subr.mxu0 0.0
  %10240 = vmatpush1.msra.mxu0 %v10202
  %10241 = vmatprep.subr.mxu0 0.0
  %10242 = vmatpush1.msra.mxu0 %v10203
  %10243 = vmatprep.subr.mxu0 0.0
  %10244 = vmatpush1.msra.mxu0 0.0
  %10245 = vmatprep.subr.mxu0 0.0
  %10246 = vmatpush1.msra.mxu0 0.0
  %10247 = vmatprep.subr.mxu0 0.0
  %10248 = vmatpush1.msra.mxu0 0.0
  %10249 = vmatprep.subr.mxu0 0.0
  %10250 = vmatpush1.msra.mxu0 0.0
  %10251 = vmatprep.subr.mxu0 0.0
  %10252 = vmatpush1.msra.mxu0 0.0
  %10253 = vmatprep.subr.mxu0 0.0
  %10254 = vmatpush1.msra.mxu0 0.0
  %10255 = vmatprep.subr.mxu0 0.0
  %10256 = vmatpush1.msra.mxu0 0.0
  %10257 = vmatprep.subr.mxu0 0.0
  %10258 = vmatpush1.msra.mxu0 0.0
  %10259 = vmatprep.subr.mxu0 0.0
  %10260 = vmatpush1.msra.mxu0 0.0
  %10261 = vmatprep.subr.mxu0 0.0
  %10262 = vmatpush1.msra.mxu0 0.0
  %10263 = vmatprep.subr.mxu0 0.0
  %10264 = vmatpush1.msra.mxu0 0.0
  %10265 = vmatprep.subr.mxu0 0.0
  %10266 = vmatpush1.msra.mxu0 0.0
  %10267 = vmatprep.subr.mxu0 0.0
  %10268 = vmatpush1.msra.mxu0 0.0
  %10269 = vmatprep.subr.mxu0 0.0
  %10270 = vmatpush1.msra.mxu0 0.0
  %10271 = vmatprep.subr.mxu0 0.0
  %10272 = vmatpush1.msra.mxu0 0.0
  %10273 = vmatprep.subr.mxu0 0.0
  %10274 = vmatpush1.msra.mxu0 0.0
  %10275 = vmatprep.mubr.f32.mxu0 0.0
  %10276 = vmatmul.mubr.f32.gmra.mrb[0].mxu0 %v10180
  %v10277 = vpop.f32.mrb[0].mxu0
  %v10278 = vadd.f32 %v10209, %v10277
  %v10279 = vpop.f32.mrb[0].mxu0
  %10280 = vmatprep.mubr.f32.mxu0 0.0
  %10281 = vmatmul.mubr.f32.gmra.mrb[0].mxu0 %v10181
  %v10282 = vpop.f32.mrb[0].mxu0
  %v10283 = vadd.f32 %v10209, %v10282
  %v10284 = vpop.f32.mrb[0].mxu0
  %10285 = vmatprep.mubr.f32.mxu0 0.0
  %10286 = vmatmul.mubr.f32.gmra.mrb[0].mxu0 %v10182
  %v10287 = vpop.f32.mrb[0].mxu0
  %v10288 = vadd.f32 %v10209, %v10287
  %v10289 = vpop.f32.mrb[0].mxu0
  %10290 = vmatprep.mubr.f32.mxu0 0.0
  %10291 = vmatmul.mubr.f32.gmra.mrb[0].mxu0 %v10183
  %v10292 = vpop.f32.mrb[0].mxu0
  %v10293 = vadd.f32 %v10209, %v10292
  %v10294 = vpop.f32.mrb[0].mxu0
  %10295 = vmatprep.mubr.f32.mxu0 0.0
  %10296 = vmatmul.mubr.f32.gmra.mrb[0].mxu0 %v10184
  %v10297 = vpop.f32.mrb[0].mxu0
  %v10298 = vadd.f32 %v10209, %v10297
  %v10299 = vpop.f32.mrb[0].mxu0
  %10300 = vmatprep.mubr.f32.mxu0 0.0
  %10301 = vmatmul.mubr.f32.gmra.mrb[0].mxu0 %v10185
  %v10302 = vpop.f32.mrb[0].mxu0
  %v10303 = vadd.f32 %v10209, %v10302
  %v10304 = vpop.f32.mrb[0].mxu0
  %10305 = vmatprep.mubr.f32.mxu0 0.0
  %10306 = vmatmul.mubr.f32.gmra.mrb[0].mxu0 %v10186
  %v10307 = vpop.f32.mrb[0].mxu0
  %v10308 = vadd.f32 %v10209, %v10307
  %v10309 = vpop.f32.mrb[0].mxu0
  %10310 = vmatprep.mubr.f32.mxu0 0.0
  %10311 = vmatmul.mubr.f32.gmra.mrb[0].mxu0 %v10187
  %v10312 = vpop.f32.mrb[0].mxu0
  %v10313 = vadd.f32 %v10209, %v10312
  %v10314 = vpop.f32.mrb[0].mxu0
  %10315 = vdwg.mxu0
  %10316 = vst [vmem:[%s8] sm:$0xff] %v10278
  %10317 = vst [vmem:[%s8 + $0x8] sm:$0xff] %v10283
  %10318 = vst [vmem:[%s8 + $0x10] sm:$0xff] %v10288
  %10319 = vst [vmem:[%s8 + $0x18] sm:$0xff] %v10293
  %10320 = vst [vmem:[%s8 + $0x20] sm:$0xff] %v10298
  %10321 = vst [vmem:[%s8 + $0x28] sm:$0xff] %v10303
  %10322 = vst [vmem:[%s8 + $0x30] sm:$0xff] %v10308
  %10323 = vst [vmem:[%s8 + $0x38] sm:$0xff] %v10313
  // Predicated region
  $region34: #{net_forward.1} parent=0 // pred_check
    _
  $region35: #{net_forward.1} parent=0 // pred_check_branch
    %10325 = sbr.rel (0) target = $region37
  $region36: #{net_forward.1} parent=0 // pred_region
    _
  $region37: #{net_forward.1} parent=0 // pred_fallthru
    _
  // Predicated region
  $region38: #{net_forward.1} parent=0 // pred_check
    _
  $region39: #{net_forward.1} parent=0 // pred_check_branch
    %10327 = sbr.rel (0) target = $region41
  $region40: #{net_forward.1} parent=0 // pred_region
    _
  $region41: #{net_forward.1} parent=0 // pred_fallthru
    _

</llo_original>
